<compile_context>
chip_gen: v7x
topology: tpu7x:2x2x1
jax: 0.10.0
libtpu: 0.0.40
codegen_flags: <defaults>
</compile_context>

<pallas_src>
import jax
import jax.numpy as jnp
import numpy as np
from jax import lax
from jax.experimental import pallas as pl
from jax.experimental.pallas import tpu as pltpu


def _make_kernel(N, H, W, Cin, Cout, K, P, eps):
    M = N * H * W
    Hp, Wp = H + 2 * P, W + 2 * P

    def kernel(xp_ref, wc1_ref, g1_ref, b1_ref, wc2t_ref, g2_ref, b2_ref,
               out_ref, pad_ref):
        # ---- SeparableConv2d #1 (relu -> depthwise -> pointwise) fused on MXU:
        # y[m, o] = sum_{kh,kw,c} relu(xpad)[shift(m), c] * dw1[c,kh,kw]*pw1[o,c]
        y = jnp.zeros((M, Cout), jnp.float32)
        for kh in range(K):
            for kw in range(K):
                xs = jnp.maximum(xp_ref[:, kh:kh + H, kw:kw + W, :], 0.0)
                y = y + jnp.dot(xs.reshape(M, Cin), wc1_ref[kh * K + kw],
                                preferred_element_type=jnp.float32)

        # ---- BatchNorm2d #1 (per-batch stats, biased variance) + ReLU.
        mu1 = jnp.mean(y, axis=0, keepdims=True)
        var1 = jnp.mean((y - mu1) ** 2, axis=0, keepdims=True)
        y = (y - mu1) * lax.rsqrt(var1 + eps) * g1_ref[...] + b1_ref[...]
        y = jnp.maximum(y, 0.0)

        # ---- Stage the padded intermediate for conv #2: zero only the P-wide
        #      border, then write the interior once.
        if P > 0:
            zrow = jnp.zeros((N, P, Wp, Cout), jnp.float32)
            pad_ref[:, :P, :, :] = zrow
            pad_ref[:, H + P:, :, :] = zrow
            zcol = jnp.zeros((N, Hp, P, Cout), jnp.float32)
            pad_ref[:, :, :P, :] = zcol
            pad_ref[:, :, W + P:, :] = zcol
        pad_ref[:, P:P + H, P:P + W, :] = y.reshape(N, H, W, Cout)

        # ---- SeparableConv2d #2 fused on MXU, accumulated directly in the
        #      transposed (Cout, M) layout (lane-dense output):
        # zt[o, m] = sum_{kh,kw,c} ypad[shift(m), c] * dw2[c,kh,kw]*pw2[o,c]
        zt = jnp.zeros((Cout, M), jnp.float32)
        for kh in range(K):
            for kw in range(K):
                sl = pad_ref[:, kh:kh + H, kw:kw + W, :].reshape(M, Cout)
                zt = zt + lax.dot_general(
                    wc2t_ref[kh * K + kw], sl,
                    dimension_numbers=(((1,), (1,)), ((), ())),
                    preferred_element_type=jnp.float32)

        # ---- BatchNorm2d #2 in the lane-dense layout (reduce along lanes).
        mu2 = jnp.mean(zt, axis=1, keepdims=True)
        var2 = jnp.mean((zt - mu2) ** 2, axis=1, keepdims=True)
        zt = (zt - mu2) * lax.rsqrt(var2 + eps) * g2_ref[...] + b2_ref[...]

        out_ref[...] = zt  # (Cout, N*H*W): unmasked, lane-dense stores

    return kernel


def branch_separables_stem(x_nchw, params, *, kernel_size, stride, padding, eps=1e-3):
    assert stride == 1  # see TODO(synk) above
    N, Cin, H, W = x_nchw.shape
    K, P = kernel_size, padding
    Cout = params["pw1"].shape[0]
    M = N * H * W

    # NCHW -> NHWC and spatial zero-pad done in the wrapper (HBM/XLA side).
    # relu(0) == 0, so padding before the in-kernel relu is exact.
    x = jnp.transpose(x_nchw, (0, 2, 3, 1)).astype(jnp.float32)
    xp = jnp.pad(x, ((0, 0), (P, P), (P, P), (0, 0)))

    # Combined depthwise*pointwise weights (pure XLA glue, done once per call).
    #   wc1[t, c, o]  = dw1[c, kh, kw] * pw1[o, c]   (conv #1, normal orient.)
    #   wc2t[t, o, c] = dw2[c, kh, kw] * pw2[o, c]   (conv #2, transposed out.)
    dw1 = jnp.transpose(params["dw1"][:, 0], (1, 2, 0)).reshape(K * K, Cin)   # [t, c]
    pw1 = params["pw1"][:, :, 0, 0]                                           # [o, c]
    wc1 = dw1[:, :, None] * jnp.transpose(pw1)[None, :, :]                    # (K*K, Cin, Cout)
    dw2 = jnp.transpose(params["dw2"][:, 0], (1, 2, 0)).reshape(K * K, Cout)  # [t, c]
    pw2 = params["pw2"][:, :, 0, 0]                                           # [o, c]
    wc2t = dw2[:, None, :] * pw2[None, :, :]                                  # (K*K, Cout, Cout)

    g1 = params["g1"].reshape(1, Cout).astype(jnp.float32)
    b1 = params["b1"].reshape(1, Cout).astype(jnp.float32)
    g2 = params["g2"].reshape(Cout, 1).astype(jnp.float32)
    b2 = params["b2"].reshape(Cout, 1).astype(jnp.float32)

    kernel = _make_kernel(N, H, W, Cin, Cout, K, P, eps)

    def full(shp):
        return pl.BlockSpec(shp, lambda i, _n=len(shp): (0,) * _n)

    flops = 2 * M * K * K * (Cin * Cout + Cout * Cout) + 16 * M * Cout
    bytes_accessed = 4 * (xp.size + M * Cout + wc1.size + wc2t.size + 4 * Cout)

    out2d = pl.pallas_call(
        kernel,
        out_shape=jax.ShapeDtypeStruct((Cout, M), jnp.float32),
        grid=(1,),
        in_specs=[full(xp.shape),
                  full(wc1.shape), full((1, Cout)), full((1, Cout)),
                  full(wc2t.shape), full((Cout, 1)), full((Cout, 1))],
        out_specs=full((Cout, M)),
        scratch_shapes=[
            pltpu.VMEM((N, H + 2 * P, W + 2 * P, Cout), jnp.float32),
        ],
        compiler_params=pltpu.CompilerParams(
            dimension_semantics=("arbitrary",),
            vmem_limit_bytes=32 * 1024 * 1024),
        cost_estimate=pl.CostEstimate(
            flops=flops, transcendentals=2 * Cout,
            bytes_accessed=bytes_accessed),
    )(xp, wc1, g1, b1, wc2t, g2, b2)

    # (Cout, N*H*W) -> NCHW (layout plumbing, HBM/XLA side).
    return jnp.transpose(out2d.reshape(Cout, N, H, W), (1, 0, 2, 3))


def reference_forward(x, params, *, kernel_size, stride, padding, eps=1e-3):
    """Pure-JAX (lax.conv) reference matching the PyTorch module, NCHW."""
    dn = ("NCHW", "OIHW", "NCHW")
    Cin = x.shape[1]
    Cout = params["pw1"].shape[0]

    def bn(v, g, b):
        mu = v.mean(axis=(0, 2, 3), keepdims=True)
        var = ((v - mu) ** 2).mean(axis=(0, 2, 3), keepdims=True)
        return (v - mu) / jnp.sqrt(var + eps) * g.reshape(1, -1, 1, 1) + b.reshape(1, -1, 1, 1)

    v = jnp.maximum(x, 0.0)
    v = lax.conv_general_dilated(v, params["dw1"], (stride, stride),
                                 [(padding, padding)] * 2,
                                 dimension_numbers=dn, feature_group_count=Cin)
    v = lax.conv_general_dilated(v, params["pw1"], (1, 1), "VALID", dimension_numbers=dn)
    v = bn(v, params["g1"], params["b1"])
    v = jnp.maximum(v, 0.0)
    v = lax.conv_general_dilated(v, params["dw2"], (1, 1),
                                 [(padding, padding)] * 2,
                                 dimension_numbers=dn, feature_group_count=Cout)
    v = lax.conv_general_dilated(v, params["pw2"], (1, 1), "VALID", dimension_numbers=dn)
    v = bn(v, params["g2"], params["b2"])
    return v


if __name__ == "__main__":
    N, Cin, Cout, H, W = 2, 4, 8, 16, 16
    K, stride, padding = 3, 1, 1

    key = jax.random.PRNGKey(0)
    ks = jax.random.split(key, 9)
    params = {
        "dw1": 0.2 * jax.random.normal(ks[0], (Cin, 1, K, K), jnp.float32),
        "pw1": 0.2 * jax.random.normal(ks[1], (Cout, Cin, 1, 1), jnp.float32),
        "dw2": 0.2 * jax.random.normal(ks[2], (Cout, 1, K, K), jnp.float32),
        "pw2": 0.2 * jax.random.normal(ks[3], (Cout, Cout, 1, 1), jnp.float32),
        "g1": 1.0 + 0.1 * jax.random.normal(ks[4], (Cout,), jnp.float32),
        "b1": 0.1 * jax.random.normal(ks[5], (Cout,), jnp.float32),
        "g2": 1.0 + 0.1 * jax.random.normal(ks[6], (Cout,), jnp.float32),
        "b2": 0.1 * jax.random.normal(ks[7], (Cout,), jnp.float32),
    }
    x = jax.random.normal(ks[8], (N, Cin, H, W), jnp.float32)

    out = branch_separables_stem(x, params, kernel_size=K, stride=stride, padding=padding)
    out = jax.block_until_ready(out)

    ref = reference_forward(x, params, kernel_size=K, stride=stride, padding=padding)
    np.testing.assert_allclose(np.asarray(out), np.asarray(ref), rtol=1e-3, atol=1e-3)

    print("KERNEL_OK")
</pallas_src>

<mosaic_0001>
module attributes {stable_mosaic.version = 11 : i64} {
  func.func @kernel(%arg0: i32, %arg1: memref<2x18x18x4xf32, #tpu.memory_space<vmem>>, %arg2: memref<9x4x8xf32, #tpu.memory_space<vmem>>, %arg3: memref<1x8xf32, #tpu.memory_space<vmem>>, %arg4: memref<1x8xf32, #tpu.memory_space<vmem>>, %arg5: memref<9x8x8xf32, #tpu.memory_space<vmem>>, %arg6: memref<8x1xf32, #tpu.memory_space<vmem>>, %arg7: memref<8x1xf32, #tpu.memory_space<vmem>>, %arg8: memref<8x512xf32, #tpu.memory_space<vmem>>, %arg9: memref<2x18x18x8xf32, #tpu.memory_space<vmem>>) attributes {dimension_semantics = [#tpu.dimension_semantics<arbitrary>], iteration_bounds = array<i64: 1>, scalar_prefetch = 0 : i64, scratch_operands = 1 : i64, tpu.core_type = #tpu.core_type<tc>, window_params = [{pipeline_mode = #tpu.pipeline_mode<synchronous>, transform_indices = @transform_0, window_bounds = array<i64: 2, 18, 18, 4>}, {pipeline_mode = #tpu.pipeline_mode<synchronous>, transform_indices = @transform_1, window_bounds = array<i64: 9, 4, 8>}, {pipeline_mode = #tpu.pipeline_mode<synchronous>, transform_indices = @transform_2, window_bounds = array<i64: 1, 8>}, {pipeline_mode = #tpu.pipeline_mode<synchronous>, transform_indices = @transform_3, window_bounds = array<i64: 1, 8>}, {pipeline_mode = #tpu.pipeline_mode<synchronous>, transform_indices = @transform_4, window_bounds = array<i64: 9, 8, 8>}, {pipeline_mode = #tpu.pipeline_mode<synchronous>, transform_indices = @transform_5, window_bounds = array<i64: 8, 1>}, {pipeline_mode = #tpu.pipeline_mode<synchronous>, transform_indices = @transform_6, window_bounds = array<i64: 8, 1>}, {pipeline_mode = #tpu.pipeline_mode<synchronous>, transform_indices = @transform_7, window_bounds = array<i64: 8, 512>}]} {
    %cst = arith.constant 0.000000e+00 : f32
    %0 = vector.broadcast %cst : f32 to vector<512x8xf32>
    %c0 = arith.constant 0 : index
    %c0_0 = arith.constant 0 : index
    %c0_1 = arith.constant 0 : index
    %c0_2 = arith.constant 0 : index
    %1 = vector.load %arg1[%c0, %c0_0, %c0_1, %c0_2] : memref<2x18x18x4xf32, #tpu.memory_space<vmem>>, vector<2x16x16x4xf32>
    %cst_3 = arith.constant 0.000000e+00 : f32
    %2 = vector.broadcast %cst_3 : f32 to vector<2x16x16x4xf32>
    %3 = arith.maximumf %1, %2 : vector<2x16x16x4xf32>
    %4 = vector.shape_cast %3 : vector<2x16x16x4xf32> to vector<512x4xf32>
    %c0_4 = arith.constant 0 : index
    %c0_5 = arith.constant 0 : index
    %c0_6 = arith.constant 0 : index
    %5 = vector.load %arg2[%c0_4, %c0_5, %c0_6] : memref<9x4x8xf32, #tpu.memory_space<vmem>>, vector<1x4x8xf32>
    %6 = vector.shape_cast %5 : vector<1x4x8xf32> to vector<4x8xf32>
    %cst_7 = arith.constant dense<0.000000e+00> : vector<512x8xf32>
    %7 = tpu.matmul %4, %6, %cst_7 {dimension_numbers = #tpu.dot_dimension_numbers<[1], [0], [0], [1], [0, 0, 1, 1], [], []>} : vector<512x4xf32>, vector<4x8xf32>, vector<512x8xf32> -> vector<512x8xf32>
    %8 = arith.addf %0, %7 : vector<512x8xf32>
    %c0_8 = arith.constant 0 : index
    %c0_9 = arith.constant 0 : index
    %c1 = arith.constant 1 : index
    %c0_10 = arith.constant 0 : index
    %9 = vector.load %arg1[%c0_8, %c0_9, %c1, %c0_10] : memref<2x18x18x4xf32, #tpu.memory_space<vmem>>, vector<2x16x16x4xf32>
    %cst_11 = arith.constant 0.000000e+00 : f32
    %10 = vector.broadcast %cst_11 : f32 to vector<2x16x16x4xf32>
    %11 = arith.maximumf %9, %10 : vector<2x16x16x4xf32>
    %12 = vector.shape_cast %11 : vector<2x16x16x4xf32> to vector<512x4xf32>
    %c1_12 = arith.constant 1 : index
    %c0_13 = arith.constant 0 : index
    %c0_14 = arith.constant 0 : index
    %13 = vector.load %arg2[%c1_12, %c0_13, %c0_14] : memref<9x4x8xf32, #tpu.memory_space<vmem>>, vector<1x4x8xf32>
    %14 = vector.shape_cast %13 : vector<1x4x8xf32> to vector<4x8xf32>
    %cst_15 = arith.constant dense<0.000000e+00> : vector<512x8xf32>
    %15 = tpu.matmul %12, %14, %cst_15 {dimension_numbers = #tpu.dot_dimension_numbers<[1], [0], [0], [1], [0, 0, 1, 1], [], []>} : vector<512x4xf32>, vector<4x8xf32>, vector<512x8xf32> -> vector<512x8xf32>
    %16 = arith.addf %8, %15 : vector<512x8xf32>
    %c0_16 = arith.constant 0 : index
    %c0_17 = arith.constant 0 : index
    %c2 = arith.constant 2 : index
    %c0_18 = arith.constant 0 : index
    %17 = vector.load %arg1[%c0_16, %c0_17, %c2, %c0_18] : memref<2x18x18x4xf32, #tpu.memory_space<vmem>>, vector<2x16x16x4xf32>
    %cst_19 = arith.constant 0.000000e+00 : f32
    %18 = vector.broadcast %cst_19 : f32 to vector<2x16x16x4xf32>
    %19 = arith.maximumf %17, %18 : vector<2x16x16x4xf32>
    %20 = vector.shape_cast %19 : vector<2x16x16x4xf32> to vector<512x4xf32>
    %c2_20 = arith.constant 2 : index
    %c0_21 = arith.constant 0 : index
    %c0_22 = arith.constant 0 : index
    %21 = vector.load %arg2[%c2_20, %c0_21, %c0_22] : memref<9x4x8xf32, #tpu.memory_space<vmem>>, vector<1x4x8xf32>
    %22 = vector.shape_cast %21 : vector<1x4x8xf32> to vector<4x8xf32>
    %cst_23 = arith.constant dense<0.000000e+00> : vector<512x8xf32>
    %23 = tpu.matmul %20, %22, %cst_23 {dimension_numbers = #tpu.dot_dimension_numbers<[1], [0], [0], [1], [0, 0, 1, 1], [], []>} : vector<512x4xf32>, vector<4x8xf32>, vector<512x8xf32> -> vector<512x8xf32>
    %24 = arith.addf %16, %23 : vector<512x8xf32>
    %c0_24 = arith.constant 0 : index
    %c1_25 = arith.constant 1 : index
    %c0_26 = arith.constant 0 : index
    %c0_27 = arith.constant 0 : index
    %25 = vector.load %arg1[%c0_24, %c1_25, %c0_26, %c0_27] : memref<2x18x18x4xf32, #tpu.memory_space<vmem>>, vector<2x16x16x4xf32>
    %cst_28 = arith.constant 0.000000e+00 : f32
    %26 = vector.broadcast %cst_28 : f32 to vector<2x16x16x4xf32>
    %27 = arith.maximumf %25, %26 : vector<2x16x16x4xf32>
    %28 = vector.shape_cast %27 : vector<2x16x16x4xf32> to vector<512x4xf32>
    %c3 = arith.constant 3 : index
    %c0_29 = arith.constant 0 : index
    %c0_30 = arith.constant 0 : index
    %29 = vector.load %arg2[%c3, %c0_29, %c0_30] : memref<9x4x8xf32, #tpu.memory_space<vmem>>, vector<1x4x8xf32>
    %30 = vector.shape_cast %29 : vector<1x4x8xf32> to vector<4x8xf32>
    %cst_31 = arith.constant dense<0.000000e+00> : vector<512x8xf32>
    %31 = tpu.matmul %28, %30, %cst_31 {dimension_numbers = #tpu.dot_dimension_numbers<[1], [0], [0], [1], [0, 0, 1, 1], [], []>} : vector<512x4xf32>, vector<4x8xf32>, vector<512x8xf32> -> vector<512x8xf32>
    %32 = arith.addf %24, %31 : vector<512x8xf32>
    %c0_32 = arith.constant 0 : index
    %c1_33 = arith.constant 1 : index
    %c1_34 = arith.constant 1 : index
    %c0_35 = arith.constant 0 : index
    %33 = vector.load %arg1[%c0_32, %c1_33, %c1_34, %c0_35] : memref<2x18x18x4xf32, #tpu.memory_space<vmem>>, vector<2x16x16x4xf32>
    %cst_36 = arith.constant 0.000000e+00 : f32
    %34 = vector.broadcast %cst_36 : f32 to vector<2x16x16x4xf32>
    %35 = arith.maximumf %33, %34 : vector<2x16x16x4xf32>
    %36 = vector.shape_cast %35 : vector<2x16x16x4xf32> to vector<512x4xf32>
    %c4 = arith.constant 4 : index
    %c0_37 = arith.constant 0 : index
    %c0_38 = arith.constant 0 : index
    %37 = vector.load %arg2[%c4, %c0_37, %c0_38] : memref<9x4x8xf32, #tpu.memory_space<vmem>>, vector<1x4x8xf32>
    %38 = vector.shape_cast %37 : vector<1x4x8xf32> to vector<4x8xf32>
    %cst_39 = arith.constant dense<0.000000e+00> : vector<512x8xf32>
    %39 = tpu.matmul %36, %38, %cst_39 {dimension_numbers = #tpu.dot_dimension_numbers<[1], [0], [0], [1], [0, 0, 1, 1], [], []>} : vector<512x4xf32>, vector<4x8xf32>, vector<512x8xf32> -> vector<512x8xf32>
    %40 = arith.addf %32, %39 : vector<512x8xf32>
    %c0_40 = arith.constant 0 : index
    %c1_41 = arith.constant 1 : index
    %c2_42 = arith.constant 2 : index
    %c0_43 = arith.constant 0 : index
    %41 = vector.load %arg1[%c0_40, %c1_41, %c2_42, %c0_43] : memref<2x18x18x4xf32, #tpu.memory_space<vmem>>, vector<2x16x16x4xf32>
    %cst_44 = arith.constant 0.000000e+00 : f32
    %42 = vector.broadcast %cst_44 : f32 to vector<2x16x16x4xf32>
    %43 = arith.maximumf %41, %42 : vector<2x16x16x4xf32>
    %44 = vector.shape_cast %43 : vector<2x16x16x4xf32> to vector<512x4xf32>
    %c5 = arith.constant 5 : index
    %c0_45 = arith.constant 0 : index
    %c0_46 = arith.constant 0 : index
    %45 = vector.load %arg2[%c5, %c0_45, %c0_46] : memref<9x4x8xf32, #tpu.memory_space<vmem>>, vector<1x4x8xf32>
    %46 = vector.shape_cast %45 : vector<1x4x8xf32> to vector<4x8xf32>
    %cst_47 = arith.constant dense<0.000000e+00> : vector<512x8xf32>
    %47 = tpu.matmul %44, %46, %cst_47 {dimension_numbers = #tpu.dot_dimension_numbers<[1], [0], [0], [1], [0, 0, 1, 1], [], []>} : vector<512x4xf32>, vector<4x8xf32>, vector<512x8xf32> -> vector<512x8xf32>
    %48 = arith.addf %40, %47 : vector<512x8xf32>
    %c0_48 = arith.constant 0 : index
    %c2_49 = arith.constant 2 : index
    %c0_50 = arith.constant 0 : index
    %c0_51 = arith.constant 0 : index
    %49 = vector.load %arg1[%c0_48, %c2_49, %c0_50, %c0_51] : memref<2x18x18x4xf32, #tpu.memory_space<vmem>>, vector<2x16x16x4xf32>
    %cst_52 = arith.constant 0.000000e+00 : f32
    %50 = vector.broadcast %cst_52 : f32 to vector<2x16x16x4xf32>
    %51 = arith.maximumf %49, %50 : vector<2x16x16x4xf32>
    %52 = vector.shape_cast %51 : vector<2x16x16x4xf32> to vector<512x4xf32>
    %c6 = arith.constant 6 : index
    %c0_53 = arith.constant 0 : index
    %c0_54 = arith.constant 0 : index
    %53 = vector.load %arg2[%c6, %c0_53, %c0_54] : memref<9x4x8xf32, #tpu.memory_space<vmem>>, vector<1x4x8xf32>
    %54 = vector.shape_cast %53 : vector<1x4x8xf32> to vector<4x8xf32>
    %cst_55 = arith.constant dense<0.000000e+00> : vector<512x8xf32>
    %55 = tpu.matmul %52, %54, %cst_55 {dimension_numbers = #tpu.dot_dimension_numbers<[1], [0], [0], [1], [0, 0, 1, 1], [], []>} : vector<512x4xf32>, vector<4x8xf32>, vector<512x8xf32> -> vector<512x8xf32>
    %56 = arith.addf %48, %55 : vector<512x8xf32>
    %c0_56 = arith.constant 0 : index
    %c2_57 = arith.constant 2 : index
    %c1_58 = arith.constant 1 : index
    %c0_59 = arith.constant 0 : index
    %57 = vector.load %arg1[%c0_56, %c2_57, %c1_58, %c0_59] : memref<2x18x18x4xf32, #tpu.memory_space<vmem>>, vector<2x16x16x4xf32>
    %cst_60 = arith.constant 0.000000e+00 : f32
    %58 = vector.broadcast %cst_60 : f32 to vector<2x16x16x4xf32>
    %59 = arith.maximumf %57, %58 : vector<2x16x16x4xf32>
    %60 = vector.shape_cast %59 : vector<2x16x16x4xf32> to vector<512x4xf32>
    %c7 = arith.constant 7 : index
    %c0_61 = arith.constant 0 : index
    %c0_62 = arith.constant 0 : index
    %61 = vector.load %arg2[%c7, %c0_61, %c0_62] : memref<9x4x8xf32, #tpu.memory_space<vmem>>, vector<1x4x8xf32>
    %62 = vector.shape_cast %61 : vector<1x4x8xf32> to vector<4x8xf32>
    %cst_63 = arith.constant dense<0.000000e+00> : vector<512x8xf32>
    %63 = tpu.matmul %60, %62, %cst_63 {dimension_numbers = #tpu.dot_dimension_numbers<[1], [0], [0], [1], [0, 0, 1, 1], [], []>} : vector<512x4xf32>, vector<4x8xf32>, vector<512x8xf32> -> vector<512x8xf32>
    %64 = arith.addf %56, %63 : vector<512x8xf32>
    %c0_64 = arith.constant 0 : index
    %c2_65 = arith.constant 2 : index
    %c2_66 = arith.constant 2 : index
    %c0_67 = arith.constant 0 : index
    %65 = vector.load %arg1[%c0_64, %c2_65, %c2_66, %c0_67] : memref<2x18x18x4xf32, #tpu.memory_space<vmem>>, vector<2x16x16x4xf32>
    %cst_68 = arith.constant 0.000000e+00 : f32
    %66 = vector.broadcast %cst_68 : f32 to vector<2x16x16x4xf32>
    %67 = arith.maximumf %65, %66 : vector<2x16x16x4xf32>
    %68 = vector.shape_cast %67 : vector<2x16x16x4xf32> to vector<512x4xf32>
    %c8 = arith.constant 8 : index
    %c0_69 = arith.constant 0 : index
    %c0_70 = arith.constant 0 : index
    %69 = vector.load %arg2[%c8, %c0_69, %c0_70] : memref<9x4x8xf32, #tpu.memory_space<vmem>>, vector<1x4x8xf32>
    %70 = vector.shape_cast %69 : vector<1x4x8xf32> to vector<4x8xf32>
    %cst_71 = arith.constant dense<0.000000e+00> : vector<512x8xf32>
    %71 = tpu.matmul %68, %70, %cst_71 {dimension_numbers = #tpu.dot_dimension_numbers<[1], [0], [0], [1], [0, 0, 1, 1], [], []>} : vector<512x4xf32>, vector<4x8xf32>, vector<512x8xf32> -> vector<512x8xf32>
    %72 = arith.addf %64, %71 : vector<512x8xf32>
    %cst_72 = arith.constant dense<0.000000e+00> : vector<8xf32>
    %73 = vector.multi_reduction <add>, %72, %cst_72 [0] : vector<512x8xf32> to vector<8xf32>
    %74 = vector.shape_cast %73 : vector<8xf32> to vector<1x8xf32>
    %cst_73 = arith.constant 5.120000e+02 : f32
    %75 = vector.broadcast %cst_73 : f32 to vector<1x8xf32>
    %76 = arith.divf %74, %75 : vector<1x8xf32>
    %77 = vector.broadcast %76 : vector<1x8xf32> to vector<512x8xf32>
    %78 = arith.subf %72, %77 : vector<512x8xf32>
    %79 = arith.mulf %78, %78 : vector<512x8xf32>
    %cst_74 = arith.constant dense<0.000000e+00> : vector<8xf32>
    %80 = vector.multi_reduction <add>, %79, %cst_74 [0] : vector<512x8xf32> to vector<8xf32>
    %81 = vector.shape_cast %80 : vector<8xf32> to vector<1x8xf32>
    %cst_75 = arith.constant 5.120000e+02 : f32
    %82 = vector.broadcast %cst_75 : f32 to vector<1x8xf32>
    %83 = arith.divf %81, %82 : vector<1x8xf32>
    %84 = vector.broadcast %76 : vector<1x8xf32> to vector<512x8xf32>
    %85 = arith.subf %72, %84 : vector<512x8xf32>
    %cst_76 = arith.constant 1.000000e-03 : f32
    %86 = vector.broadcast %cst_76 : f32 to vector<1x8xf32>
    %87 = arith.addf %83, %86 : vector<1x8xf32>
    %88 = math.rsqrt %87 : vector<1x8xf32>
    %89 = vector.broadcast %88 : vector<1x8xf32> to vector<512x8xf32>
    %90 = arith.mulf %85, %89 : vector<512x8xf32>
    %c0_77 = arith.constant 0 : index
    %c0_78 = arith.constant 0 : index
    %91 = vector.load %arg3[%c0_77, %c0_78] : memref<1x8xf32, #tpu.memory_space<vmem>>, vector<1x8xf32>
    %92 = vector.broadcast %91 : vector<1x8xf32> to vector<512x8xf32>
    %93 = arith.mulf %90, %92 : vector<512x8xf32>
    %c0_79 = arith.constant 0 : index
    %c0_80 = arith.constant 0 : index
    %94 = vector.load %arg4[%c0_79, %c0_80] : memref<1x8xf32, #tpu.memory_space<vmem>>, vector<1x8xf32>
    %95 = vector.broadcast %94 : vector<1x8xf32> to vector<512x8xf32>
    %96 = arith.addf %93, %95 : vector<512x8xf32>
    %cst_81 = arith.constant 0.000000e+00 : f32
    %97 = vector.broadcast %cst_81 : f32 to vector<512x8xf32>
    %98 = arith.maximumf %96, %97 : vector<512x8xf32>
    %cst_82 = arith.constant 0.000000e+00 : f32
    %99 = vector.broadcast %cst_82 : f32 to vector<2x1x18x8xf32>
    %c0_83 = arith.constant 0 : index
    %c0_84 = arith.constant 0 : index
    %c0_85 = arith.constant 0 : index
    %c0_86 = arith.constant 0 : index
    %100 = vector.load %arg9[%c0_83, %c0_84, %c0_85, %c0_86] : memref<2x18x18x8xf32, #tpu.memory_space<vmem>>, vector<2x1x18x8xf32>
    tpu.vector_store %arg9[%c0_83, %c0_84, %c0_85, %c0_86], %99 {strides = array<i32>} : memref<2x18x18x8xf32, #tpu.memory_space<vmem>>, vector<2x1x18x8xf32>,
    %c0_87 = arith.constant 0 : index
    %c17 = arith.constant 17 : index
    %c0_88 = arith.constant 0 : index
    %c0_89 = arith.constant 0 : index
    %101 = vector.load %arg9[%c0_87, %c17, %c0_88, %c0_89] : memref<2x18x18x8xf32, #tpu.memory_space<vmem>>, vector<2x1x18x8xf32>
    tpu.vector_store %arg9[%c0_87, %c17, %c0_88, %c0_89], %99 {strides = array<i32>} : memref<2x18x18x8xf32, #tpu.memory_space<vmem>>, vector<2x1x18x8xf32>,
    %cst_90 = arith.constant 0.000000e+00 : f32
    %102 = vector.broadcast %cst_90 : f32 to vector<2x18x1x8xf32>
    %c0_91 = arith.constant 0 : index
    %c0_92 = arith.constant 0 : index
    %c0_93 = arith.constant 0 : index
    %c0_94 = arith.constant 0 : index
    %103 = vector.load %arg9[%c0_91, %c0_92, %c0_93, %c0_94] : memref<2x18x18x8xf32, #tpu.memory_space<vmem>>, vector<2x18x1x8xf32>
    tpu.vector_store %arg9[%c0_91, %c0_92, %c0_93, %c0_94], %102 {strides = array<i32>} : memref<2x18x18x8xf32, #tpu.memory_space<vmem>>, vector<2x18x1x8xf32>,
    %c0_95 = arith.constant 0 : index
    %c0_96 = arith.constant 0 : index
    %c17_97 = arith.constant 17 : index
    %c0_98 = arith.constant 0 : index
    %104 = vector.load %arg9[%c0_95, %c0_96, %c17_97, %c0_98] : memref<2x18x18x8xf32, #tpu.memory_space<vmem>>, vector<2x18x1x8xf32>
    tpu.vector_store %arg9[%c0_95, %c0_96, %c17_97, %c0_98], %102 {strides = array<i32>} : memref<2x18x18x8xf32, #tpu.memory_space<vmem>>, vector<2x18x1x8xf32>,
    %105 = vector.shape_cast %98 : vector<512x8xf32> to vector<2x16x16x8xf32>
    %c0_99 = arith.constant 0 : index
    %c1_100 = arith.constant 1 : index
    %c1_101 = arith.constant 1 : index
    %c0_102 = arith.constant 0 : index
    %106 = vector.load %arg9[%c0_99, %c1_100, %c1_101, %c0_102] : memref<2x18x18x8xf32, #tpu.memory_space<vmem>>, vector<2x16x16x8xf32>
    tpu.vector_store %arg9[%c0_99, %c1_100, %c1_101, %c0_102], %105 {strides = array<i32>} : memref<2x18x18x8xf32, #tpu.memory_space<vmem>>, vector<2x16x16x8xf32>,
    %cst_103 = arith.constant 0.000000e+00 : f32
    %107 = vector.broadcast %cst_103 : f32 to vector<8x512xf32>
    %c0_104 = arith.constant 0 : index
    %c0_105 = arith.constant 0 : index
    %c0_106 = arith.constant 0 : index
    %c0_107 = arith.constant 0 : index
    %108 = vector.load %arg9[%c0_104, %c0_105, %c0_106, %c0_107] : memref<2x18x18x8xf32, #tpu.memory_space<vmem>>, vector<2x16x16x8xf32>
    %109 = vector.shape_cast %108 : vector<2x16x16x8xf32> to vector<512x8xf32>
    %c0_108 = arith.constant 0 : index
    %c0_109 = arith.constant 0 : index
    %c0_110 = arith.constant 0 : index
    %110 = vector.load %arg5[%c0_108, %c0_109, %c0_110] : memref<9x8x8xf32, #tpu.memory_space<vmem>>, vector<1x8x8xf32>
    %111 = vector.shape_cast %110 : vector<1x8x8xf32> to vector<8x8xf32>
    %cst_111 = arith.constant dense<0.000000e+00> : vector<8x512xf32>
    %112 = tpu.matmul %111, %109, %cst_111 {dimension_numbers = #tpu.dot_dimension_numbers<[1], [1], [0], [0], [0, 0, 1, 0], [], []>} : vector<8x8xf32>, vector<512x8xf32>, vector<8x512xf32> -> vector<8x512xf32>
    %113 = arith.addf %107, %112 : vector<8x512xf32>
    %c0_112 = arith.constant 0 : index
    %c0_113 = arith.constant 0 : index
    %c1_114 = arith.constant 1 : index
    %c0_115 = arith.constant 0 : index
    %114 = vector.load %arg9[%c0_112, %c0_113, %c1_114, %c0_115] : memref<2x18x18x8xf32, #tpu.memory_space<vmem>>, vector<2x16x16x8xf32>
    %115 = vector.shape_cast %114 : vector<2x16x16x8xf32> to vector<512x8xf32>
    %c1_116 = arith.constant 1 : index
    %c0_117 = arith.constant 0 : index
    %c0_118 = arith.constant 0 : index
    %116 = vector.load %arg5[%c1_116, %c0_117, %c0_118] : memref<9x8x8xf32, #tpu.memory_space<vmem>>, vector<1x8x8xf32>
    %117 = vector.shape_cast %116 : vector<1x8x8xf32> to vector<8x8xf32>
    %cst_119 = arith.constant dense<0.000000e+00> : vector<8x512xf32>
    %118 = tpu.matmul %117, %115, %cst_119 {dimension_numbers = #tpu.dot_dimension_numbers<[1], [1], [0], [0], [0, 0, 1, 0], [], []>} : vector<8x8xf32>, vector<512x8xf32>, vector<8x512xf32> -> vector<8x512xf32>
    %119 = arith.addf %113, %118 : vector<8x512xf32>
    %c0_120 = arith.constant 0 : index
    %c0_121 = arith.constant 0 : index
    %c2_122 = arith.constant 2 : index
    %c0_123 = arith.constant 0 : index
    %120 = vector.load %arg9[%c0_120, %c0_121, %c2_122, %c0_123] : memref<2x18x18x8xf32, #tpu.memory_space<vmem>>, vector<2x16x16x8xf32>
    %121 = vector.shape_cast %120 : vector<2x16x16x8xf32> to vector<512x8xf32>
    %c2_124 = arith.constant 2 : index
    %c0_125 = arith.constant 0 : index
    %c0_126 = arith.constant 0 : index
    %122 = vector.load %arg5[%c2_124, %c0_125, %c0_126] : memref<9x8x8xf32, #tpu.memory_space<vmem>>, vector<1x8x8xf32>
    %123 = vector.shape_cast %122 : vector<1x8x8xf32> to vector<8x8xf32>
    %cst_127 = arith.constant dense<0.000000e+00> : vector<8x512xf32>
    %124 = tpu.matmul %123, %121, %cst_127 {dimension_numbers = #tpu.dot_dimension_numbers<[1], [1], [0], [0], [0, 0, 1, 0], [], []>} : vector<8x8xf32>, vector<512x8xf32>, vector<8x512xf32> -> vector<8x512xf32>
    %125 = arith.addf %119, %124 : vector<8x512xf32>
    %c0_128 = arith.constant 0 : index
    %c1_129 = arith.constant 1 : index
    %c0_130 = arith.constant 0 : index
    %c0_131 = arith.constant 0 : index
    %126 = vector.load %arg9[%c0_128, %c1_129, %c0_130, %c0_131] : memref<2x18x18x8xf32, #tpu.memory_space<vmem>>, vector<2x16x16x8xf32>
    %127 = vector.shape_cast %126 : vector<2x16x16x8xf32> to vector<512x8xf32>
    %c3_132 = arith.constant 3 : index
    %c0_133 = arith.constant 0 : index
    %c0_134 = arith.constant 0 : index
    %128 = vector.load %arg5[%c3_132, %c0_133, %c0_134] : memref<9x8x8xf32, #tpu.memory_space<vmem>>, vector<1x8x8xf32>
    %129 = vector.shape_cast %128 : vector<1x8x8xf32> to vector<8x8xf32>
    %cst_135 = arith.constant dense<0.000000e+00> : vector<8x512xf32>
    %130 = tpu.matmul %129, %127, %cst_135 {dimension_numbers = #tpu.dot_dimension_numbers<[1], [1], [0], [0], [0, 0, 1, 0], [], []>} : vector<8x8xf32>, vector<512x8xf32>, vector<8x512xf32> -> vector<8x512xf32>
    %131 = arith.addf %125, %130 : vector<8x512xf32>
    %c0_136 = arith.constant 0 : index
    %c1_137 = arith.constant 1 : index
    %c1_138 = arith.constant 1 : index
    %c0_139 = arith.constant 0 : index
    %132 = vector.load %arg9[%c0_136, %c1_137, %c1_138, %c0_139] : memref<2x18x18x8xf32, #tpu.memory_space<vmem>>, vector<2x16x16x8xf32>
    %133 = vector.shape_cast %132 : vector<2x16x16x8xf32> to vector<512x8xf32>
    %c4_140 = arith.constant 4 : index
    %c0_141 = arith.constant 0 : index
    %c0_142 = arith.constant 0 : index
    %134 = vector.load %arg5[%c4_140, %c0_141, %c0_142] : memref<9x8x8xf32, #tpu.memory_space<vmem>>, vector<1x8x8xf32>
    %135 = vector.shape_cast %134 : vector<1x8x8xf32> to vector<8x8xf32>
    %cst_143 = arith.constant dense<0.000000e+00> : vector<8x512xf32>
    %136 = tpu.matmul %135, %133, %cst_143 {dimension_numbers = #tpu.dot_dimension_numbers<[1], [1], [0], [0], [0, 0, 1, 0], [], []>} : vector<8x8xf32>, vector<512x8xf32>, vector<8x512xf32> -> vector<8x512xf32>
    %137 = arith.addf %131, %136 : vector<8x512xf32>
    %c0_144 = arith.constant 0 : index
    %c1_145 = arith.constant 1 : index
    %c2_146 = arith.constant 2 : index
    %c0_147 = arith.constant 0 : index
    %138 = vector.load %arg9[%c0_144, %c1_145, %c2_146, %c0_147] : memref<2x18x18x8xf32, #tpu.memory_space<vmem>>, vector<2x16x16x8xf32>
    %139 = vector.shape_cast %138 : vector<2x16x16x8xf32> to vector<512x8xf32>
    %c5_148 = arith.constant 5 : index
    %c0_149 = arith.constant 0 : index
    %c0_150 = arith.constant 0 : index
    %140 = vector.load %arg5[%c5_148, %c0_149, %c0_150] : memref<9x8x8xf32, #tpu.memory_space<vmem>>, vector<1x8x8xf32>
    %141 = vector.shape_cast %140 : vector<1x8x8xf32> to vector<8x8xf32>
    %cst_151 = arith.constant dense<0.000000e+00> : vector<8x512xf32>
    %142 = tpu.matmul %141, %139, %cst_151 {dimension_numbers = #tpu.dot_dimension_numbers<[1], [1], [0], [0], [0, 0, 1, 0], [], []>} : vector<8x8xf32>, vector<512x8xf32>, vector<8x512xf32> -> vector<8x512xf32>
    %143 = arith.addf %137, %142 : vector<8x512xf32>
    %c0_152 = arith.constant 0 : index
    %c2_153 = arith.constant 2 : index
    %c0_154 = arith.constant 0 : index
    %c0_155 = arith.constant 0 : index
    %144 = vector.load %arg9[%c0_152, %c2_153, %c0_154, %c0_155] : memref<2x18x18x8xf32, #tpu.memory_space<vmem>>, vector<2x16x16x8xf32>
    %145 = vector.shape_cast %144 : vector<2x16x16x8xf32> to vector<512x8xf32>
    %c6_156 = arith.constant 6 : index
    %c0_157 = arith.constant 0 : index
    %c0_158 = arith.constant 0 : index
    %146 = vector.load %arg5[%c6_156, %c0_157, %c0_158] : memref<9x8x8xf32, #tpu.memory_space<vmem>>, vector<1x8x8xf32>
    %147 = vector.shape_cast %146 : vector<1x8x8xf32> to vector<8x8xf32>
    %cst_159 = arith.constant dense<0.000000e+00> : vector<8x512xf32>
    %148 = tpu.matmul %147, %145, %cst_159 {dimension_numbers = #tpu.dot_dimension_numbers<[1], [1], [0], [0], [0, 0, 1, 0], [], []>} : vector<8x8xf32>, vector<512x8xf32>, vector<8x512xf32> -> vector<8x512xf32>
    %149 = arith.addf %143, %148 : vector<8x512xf32>
    %c0_160 = arith.constant 0 : index
    %c2_161 = arith.constant 2 : index
    %c1_162 = arith.constant 1 : index
    %c0_163 = arith.constant 0 : index
    %150 = vector.load %arg9[%c0_160, %c2_161, %c1_162, %c0_163] : memref<2x18x18x8xf32, #tpu.memory_space<vmem>>, vector<2x16x16x8xf32>
    %151 = vector.shape_cast %150 : vector<2x16x16x8xf32> to vector<512x8xf32>
    %c7_164 = arith.constant 7 : index
    %c0_165 = arith.constant 0 : index
    %c0_166 = arith.constant 0 : index
    %152 = vector.load %arg5[%c7_164, %c0_165, %c0_166] : memref<9x8x8xf32, #tpu.memory_space<vmem>>, vector<1x8x8xf32>
    %153 = vector.shape_cast %152 : vector<1x8x8xf32> to vector<8x8xf32>
    %cst_167 = arith.constant dense<0.000000e+00> : vector<8x512xf32>
    %154 = tpu.matmul %153, %151, %cst_167 {dimension_numbers = #tpu.dot_dimension_numbers<[1], [1], [0], [0], [0, 0, 1, 0], [], []>} : vector<8x8xf32>, vector<512x8xf32>, vector<8x512xf32> -> vector<8x512xf32>
    %155 = arith.addf %149, %154 : vector<8x512xf32>
    %c0_168 = arith.constant 0 : index
    %c2_169 = arith.constant 2 : index
    %c2_170 = arith.constant 2 : index
    %c0_171 = arith.constant 0 : index
    %156 = vector.load %arg9[%c0_168, %c2_169, %c2_170, %c0_171] : memref<2x18x18x8xf32, #tpu.memory_space<vmem>>, vector<2x16x16x8xf32>
    %157 = vector.shape_cast %156 : vector<2x16x16x8xf32> to vector<512x8xf32>
    %c8_172 = arith.constant 8 : index
    %c0_173 = arith.constant 0 : index
    %c0_174 = arith.constant 0 : index
    %158 = vector.load %arg5[%c8_172, %c0_173, %c0_174] : memref<9x8x8xf32, #tpu.memory_space<vmem>>, vector<1x8x8xf32>
    %159 = vector.shape_cast %158 : vector<1x8x8xf32> to vector<8x8xf32>
    %cst_175 = arith.constant dense<0.000000e+00> : vector<8x512xf32>
    %160 = tpu.matmul %159, %157, %cst_175 {dimension_numbers = #tpu.dot_dimension_numbers<[1], [1], [0], [0], [0, 0, 1, 0], [], []>} : vector<8x8xf32>, vector<512x8xf32>, vector<8x512xf32> -> vector<8x512xf32>
    %161 = arith.addf %155, %160 : vector<8x512xf32>
    %cst_176 = arith.constant dense<0.000000e+00> : vector<8xf32>
    %162 = vector.multi_reduction <add>, %161, %cst_176 [1] : vector<8x512xf32> to vector<8xf32>
    %163 = vector.shape_cast %162 : vector<8xf32> to vector<8x1xf32>
    %cst_177 = arith.constant 5.120000e+02 : f32
    %164 = vector.broadcast %cst_177 : f32 to vector<8x1xf32>
    %165 = arith.divf %163, %164 : vector<8x1xf32>
    %166 = vector.broadcast %165 : vector<8x1xf32> to vector<8x512xf32>
    %167 = arith.subf %161, %166 : vector<8x512xf32>
    %168 = arith.mulf %167, %167 : vector<8x512xf32>
    %cst_178 = arith.constant dense<0.000000e+00> : vector<8xf32>
    %169 = vector.multi_reduction <add>, %168, %cst_178 [1] : vector<8x512xf32> to vector<8xf32>
    %170 = vector.shape_cast %169 : vector<8xf32> to vector<8x1xf32>
    %cst_179 = arith.constant 5.120000e+02 : f32
    %171 = vector.broadcast %cst_179 : f32 to vector<8x1xf32>
    %172 = arith.divf %170, %171 : vector<8x1xf32>
    %173 = vector.broadcast %165 : vector<8x1xf32> to vector<8x512xf32>
    %174 = arith.subf %161, %173 : vector<8x512xf32>
    %cst_180 = arith.constant 1.000000e-03 : f32
    %175 = vector.broadcast %cst_180 : f32 to vector<8x1xf32>
    %176 = arith.addf %172, %175 : vector<8x1xf32>
    %177 = math.rsqrt %176 : vector<8x1xf32>
    %178 = vector.broadcast %177 : vector<8x1xf32> to vector<8x512xf32>
    %179 = arith.mulf %174, %178 : vector<8x512xf32>
    %c0_181 = arith.constant 0 : index
    %c0_182 = arith.constant 0 : index
    %180 = vector.load %arg6[%c0_181, %c0_182] : memref<8x1xf32, #tpu.memory_space<vmem>>, vector<8x1xf32>
    %181 = vector.broadcast %180 : vector<8x1xf32> to vector<8x512xf32>
    %182 = arith.mulf %179, %181 : vector<8x512xf32>
    %c0_183 = arith.constant 0 : index
    %c0_184 = arith.constant 0 : index
    %183 = vector.load %arg7[%c0_183, %c0_184] : memref<8x1xf32, #tpu.memory_space<vmem>>, vector<8x1xf32>
    %184 = vector.broadcast %183 : vector<8x1xf32> to vector<8x512xf32>
    %185 = arith.addf %182, %184 : vector<8x512xf32>
    %c0_185 = arith.constant 0 : index
    %c0_186 = arith.constant 0 : index
    %186 = vector.load %arg8[%c0_185, %c0_186] : memref<8x512xf32, #tpu.memory_space<vmem>>, vector<8x512xf32>
    tpu.vector_store %arg8[%c0_185, %c0_186], %185 {strides = array<i32>} : memref<8x512xf32, #tpu.memory_space<vmem>>, vector<8x512xf32>,
    return
  }
  func.func @transform_0(%arg0: i32) -> (i32, i32, i32, i32) {
    %c0_i32 = arith.constant 0 : i32
    %c0_i32_0 = arith.constant 0 : i32
    %c0_i32_1 = arith.constant 0 : i32
    %c0_i32_2 = arith.constant 0 : i32
    %c0_i32_3 = arith.constant 0 : i32
    return %c0_i32, %c0_i32_0, %c0_i32_1, %c0_i32_2 : i32, i32, i32, i32
  }
  func.func @transform_1(%arg0: i32) -> (i32, i32, i32) {
    %c0_i32 = arith.constant 0 : i32
    %c0_i32_0 = arith.constant 0 : i32
    %c0_i32_1 = arith.constant 0 : i32
    %c0_i32_2 = arith.constant 0 : i32
    return %c0_i32, %c0_i32_0, %c0_i32_1 : i32, i32, i32
  }
  func.func @transform_2(%arg0: i32) -> (i32, i32) {
    %c0_i32 = arith.constant 0 : i32
    %c0_i32_0 = arith.constant 0 : i32
    %c0_i32_1 = arith.constant 0 : i32
    return %c0_i32, %c0_i32_0 : i32, i32
  }
  func.func @transform_3(%arg0: i32) -> (i32, i32) {
    %c0_i32 = arith.constant 0 : i32
    %c0_i32_0 = arith.constant 0 : i32
    %c0_i32_1 = arith.constant 0 : i32
    return %c0_i32, %c0_i32_0 : i32, i32
  }
  func.func @transform_4(%arg0: i32) -> (i32, i32, i32) {
    %c0_i32 = arith.constant 0 : i32
    %c0_i32_0 = arith.constant 0 : i32
    %c0_i32_1 = arith.constant 0 : i32
    %c0_i32_2 = arith.constant 0 : i32
    return %c0_i32, %c0_i32_0, %c0_i32_1 : i32, i32, i32
  }
  func.func @transform_5(%arg0: i32) -> (i32, i32) {
    %c0_i32 = arith.constant 0 : i32
    %c0_i32_0 = arith.constant 0 : i32
    %c0_i32_1 = arith.constant 0 : i32
    return %c0_i32, %c0_i32_0 : i32, i32
  }
  func.func @transform_6(%arg0: i32) -> (i32, i32) {
    %c0_i32 = arith.constant 0 : i32
    %c0_i32_0 = arith.constant 0 : i32
    %c0_i32_1 = arith.constant 0 : i32
    return %c0_i32, %c0_i32_0 : i32, i32
  }
  func.func @transform_7(%arg0: i32) -> (i32, i32) {
    %c0_i32 = arith.constant 0 : i32
    %c0_i32_0 = arith.constant 0 : i32
    %c0_i32_1 = arith.constant 0 : i32
    return %c0_i32, %c0_i32_0 : i32, i32
  }
}

</mosaic_0001>

<llo_original>
// kernel: tpu_custom_call.1
$region0: #{tpu_custom_call.1}
  #allocation0 [shape = 'u32[]', space=smem, size = 0x4, offset = 0x4, fixed_abs, tag = 'smem constant byte address 0x4 - core index']
  #allocation1 [shape = 'u32[144,128]{1,0:T(1,128)}', space=vmem, size = 0x12000, scoped, tag = 'internal scratch']
  #allocation2 [shape = 'f32[2,18,18,8]{3,2,1,0:T(8,128)}', space=vmem, size = 0x6c000, scoped, tag = 'scratch operand']
  %s0 = inlined_call_operand.vmem [shape: f32[2,18,18,4], index: 0, kind: input, shape index: {}]
  %s1 = inlined_call_operand.vmem [shape: f32[9,4,8], index: 1, kind: input, shape index: {}]
  %s2 = inlined_call_operand.vmem [shape: f32[1,8], index: 2, kind: input, shape index: {}]
  %s3 = inlined_call_operand.vmem [shape: f32[1,8], index: 3, kind: input, shape index: {}]
  %s4 = inlined_call_operand.vmem [shape: f32[9,8,8], index: 4, kind: input, shape index: {}]
  %s5 = inlined_call_operand.vmem [shape: f32[8,1], index: 5, kind: input, shape index: {}]
  %s6 = inlined_call_operand.vmem [shape: f32[8,1], index: 6, kind: input, shape index: {}]
  %s7 = inlined_call_operand.hbm [shape: f32[8,512], index: 7, kind: output, shape index: {}]
  %s8 = sld [smem:[#allocation0]]
  $region38: #{tpu_custom_call.1} parent=0
    _
  %s10 = ssub.s32 1, %s8
  %s11 = scalar_select 0, %s10, %s8
  $region1: #{tpu_custom_call.1} parent=0
    #allocation3 [shape = 'u8[16384]{0}', space=vmem, size = 0x4000, scoped, tag = 'output window, operand 0, single buffered']
    #allocation4 [shape = 's32[1]{0}', space=sflag, size = 0x4, scoped, tag = 'scoped memory for tpu_custom_call.1']
    %12 = vsyncpa [#allocation4], 0
    // Predicated region
    $region2: #{tpu_custom_call.1} parent=1 // pred_check
      _
    $region3: #{tpu_custom_call.1} parent=1 // pred_check_branch
      %14 = sbr.rel (0) target = $region5
    $region4: #{tpu_custom_call.1} parent=1 // pred_region
      _
    $region5: #{tpu_custom_call.1} parent=1 // pred_fallthru
      _
    // Predicated region
    $region6: #{tpu_custom_call.1} parent=1 // pred_check
      _
    $region7: #{tpu_custom_call.1} parent=1 // pred_check_branch
      %16 = sbr.rel (0) target = $region9
    $region8: #{tpu_custom_call.1} parent=1 // pred_region
      _
    $region9: #{tpu_custom_call.1} parent=1 // pred_fallthru
      _
    // Predicated region
    $region10: #{tpu_custom_call.1} parent=1 // pred_check
      _
    $region11: #{tpu_custom_call.1} parent=1 // pred_check_branch
      %18 = sbr.rel (0) target = $region13
    $region12: #{tpu_custom_call.1} parent=1 // pred_region
      _
    $region13: #{tpu_custom_call.1} parent=1 // pred_fallthru
      _
    // Predicated region
    $region14: #{tpu_custom_call.1} parent=1 // pred_check
      _
    $region15: #{tpu_custom_call.1} parent=1 // pred_check_branch
      %20 = sbr.rel (0) target = $region17
    $region16: #{tpu_custom_call.1} parent=1 // pred_region
      _
    $region17: #{tpu_custom_call.1} parent=1 // pred_fallthru
      _
    // Predicated region
    $region18: #{tpu_custom_call.1} parent=1 // pred_check
      _
    $region19: #{tpu_custom_call.1} parent=1 // pred_check_branch
      %22 = sbr.rel (0) target = $region21
    $region20: #{tpu_custom_call.1} parent=1 // pred_region
      _
    $region21: #{tpu_custom_call.1} parent=1 // pred_fallthru
      _
    // Predicated region
    $region22: #{tpu_custom_call.1} parent=1 // pred_check
      _
    $region23: #{tpu_custom_call.1} parent=1 // pred_check_branch
      %24 = sbr.rel (0) target = $region25
    $region24: #{tpu_custom_call.1} parent=1 // pred_region
      _
    $region25: #{tpu_custom_call.1} parent=1 // pred_fallthru
      _
    // Predicated region
    $region26: #{tpu_custom_call.1} parent=1 // pred_check
      _
    $region27: #{tpu_custom_call.1} parent=1 // pred_check_branch
      %26 = sbr.rel (0) target = $region29
    $region28: #{tpu_custom_call.1} parent=1 // pred_region
      _
    $region29: #{tpu_custom_call.1} parent=1 // pred_fallthru
      _
    %v27 = vld [vmem:[%s0] sm:$0xff]
    %v28 = vld [vmem:[%s0 + $0x8] sm:$0xff]
    %v29 = vld [vmem:[%s0 + $0x18] sm:$0xff]
    %v30 = vld [vmem:[%s0 + $0x20] sm:$0xff]
    %v31 = vld [vmem:[%s0 + $0x30] sm:$0xff]
    %v32 = vld [vmem:[%s0 + $0x38] sm:$0xff]
    %v33 = vld [vmem:[%s0 + $0x48] sm:$0xff]
    %v34 = vld [vmem:[%s0 + $0x50] sm:$0xff]
    %v35 = vld [vmem:[%s0 + $0x60] sm:$0xff]
    %v36 = vld [vmem:[%s0 + $0x68] sm:$0xff]
    %v37 = vld [vmem:[%s0 + $0x78] sm:$0xff]
    %v38 = vld [vmem:[%s0 + $0x80] sm:$0xff]
    %v39 = vld [vmem:[%s0 + $0x90] sm:$0xff]
    %v40 = vld [vmem:[%s0 + $0x98] sm:$0xff]
    %v41 = vld [vmem:[%s0 + $0xa8] sm:$0xff]
    %v42 = vld [vmem:[%s0 + $0xb0] sm:$0xff]
    %v43 = vld [vmem:[%s0 + $0xc0] sm:$0xff]
    %v44 = vld [vmem:[%s0 + $0xc8] sm:$0xff]
    %v45 = vld [vmem:[%s0 + $0xd8] sm:$0xff]
    %v46 = vld [vmem:[%s0 + $0xe0] sm:$0xff]
    %v47 = vld [vmem:[%s0 + $0xf0] sm:$0xff]
    %v48 = vld [vmem:[%s0 + $0xf8] sm:$0xff]
    %v49 = vld [vmem:[%s0 + $0x108] sm:$0xff]
    %v50 = vld [vmem:[%s0 + $0x110] sm:$0xff]
    %v51 = vld [vmem:[%s0 + $0x120] sm:$0xff]
    %v52 = vld [vmem:[%s0 + $0x128] sm:$0xff]
    %v53 = vld [vmem:[%s0 + $0x138] sm:$0xff]
    %v54 = vld [vmem:[%s0 + $0x140] sm:$0xff]
    %v55 = vld [vmem:[%s0 + $0x150] sm:$0xff]
    %v56 = vld [vmem:[%s0 + $0x158] sm:$0xff]
    %v57 = vld [vmem:[%s0 + $0x168] sm:$0xff]
    %v58 = vld [vmem:[%s0 + $0x170] sm:$0xff]
    %v59 = vld [vmem:[%s0 + $0x1b0] sm:$0xff]
    %v60 = vld [vmem:[%s0 + $0x1b8] sm:$0xff]
    %v61 = vld [vmem:[%s0 + $0x1c8] sm:$0xff]
    %v62 = vld [vmem:[%s0 + $0x1d0] sm:$0xff]
    %v63 = vld [vmem:[%s0 + $0x1e0] sm:$0xff]
    %v64 = vld [vmem:[%s0 + $0x1e8] sm:$0xff]
    %v65 = vld [vmem:[%s0 + $0x1f8] sm:$0xff]
    %v66 = vld [vmem:[%s0 + $0x200] sm:$0xff]
    %v67 = vld [vmem:[%s0 + $0x210] sm:$0xff]
    %v68 = vld [vmem:[%s0 + $0x218] sm:$0xff]
    %v69 = vld [vmem:[%s0 + $0x228] sm:$0xff]
    %v70 = vld [vmem:[%s0 + $0x230] sm:$0xff]
    %v71 = vld [vmem:[%s0 + $0x240] sm:$0xff]
    %v72 = vld [vmem:[%s0 + $0x248] sm:$0xff]
    %v73 = vld [vmem:[%s0 + $0x258] sm:$0xff]
    %v74 = vld [vmem:[%s0 + $0x260] sm:$0xff]
    %v75 = vld [vmem:[%s0 + $0x270] sm:$0xff]
    %v76 = vld [vmem:[%s0 + $0x278] sm:$0xff]
    %v77 = vld [vmem:[%s0 + $0x288] sm:$0xff]
    %v78 = vld [vmem:[%s0 + $0x290] sm:$0xff]
    %v79 = vld [vmem:[%s0 + $0x2a0] sm:$0xff]
    %v80 = vld [vmem:[%s0 + $0x2a8] sm:$0xff]
    %v81 = vld [vmem:[%s0 + $0x2b8] sm:$0xff]
    %v82 = vld [vmem:[%s0 + $0x2c0] sm:$0xff]
    %v83 = vld [vmem:[%s0 + $0x2d0] sm:$0xff]
    %v84 = vld [vmem:[%s0 + $0x2d8] sm:$0xff]
    %v85 = vld [vmem:[%s0 + $0x2e8] sm:$0xff]
    %v86 = vld [vmem:[%s0 + $0x2f0] sm:$0xff]
    %v87 = vld [vmem:[%s0 + $0x300] sm:$0xff]
    %v88 = vld [vmem:[%s0 + $0x308] sm:$0xff]
    %v89 = vld [vmem:[%s0 + $0x318] sm:$0xff]
    %v90 = vld [vmem:[%s0 + $0x320] sm:$0xff]
    %v91 = vmax.f32 %v27, 0.0
    %v92 = vmax.f32 %v28, 0.0
    %v93 = vmax.f32 %v29, 0.0
    %v94 = vmax.f32 %v30, 0.0
    %v95 = vmax.f32 %v31, 0.0
    %v96 = vmax.f32 %v32, 0.0
    %v97 = vmax.f32 %v33, 0.0
    %v98 = vmax.f32 %v34, 0.0
    %v99 = vmax.f32 %v35, 0.0
    %v100 = vmax.f32 %v36, 0.0
    %v101 = vmax.f32 %v37, 0.0
    %v102 = vmax.f32 %v38, 0.0
    %v103 = vmax.f32 %v39, 0.0
    %v104 = vmax.f32 %v40, 0.0
    %v105 = vmax.f32 %v41, 0.0
    %v106 = vmax.f32 %v42, 0.0
    %v107 = vmax.f32 %v43, 0.0
    %v108 = vmax.f32 %v44, 0.0
    %v109 = vmax.f32 %v45, 0.0
    %v110 = vmax.f32 %v46, 0.0
    %v111 = vmax.f32 %v47, 0.0
    %v112 = vmax.f32 %v48, 0.0
    %v113 = vmax.f32 %v49, 0.0
    %v114 = vmax.f32 %v50, 0.0
    %v115 = vmax.f32 %v51, 0.0
    %v116 = vmax.f32 %v52, 0.0
    %v117 = vmax.f32 %v53, 0.0
    %v118 = vmax.f32 %v54, 0.0
    %v119 = vmax.f32 %v55, 0.0
    %v120 = vmax.f32 %v56, 0.0
    %v121 = vmax.f32 %v57, 0.0
    %v122 = vmax.f32 %v58, 0.0
    %v123 = vmax.f32 %v59, 0.0
    %v124 = vmax.f32 %v60, 0.0
    %v125 = vmax.f32 %v61, 0.0
    %v126 = vmax.f32 %v62, 0.0
    %v127 = vmax.f32 %v63, 0.0
    %v128 = vmax.f32 %v64, 0.0
    %v129 = vmax.f32 %v65, 0.0
    %v130 = vmax.f32 %v66, 0.0
    %v131 = vmax.f32 %v67, 0.0
    %v132 = vmax.f32 %v68, 0.0
    %v133 = vmax.f32 %v69, 0.0
    %v134 = vmax.f32 %v70, 0.0
    %v135 = vmax.f32 %v71, 0.0
    %v136 = vmax.f32 %v72, 0.0
    %v137 = vmax.f32 %v73, 0.0
    %v138 = vmax.f32 %v74, 0.0
    %v139 = vmax.f32 %v75, 0.0
    %v140 = vmax.f32 %v76, 0.0
    %v141 = vmax.f32 %v77, 0.0
    %v142 = vmax.f32 %v78, 0.0
    %v143 = vmax.f32 %v79, 0.0
    %v144 = vmax.f32 %v80, 0.0
    %v145 = vmax.f32 %v81, 0.0
    %v146 = vmax.f32 %v82, 0.0
    %v147 = vmax.f32 %v83, 0.0
    %v148 = vmax.f32 %v84, 0.0
    %v149 = vmax.f32 %v85, 0.0
    %v150 = vmax.f32 %v86, 0.0
    %v151 = vmax.f32 %v87, 0.0
    %v152 = vmax.f32 %v88, 0.0
    %v153 = vmax.f32 %v89, 0.0
    %v154 = vmax.f32 %v90, 0.0
    %v155 = vld [vmem:[%s1] sm:$0xf]
    %v156 = vld [vmem:[%s0 + $0x1] sm:$0xff]
    %v157 = vld [vmem:[%s0 + $0x9] sm:$0xff]
    %v158 = vld [vmem:[%s0 + $0x19] sm:$0xff]
    %v159 = vld [vmem:[%s0 + $0x21] sm:$0xff]
    %v160 = vld [vmem:[%s0 + $0x31] sm:$0xff]
    %v161 = vld [vmem:[%s0 + $0x39] sm:$0xff]
    %v162 = vld [vmem:[%s0 + $0x49] sm:$0xff]
    %v163 = vld [vmem:[%s0 + $0x51] sm:$0xff]
    %v164 = vld [vmem:[%s0 + $0x61] sm:$0xff]
    %v165 = vld [vmem:[%s0 + $0x69] sm:$0xff]
    %v166 = vld [vmem:[%s0 + $0x79] sm:$0xff]
    %v167 = vld [vmem:[%s0 + $0x81] sm:$0xff]
    %v168 = vld [vmem:[%s0 + $0x91] sm:$0xff]
    %v169 = vld [vmem:[%s0 + $0x99] sm:$0xff]
    %v170 = vld [vmem:[%s0 + $0xa9] sm:$0xff]
    %v171 = vld [vmem:[%s0 + $0xb1] sm:$0xff]
    %v172 = vld [vmem:[%s0 + $0xc1] sm:$0xff]
    %v173 = vld [vmem:[%s0 + $0xc9] sm:$0xff]
    %v174 = vld [vmem:[%s0 + $0xd9] sm:$0xff]
    %v175 = vld [vmem:[%s0 + $0xe1] sm:$0xff]
    %v176 = vld [vmem:[%s0 + $0xf1] sm:$0xff]
    %v177 = vld [vmem:[%s0 + $0xf9] sm:$0xff]
    %v178 = vld [vmem:[%s0 + $0x109] sm:$0xff]
    %v179 = vld [vmem:[%s0 + $0x111] sm:$0xff]
    %v180 = vld [vmem:[%s0 + $0x121] sm:$0xff]
    %v181 = vld [vmem:[%s0 + $0x129] sm:$0xff]
    %v182 = vld [vmem:[%s0 + $0x139] sm:$0xff]
    %v183 = vld [vmem:[%s0 + $0x141] sm:$0xff]
    %v184 = vld [vmem:[%s0 + $0x151] sm:$0xff]
    %v185 = vld [vmem:[%s0 + $0x159] sm:$0xff]
    %v186 = vld [vmem:[%s0 + $0x169] sm:$0xff]
    %v187 = vld [vmem:[%s0 + $0x171] sm:$0xff]
    %v188 = vld [vmem:[%s0 + $0x1b1] sm:$0xff]
    %v189 = vld [vmem:[%s0 + $0x1b9] sm:$0xff]
    %v190 = vld [vmem:[%s0 + $0x1c9] sm:$0xff]
    %v191 = vld [vmem:[%s0 + $0x1d1] sm:$0xff]
    %v192 = vld [vmem:[%s0 + $0x1e1] sm:$0xff]
    %v193 = vld [vmem:[%s0 + $0x1e9] sm:$0xff]
    %v194 = vld [vmem:[%s0 + $0x1f9] sm:$0xff]
    %v195 = vld [vmem:[%s0 + $0x201] sm:$0xff]
    %v196 = vld [vmem:[%s0 + $0x211] sm:$0xff]
    %v197 = vld [vmem:[%s0 + $0x219] sm:$0xff]
    %v198 = vld [vmem:[%s0 + $0x229] sm:$0xff]
    %v199 = vld [vmem:[%s0 + $0x231] sm:$0xff]
    %v200 = vld [vmem:[%s0 + $0x241] sm:$0xff]
    %v201 = vld [vmem:[%s0 + $0x249] sm:$0xff]
    %v202 = vld [vmem:[%s0 + $0x259] sm:$0xff]
    %v203 = vld [vmem:[%s0 + $0x261] sm:$0xff]
    %v204 = vld [vmem:[%s0 + $0x271] sm:$0xff]
    %v205 = vld [vmem:[%s0 + $0x279] sm:$0xff]
    %v206 = vld [vmem:[%s0 + $0x289] sm:$0xff]
    %v207 = vld [vmem:[%s0 + $0x291] sm:$0xff]
    %v208 = vld [vmem:[%s0 + $0x2a1] sm:$0xff]
    %v209 = vld [vmem:[%s0 + $0x2a9] sm:$0xff]
    %v210 = vld [vmem:[%s0 + $0x2b9] sm:$0xff]
    %v211 = vld [vmem:[%s0 + $0x2c1] sm:$0xff]
    %v212 = vld [vmem:[%s0 + $0x2d1] sm:$0xff]
    %v213 = vld [vmem:[%s0 + $0x2d9] sm:$0xff]
    %v214 = vld [vmem:[%s0 + $0x2e9] sm:$0xff]
    %v215 = vld [vmem:[%s0 + $0x2f1] sm:$0xff]
    %v216 = vld [vmem:[%s0 + $0x301] sm:$0xff]
    %v217 = vld [vmem:[%s0 + $0x309] sm:$0xff]
    %v218 = vld [vmem:[%s0 + $0x319] sm:$0xff]
    %v219 = vld [vmem:[%s0 + $0x321] sm:$0xff]
    %v220 = vmax.f32 %v156, 0.0
    %v221 = vmax.f32 %v157, 0.0
    %v222 = vmax.f32 %v158, 0.0
    %v223 = vmax.f32 %v159, 0.0
    %v224 = vmax.f32 %v160, 0.0
    %v225 = vmax.f32 %v161, 0.0
    %v226 = vmax.f32 %v162, 0.0
    %v227 = vmax.f32 %v163, 0.0
    %v228 = vmax.f32 %v164, 0.0
    %v229 = vmax.f32 %v165, 0.0
    %v230 = vmax.f32 %v166, 0.0
    %v231 = vmax.f32 %v167, 0.0
    %v232 = vmax.f32 %v168, 0.0
    %v233 = vmax.f32 %v169, 0.0
    %v234 = vmax.f32 %v170, 0.0
    %v235 = vmax.f32 %v171, 0.0
    %v236 = vmax.f32 %v172, 0.0
    %v237 = vmax.f32 %v173, 0.0
    %v238 = vmax.f32 %v174, 0.0
    %v239 = vmax.f32 %v175, 0.0
    %v240 = vmax.f32 %v176, 0.0
    %v241 = vmax.f32 %v177, 0.0
    %v242 = vmax.f32 %v178, 0.0
    %v243 = vmax.f32 %v179, 0.0
    %v244 = vmax.f32 %v180, 0.0
    %v245 = vmax.f32 %v181, 0.0
    %v246 = vmax.f32 %v182, 0.0
    %v247 = vmax.f32 %v183, 0.0
    %v248 = vmax.f32 %v184, 0.0
    %v249 = vmax.f32 %v185, 0.0
    %v250 = vmax.f32 %v186, 0.0
    %v251 = vmax.f32 %v187, 0.0
    %v252 = vmax.f32 %v188, 0.0
    %v253 = vmax.f32 %v189, 0.0
    %v254 = vmax.f32 %v190, 0.0
    %v255 = vmax.f32 %v191, 0.0
    %v256 = vmax.f32 %v192, 0.0
    %v257 = vmax.f32 %v193, 0.0
    %v258 = vmax.f32 %v194, 0.0
    %v259 = vmax.f32 %v195, 0.0
    %v260 = vmax.f32 %v196, 0.0
    %v261 = vmax.f32 %v197, 0.0
    %v262 = vmax.f32 %v198, 0.0
    %v263 = vmax.f32 %v199, 0.0
    %v264 = vmax.f32 %v200, 0.0
    %v265 = vmax.f32 %v201, 0.0
    %v266 = vmax.f32 %v202, 0.0
    %v267 = vmax.f32 %v203, 0.0
    %v268 = vmax.f32 %v204, 0.0
    %v269 = vmax.f32 %v205, 0.0
    %v270 = vmax.f32 %v206, 0.0
    %v271 = vmax.f32 %v207, 0.0
    %v272 = vmax.f32 %v208, 0.0
    %v273 = vmax.f32 %v209, 0.0
    %v274 = vmax.f32 %v210, 0.0
    %v275 = vmax.f32 %v211, 0.0
    %v276 = vmax.f32 %v212, 0.0
    %v277 = vmax.f32 %v213, 0.0
    %v278 = vmax.f32 %v214, 0.0
    %v279 = vmax.f32 %v215, 0.0
    %v280 = vmax.f32 %v216, 0.0
    %v281 = vmax.f32 %v217, 0.0
    %v282 = vmax.f32 %v218, 0.0
    %v283 = vmax.f32 %v219, 0.0
    %s284 = scalar_lea.vmem %s1, 4
    %v285 = vld [vmem:[%s284] sm:$0xf]
    %vm286 = vcmask 31744
    %v288 = vsel %vm286, %v220, 0
    %v291 = vsel %vm286, %v221, 0
    %v294 = vsel %vm286, %v222, 0
    %v297 = vsel %vm286, %v223, 0
    %v300 = vsel %vm286, %v224, 0
    %v303 = vsel %vm286, %v225, 0
    %v306 = vsel %vm286, %v226, 0
    %v309 = vsel %vm286, %v227, 0
    %v312 = vsel %vm286, %v228, 0
    %v315 = vsel %vm286, %v229, 0
    %v318 = vsel %vm286, %v230, 0
    %v321 = vsel %vm286, %v231, 0
    %v324 = vsel %vm286, %v232, 0
    %v327 = vsel %vm286, %v233, 0
    %v330 = vsel %vm286, %v234, 0
    %v333 = vsel %vm286, %v235, 0
    %v336 = vsel %vm286, %v236, 0
    %v339 = vsel %vm286, %v237, 0
    %v342 = vsel %vm286, %v238, 0
    %v345 = vsel %vm286, %v239, 0
    %v348 = vsel %vm286, %v240, 0
    %v351 = vsel %vm286, %v241, 0
    %v354 = vsel %vm286, %v242, 0
    %v357 = vsel %vm286, %v243, 0
    %v360 = vsel %vm286, %v244, 0
    %v363 = vsel %vm286, %v245, 0
    %v366 = vsel %vm286, %v246, 0
    %v369 = vsel %vm286, %v247, 0
    %v372 = vsel %vm286, %v248, 0
    %v375 = vsel %vm286, %v249, 0
    %v378 = vsel %vm286, %v250, 0
    %v381 = vsel %vm286, %v251, 0
    %v384 = vsel %vm286, %v252, 0
    %v387 = vsel %vm286, %v253, 0
    %v390 = vsel %vm286, %v254, 0
    %v393 = vsel %vm286, %v255, 0
    %v396 = vsel %vm286, %v256, 0
    %v399 = vsel %vm286, %v257, 0
    %v402 = vsel %vm286, %v258, 0
    %v405 = vsel %vm286, %v259, 0
    %v408 = vsel %vm286, %v260, 0
    %v411 = vsel %vm286, %v261, 0
    %v414 = vsel %vm286, %v262, 0
    %v417 = vsel %vm286, %v263, 0
    %v420 = vsel %vm286, %v264, 0
    %v423 = vsel %vm286, %v265, 0
    %v426 = vsel %vm286, %v266, 0
    %v429 = vsel %vm286, %v267, 0
    %v432 = vsel %vm286, %v268, 0
    %v435 = vsel %vm286, %v269, 0
    %v438 = vsel %vm286, %v270, 0
    %v441 = vsel %vm286, %v271, 0
    %v444 = vsel %vm286, %v272, 0
    %v447 = vsel %vm286, %v273, 0
    %v450 = vsel %vm286, %v274, 0
    %v453 = vsel %vm286, %v275, 0
    %v456 = vsel %vm286, %v276, 0
    %v459 = vsel %vm286, %v277, 0
    %v462 = vsel %vm286, %v278, 0
    %v465 = vsel %vm286, %v279, 0
    %v468 = vsel %vm286, %v280, 0
    %v471 = vsel %vm286, %v281, 0
    %v474 = vsel %vm286, %v282, 0
    %v477 = vsel %vm286, %v283, 0
    %vm479 = vcmask 1043456
    %v481 = vsel %vm479, %v285, 0
    %483 = vmatprep.subr.mxu0 0.0
    %484 = vmatpush1.msra.mxu0 %v481
    %485 = vmatprep.subr.mxu0 0.0
    %486 = vmatpush1.msra.mxu0 0.0
    %487 = vmatprep.subr.mxu0 0.0
    %488 = vmatpush1.msra.mxu0 0.0
    %489 = vmatprep.subr.mxu0 0.0
    %490 = vmatpush1.msra.mxu0 0.0
    %491 = vmatprep.subr.mxu0 0.0
    %492 = vmatpush1.msra.mxu0 0.0
    %493 = vmatprep.subr.mxu0 0.0
    %494 = vmatpush1.msra.mxu0 0.0
    %495 = vmatprep.subr.mxu0 0.0
    %496 = vmatpush1.msra.mxu0 0.0
    %497 = vmatprep.subr.mxu0 0.0
    %498 = vmatpush1.msra.mxu0 0.0
    %499 = vmatprep.subr.mxu0 0.0
    %500 = vmatpush1.msra.mxu0 0.0
    %501 = vmatprep.subr.mxu0 0.0
    %502 = vmatpush1.msra.mxu0 0.0
    %503 = vmatprep.subr.mxu0 0.0
    %504 = vmatpush1.msra.mxu0 0.0
    %505 = vmatprep.subr.mxu0 0.0
    %506 = vmatpush1.msra.mxu0 0.0
    %507 = vmatprep.subr.mxu0 0.0
    %508 = vmatpush1.msra.mxu0 0.0
    %509 = vmatprep.subr.mxu0 0.0
    %510 = vmatpush1.msra.mxu0 0.0
    %511 = vmatprep.subr.mxu0 0.0
    %512 = vmatpush1.msra.mxu0 0.0
    %513 = vmatprep.subr.mxu0 0.0
    %514 = vmatpush1.msra.mxu0 0.0
    %515 = vmatprep.subr.mxu0 0.0
    %516 = vmatpush1.msra.mxu0 0.0
    %517 = vmatprep.subr.mxu0 0.0
    %518 = vmatpush1.msra.mxu0 0.0
    %519 = vmatprep.subr.mxu0 0.0
    %520 = vmatpush1.msra.mxu0 0.0
    %521 = vmatprep.subr.mxu0 0.0
    %522 = vmatpush1.msra.mxu0 0.0
    %523 = vmatprep.subr.mxu0 0.0
    %524 = vmatpush1.msra.mxu0 0.0
    %525 = vmatprep.subr.mxu0 0.0
    %526 = vmatpush1.msra.mxu0 0.0
    %527 = vmatprep.subr.mxu0 0.0
    %528 = vmatpush1.msra.mxu0 0.0
    %529 = vmatprep.subr.mxu0 0.0
    %530 = vmatpush1.msra.mxu0 0.0
    %531 = vmatprep.subr.mxu0 0.0
    %532 = vmatpush1.msra.mxu0 0.0
    %533 = vmatprep.subr.mxu0 0.0
    %534 = vmatpush1.msra.mxu0 0.0
    %535 = vmatprep.subr.mxu0 0.0
    %536 = vmatpush1.msra.mxu0 0.0
    %537 = vmatprep.subr.mxu0 0.0
    %538 = vmatpush1.msra.mxu0 0.0
    %539 = vmatprep.subr.mxu0 0.0
    %540 = vmatpush1.msra.mxu0 0.0
    %541 = vmatprep.subr.mxu0 0.0
    %542 = vmatpush1.msra.mxu0 0.0
    %543 = vmatprep.subr.mxu0 0.0
    %544 = vmatpush1.msra.mxu0 0.0
    %545 = vmatprep.subr.mxu0 0.0
    %546 = vmatpush1.msra.mxu0 0.0
    %547 = vmatprep.mubr.f32.mxu0 0.0
    %548 = vmatmul.mubr.f32.gmra.mrb[0].mxu0 %v288
    %v549 = vpop.f32.mrb[0].mxu0
    %v550 = vadd.f32 0.0, %v549
    %v551 = vpop.f32.mrb[0].mxu0
    %552 = vmatprep.mubr.f32.mxu0 0.0
    %553 = vmatmul.mubr.f32.gmra.mrb[0].mxu0 %v291
    %v554 = vpop.f32.mrb[0].mxu0
    %v555 = vadd.f32 0.0, %v554
    %v556 = vpop.f32.mrb[0].mxu0
    %557 = vmatprep.mubr.f32.mxu0 0.0
    %558 = vmatmul.mubr.f32.gmra.mrb[0].mxu0 %v294
    %v559 = vpop.f32.mrb[0].mxu0
    %v560 = vadd.f32 0.0, %v559
    %v561 = vpop.f32.mrb[0].mxu0
    %562 = vmatprep.mubr.f32.mxu0 0.0
    %563 = vmatmul.mubr.f32.gmra.mrb[0].mxu0 %v297
    %v564 = vpop.f32.mrb[0].mxu0
    %v565 = vadd.f32 0.0, %v564
    %v566 = vpop.f32.mrb[0].mxu0
    %567 = vmatprep.mubr.f32.mxu0 0.0
    %568 = vmatmul.mubr.f32.gmra.mrb[0].mxu0 %v300
    %v569 = vpop.f32.mrb[0].mxu0
    %v570 = vadd.f32 0.0, %v569
    %v571 = vpop.f32.mrb[0].mxu0
    %572 = vmatprep.mubr.f32.mxu0 0.0
    %573 = vmatmul.mubr.f32.gmra.mrb[0].mxu0 %v303
    %v574 = vpop.f32.mrb[0].mxu0
    %v575 = vadd.f32 0.0, %v574
    %v576 = vpop.f32.mrb[0].mxu0
    %577 = vmatprep.mubr.f32.mxu0 0.0
    %578 = vmatmul.mubr.f32.gmra.mrb[0].mxu0 %v306
    %v579 = vpop.f32.mrb[0].mxu0
    %v580 = vadd.f32 0.0, %v579
    %v581 = vpop.f32.mrb[0].mxu0
    %582 = vmatprep.mubr.f32.mxu0 0.0
    %583 = vmatmul.mubr.f32.gmra.mrb[0].mxu0 %v309
    %v584 = vpop.f32.mrb[0].mxu0
    %v585 = vadd.f32 0.0, %v584
    %v586 = vpop.f32.mrb[0].mxu0
    %587 = vmatprep.mubr.f32.mxu0 0.0
    %588 = vmatmul.mubr.f32.gmra.mrb[0].mxu0 %v312
    %v589 = vpop.f32.mrb[0].mxu0
    %v590 = vadd.f32 0.0, %v589
    %v591 = vpop.f32.mrb[0].mxu0
    %592 = vmatprep.mubr.f32.mxu0 0.0
    %593 = vmatmul.mubr.f32.gmra.mrb[0].mxu0 %v315
    %v594 = vpop.f32.mrb[0].mxu0
    %v595 = vadd.f32 0.0, %v594
    %v596 = vpop.f32.mrb[0].mxu0
    %597 = vmatprep.mubr.f32.mxu0 0.0
    %598 = vmatmul.mubr.f32.gmra.mrb[0].mxu0 %v318
    %v599 = vpop.f32.mrb[0].mxu0
    %v600 = vadd.f32 0.0, %v599
    %v601 = vpop.f32.mrb[0].mxu0
    %602 = vmatprep.mubr.f32.mxu0 0.0
    %603 = vmatmul.mubr.f32.gmra.mrb[0].mxu0 %v321
    %v604 = vpop.f32.mrb[0].mxu0
    %v605 = vadd.f32 0.0, %v604
    %v606 = vpop.f32.mrb[0].mxu0
    %607 = vmatprep.mubr.f32.mxu0 0.0
    %608 = vmatmul.mubr.f32.gmra.mrb[0].mxu0 %v324
    %v609 = vpop.f32.mrb[0].mxu0
    %v610 = vadd.f32 0.0, %v609
    %v611 = vpop.f32.mrb[0].mxu0
    %612 = vmatprep.mubr.f32.mxu0 0.0
    %613 = vmatmul.mubr.f32.gmra.mrb[0].mxu0 %v327
    %v614 = vpop.f32.mrb[0].mxu0
    %v615 = vadd.f32 0.0, %v614
    %v616 = vpop.f32.mrb[0].mxu0
    %617 = vmatprep.mubr.f32.mxu0 0.0
    %618 = vmatmul.mubr.f32.gmra.mrb[0].mxu0 %v330
    %v619 = vpop.f32.mrb[0].mxu0
    %v620 = vadd.f32 0.0, %v619
    %v621 = vpop.f32.mrb[0].mxu0
    %622 = vmatprep.mubr.f32.mxu0 0.0
    %623 = vmatmul.mubr.f32.gmra.mrb[0].mxu0 %v333
    %v624 = vpop.f32.mrb[0].mxu0
    %v625 = vadd.f32 0.0, %v624
    %v626 = vpop.f32.mrb[0].mxu0
    %627 = vmatprep.mubr.f32.mxu0 0.0
    %628 = vmatmul.mubr.f32.gmra.mrb[0].mxu0 %v336
    %v629 = vpop.f32.mrb[0].mxu0
    %v630 = vadd.f32 0.0, %v629
    %v631 = vpop.f32.mrb[0].mxu0
    %632 = vmatprep.mubr.f32.mxu0 0.0
    %633 = vmatmul.mubr.f32.gmra.mrb[0].mxu0 %v339
    %v634 = vpop.f32.mrb[0].mxu0
    %v635 = vadd.f32 0.0, %v634
    %v636 = vpop.f32.mrb[0].mxu0
    %637 = vmatprep.mubr.f32.mxu0 0.0
    %638 = vmatmul.mubr.f32.gmra.mrb[0].mxu0 %v342
    %v639 = vpop.f32.mrb[0].mxu0
    %v640 = vadd.f32 0.0, %v639
    %v641 = vpop.f32.mrb[0].mxu0
    %642 = vmatprep.mubr.f32.mxu0 0.0
    %643 = vmatmul.mubr.f32.gmra.mrb[0].mxu0 %v345
    %v644 = vpop.f32.mrb[0].mxu0
    %v645 = vadd.f32 0.0, %v644
    %v646 = vpop.f32.mrb[0].mxu0
    %647 = vmatprep.mubr.f32.mxu0 0.0
    %648 = vmatmul.mubr.f32.gmra.mrb[0].mxu0 %v348
    %v649 = vpop.f32.mrb[0].mxu0
    %v650 = vadd.f32 0.0, %v649
    %v651 = vpop.f32.mrb[0].mxu0
    %652 = vmatprep.mubr.f32.mxu0 0.0
    %653 = vmatmul.mubr.f32.gmra.mrb[0].mxu0 %v351
    %v654 = vpop.f32.mrb[0].mxu0
    %v655 = vadd.f32 0.0, %v654
    %v656 = vpop.f32.mrb[0].mxu0
    %657 = vmatprep.mubr.f32.mxu0 0.0
    %658 = vmatmul.mubr.f32.gmra.mrb[0].mxu0 %v354
    %v659 = vpop.f32.mrb[0].mxu0
    %v660 = vadd.f32 0.0, %v659
    %v661 = vpop.f32.mrb[0].mxu0
    %662 = vmatprep.mubr.f32.mxu0 0.0
    %663 = vmatmul.mubr.f32.gmra.mrb[0].mxu0 %v357
    %v664 = vpop.f32.mrb[0].mxu0
    %v665 = vadd.f32 0.0, %v664
    %v666 = vpop.f32.mrb[0].mxu0
    %667 = vmatprep.mubr.f32.mxu0 0.0
    %668 = vmatmul.mubr.f32.gmra.mrb[0].mxu0 %v360
    %v669 = vpop.f32.mrb[0].mxu0
    %v670 = vadd.f32 0.0, %v669
    %v671 = vpop.f32.mrb[0].mxu0
    %672 = vmatprep.mubr.f32.mxu0 0.0
    %673 = vmatmul.mubr.f32.gmra.mrb[0].mxu0 %v363
    %v674 = vpop.f32.mrb[0].mxu0
    %v675 = vadd.f32 0.0, %v674
    %v676 = vpop.f32.mrb[0].mxu0
    %677 = vmatprep.mubr.f32.mxu0 0.0
    %678 = vmatmul.mubr.f32.gmra.mrb[0].mxu0 %v366
    %v679 = vpop.f32.mrb[0].mxu0
    %v680 = vadd.f32 0.0, %v679
    %v681 = vpop.f32.mrb[0].mxu0
    %682 = vmatprep.mubr.f32.mxu0 0.0
    %683 = vmatmul.mubr.f32.gmra.mrb[0].mxu0 %v369
    %v684 = vpop.f32.mrb[0].mxu0
    %v685 = vadd.f32 0.0, %v684
    %v686 = vpop.f32.mrb[0].mxu0
    %687 = vmatprep.mubr.f32.mxu0 0.0
    %688 = vmatmul.mubr.f32.gmra.mrb[0].mxu0 %v372
    %v689 = vpop.f32.mrb[0].mxu0
    %v690 = vadd.f32 0.0, %v689
    %v691 = vpop.f32.mrb[0].mxu0
    %692 = vmatprep.mubr.f32.mxu0 0.0
    %693 = vmatmul.mubr.f32.gmra.mrb[0].mxu0 %v375
    %v694 = vpop.f32.mrb[0].mxu0
    %v695 = vadd.f32 0.0, %v694
    %v696 = vpop.f32.mrb[0].mxu0
    %697 = vmatprep.mubr.f32.mxu0 0.0
    %698 = vmatmul.mubr.f32.gmra.mrb[0].mxu0 %v378
    %v699 = vpop.f32.mrb[0].mxu0
    %v700 = vadd.f32 0.0, %v699
    %v701 = vpop.f32.mrb[0].mxu0
    %702 = vmatprep.mubr.f32.mxu0 0.0
    %703 = vmatmul.mubr.f32.gmra.mrb[0].mxu0 %v381
    %v704 = vpop.f32.mrb[0].mxu0
    %v705 = vadd.f32 0.0, %v704
    %v706 = vpop.f32.mrb[0].mxu0
    %707 = vmatprep.mubr.f32.mxu0 0.0
    %708 = vmatmul.mubr.f32.gmra.mrb[0].mxu0 %v384
    %v709 = vpop.f32.mrb[0].mxu0
    %v710 = vadd.f32 0.0, %v709
    %v711 = vpop.f32.mrb[0].mxu0
    %712 = vmatprep.mubr.f32.mxu0 0.0
    %713 = vmatmul.mubr.f32.gmra.mrb[0].mxu0 %v387
    %v714 = vpop.f32.mrb[0].mxu0
    %v715 = vadd.f32 0.0, %v714
    %v716 = vpop.f32.mrb[0].mxu0
    %717 = vmatprep.mubr.f32.mxu0 0.0
    %718 = vmatmul.mubr.f32.gmra.mrb[0].mxu0 %v390
    %v719 = vpop.f32.mrb[0].mxu0
    %v720 = vadd.f32 0.0, %v719
    %v721 = vpop.f32.mrb[0].mxu0
    %722 = vmatprep.mubr.f32.mxu0 0.0
    %723 = vmatmul.mubr.f32.gmra.mrb[0].mxu0 %v393
    %v724 = vpop.f32.mrb[0].mxu0
    %v725 = vadd.f32 0.0, %v724
    %v726 = vpop.f32.mrb[0].mxu0
    %727 = vmatprep.mubr.f32.mxu0 0.0
    %728 = vmatmul.mubr.f32.gmra.mrb[0].mxu0 %v396
    %v729 = vpop.f32.mrb[0].mxu0
    %v730 = vadd.f32 0.0, %v729
    %v731 = vpop.f32.mrb[0].mxu0
    %732 = vmatprep.mubr.f32.mxu0 0.0
    %733 = vmatmul.mubr.f32.gmra.mrb[0].mxu0 %v399
    %v734 = vpop.f32.mrb[0].mxu0
    %v735 = vadd.f32 0.0, %v734
    %v736 = vpop.f32.mrb[0].mxu0
    %737 = vmatprep.mubr.f32.mxu0 0.0
    %738 = vmatmul.mubr.f32.gmra.mrb[0].mxu0 %v402
    %v739 = vpop.f32.mrb[0].mxu0
    %v740 = vadd.f32 0.0, %v739
    %v741 = vpop.f32.mrb[0].mxu0
    %742 = vmatprep.mubr.f32.mxu0 0.0
    %743 = vmatmul.mubr.f32.gmra.mrb[0].mxu0 %v405
    %v744 = vpop.f32.mrb[0].mxu0
    %v745 = vadd.f32 0.0, %v744
    %v746 = vpop.f32.mrb[0].mxu0
    %747 = vmatprep.mubr.f32.mxu0 0.0
    %748 = vmatmul.mubr.f32.gmra.mrb[0].mxu0 %v408
    %v749 = vpop.f32.mrb[0].mxu0
    %v750 = vadd.f32 0.0, %v749
    %v751 = vpop.f32.mrb[0].mxu0
    %752 = vmatprep.mubr.f32.mxu0 0.0
    %753 = vmatmul.mubr.f32.gmra.mrb[0].mxu0 %v411
    %v754 = vpop.f32.mrb[0].mxu0
    %v755 = vadd.f32 0.0, %v754
    %v756 = vpop.f32.mrb[0].mxu0
    %757 = vmatprep.mubr.f32.mxu0 0.0
    %758 = vmatmul.mubr.f32.gmra.mrb[0].mxu0 %v414
    %v759 = vpop.f32.mrb[0].mxu0
    %v760 = vadd.f32 0.0, %v759
    %v761 = vpop.f32.mrb[0].mxu0
    %762 = vmatprep.mubr.f32.mxu0 0.0
    %763 = vmatmul.mubr.f32.gmra.mrb[0].mxu0 %v417
    %v764 = vpop.f32.mrb[0].mxu0
    %v765 = vadd.f32 0.0, %v764
    %v766 = vpop.f32.mrb[0].mxu0
    %767 = vmatprep.mubr.f32.mxu0 0.0
    %768 = vmatmul.mubr.f32.gmra.mrb[0].mxu0 %v420
    %v769 = vpop.f32.mrb[0].mxu0
    %v770 = vadd.f32 0.0, %v769
    %v771 = vpop.f32.mrb[0].mxu0
    %772 = vmatprep.mubr.f32.mxu0 0.0
    %773 = vmatmul.mubr.f32.gmra.mrb[0].mxu0 %v423
    %v774 = vpop.f32.mrb[0].mxu0
    %v775 = vadd.f32 0.0, %v774
    %v776 = vpop.f32.mrb[0].mxu0
    %777 = vmatprep.mubr.f32.mxu0 0.0
    %778 = vmatmul.mubr.f32.gmra.mrb[0].mxu0 %v426
    %v779 = vpop.f32.mrb[0].mxu0
    %v780 = vadd.f32 0.0, %v779
    %v781 = vpop.f32.mrb[0].mxu0
    %782 = vmatprep.mubr.f32.mxu0 0.0
    %783 = vmatmul.mubr.f32.gmra.mrb[0].mxu0 %v429
    %v784 = vpop.f32.mrb[0].mxu0
    %v785 = vadd.f32 0.0, %v784
    %v786 = vpop.f32.mrb[0].mxu0
    %787 = vmatprep.mubr.f32.mxu0 0.0
    %788 = vmatmul.mubr.f32.gmra.mrb[0].mxu0 %v432
    %v789 = vpop.f32.mrb[0].mxu0
    %v790 = vadd.f32 0.0, %v789
    %v791 = vpop.f32.mrb[0].mxu0
    %792 = vmatprep.mubr.f32.mxu0 0.0
    %793 = vmatmul.mubr.f32.gmra.mrb[0].mxu0 %v435
    %v794 = vpop.f32.mrb[0].mxu0
    %v795 = vadd.f32 0.0, %v794
    %v796 = vpop.f32.mrb[0].mxu0
    %797 = vmatprep.mubr.f32.mxu0 0.0
    %798 = vmatmul.mubr.f32.gmra.mrb[0].mxu0 %v438
    %v799 = vpop.f32.mrb[0].mxu0
    %v800 = vadd.f32 0.0, %v799
    %v801 = vpop.f32.mrb[0].mxu0
    %802 = vmatprep.mubr.f32.mxu0 0.0
    %803 = vmatmul.mubr.f32.gmra.mrb[0].mxu0 %v441
    %v804 = vpop.f32.mrb[0].mxu0
    %v805 = vadd.f32 0.0, %v804
    %v806 = vpop.f32.mrb[0].mxu0
    %807 = vmatprep.mubr.f32.mxu0 0.0
    %808 = vmatmul.mubr.f32.gmra.mrb[0].mxu0 %v444
    %v809 = vpop.f32.mrb[0].mxu0
    %v810 = vadd.f32 0.0, %v809
    %v811 = vpop.f32.mrb[0].mxu0
    %812 = vmatprep.mubr.f32.mxu0 0.0
    %813 = vmatmul.mubr.f32.gmra.mrb[0].mxu0 %v447
    %v814 = vpop.f32.mrb[0].mxu0
    %v815 = vadd.f32 0.0, %v814
    %v816 = vpop.f32.mrb[0].mxu0
    %817 = vmatprep.mubr.f32.mxu0 0.0
    %818 = vmatmul.mubr.f32.gmra.mrb[0].mxu0 %v450
    %v819 = vpop.f32.mrb[0].mxu0
    %v820 = vadd.f32 0.0, %v819
    %v821 = vpop.f32.mrb[0].mxu0
    %822 = vmatprep.mubr.f32.mxu0 0.0
    %823 = vmatmul.mubr.f32.gmra.mrb[0].mxu0 %v453
    %v824 = vpop.f32.mrb[0].mxu0
    %v825 = vadd.f32 0.0, %v824
    %v826 = vpop.f32.mrb[0].mxu0
    %827 = vmatprep.mubr.f32.mxu0 0.0
    %828 = vmatmul.mubr.f32.gmra.mrb[0].mxu0 %v456
    %v829 = vpop.f32.mrb[0].mxu0
    %v830 = vadd.f32 0.0, %v829
    %v831 = vpop.f32.mrb[0].mxu0
    %832 = vmatprep.mubr.f32.mxu0 0.0
    %833 = vmatmul.mubr.f32.gmra.mrb[0].mxu0 %v459
    %v834 = vpop.f32.mrb[0].mxu0
    %v835 = vadd.f32 0.0, %v834
    %v836 = vpop.f32.mrb[0].mxu0
    %837 = vmatprep.mubr.f32.mxu0 0.0
    %838 = vmatmul.mubr.f32.gmra.mrb[0].mxu0 %v462
    %v839 = vpop.f32.mrb[0].mxu0
    %v840 = vadd.f32 0.0, %v839
    %v841 = vpop.f32.mrb[0].mxu0
    %842 = vmatprep.mubr.f32.mxu0 0.0
    %843 = vmatmul.mubr.f32.gmra.mrb[0].mxu0 %v465
    %v844 = vpop.f32.mrb[0].mxu0
    %v845 = vadd.f32 0.0, %v844
    %v846 = vpop.f32.mrb[0].mxu0
    %847 = vmatprep.mubr.f32.mxu0 0.0
    %848 = vmatmul.mubr.f32.gmra.mrb[0].mxu0 %v468
    %v849 = vpop.f32.mrb[0].mxu0
    %v850 = vadd.f32 0.0, %v849
    %v851 = vpop.f32.mrb[0].mxu0
    %852 = vmatprep.mubr.f32.mxu0 0.0
    %853 = vmatmul.mubr.f32.gmra.mrb[0].mxu0 %v471
    %v854 = vpop.f32.mrb[0].mxu0
    %v855 = vadd.f32 0.0, %v854
    %v856 = vpop.f32.mrb[0].mxu0
    %857 = vmatprep.mubr.f32.mxu0 0.0
    %858 = vmatmul.mubr.f32.gmra.mrb[0].mxu0 %v474
    %v859 = vpop.f32.mrb[0].mxu0
    %v860 = vadd.f32 0.0, %v859
    %v861 = vpop.f32.mrb[0].mxu0
    %862 = vmatprep.mubr.f32.mxu0 0.0
    %863 = vmatmul.mubr.f32.gmra.mrb[0].mxu0 %v477
    %v864 = vpop.f32.mrb[0].mxu0
    %v865 = vadd.f32 0.0, %v864
    %v866 = vpop.f32.mrb[0].mxu0
    %867 = vdwg.mxu0
    %v869 = vsel %vm286, %v91, 0
    %v872 = vsel %vm286, %v92, 0
    %v875 = vsel %vm286, %v93, 0
    %v878 = vsel %vm286, %v94, 0
    %v881 = vsel %vm286, %v95, 0
    %v884 = vsel %vm286, %v96, 0
    %v887 = vsel %vm286, %v97, 0
    %v890 = vsel %vm286, %v98, 0
    %v893 = vsel %vm286, %v99, 0
    %v896 = vsel %vm286, %v100, 0
    %v899 = vsel %vm286, %v101, 0
    %v902 = vsel %vm286, %v102, 0
    %v905 = vsel %vm286, %v103, 0
    %v908 = vsel %vm286, %v104, 0
    %v911 = vsel %vm286, %v105, 0
    %v914 = vsel %vm286, %v106, 0
    %v917 = vsel %vm286, %v107, 0
    %v920 = vsel %vm286, %v108, 0
    %v923 = vsel %vm286, %v109, 0
    %v926 = vsel %vm286, %v110, 0
    %v929 = vsel %vm286, %v111, 0
    %v932 = vsel %vm286, %v112, 0
    %v935 = vsel %vm286, %v113, 0
    %v938 = vsel %vm286, %v114, 0
    %v941 = vsel %vm286, %v115, 0
    %v944 = vsel %vm286, %v116, 0
    %v947 = vsel %vm286, %v117, 0
    %v950 = vsel %vm286, %v118, 0
    %v953 = vsel %vm286, %v119, 0
    %v956 = vsel %vm286, %v120, 0
    %v959 = vsel %vm286, %v121, 0
    %v962 = vsel %vm286, %v122, 0
    %v965 = vsel %vm286, %v123, 0
    %v968 = vsel %vm286, %v124, 0
    %v971 = vsel %vm286, %v125, 0
    %v974 = vsel %vm286, %v126, 0
    %v977 = vsel %vm286, %v127, 0
    %v980 = vsel %vm286, %v128, 0
    %v983 = vsel %vm286, %v129, 0
    %v986 = vsel %vm286, %v130, 0
    %v989 = vsel %vm286, %v131, 0
    %v992 = vsel %vm286, %v132, 0
    %v995 = vsel %vm286, %v133, 0
    %v998 = vsel %vm286, %v134, 0
    %v1001 = vsel %vm286, %v135, 0
    %v1004 = vsel %vm286, %v136, 0
    %v1007 = vsel %vm286, %v137, 0
    %v1010 = vsel %vm286, %v138, 0
    %v1013 = vsel %vm286, %v139, 0
    %v1016 = vsel %vm286, %v140, 0
    %v1019 = vsel %vm286, %v141, 0
    %v1022 = vsel %vm286, %v142, 0
    %v1025 = vsel %vm286, %v143, 0
    %v1028 = vsel %vm286, %v144, 0
    %v1031 = vsel %vm286, %v145, 0
    %v1034 = vsel %vm286, %v146, 0
    %v1037 = vsel %vm286, %v147, 0
    %v1040 = vsel %vm286, %v148, 0
    %v1043 = vsel %vm286, %v149, 0
    %v1046 = vsel %vm286, %v150, 0
    %v1049 = vsel %vm286, %v151, 0
    %v1052 = vsel %vm286, %v152, 0
    %v1055 = vsel %vm286, %v153, 0
    %v1058 = vsel %vm286, %v154, 0
    %v1061 = vsel %vm479, %v155, 0
    %1063 = vmatprep.subr.mxu0 0.0
    %1064 = vmatpush1.msra.mxu0 %v1061
    %1065 = vmatprep.subr.mxu0 0.0
    %1066 = vmatpush1.msra.mxu0 0.0
    %1067 = vmatprep.subr.mxu0 0.0
    %1068 = vmatpush1.msra.mxu0 0.0
    %1069 = vmatprep.subr.mxu0 0.0
    %1070 = vmatpush1.msra.mxu0 0.0
    %1071 = vmatprep.subr.mxu0 0.0
    %1072 = vmatpush1.msra.mxu0 0.0
    %1073 = vmatprep.subr.mxu0 0.0
    %1074 = vmatpush1.msra.mxu0 0.0
    %1075 = vmatprep.subr.mxu0 0.0
    %1076 = vmatpush1.msra.mxu0 0.0
    %1077 = vmatprep.subr.mxu0 0.0
    %1078 = vmatpush1.msra.mxu0 0.0
    %1079 = vmatprep.subr.mxu0 0.0
    %1080 = vmatpush1.msra.mxu0 0.0
    %1081 = vmatprep.subr.mxu0 0.0
    %1082 = vmatpush1.msra.mxu0 0.0
    %1083 = vmatprep.subr.mxu0 0.0
    %1084 = vmatpush1.msra.mxu0 0.0
    %1085 = vmatprep.subr.mxu0 0.0
    %1086 = vmatpush1.msra.mxu0 0.0
    %1087 = vmatprep.subr.mxu0 0.0
    %1088 = vmatpush1.msra.mxu0 0.0
    %1089 = vmatprep.subr.mxu0 0.0
    %1090 = vmatpush1.msra.mxu0 0.0
    %1091 = vmatprep.subr.mxu0 0.0
    %1092 = vmatpush1.msra.mxu0 0.0
    %1093 = vmatprep.subr.mxu0 0.0
    %1094 = vmatpush1.msra.mxu0 0.0
    %1095 = vmatprep.subr.mxu0 0.0
    %1096 = vmatpush1.msra.mxu0 0.0
    %1097 = vmatprep.subr.mxu0 0.0
    %1098 = vmatpush1.msra.mxu0 0.0
    %1099 = vmatprep.subr.mxu0 0.0
    %1100 = vmatpush1.msra.mxu0 0.0
    %1101 = vmatprep.subr.mxu0 0.0
    %1102 = vmatpush1.msra.mxu0 0.0
    %1103 = vmatprep.subr.mxu0 0.0
    %1104 = vmatpush1.msra.mxu0 0.0
    %1105 = vmatprep.subr.mxu0 0.0
    %1106 = vmatpush1.msra.mxu0 0.0
    %1107 = vmatprep.subr.mxu0 0.0
    %1108 = vmatpush1.msra.mxu0 0.0
    %1109 = vmatprep.subr.mxu0 0.0
    %1110 = vmatpush1.msra.mxu0 0.0
    %1111 = vmatprep.subr.mxu0 0.0
    %1112 = vmatpush1.msra.mxu0 0.0
    %1113 = vmatprep.subr.mxu0 0.0
    %1114 = vmatpush1.msra.mxu0 0.0
    %1115 = vmatprep.subr.mxu0 0.0
    %1116 = vmatpush1.msra.mxu0 0.0
    %1117 = vmatprep.subr.mxu0 0.0
    %1118 = vmatpush1.msra.mxu0 0.0
    %1119 = vmatprep.subr.mxu0 0.0
    %1120 = vmatpush1.msra.mxu0 0.0
    %1121 = vmatprep.subr.mxu0 0.0
    %1122 = vmatpush1.msra.mxu0 0.0
    %1123 = vmatprep.subr.mxu0 0.0
    %1124 = vmatpush1.msra.mxu0 0.0
    %1125 = vmatprep.subr.mxu0 0.0
    %1126 = vmatpush1.msra.mxu0 0.0
    %1127 = vmatprep.mubr.f32.mxu0 0.0
    %1128 = vmatmul.mubr.f32.gmra.mrb[0].mxu0 %v869
    %v1129 = vpop.f32.mrb[0].mxu0
    %v1130 = vadd.f32 %v550, %v1129
    %v1131 = vpop.f32.mrb[0].mxu0
    %1132 = vmatprep.mubr.f32.mxu0 0.0
    %1133 = vmatmul.mubr.f32.gmra.mrb[0].mxu0 %v872
    %v1134 = vpop.f32.mrb[0].mxu0
    %v1135 = vadd.f32 %v555, %v1134
    %v1136 = vpop.f32.mrb[0].mxu0
    %1137 = vmatprep.mubr.f32.mxu0 0.0
    %1138 = vmatmul.mubr.f32.gmra.mrb[0].mxu0 %v875
    %v1139 = vpop.f32.mrb[0].mxu0
    %v1140 = vadd.f32 %v560, %v1139
    %v1141 = vpop.f32.mrb[0].mxu0
    %1142 = vmatprep.mubr.f32.mxu0 0.0
    %1143 = vmatmul.mubr.f32.gmra.mrb[0].mxu0 %v878
    %v1144 = vpop.f32.mrb[0].mxu0
    %v1145 = vadd.f32 %v565, %v1144
    %v1146 = vpop.f32.mrb[0].mxu0
    %1147 = vmatprep.mubr.f32.mxu0 0.0
    %1148 = vmatmul.mubr.f32.gmra.mrb[0].mxu0 %v881
    %v1149 = vpop.f32.mrb[0].mxu0
    %v1150 = vadd.f32 %v570, %v1149
    %v1151 = vpop.f32.mrb[0].mxu0
    %1152 = vmatprep.mubr.f32.mxu0 0.0
    %1153 = vmatmul.mubr.f32.gmra.mrb[0].mxu0 %v884
    %v1154 = vpop.f32.mrb[0].mxu0
    %v1155 = vadd.f32 %v575, %v1154
    %v1156 = vpop.f32.mrb[0].mxu0
    %1157 = vmatprep.mubr.f32.mxu0 0.0
    %1158 = vmatmul.mubr.f32.gmra.mrb[0].mxu0 %v887
    %v1159 = vpop.f32.mrb[0].mxu0
    %v1160 = vadd.f32 %v580, %v1159
    %v1161 = vpop.f32.mrb[0].mxu0
    %1162 = vmatprep.mubr.f32.mxu0 0.0
    %1163 = vmatmul.mubr.f32.gmra.mrb[0].mxu0 %v890
    %v1164 = vpop.f32.mrb[0].mxu0
    %v1165 = vadd.f32 %v585, %v1164
    %v1166 = vpop.f32.mrb[0].mxu0
    %1167 = vmatprep.mubr.f32.mxu0 0.0
    %1168 = vmatmul.mubr.f32.gmra.mrb[0].mxu0 %v893
    %v1169 = vpop.f32.mrb[0].mxu0
    %v1170 = vadd.f32 %v590, %v1169
    %v1171 = vpop.f32.mrb[0].mxu0
    %1172 = vmatprep.mubr.f32.mxu0 0.0
    %1173 = vmatmul.mubr.f32.gmra.mrb[0].mxu0 %v896
    %v1174 = vpop.f32.mrb[0].mxu0
    %v1175 = vadd.f32 %v595, %v1174
    %v1176 = vpop.f32.mrb[0].mxu0
    %1177 = vmatprep.mubr.f32.mxu0 0.0
    %1178 = vmatmul.mubr.f32.gmra.mrb[0].mxu0 %v899
    %v1179 = vpop.f32.mrb[0].mxu0
    %v1180 = vadd.f32 %v600, %v1179
    %v1181 = vpop.f32.mrb[0].mxu0
    %1182 = vmatprep.mubr.f32.mxu0 0.0
    %1183 = vmatmul.mubr.f32.gmra.mrb[0].mxu0 %v902
    %v1184 = vpop.f32.mrb[0].mxu0
    %v1185 = vadd.f32 %v605, %v1184
    %v1186 = vpop.f32.mrb[0].mxu0
    %1187 = vmatprep.mubr.f32.mxu0 0.0
    %1188 = vmatmul.mubr.f32.gmra.mrb[0].mxu0 %v905
    %v1189 = vpop.f32.mrb[0].mxu0
    %v1190 = vadd.f32 %v610, %v1189
    %v1191 = vpop.f32.mrb[0].mxu0
    %1192 = vmatprep.mubr.f32.mxu0 0.0
    %1193 = vmatmul.mubr.f32.gmra.mrb[0].mxu0 %v908
    %v1194 = vpop.f32.mrb[0].mxu0
    %v1195 = vadd.f32 %v615, %v1194
    %v1196 = vpop.f32.mrb[0].mxu0
    %1197 = vmatprep.mubr.f32.mxu0 0.0
    %1198 = vmatmul.mubr.f32.gmra.mrb[0].mxu0 %v911
    %v1199 = vpop.f32.mrb[0].mxu0
    %v1200 = vadd.f32 %v620, %v1199
    %v1201 = vpop.f32.mrb[0].mxu0
    %1202 = vmatprep.mubr.f32.mxu0 0.0
    %1203 = vmatmul.mubr.f32.gmra.mrb[0].mxu0 %v914
    %v1204 = vpop.f32.mrb[0].mxu0
    %v1205 = vadd.f32 %v625, %v1204
    %v1206 = vpop.f32.mrb[0].mxu0
    %1207 = vmatprep.mubr.f32.mxu0 0.0
    %1208 = vmatmul.mubr.f32.gmra.mrb[0].mxu0 %v917
    %v1209 = vpop.f32.mrb[0].mxu0
    %v1210 = vadd.f32 %v630, %v1209
    %v1211 = vpop.f32.mrb[0].mxu0
    %1212 = vmatprep.mubr.f32.mxu0 0.0
    %1213 = vmatmul.mubr.f32.gmra.mrb[0].mxu0 %v920
    %v1214 = vpop.f32.mrb[0].mxu0
    %v1215 = vadd.f32 %v635, %v1214
    %v1216 = vpop.f32.mrb[0].mxu0
    %1217 = vmatprep.mubr.f32.mxu0 0.0
    %1218 = vmatmul.mubr.f32.gmra.mrb[0].mxu0 %v923
    %v1219 = vpop.f32.mrb[0].mxu0
    %v1220 = vadd.f32 %v640, %v1219
    %v1221 = vpop.f32.mrb[0].mxu0
    %1222 = vmatprep.mubr.f32.mxu0 0.0
    %1223 = vmatmul.mubr.f32.gmra.mrb[0].mxu0 %v926
    %v1224 = vpop.f32.mrb[0].mxu0
    %v1225 = vadd.f32 %v645, %v1224
    %v1226 = vpop.f32.mrb[0].mxu0
    %1227 = vmatprep.mubr.f32.mxu0 0.0
    %1228 = vmatmul.mubr.f32.gmra.mrb[0].mxu0 %v929
    %v1229 = vpop.f32.mrb[0].mxu0
    %v1230 = vadd.f32 %v650, %v1229
    %v1231 = vpop.f32.mrb[0].mxu0
    %1232 = vmatprep.mubr.f32.mxu0 0.0
    %1233 = vmatmul.mubr.f32.gmra.mrb[0].mxu0 %v932
    %v1234 = vpop.f32.mrb[0].mxu0
    %v1235 = vadd.f32 %v655, %v1234
    %v1236 = vpop.f32.mrb[0].mxu0
    %1237 = vmatprep.mubr.f32.mxu0 0.0
    %1238 = vmatmul.mubr.f32.gmra.mrb[0].mxu0 %v935
    %v1239 = vpop.f32.mrb[0].mxu0
    %v1240 = vadd.f32 %v660, %v1239
    %v1241 = vpop.f32.mrb[0].mxu0
    %1242 = vmatprep.mubr.f32.mxu0 0.0
    %1243 = vmatmul.mubr.f32.gmra.mrb[0].mxu0 %v938
    %v1244 = vpop.f32.mrb[0].mxu0
    %v1245 = vadd.f32 %v665, %v1244
    %v1246 = vpop.f32.mrb[0].mxu0
    %1247 = vmatprep.mubr.f32.mxu0 0.0
    %1248 = vmatmul.mubr.f32.gmra.mrb[0].mxu0 %v941
    %v1249 = vpop.f32.mrb[0].mxu0
    %v1250 = vadd.f32 %v670, %v1249
    %v1251 = vpop.f32.mrb[0].mxu0
    %1252 = vmatprep.mubr.f32.mxu0 0.0
    %1253 = vmatmul.mubr.f32.gmra.mrb[0].mxu0 %v944
    %v1254 = vpop.f32.mrb[0].mxu0
    %v1255 = vadd.f32 %v675, %v1254
    %v1256 = vpop.f32.mrb[0].mxu0
    %1257 = vmatprep.mubr.f32.mxu0 0.0
    %1258 = vmatmul.mubr.f32.gmra.mrb[0].mxu0 %v947
    %v1259 = vpop.f32.mrb[0].mxu0
    %v1260 = vadd.f32 %v680, %v1259
    %v1261 = vpop.f32.mrb[0].mxu0
    %1262 = vmatprep.mubr.f32.mxu0 0.0
    %1263 = vmatmul.mubr.f32.gmra.mrb[0].mxu0 %v950
    %v1264 = vpop.f32.mrb[0].mxu0
    %v1265 = vadd.f32 %v685, %v1264
    %v1266 = vpop.f32.mrb[0].mxu0
    %1267 = vmatprep.mubr.f32.mxu0 0.0
    %1268 = vmatmul.mubr.f32.gmra.mrb[0].mxu0 %v953
    %v1269 = vpop.f32.mrb[0].mxu0
    %v1270 = vadd.f32 %v690, %v1269
    %v1271 = vpop.f32.mrb[0].mxu0
    %1272 = vmatprep.mubr.f32.mxu0 0.0
    %1273 = vmatmul.mubr.f32.gmra.mrb[0].mxu0 %v956
    %v1274 = vpop.f32.mrb[0].mxu0
    %v1275 = vadd.f32 %v695, %v1274
    %v1276 = vpop.f32.mrb[0].mxu0
    %1277 = vmatprep.mubr.f32.mxu0 0.0
    %1278 = vmatmul.mubr.f32.gmra.mrb[0].mxu0 %v959
    %v1279 = vpop.f32.mrb[0].mxu0
    %v1280 = vadd.f32 %v700, %v1279
    %v1281 = vpop.f32.mrb[0].mxu0
    %1282 = vmatprep.mubr.f32.mxu0 0.0
    %1283 = vmatmul.mubr.f32.gmra.mrb[0].mxu0 %v962
    %v1284 = vpop.f32.mrb[0].mxu0
    %v1285 = vadd.f32 %v705, %v1284
    %v1286 = vpop.f32.mrb[0].mxu0
    %1287 = vmatprep.mubr.f32.mxu0 0.0
    %1288 = vmatmul.mubr.f32.gmra.mrb[0].mxu0 %v965
    %v1289 = vpop.f32.mrb[0].mxu0
    %v1290 = vadd.f32 %v710, %v1289
    %v1291 = vpop.f32.mrb[0].mxu0
    %1292 = vmatprep.mubr.f32.mxu0 0.0
    %1293 = vmatmul.mubr.f32.gmra.mrb[0].mxu0 %v968
    %v1294 = vpop.f32.mrb[0].mxu0
    %v1295 = vadd.f32 %v715, %v1294
    %v1296 = vpop.f32.mrb[0].mxu0
    %1297 = vmatprep.mubr.f32.mxu0 0.0
    %1298 = vmatmul.mubr.f32.gmra.mrb[0].mxu0 %v971
    %v1299 = vpop.f32.mrb[0].mxu0
    %v1300 = vadd.f32 %v720, %v1299
    %v1301 = vpop.f32.mrb[0].mxu0
    %1302 = vmatprep.mubr.f32.mxu0 0.0
    %1303 = vmatmul.mubr.f32.gmra.mrb[0].mxu0 %v974
    %v1304 = vpop.f32.mrb[0].mxu0
    %v1305 = vadd.f32 %v725, %v1304
    %v1306 = vpop.f32.mrb[0].mxu0
    %1307 = vmatprep.mubr.f32.mxu0 0.0
    %1308 = vmatmul.mubr.f32.gmra.mrb[0].mxu0 %v977
    %v1309 = vpop.f32.mrb[0].mxu0
    %v1310 = vadd.f32 %v730, %v1309
    %v1311 = vpop.f32.mrb[0].mxu0
    %1312 = vmatprep.mubr.f32.mxu0 0.0
    %1313 = vmatmul.mubr.f32.gmra.mrb[0].mxu0 %v980
    %v1314 = vpop.f32.mrb[0].mxu0
    %v1315 = vadd.f32 %v735, %v1314
    %v1316 = vpop.f32.mrb[0].mxu0
    %1317 = vmatprep.mubr.f32.mxu0 0.0
    %1318 = vmatmul.mubr.f32.gmra.mrb[0].mxu0 %v983
    %v1319 = vpop.f32.mrb[0].mxu0
    %v1320 = vadd.f32 %v740, %v1319
    %v1321 = vpop.f32.mrb[0].mxu0
    %1322 = vmatprep.mubr.f32.mxu0 0.0
    %1323 = vmatmul.mubr.f32.gmra.mrb[0].mxu0 %v986
    %v1324 = vpop.f32.mrb[0].mxu0
    %v1325 = vadd.f32 %v745, %v1324
    %v1326 = vpop.f32.mrb[0].mxu0
    %1327 = vmatprep.mubr.f32.mxu0 0.0
    %1328 = vmatmul.mubr.f32.gmra.mrb[0].mxu0 %v989
    %v1329 = vpop.f32.mrb[0].mxu0
    %v1330 = vadd.f32 %v750, %v1329
    %v1331 = vpop.f32.mrb[0].mxu0
    %1332 = vmatprep.mubr.f32.mxu0 0.0
    %1333 = vmatmul.mubr.f32.gmra.mrb[0].mxu0 %v992
    %v1334 = vpop.f32.mrb[0].mxu0
    %v1335 = vadd.f32 %v755, %v1334
    %v1336 = vpop.f32.mrb[0].mxu0
    %1337 = vmatprep.mubr.f32.mxu0 0.0
    %1338 = vmatmul.mubr.f32.gmra.mrb[0].mxu0 %v995
    %v1339 = vpop.f32.mrb[0].mxu0
    %v1340 = vadd.f32 %v760, %v1339
    %v1341 = vpop.f32.mrb[0].mxu0
    %1342 = vmatprep.mubr.f32.mxu0 0.0
    %1343 = vmatmul.mubr.f32.gmra.mrb[0].mxu0 %v998
    %v1344 = vpop.f32.mrb[0].mxu0
    %v1345 = vadd.f32 %v765, %v1344
    %v1346 = vpop.f32.mrb[0].mxu0
    %1347 = vmatprep.mubr.f32.mxu0 0.0
    %1348 = vmatmul.mubr.f32.gmra.mrb[0].mxu0 %v1001
    %v1349 = vpop.f32.mrb[0].mxu0
    %v1350 = vadd.f32 %v770, %v1349
    %v1351 = vpop.f32.mrb[0].mxu0
    %1352 = vmatprep.mubr.f32.mxu0 0.0
    %1353 = vmatmul.mubr.f32.gmra.mrb[0].mxu0 %v1004
    %v1354 = vpop.f32.mrb[0].mxu0
    %v1355 = vadd.f32 %v775, %v1354
    %v1356 = vpop.f32.mrb[0].mxu0
    %1357 = vmatprep.mubr.f32.mxu0 0.0
    %1358 = vmatmul.mubr.f32.gmra.mrb[0].mxu0 %v1007
    %v1359 = vpop.f32.mrb[0].mxu0
    %v1360 = vadd.f32 %v780, %v1359
    %v1361 = vpop.f32.mrb[0].mxu0
    %1362 = vmatprep.mubr.f32.mxu0 0.0
    %1363 = vmatmul.mubr.f32.gmra.mrb[0].mxu0 %v1010
    %v1364 = vpop.f32.mrb[0].mxu0
    %v1365 = vadd.f32 %v785, %v1364
    %v1366 = vpop.f32.mrb[0].mxu0
    %1367 = vmatprep.mubr.f32.mxu0 0.0
    %1368 = vmatmul.mubr.f32.gmra.mrb[0].mxu0 %v1013
    %v1369 = vpop.f32.mrb[0].mxu0
    %v1370 = vadd.f32 %v790, %v1369
    %v1371 = vpop.f32.mrb[0].mxu0
    %1372 = vmatprep.mubr.f32.mxu0 0.0
    %1373 = vmatmul.mubr.f32.gmra.mrb[0].mxu0 %v1016
    %v1374 = vpop.f32.mrb[0].mxu0
    %v1375 = vadd.f32 %v795, %v1374
    %v1376 = vpop.f32.mrb[0].mxu0
    %1377 = vmatprep.mubr.f32.mxu0 0.0
    %1378 = vmatmul.mubr.f32.gmra.mrb[0].mxu0 %v1019
    %v1379 = vpop.f32.mrb[0].mxu0
    %v1380 = vadd.f32 %v800, %v1379
    %v1381 = vpop.f32.mrb[0].mxu0
    %1382 = vmatprep.mubr.f32.mxu0 0.0
    %1383 = vmatmul.mubr.f32.gmra.mrb[0].mxu0 %v1022
    %v1384 = vpop.f32.mrb[0].mxu0
    %v1385 = vadd.f32 %v805, %v1384
    %v1386 = vpop.f32.mrb[0].mxu0
    %1387 = vmatprep.mubr.f32.mxu0 0.0
    %1388 = vmatmul.mubr.f32.gmra.mrb[0].mxu0 %v1025
    %v1389 = vpop.f32.mrb[0].mxu0
    %v1390 = vadd.f32 %v810, %v1389
    %v1391 = vpop.f32.mrb[0].mxu0
    %1392 = vmatprep.mubr.f32.mxu0 0.0
    %1393 = vmatmul.mubr.f32.gmra.mrb[0].mxu0 %v1028
    %v1394 = vpop.f32.mrb[0].mxu0
    %v1395 = vadd.f32 %v815, %v1394
    %v1396 = vpop.f32.mrb[0].mxu0
    %1397 = vmatprep.mubr.f32.mxu0 0.0
    %1398 = vmatmul.mubr.f32.gmra.mrb[0].mxu0 %v1031
    %v1399 = vpop.f32.mrb[0].mxu0
    %v1400 = vadd.f32 %v820, %v1399
    %v1401 = vpop.f32.mrb[0].mxu0
    %1402 = vmatprep.mubr.f32.mxu0 0.0
    %1403 = vmatmul.mubr.f32.gmra.mrb[0].mxu0 %v1034
    %v1404 = vpop.f32.mrb[0].mxu0
    %v1405 = vadd.f32 %v825, %v1404
    %v1406 = vpop.f32.mrb[0].mxu0
    %1407 = vmatprep.mubr.f32.mxu0 0.0
    %1408 = vmatmul.mubr.f32.gmra.mrb[0].mxu0 %v1037
    %v1409 = vpop.f32.mrb[0].mxu0
    %v1410 = vadd.f32 %v830, %v1409
    %v1411 = vpop.f32.mrb[0].mxu0
    %1412 = vmatprep.mubr.f32.mxu0 0.0
    %1413 = vmatmul.mubr.f32.gmra.mrb[0].mxu0 %v1040
    %v1414 = vpop.f32.mrb[0].mxu0
    %v1415 = vadd.f32 %v835, %v1414
    %v1416 = vpop.f32.mrb[0].mxu0
    %1417 = vmatprep.mubr.f32.mxu0 0.0
    %1418 = vmatmul.mubr.f32.gmra.mrb[0].mxu0 %v1043
    %v1419 = vpop.f32.mrb[0].mxu0
    %v1420 = vadd.f32 %v840, %v1419
    %v1421 = vpop.f32.mrb[0].mxu0
    %1422 = vmatprep.mubr.f32.mxu0 0.0
    %1423 = vmatmul.mubr.f32.gmra.mrb[0].mxu0 %v1046
    %v1424 = vpop.f32.mrb[0].mxu0
    %v1425 = vadd.f32 %v845, %v1424
    %v1426 = vpop.f32.mrb[0].mxu0
    %1427 = vmatprep.mubr.f32.mxu0 0.0
    %1428 = vmatmul.mubr.f32.gmra.mrb[0].mxu0 %v1049
    %v1429 = vpop.f32.mrb[0].mxu0
    %v1430 = vadd.f32 %v850, %v1429
    %v1431 = vpop.f32.mrb[0].mxu0
    %1432 = vmatprep.mubr.f32.mxu0 0.0
    %1433 = vmatmul.mubr.f32.gmra.mrb[0].mxu0 %v1052
    %v1434 = vpop.f32.mrb[0].mxu0
    %v1435 = vadd.f32 %v855, %v1434
    %v1436 = vpop.f32.mrb[0].mxu0
    %1437 = vmatprep.mubr.f32.mxu0 0.0
    %1438 = vmatmul.mubr.f32.gmra.mrb[0].mxu0 %v1055
    %v1439 = vpop.f32.mrb[0].mxu0
    %v1440 = vadd.f32 %v860, %v1439
    %v1441 = vpop.f32.mrb[0].mxu0
    %1442 = vmatprep.mubr.f32.mxu0 0.0
    %1443 = vmatmul.mubr.f32.gmra.mrb[0].mxu0 %v1058
    %v1444 = vpop.f32.mrb[0].mxu0
    %v1445 = vadd.f32 %v865, %v1444
    %v1446 = vpop.f32.mrb[0].mxu0
    %1447 = vdwg.mxu0
    %v1448 = vld [vmem:[%s0 + $0x2] sm:$0xff]
    %v1449 = vld [vmem:[%s0 + $0xa] sm:$0xff]
    %v1450 = vld [vmem:[%s0 + $0x1a] sm:$0xff]
    %v1451 = vld [vmem:[%s0 + $0x22] sm:$0xff]
    %v1452 = vld [vmem:[%s0 + $0x32] sm:$0xff]
    %v1453 = vld [vmem:[%s0 + $0x3a] sm:$0xff]
    %v1454 = vld [vmem:[%s0 + $0x4a] sm:$0xff]
    %v1455 = vld [vmem:[%s0 + $0x52] sm:$0xff]
    %v1456 = vld [vmem:[%s0 + $0x62] sm:$0xff]
    %v1457 = vld [vmem:[%s0 + $0x6a] sm:$0xff]
    %v1458 = vld [vmem:[%s0 + $0x7a] sm:$0xff]
    %v1459 = vld [vmem:[%s0 + $0x82] sm:$0xff]
    %v1460 = vld [vmem:[%s0 + $0x92] sm:$0xff]
    %v1461 = vld [vmem:[%s0 + $0x9a] sm:$0xff]
    %v1462 = vld [vmem:[%s0 + $0xaa] sm:$0xff]
    %v1463 = vld [vmem:[%s0 + $0xb2] sm:$0xff]
    %v1464 = vld [vmem:[%s0 + $0xc2] sm:$0xff]
    %v1465 = vld [vmem:[%s0 + $0xca] sm:$0xff]
    %v1466 = vld [vmem:[%s0 + $0xda] sm:$0xff]
    %v1467 = vld [vmem:[%s0 + $0xe2] sm:$0xff]
    %v1468 = vld [vmem:[%s0 + $0xf2] sm:$0xff]
    %v1469 = vld [vmem:[%s0 + $0xfa] sm:$0xff]
    %v1470 = vld [vmem:[%s0 + $0x10a] sm:$0xff]
    %v1471 = vld [vmem:[%s0 + $0x112] sm:$0xff]
    %v1472 = vld [vmem:[%s0 + $0x122] sm:$0xff]
    %v1473 = vld [vmem:[%s0 + $0x12a] sm:$0xff]
    %v1474 = vld [vmem:[%s0 + $0x13a] sm:$0xff]
    %v1475 = vld [vmem:[%s0 + $0x142] sm:$0xff]
    %v1476 = vld [vmem:[%s0 + $0x152] sm:$0xff]
    %v1477 = vld [vmem:[%s0 + $0x15a] sm:$0xff]
    %v1478 = vld [vmem:[%s0 + $0x16a] sm:$0xff]
    %v1479 = vld [vmem:[%s0 + $0x172] sm:$0xff]
    %v1480 = vld [vmem:[%s0 + $0x1b2] sm:$0xff]
    %v1481 = vld [vmem:[%s0 + $0x1ba] sm:$0xff]
    %v1482 = vld [vmem:[%s0 + $0x1ca] sm:$0xff]
    %v1483 = vld [vmem:[%s0 + $0x1d2] sm:$0xff]
    %v1484 = vld [vmem:[%s0 + $0x1e2] sm:$0xff]
    %v1485 = vld [vmem:[%s0 + $0x1ea] sm:$0xff]
    %v1486 = vld [vmem:[%s0 + $0x1fa] sm:$0xff]
    %v1487 = vld [vmem:[%s0 + $0x202] sm:$0xff]
    %v1488 = vld [vmem:[%s0 + $0x212] sm:$0xff]
    %v1489 = vld [vmem:[%s0 + $0x21a] sm:$0xff]
    %v1490 = vld [vmem:[%s0 + $0x22a] sm:$0xff]
    %v1491 = vld [vmem:[%s0 + $0x232] sm:$0xff]
    %v1492 = vld [vmem:[%s0 + $0x242] sm:$0xff]
    %v1493 = vld [vmem:[%s0 + $0x24a] sm:$0xff]
    %v1494 = vld [vmem:[%s0 + $0x25a] sm:$0xff]
    %v1495 = vld [vmem:[%s0 + $0x262] sm:$0xff]
    %v1496 = vld [vmem:[%s0 + $0x272] sm:$0xff]
    %v1497 = vld [vmem:[%s0 + $0x27a] sm:$0xff]
    %v1498 = vld [vmem:[%s0 + $0x28a] sm:$0xff]
    %v1499 = vld [vmem:[%s0 + $0x292] sm:$0xff]
    %v1500 = vld [vmem:[%s0 + $0x2a2] sm:$0xff]
    %v1501 = vld [vmem:[%s0 + $0x2aa] sm:$0xff]
    %v1502 = vld [vmem:[%s0 + $0x2ba] sm:$0xff]
    %v1503 = vld [vmem:[%s0 + $0x2c2] sm:$0xff]
    %v1504 = vld [vmem:[%s0 + $0x2d2] sm:$0xff]
    %v1505 = vld [vmem:[%s0 + $0x2da] sm:$0xff]
    %v1506 = vld [vmem:[%s0 + $0x2ea] sm:$0xff]
    %v1507 = vld [vmem:[%s0 + $0x2f2] sm:$0xff]
    %v1508 = vld [vmem:[%s0 + $0x302] sm:$0xff]
    %v1509 = vld [vmem:[%s0 + $0x30a] sm:$0xff]
    %v1510 = vld [vmem:[%s0 + $0x31a] sm:$0xff]
    %v1511 = vld [vmem:[%s0 + $0x322] sm:$0xff]
    %v1512 = vmax.f32 %v1448, 0.0
    %v1513 = vmax.f32 %v1449, 0.0
    %v1514 = vmax.f32 %v1450, 0.0
    %v1515 = vmax.f32 %v1451, 0.0
    %v1516 = vmax.f32 %v1452, 0.0
    %v1517 = vmax.f32 %v1453, 0.0
    %v1518 = vmax.f32 %v1454, 0.0
    %v1519 = vmax.f32 %v1455, 0.0
    %v1520 = vmax.f32 %v1456, 0.0
    %v1521 = vmax.f32 %v1457, 0.0
    %v1522 = vmax.f32 %v1458, 0.0
    %v1523 = vmax.f32 %v1459, 0.0
    %v1524 = vmax.f32 %v1460, 0.0
    %v1525 = vmax.f32 %v1461, 0.0
    %v1526 = vmax.f32 %v1462, 0.0
    %v1527 = vmax.f32 %v1463, 0.0
    %v1528 = vmax.f32 %v1464, 0.0
    %v1529 = vmax.f32 %v1465, 0.0
    %v1530 = vmax.f32 %v1466, 0.0
    %v1531 = vmax.f32 %v1467, 0.0
    %v1532 = vmax.f32 %v1468, 0.0
    %v1533 = vmax.f32 %v1469, 0.0
    %v1534 = vmax.f32 %v1470, 0.0
    %v1535 = vmax.f32 %v1471, 0.0
    %v1536 = vmax.f32 %v1472, 0.0
    %v1537 = vmax.f32 %v1473, 0.0
    %v1538 = vmax.f32 %v1474, 0.0
    %v1539 = vmax.f32 %v1475, 0.0
    %v1540 = vmax.f32 %v1476, 0.0
    %v1541 = vmax.f32 %v1477, 0.0
    %v1542 = vmax.f32 %v1478, 0.0
    %v1543 = vmax.f32 %v1479, 0.0
    %v1544 = vmax.f32 %v1480, 0.0
    %v1545 = vmax.f32 %v1481, 0.0
    %v1546 = vmax.f32 %v1482, 0.0
    %v1547 = vmax.f32 %v1483, 0.0
    %v1548 = vmax.f32 %v1484, 0.0
    %v1549 = vmax.f32 %v1485, 0.0
    %v1550 = vmax.f32 %v1486, 0.0
    %v1551 = vmax.f32 %v1487, 0.0
    %v1552 = vmax.f32 %v1488, 0.0
    %v1553 = vmax.f32 %v1489, 0.0
    %v1554 = vmax.f32 %v1490, 0.0
    %v1555 = vmax.f32 %v1491, 0.0
    %v1556 = vmax.f32 %v1492, 0.0
    %v1557 = vmax.f32 %v1493, 0.0
    %v1558 = vmax.f32 %v1494, 0.0
    %v1559 = vmax.f32 %v1495, 0.0
    %v1560 = vmax.f32 %v1496, 0.0
    %v1561 = vmax.f32 %v1497, 0.0
    %v1562 = vmax.f32 %v1498, 0.0
    %v1563 = vmax.f32 %v1499, 0.0
    %v1564 = vmax.f32 %v1500, 0.0
    %v1565 = vmax.f32 %v1501, 0.0
    %v1566 = vmax.f32 %v1502, 0.0
    %v1567 = vmax.f32 %v1503, 0.0
    %v1568 = vmax.f32 %v1504, 0.0
    %v1569 = vmax.f32 %v1505, 0.0
    %v1570 = vmax.f32 %v1506, 0.0
    %v1571 = vmax.f32 %v1507, 0.0
    %v1572 = vmax.f32 %v1508, 0.0
    %v1573 = vmax.f32 %v1509, 0.0
    %v1574 = vmax.f32 %v1510, 0.0
    %v1575 = vmax.f32 %v1511, 0.0
    %s1576 = scalar_lea.vmem %s1, 8
    %v1577 = vld [vmem:[%s1576] sm:$0xf]
    %v1579 = vsel %vm286, %v1512, 0
    %v1582 = vsel %vm286, %v1513, 0
    %v1585 = vsel %vm286, %v1514, 0
    %v1588 = vsel %vm286, %v1515, 0
    %v1591 = vsel %vm286, %v1516, 0
    %v1594 = vsel %vm286, %v1517, 0
    %v1597 = vsel %vm286, %v1518, 0
    %v1600 = vsel %vm286, %v1519, 0
    %v1603 = vsel %vm286, %v1520, 0
    %v1606 = vsel %vm286, %v1521, 0
    %v1609 = vsel %vm286, %v1522, 0
    %v1612 = vsel %vm286, %v1523, 0
    %v1615 = vsel %vm286, %v1524, 0
    %v1618 = vsel %vm286, %v1525, 0
    %v1621 = vsel %vm286, %v1526, 0
    %v1624 = vsel %vm286, %v1527, 0
    %v1627 = vsel %vm286, %v1528, 0
    %v1630 = vsel %vm286, %v1529, 0
    %v1633 = vsel %vm286, %v1530, 0
    %v1636 = vsel %vm286, %v1531, 0
    %v1639 = vsel %vm286, %v1532, 0
    %v1642 = vsel %vm286, %v1533, 0
    %v1645 = vsel %vm286, %v1534, 0
    %v1648 = vsel %vm286, %v1535, 0
    %v1651 = vsel %vm286, %v1536, 0
    %v1654 = vsel %vm286, %v1537, 0
    %v1657 = vsel %vm286, %v1538, 0
    %v1660 = vsel %vm286, %v1539, 0
    %v1663 = vsel %vm286, %v1540, 0
    %v1666 = vsel %vm286, %v1541, 0
    %v1669 = vsel %vm286, %v1542, 0
    %v1672 = vsel %vm286, %v1543, 0
    %v1675 = vsel %vm286, %v1544, 0
    %v1678 = vsel %vm286, %v1545, 0
    %v1681 = vsel %vm286, %v1546, 0
    %v1684 = vsel %vm286, %v1547, 0
    %v1687 = vsel %vm286, %v1548, 0
    %v1690 = vsel %vm286, %v1549, 0
    %v1693 = vsel %vm286, %v1550, 0
    %v1696 = vsel %vm286, %v1551, 0
    %v1699 = vsel %vm286, %v1552, 0
    %v1702 = vsel %vm286, %v1553, 0
    %v1705 = vsel %vm286, %v1554, 0
    %v1708 = vsel %vm286, %v1555, 0
    %v1711 = vsel %vm286, %v1556, 0
    %v1714 = vsel %vm286, %v1557, 0
    %v1717 = vsel %vm286, %v1558, 0
    %v1720 = vsel %vm286, %v1559, 0
    %v1723 = vsel %vm286, %v1560, 0
    %v1726 = vsel %vm286, %v1561, 0
    %v1729 = vsel %vm286, %v1562, 0
    %v1732 = vsel %vm286, %v1563, 0
    %v1735 = vsel %vm286, %v1564, 0
    %v1738 = vsel %vm286, %v1565, 0
    %v1741 = vsel %vm286, %v1566, 0
    %v1744 = vsel %vm286, %v1567, 0
    %v1747 = vsel %vm286, %v1568, 0
    %v1750 = vsel %vm286, %v1569, 0
    %v1753 = vsel %vm286, %v1570, 0
    %v1756 = vsel %vm286, %v1571, 0
    %v1759 = vsel %vm286, %v1572, 0
    %v1762 = vsel %vm286, %v1573, 0
    %v1765 = vsel %vm286, %v1574, 0
    %v1768 = vsel %vm286, %v1575, 0
    %v1771 = vsel %vm479, %v1577, 0
    %1773 = vmatprep.subr.mxu0 0.0
    %1774 = vmatpush1.msra.mxu0 %v1771
    %1775 = vmatprep.subr.mxu0 0.0
    %1776 = vmatpush1.msra.mxu0 0.0
    %1777 = vmatprep.subr.mxu0 0.0
    %1778 = vmatpush1.msra.mxu0 0.0
    %1779 = vmatprep.subr.mxu0 0.0
    %1780 = vmatpush1.msra.mxu0 0.0
    %1781 = vmatprep.subr.mxu0 0.0
    %1782 = vmatpush1.msra.mxu0 0.0
    %1783 = vmatprep.subr.mxu0 0.0
    %1784 = vmatpush1.msra.mxu0 0.0
    %1785 = vmatprep.subr.mxu0 0.0
    %1786 = vmatpush1.msra.mxu0 0.0
    %1787 = vmatprep.subr.mxu0 0.0
    %1788 = vmatpush1.msra.mxu0 0.0
    %1789 = vmatprep.subr.mxu0 0.0
    %1790 = vmatpush1.msra.mxu0 0.0
    %1791 = vmatprep.subr.mxu0 0.0
    %1792 = vmatpush1.msra.mxu0 0.0
    %1793 = vmatprep.subr.mxu0 0.0
    %1794 = vmatpush1.msra.mxu0 0.0
    %1795 = vmatprep.subr.mxu0 0.0
    %1796 = vmatpush1.msra.mxu0 0.0
    %1797 = vmatprep.subr.mxu0 0.0
    %1798 = vmatpush1.msra.mxu0 0.0
    %1799 = vmatprep.subr.mxu0 0.0
    %1800 = vmatpush1.msra.mxu0 0.0
    %1801 = vmatprep.subr.mxu0 0.0
    %1802 = vmatpush1.msra.mxu0 0.0
    %1803 = vmatprep.subr.mxu0 0.0
    %1804 = vmatpush1.msra.mxu0 0.0
    %1805 = vmatprep.subr.mxu0 0.0
    %1806 = vmatpush1.msra.mxu0 0.0
    %1807 = vmatprep.subr.mxu0 0.0
    %1808 = vmatpush1.msra.mxu0 0.0
    %1809 = vmatprep.subr.mxu0 0.0
    %1810 = vmatpush1.msra.mxu0 0.0
    %1811 = vmatprep.subr.mxu0 0.0
    %1812 = vmatpush1.msra.mxu0 0.0
    %1813 = vmatprep.subr.mxu0 0.0
    %1814 = vmatpush1.msra.mxu0 0.0
    %1815 = vmatprep.subr.mxu0 0.0
    %1816 = vmatpush1.msra.mxu0 0.0
    %1817 = vmatprep.subr.mxu0 0.0
    %1818 = vmatpush1.msra.mxu0 0.0
    %1819 = vmatprep.subr.mxu0 0.0
    %1820 = vmatpush1.msra.mxu0 0.0
    %1821 = vmatprep.subr.mxu0 0.0
    %1822 = vmatpush1.msra.mxu0 0.0
    %1823 = vmatprep.subr.mxu0 0.0
    %1824 = vmatpush1.msra.mxu0 0.0
    %1825 = vmatprep.subr.mxu0 0.0
    %1826 = vmatpush1.msra.mxu0 0.0
    %1827 = vmatprep.subr.mxu0 0.0
    %1828 = vmatpush1.msra.mxu0 0.0
    %1829 = vmatprep.subr.mxu0 0.0
    %1830 = vmatpush1.msra.mxu0 0.0
    %1831 = vmatprep.subr.mxu0 0.0
    %1832 = vmatpush1.msra.mxu0 0.0
    %1833 = vmatprep.subr.mxu0 0.0
    %1834 = vmatpush1.msra.mxu0 0.0
    %1835 = vmatprep.subr.mxu0 0.0
    %1836 = vmatpush1.msra.mxu0 0.0
    %1837 = vmatprep.mubr.f32.mxu0 0.0
    %1838 = vmatmul.mubr.f32.gmra.mrb[0].mxu0 %v1579
    %v1839 = vpop.f32.mrb[0].mxu0
    %v1840 = vadd.f32 0.0, %v1839
    %v1841 = vpop.f32.mrb[0].mxu0
    %1842 = vmatprep.mubr.f32.mxu0 0.0
    %1843 = vmatmul.mubr.f32.gmra.mrb[0].mxu0 %v1582
    %v1844 = vpop.f32.mrb[0].mxu0
    %v1845 = vadd.f32 0.0, %v1844
    %v1846 = vpop.f32.mrb[0].mxu0
    %1847 = vmatprep.mubr.f32.mxu0 0.0
    %1848 = vmatmul.mubr.f32.gmra.mrb[0].mxu0 %v1585
    %v1849 = vpop.f32.mrb[0].mxu0
    %v1850 = vadd.f32 0.0, %v1849
    %v1851 = vpop.f32.mrb[0].mxu0
    %1852 = vmatprep.mubr.f32.mxu0 0.0
    %1853 = vmatmul.mubr.f32.gmra.mrb[0].mxu0 %v1588
    %v1854 = vpop.f32.mrb[0].mxu0
    %v1855 = vadd.f32 0.0, %v1854
    %v1856 = vpop.f32.mrb[0].mxu0
    %1857 = vmatprep.mubr.f32.mxu0 0.0
    %1858 = vmatmul.mubr.f32.gmra.mrb[0].mxu0 %v1591
    %v1859 = vpop.f32.mrb[0].mxu0
    %v1860 = vadd.f32 0.0, %v1859
    %v1861 = vpop.f32.mrb[0].mxu0
    %1862 = vmatprep.mubr.f32.mxu0 0.0
    %1863 = vmatmul.mubr.f32.gmra.mrb[0].mxu0 %v1594
    %v1864 = vpop.f32.mrb[0].mxu0
    %v1865 = vadd.f32 0.0, %v1864
    %v1866 = vpop.f32.mrb[0].mxu0
    %1867 = vmatprep.mubr.f32.mxu0 0.0
    %1868 = vmatmul.mubr.f32.gmra.mrb[0].mxu0 %v1597
    %v1869 = vpop.f32.mrb[0].mxu0
    %v1870 = vadd.f32 0.0, %v1869
    %v1871 = vpop.f32.mrb[0].mxu0
    %1872 = vmatprep.mubr.f32.mxu0 0.0
    %1873 = vmatmul.mubr.f32.gmra.mrb[0].mxu0 %v1600
    %v1874 = vpop.f32.mrb[0].mxu0
    %v1875 = vadd.f32 0.0, %v1874
    %v1876 = vpop.f32.mrb[0].mxu0
    %1877 = vmatprep.mubr.f32.mxu0 0.0
    %1878 = vmatmul.mubr.f32.gmra.mrb[0].mxu0 %v1603
    %v1879 = vpop.f32.mrb[0].mxu0
    %v1880 = vadd.f32 0.0, %v1879
    %v1881 = vpop.f32.mrb[0].mxu0
    %1882 = vmatprep.mubr.f32.mxu0 0.0
    %1883 = vmatmul.mubr.f32.gmra.mrb[0].mxu0 %v1606
    %v1884 = vpop.f32.mrb[0].mxu0
    %v1885 = vadd.f32 0.0, %v1884
    %v1886 = vpop.f32.mrb[0].mxu0
    %1887 = vmatprep.mubr.f32.mxu0 0.0
    %1888 = vmatmul.mubr.f32.gmra.mrb[0].mxu0 %v1609
    %v1889 = vpop.f32.mrb[0].mxu0
    %v1890 = vadd.f32 0.0, %v1889
    %v1891 = vpop.f32.mrb[0].mxu0
    %1892 = vmatprep.mubr.f32.mxu0 0.0
    %1893 = vmatmul.mubr.f32.gmra.mrb[0].mxu0 %v1612
    %v1894 = vpop.f32.mrb[0].mxu0
    %v1895 = vadd.f32 0.0, %v1894
    %v1896 = vpop.f32.mrb[0].mxu0
    %1897 = vmatprep.mubr.f32.mxu0 0.0
    %1898 = vmatmul.mubr.f32.gmra.mrb[0].mxu0 %v1615
    %v1899 = vpop.f32.mrb[0].mxu0
    %v1900 = vadd.f32 0.0, %v1899
    %v1901 = vpop.f32.mrb[0].mxu0
    %1902 = vmatprep.mubr.f32.mxu0 0.0
    %1903 = vmatmul.mubr.f32.gmra.mrb[0].mxu0 %v1618
    %v1904 = vpop.f32.mrb[0].mxu0
    %v1905 = vadd.f32 0.0, %v1904
    %v1906 = vpop.f32.mrb[0].mxu0
    %1907 = vmatprep.mubr.f32.mxu0 0.0
    %1908 = vmatmul.mubr.f32.gmra.mrb[0].mxu0 %v1621
    %v1909 = vpop.f32.mrb[0].mxu0
    %v1910 = vadd.f32 0.0, %v1909
    %v1911 = vpop.f32.mrb[0].mxu0
    %1912 = vmatprep.mubr.f32.mxu0 0.0
    %1913 = vmatmul.mubr.f32.gmra.mrb[0].mxu0 %v1624
    %v1914 = vpop.f32.mrb[0].mxu0
    %v1915 = vadd.f32 0.0, %v1914
    %v1916 = vpop.f32.mrb[0].mxu0
    %1917 = vmatprep.mubr.f32.mxu0 0.0
    %1918 = vmatmul.mubr.f32.gmra.mrb[0].mxu0 %v1627
    %v1919 = vpop.f32.mrb[0].mxu0
    %v1920 = vadd.f32 0.0, %v1919
    %v1921 = vpop.f32.mrb[0].mxu0
    %1922 = vmatprep.mubr.f32.mxu0 0.0
    %1923 = vmatmul.mubr.f32.gmra.mrb[0].mxu0 %v1630
    %v1924 = vpop.f32.mrb[0].mxu0
    %v1925 = vadd.f32 0.0, %v1924
    %v1926 = vpop.f32.mrb[0].mxu0
    %1927 = vmatprep.mubr.f32.mxu0 0.0
    %1928 = vmatmul.mubr.f32.gmra.mrb[0].mxu0 %v1633
    %v1929 = vpop.f32.mrb[0].mxu0
    %v1930 = vadd.f32 0.0, %v1929
    %v1931 = vpop.f32.mrb[0].mxu0
    %1932 = vmatprep.mubr.f32.mxu0 0.0
    %1933 = vmatmul.mubr.f32.gmra.mrb[0].mxu0 %v1636
    %v1934 = vpop.f32.mrb[0].mxu0
    %v1935 = vadd.f32 0.0, %v1934
    %v1936 = vpop.f32.mrb[0].mxu0
    %1937 = vmatprep.mubr.f32.mxu0 0.0
    %1938 = vmatmul.mubr.f32.gmra.mrb[0].mxu0 %v1639
    %v1939 = vpop.f32.mrb[0].mxu0
    %v1940 = vadd.f32 0.0, %v1939
    %v1941 = vpop.f32.mrb[0].mxu0
    %1942 = vmatprep.mubr.f32.mxu0 0.0
    %1943 = vmatmul.mubr.f32.gmra.mrb[0].mxu0 %v1642
    %v1944 = vpop.f32.mrb[0].mxu0
    %v1945 = vadd.f32 0.0, %v1944
    %v1946 = vpop.f32.mrb[0].mxu0
    %1947 = vmatprep.mubr.f32.mxu0 0.0
    %1948 = vmatmul.mubr.f32.gmra.mrb[0].mxu0 %v1645
    %v1949 = vpop.f32.mrb[0].mxu0
    %v1950 = vadd.f32 0.0, %v1949
    %v1951 = vpop.f32.mrb[0].mxu0
    %1952 = vmatprep.mubr.f32.mxu0 0.0
    %1953 = vmatmul.mubr.f32.gmra.mrb[0].mxu0 %v1648
    %v1954 = vpop.f32.mrb[0].mxu0
    %v1955 = vadd.f32 0.0, %v1954
    %v1956 = vpop.f32.mrb[0].mxu0
    %1957 = vmatprep.mubr.f32.mxu0 0.0
    %1958 = vmatmul.mubr.f32.gmra.mrb[0].mxu0 %v1651
    %v1959 = vpop.f32.mrb[0].mxu0
    %v1960 = vadd.f32 0.0, %v1959
    %v1961 = vpop.f32.mrb[0].mxu0
    %1962 = vmatprep.mubr.f32.mxu0 0.0
    %1963 = vmatmul.mubr.f32.gmra.mrb[0].mxu0 %v1654
    %v1964 = vpop.f32.mrb[0].mxu0
    %v1965 = vadd.f32 0.0, %v1964
    %v1966 = vpop.f32.mrb[0].mxu0
    %1967 = vmatprep.mubr.f32.mxu0 0.0
    %1968 = vmatmul.mubr.f32.gmra.mrb[0].mxu0 %v1657
    %v1969 = vpop.f32.mrb[0].mxu0
    %v1970 = vadd.f32 0.0, %v1969
    %v1971 = vpop.f32.mrb[0].mxu0
    %1972 = vmatprep.mubr.f32.mxu0 0.0
    %1973 = vmatmul.mubr.f32.gmra.mrb[0].mxu0 %v1660
    %v1974 = vpop.f32.mrb[0].mxu0
    %v1975 = vadd.f32 0.0, %v1974
    %v1976 = vpop.f32.mrb[0].mxu0
    %1977 = vmatprep.mubr.f32.mxu0 0.0
    %1978 = vmatmul.mubr.f32.gmra.mrb[0].mxu0 %v1663
    %v1979 = vpop.f32.mrb[0].mxu0
    %v1980 = vadd.f32 0.0, %v1979
    %v1981 = vpop.f32.mrb[0].mxu0
    %1982 = vmatprep.mubr.f32.mxu0 0.0
    %1983 = vmatmul.mubr.f32.gmra.mrb[0].mxu0 %v1666
    %v1984 = vpop.f32.mrb[0].mxu0
    %v1985 = vadd.f32 0.0, %v1984
    %v1986 = vpop.f32.mrb[0].mxu0
    %1987 = vmatprep.mubr.f32.mxu0 0.0
    %1988 = vmatmul.mubr.f32.gmra.mrb[0].mxu0 %v1669
    %v1989 = vpop.f32.mrb[0].mxu0
    %v1990 = vadd.f32 0.0, %v1989
    %v1991 = vpop.f32.mrb[0].mxu0
    %1992 = vmatprep.mubr.f32.mxu0 0.0
    %1993 = vmatmul.mubr.f32.gmra.mrb[0].mxu0 %v1672
    %v1994 = vpop.f32.mrb[0].mxu0
    %v1995 = vadd.f32 0.0, %v1994
    %v1996 = vpop.f32.mrb[0].mxu0
    %1997 = vmatprep.mubr.f32.mxu0 0.0
    %1998 = vmatmul.mubr.f32.gmra.mrb[0].mxu0 %v1675
    %v1999 = vpop.f32.mrb[0].mxu0
    %v2000 = vadd.f32 0.0, %v1999
    %v2001 = vpop.f32.mrb[0].mxu0
    %2002 = vmatprep.mubr.f32.mxu0 0.0
    %2003 = vmatmul.mubr.f32.gmra.mrb[0].mxu0 %v1678
    %v2004 = vpop.f32.mrb[0].mxu0
    %v2005 = vadd.f32 0.0, %v2004
    %v2006 = vpop.f32.mrb[0].mxu0
    %2007 = vmatprep.mubr.f32.mxu0 0.0
    %2008 = vmatmul.mubr.f32.gmra.mrb[0].mxu0 %v1681
    %v2009 = vpop.f32.mrb[0].mxu0
    %v2010 = vadd.f32 0.0, %v2009
    %v2011 = vpop.f32.mrb[0].mxu0
    %2012 = vmatprep.mubr.f32.mxu0 0.0
    %2013 = vmatmul.mubr.f32.gmra.mrb[0].mxu0 %v1684
    %v2014 = vpop.f32.mrb[0].mxu0
    %v2015 = vadd.f32 0.0, %v2014
    %v2016 = vpop.f32.mrb[0].mxu0
    %2017 = vmatprep.mubr.f32.mxu0 0.0
    %2018 = vmatmul.mubr.f32.gmra.mrb[0].mxu0 %v1687
    %v2019 = vpop.f32.mrb[0].mxu0
    %v2020 = vadd.f32 0.0, %v2019
    %v2021 = vpop.f32.mrb[0].mxu0
    %2022 = vmatprep.mubr.f32.mxu0 0.0
    %2023 = vmatmul.mubr.f32.gmra.mrb[0].mxu0 %v1690
    %v2024 = vpop.f32.mrb[0].mxu0
    %v2025 = vadd.f32 0.0, %v2024
    %v2026 = vpop.f32.mrb[0].mxu0
    %2027 = vmatprep.mubr.f32.mxu0 0.0
    %2028 = vmatmul.mubr.f32.gmra.mrb[0].mxu0 %v1693
    %v2029 = vpop.f32.mrb[0].mxu0
    %v2030 = vadd.f32 0.0, %v2029
    %v2031 = vpop.f32.mrb[0].mxu0
    %2032 = vmatprep.mubr.f32.mxu0 0.0
    %2033 = vmatmul.mubr.f32.gmra.mrb[0].mxu0 %v1696
    %v2034 = vpop.f32.mrb[0].mxu0
    %v2035 = vadd.f32 0.0, %v2034
    %v2036 = vpop.f32.mrb[0].mxu0
    %2037 = vmatprep.mubr.f32.mxu0 0.0
    %2038 = vmatmul.mubr.f32.gmra.mrb[0].mxu0 %v1699
    %v2039 = vpop.f32.mrb[0].mxu0
    %v2040 = vadd.f32 0.0, %v2039
    %v2041 = vpop.f32.mrb[0].mxu0
    %2042 = vmatprep.mubr.f32.mxu0 0.0
    %2043 = vmatmul.mubr.f32.gmra.mrb[0].mxu0 %v1702
    %v2044 = vpop.f32.mrb[0].mxu0
    %v2045 = vadd.f32 0.0, %v2044
    %v2046 = vpop.f32.mrb[0].mxu0
    %2047 = vmatprep.mubr.f32.mxu0 0.0
    %2048 = vmatmul.mubr.f32.gmra.mrb[0].mxu0 %v1705
    %v2049 = vpop.f32.mrb[0].mxu0
    %v2050 = vadd.f32 0.0, %v2049
    %v2051 = vpop.f32.mrb[0].mxu0
    %2052 = vmatprep.mubr.f32.mxu0 0.0
    %2053 = vmatmul.mubr.f32.gmra.mrb[0].mxu0 %v1708
    %v2054 = vpop.f32.mrb[0].mxu0
    %v2055 = vadd.f32 0.0, %v2054
    %v2056 = vpop.f32.mrb[0].mxu0
    %2057 = vmatprep.mubr.f32.mxu0 0.0
    %2058 = vmatmul.mubr.f32.gmra.mrb[0].mxu0 %v1711
    %v2059 = vpop.f32.mrb[0].mxu0
    %v2060 = vadd.f32 0.0, %v2059
    %v2061 = vpop.f32.mrb[0].mxu0
    %2062 = vmatprep.mubr.f32.mxu0 0.0
    %2063 = vmatmul.mubr.f32.gmra.mrb[0].mxu0 %v1714
    %v2064 = vpop.f32.mrb[0].mxu0
    %v2065 = vadd.f32 0.0, %v2064
    %v2066 = vpop.f32.mrb[0].mxu0
    %2067 = vmatprep.mubr.f32.mxu0 0.0
    %2068 = vmatmul.mubr.f32.gmra.mrb[0].mxu0 %v1717
    %v2069 = vpop.f32.mrb[0].mxu0
    %v2070 = vadd.f32 0.0, %v2069
    %v2071 = vpop.f32.mrb[0].mxu0
    %2072 = vmatprep.mubr.f32.mxu0 0.0
    %2073 = vmatmul.mubr.f32.gmra.mrb[0].mxu0 %v1720
    %v2074 = vpop.f32.mrb[0].mxu0
    %v2075 = vadd.f32 0.0, %v2074
    %v2076 = vpop.f32.mrb[0].mxu0
    %2077 = vmatprep.mubr.f32.mxu0 0.0
    %2078 = vmatmul.mubr.f32.gmra.mrb[0].mxu0 %v1723
    %v2079 = vpop.f32.mrb[0].mxu0
    %v2080 = vadd.f32 0.0, %v2079
    %v2081 = vpop.f32.mrb[0].mxu0
    %2082 = vmatprep.mubr.f32.mxu0 0.0
    %2083 = vmatmul.mubr.f32.gmra.mrb[0].mxu0 %v1726
    %v2084 = vpop.f32.mrb[0].mxu0
    %v2085 = vadd.f32 0.0, %v2084
    %v2086 = vpop.f32.mrb[0].mxu0
    %2087 = vmatprep.mubr.f32.mxu0 0.0
    %2088 = vmatmul.mubr.f32.gmra.mrb[0].mxu0 %v1729
    %v2089 = vpop.f32.mrb[0].mxu0
    %v2090 = vadd.f32 0.0, %v2089
    %v2091 = vpop.f32.mrb[0].mxu0
    %2092 = vmatprep.mubr.f32.mxu0 0.0
    %2093 = vmatmul.mubr.f32.gmra.mrb[0].mxu0 %v1732
    %v2094 = vpop.f32.mrb[0].mxu0
    %v2095 = vadd.f32 0.0, %v2094
    %v2096 = vpop.f32.mrb[0].mxu0
    %2097 = vmatprep.mubr.f32.mxu0 0.0
    %2098 = vmatmul.mubr.f32.gmra.mrb[0].mxu0 %v1735
    %v2099 = vpop.f32.mrb[0].mxu0
    %v2100 = vadd.f32 0.0, %v2099
    %v2101 = vpop.f32.mrb[0].mxu0
    %2102 = vmatprep.mubr.f32.mxu0 0.0
    %2103 = vmatmul.mubr.f32.gmra.mrb[0].mxu0 %v1738
    %v2104 = vpop.f32.mrb[0].mxu0
    %v2105 = vadd.f32 0.0, %v2104
    %v2106 = vpop.f32.mrb[0].mxu0
    %2107 = vmatprep.mubr.f32.mxu0 0.0
    %2108 = vmatmul.mubr.f32.gmra.mrb[0].mxu0 %v1741
    %v2109 = vpop.f32.mrb[0].mxu0
    %v2110 = vadd.f32 0.0, %v2109
    %v2111 = vpop.f32.mrb[0].mxu0
    %2112 = vmatprep.mubr.f32.mxu0 0.0
    %2113 = vmatmul.mubr.f32.gmra.mrb[0].mxu0 %v1744
    %v2114 = vpop.f32.mrb[0].mxu0
    %v2115 = vadd.f32 0.0, %v2114
    %v2116 = vpop.f32.mrb[0].mxu0
    %2117 = vmatprep.mubr.f32.mxu0 0.0
    %2118 = vmatmul.mubr.f32.gmra.mrb[0].mxu0 %v1747
    %v2119 = vpop.f32.mrb[0].mxu0
    %v2120 = vadd.f32 0.0, %v2119
    %v2121 = vpop.f32.mrb[0].mxu0
    %2122 = vmatprep.mubr.f32.mxu0 0.0
    %2123 = vmatmul.mubr.f32.gmra.mrb[0].mxu0 %v1750
    %v2124 = vpop.f32.mrb[0].mxu0
    %v2125 = vadd.f32 0.0, %v2124
    %v2126 = vpop.f32.mrb[0].mxu0
    %2127 = vmatprep.mubr.f32.mxu0 0.0
    %2128 = vmatmul.mubr.f32.gmra.mrb[0].mxu0 %v1753
    %v2129 = vpop.f32.mrb[0].mxu0
    %v2130 = vadd.f32 0.0, %v2129
    %v2131 = vpop.f32.mrb[0].mxu0
    %2132 = vmatprep.mubr.f32.mxu0 0.0
    %2133 = vmatmul.mubr.f32.gmra.mrb[0].mxu0 %v1756
    %v2134 = vpop.f32.mrb[0].mxu0
    %v2135 = vadd.f32 0.0, %v2134
    %v2136 = vpop.f32.mrb[0].mxu0
    %2137 = vmatprep.mubr.f32.mxu0 0.0
    %2138 = vmatmul.mubr.f32.gmra.mrb[0].mxu0 %v1759
    %v2139 = vpop.f32.mrb[0].mxu0
    %v2140 = vadd.f32 0.0, %v2139
    %v2141 = vpop.f32.mrb[0].mxu0
    %2142 = vmatprep.mubr.f32.mxu0 0.0
    %2143 = vmatmul.mubr.f32.gmra.mrb[0].mxu0 %v1762
    %v2144 = vpop.f32.mrb[0].mxu0
    %v2145 = vadd.f32 0.0, %v2144
    %v2146 = vpop.f32.mrb[0].mxu0
    %2147 = vmatprep.mubr.f32.mxu0 0.0
    %2148 = vmatmul.mubr.f32.gmra.mrb[0].mxu0 %v1765
    %v2149 = vpop.f32.mrb[0].mxu0
    %v2150 = vadd.f32 0.0, %v2149
    %v2151 = vpop.f32.mrb[0].mxu0
    %2152 = vmatprep.mubr.f32.mxu0 0.0
    %2153 = vmatmul.mubr.f32.gmra.mrb[0].mxu0 %v1768
    %v2154 = vpop.f32.mrb[0].mxu0
    %v2155 = vadd.f32 0.0, %v2154
    %v2156 = vpop.f32.mrb[0].mxu0
    %2157 = vdwg.mxu0
    %v2158 = vadd.f32 %v1130, %v1840
    %v2159 = vadd.f32 %v1135, %v1845
    %v2160 = vadd.f32 %v1140, %v1850
    %v2161 = vadd.f32 %v1145, %v1855
    %v2162 = vadd.f32 %v1150, %v1860
    %v2163 = vadd.f32 %v1155, %v1865
    %v2164 = vadd.f32 %v1160, %v1870
    %v2165 = vadd.f32 %v1165, %v1875
    %v2166 = vadd.f32 %v1170, %v1880
    %v2167 = vadd.f32 %v1175, %v1885
    %v2168 = vadd.f32 %v1180, %v1890
    %v2169 = vadd.f32 %v1185, %v1895
    %v2170 = vadd.f32 %v1190, %v1900
    %v2171 = vadd.f32 %v1195, %v1905
    %v2172 = vadd.f32 %v1200, %v1910
    %v2173 = vadd.f32 %v1205, %v1915
    %v2174 = vadd.f32 %v1210, %v1920
    %v2175 = vadd.f32 %v1215, %v1925
    %v2176 = vadd.f32 %v1220, %v1930
    %v2177 = vadd.f32 %v1225, %v1935
    %v2178 = vadd.f32 %v1230, %v1940
    %v2179 = vadd.f32 %v1235, %v1945
    %v2180 = vadd.f32 %v1240, %v1950
    %v2181 = vadd.f32 %v1245, %v1955
    %v2182 = vadd.f32 %v1250, %v1960
    %v2183 = vadd.f32 %v1255, %v1965
    %v2184 = vadd.f32 %v1260, %v1970
    %v2185 = vadd.f32 %v1265, %v1975
    %v2186 = vadd.f32 %v1270, %v1980
    %v2187 = vadd.f32 %v1275, %v1985
    %v2188 = vadd.f32 %v1280, %v1990
    %v2189 = vadd.f32 %v1285, %v1995
    %v2190 = vadd.f32 %v1290, %v2000
    %v2191 = vadd.f32 %v1295, %v2005
    %v2192 = vadd.f32 %v1300, %v2010
    %v2193 = vadd.f32 %v1305, %v2015
    %v2194 = vadd.f32 %v1310, %v2020
    %v2195 = vadd.f32 %v1315, %v2025
    %v2196 = vadd.f32 %v1320, %v2030
    %v2197 = vadd.f32 %v1325, %v2035
    %v2198 = vadd.f32 %v1330, %v2040
    %v2199 = vadd.f32 %v1335, %v2045
    %v2200 = vadd.f32 %v1340, %v2050
    %v2201 = vadd.f32 %v1345, %v2055
    %v2202 = vadd.f32 %v1350, %v2060
    %v2203 = vadd.f32 %v1355, %v2065
    %v2204 = vadd.f32 %v1360, %v2070
    %v2205 = vadd.f32 %v1365, %v2075
    %v2206 = vadd.f32 %v1370, %v2080
    %v2207 = vadd.f32 %v1375, %v2085
    %v2208 = vadd.f32 %v1380, %v2090
    %v2209 = vadd.f32 %v1385, %v2095
    %v2210 = vadd.f32 %v1390, %v2100
    %v2211 = vadd.f32 %v1395, %v2105
    %v2212 = vadd.f32 %v1400, %v2110
    %v2213 = vadd.f32 %v1405, %v2115
    %v2214 = vadd.f32 %v1410, %v2120
    %v2215 = vadd.f32 %v1415, %v2125
    %v2216 = vadd.f32 %v1420, %v2130
    %v2217 = vadd.f32 %v1425, %v2135
    %v2218 = vadd.f32 %v1430, %v2140
    %v2219 = vadd.f32 %v1435, %v2145
    %v2220 = vadd.f32 %v1440, %v2150
    %v2221 = vadd.f32 %v1445, %v2155
    %s2222 = scalar_lea.vmem %s0, 24
    %v2223 = vld [vmem:[%s2222] sm:$0xff]
    %v2224 = vld [vmem:[%s2222 + $0x8] sm:$0xff]
    %v2225 = vld [vmem:[%s2222 + $0x18] sm:$0xff]
    %v2226 = vld [vmem:[%s2222 + $0x20] sm:$0xff]
    %v2227 = vld [vmem:[%s2222 + $0x30] sm:$0xff]
    %v2228 = vld [vmem:[%s2222 + $0x38] sm:$0xff]
    %v2229 = vld [vmem:[%s2222 + $0x48] sm:$0xff]
    %v2230 = vld [vmem:[%s2222 + $0x50] sm:$0xff]
    %v2231 = vld [vmem:[%s2222 + $0x60] sm:$0xff]
    %v2232 = vld [vmem:[%s2222 + $0x68] sm:$0xff]
    %v2233 = vld [vmem:[%s2222 + $0x78] sm:$0xff]
    %v2234 = vld [vmem:[%s2222 + $0x80] sm:$0xff]
    %v2235 = vld [vmem:[%s2222 + $0x90] sm:$0xff]
    %v2236 = vld [vmem:[%s2222 + $0x98] sm:$0xff]
    %v2237 = vld [vmem:[%s2222 + $0xa8] sm:$0xff]
    %v2238 = vld [vmem:[%s2222 + $0xb0] sm:$0xff]
    %v2239 = vld [vmem:[%s2222 + $0xc0] sm:$0xff]
    %v2240 = vld [vmem:[%s2222 + $0xc8] sm:$0xff]
    %v2241 = vld [vmem:[%s2222 + $0xd8] sm:$0xff]
    %v2242 = vld [vmem:[%s2222 + $0xe0] sm:$0xff]
    %v2243 = vld [vmem:[%s2222 + $0xf0] sm:$0xff]
    %v2244 = vld [vmem:[%s2222 + $0xf8] sm:$0xff]
    %v2245 = vld [vmem:[%s2222 + $0x108] sm:$0xff]
    %v2246 = vld [vmem:[%s2222 + $0x110] sm:$0xff]
    %v2247 = vld [vmem:[%s2222 + $0x120] sm:$0xff]
    %v2248 = vld [vmem:[%s2222 + $0x128] sm:$0xff]
    %v2249 = vld [vmem:[%s2222 + $0x138] sm:$0xff]
    %v2250 = vld [vmem:[%s2222 + $0x140] sm:$0xff]
    %v2251 = vld [vmem:[%s2222 + $0x150] sm:$0xff]
    %v2252 = vld [vmem:[%s2222 + $0x158] sm:$0xff]
    %v2253 = vld [vmem:[%s2222 + $0x168] sm:$0xff]
    %v2254 = vld [vmem:[%s2222 + $0x170] sm:$0xff]
    %v2255 = vld [vmem:[%s2222 + $0x1b0] sm:$0xff]
    %v2256 = vld [vmem:[%s2222 + $0x1b8] sm:$0xff]
    %v2257 = vld [vmem:[%s2222 + $0x1c8] sm:$0xff]
    %v2258 = vld [vmem:[%s2222 + $0x1d0] sm:$0xff]
    %v2259 = vld [vmem:[%s2222 + $0x1e0] sm:$0xff]
    %v2260 = vld [vmem:[%s2222 + $0x1e8] sm:$0xff]
    %v2261 = vld [vmem:[%s2222 + $0x1f8] sm:$0xff]
    %v2262 = vld [vmem:[%s2222 + $0x200] sm:$0xff]
    %v2263 = vld [vmem:[%s2222 + $0x210] sm:$0xff]
    %v2264 = vld [vmem:[%s2222 + $0x218] sm:$0xff]
    %v2265 = vld [vmem:[%s2222 + $0x228] sm:$0xff]
    %v2266 = vld [vmem:[%s2222 + $0x230] sm:$0xff]
    %v2267 = vld [vmem:[%s2222 + $0x240] sm:$0xff]
    %v2268 = vld [vmem:[%s2222 + $0x248] sm:$0xff]
    %v2269 = vld [vmem:[%s2222 + $0x258] sm:$0xff]
    %v2270 = vld [vmem:[%s2222 + $0x260] sm:$0xff]
    %v2271 = vld [vmem:[%s2222 + $0x270] sm:$0xff]
    %v2272 = vld [vmem:[%s2222 + $0x278] sm:$0xff]
    %v2273 = vld [vmem:[%s2222 + $0x288] sm:$0xff]
    %v2274 = vld [vmem:[%s2222 + $0x290] sm:$0xff]
    %v2275 = vld [vmem:[%s2222 + $0x2a0] sm:$0xff]
    %v2276 = vld [vmem:[%s2222 + $0x2a8] sm:$0xff]
    %v2277 = vld [vmem:[%s2222 + $0x2b8] sm:$0xff]
    %v2278 = vld [vmem:[%s2222 + $0x2c0] sm:$0xff]
    %v2279 = vld [vmem:[%s2222 + $0x2d0] sm:$0xff]
    %v2280 = vld [vmem:[%s2222 + $0x2d8] sm:$0xff]
    %v2281 = vld [vmem:[%s2222 + $0x2e8] sm:$0xff]
    %v2282 = vld [vmem:[%s2222 + $0x2f0] sm:$0xff]
    %v2283 = vld [vmem:[%s2222 + $0x300] sm:$0xff]
    %v2284 = vld [vmem:[%s2222 + $0x308] sm:$0xff]
    %v2285 = vld [vmem:[%s2222 + $0x318] sm:$0xff]
    %v2286 = vld [vmem:[%s2222 + $0x320] sm:$0xff]
    %v2287 = vmax.f32 %v2223, 0.0
    %v2288 = vmax.f32 %v2224, 0.0
    %v2289 = vmax.f32 %v2225, 0.0
    %v2290 = vmax.f32 %v2226, 0.0
    %v2291 = vmax.f32 %v2227, 0.0
    %v2292 = vmax.f32 %v2228, 0.0
    %v2293 = vmax.f32 %v2229, 0.0
    %v2294 = vmax.f32 %v2230, 0.0
    %v2295 = vmax.f32 %v2231, 0.0
    %v2296 = vmax.f32 %v2232, 0.0
    %v2297 = vmax.f32 %v2233, 0.0
    %v2298 = vmax.f32 %v2234, 0.0
    %v2299 = vmax.f32 %v2235, 0.0
    %v2300 = vmax.f32 %v2236, 0.0
    %v2301 = vmax.f32 %v2237, 0.0
    %v2302 = vmax.f32 %v2238, 0.0
    %v2303 = vmax.f32 %v2239, 0.0
    %v2304 = vmax.f32 %v2240, 0.0
    %v2305 = vmax.f32 %v2241, 0.0
    %v2306 = vmax.f32 %v2242, 0.0
    %v2307 = vmax.f32 %v2243, 0.0
    %v2308 = vmax.f32 %v2244, 0.0
    %v2309 = vmax.f32 %v2245, 0.0
    %v2310 = vmax.f32 %v2246, 0.0
    %v2311 = vmax.f32 %v2247, 0.0
    %v2312 = vmax.f32 %v2248, 0.0
    %v2313 = vmax.f32 %v2249, 0.0
    %v2314 = vmax.f32 %v2250, 0.0
    %v2315 = vmax.f32 %v2251, 0.0
    %v2316 = vmax.f32 %v2252, 0.0
    %v2317 = vmax.f32 %v2253, 0.0
    %v2318 = vmax.f32 %v2254, 0.0
    %v2319 = vmax.f32 %v2255, 0.0
    %v2320 = vmax.f32 %v2256, 0.0
    %v2321 = vmax.f32 %v2257, 0.0
    %v2322 = vmax.f32 %v2258, 0.0
    %v2323 = vmax.f32 %v2259, 0.0
    %v2324 = vmax.f32 %v2260, 0.0
    %v2325 = vmax.f32 %v2261, 0.0
    %v2326 = vmax.f32 %v2262, 0.0
    %v2327 = vmax.f32 %v2263, 0.0
    %v2328 = vmax.f32 %v2264, 0.0
    %v2329 = vmax.f32 %v2265, 0.0
    %v2330 = vmax.f32 %v2266, 0.0
    %v2331 = vmax.f32 %v2267, 0.0
    %v2332 = vmax.f32 %v2268, 0.0
    %v2333 = vmax.f32 %v2269, 0.0
    %v2334 = vmax.f32 %v2270, 0.0
    %v2335 = vmax.f32 %v2271, 0.0
    %v2336 = vmax.f32 %v2272, 0.0
    %v2337 = vmax.f32 %v2273, 0.0
    %v2338 = vmax.f32 %v2274, 0.0
    %v2339 = vmax.f32 %v2275, 0.0
    %v2340 = vmax.f32 %v2276, 0.0
    %v2341 = vmax.f32 %v2277, 0.0
    %v2342 = vmax.f32 %v2278, 0.0
    %v2343 = vmax.f32 %v2279, 0.0
    %v2344 = vmax.f32 %v2280, 0.0
    %v2345 = vmax.f32 %v2281, 0.0
    %v2346 = vmax.f32 %v2282, 0.0
    %v2347 = vmax.f32 %v2283, 0.0
    %v2348 = vmax.f32 %v2284, 0.0
    %v2349 = vmax.f32 %v2285, 0.0
    %v2350 = vmax.f32 %v2286, 0.0
    %s2351 = scalar_lea.vmem %s1, 12
    %v2352 = vld [vmem:[%s2351] sm:$0xf]
    %v2354 = vsel %vm286, %v2287, 0
    %v2357 = vsel %vm286, %v2288, 0
    %v2360 = vsel %vm286, %v2289, 0
    %v2363 = vsel %vm286, %v2290, 0
    %v2366 = vsel %vm286, %v2291, 0
    %v2369 = vsel %vm286, %v2292, 0
    %v2372 = vsel %vm286, %v2293, 0
    %v2375 = vsel %vm286, %v2294, 0
    %v2378 = vsel %vm286, %v2295, 0
    %v2381 = vsel %vm286, %v2296, 0
    %v2384 = vsel %vm286, %v2297, 0
    %v2387 = vsel %vm286, %v2298, 0
    %v2390 = vsel %vm286, %v2299, 0
    %v2393 = vsel %vm286, %v2300, 0
    %v2396 = vsel %vm286, %v2301, 0
    %v2399 = vsel %vm286, %v2302, 0
    %v2402 = vsel %vm286, %v2303, 0
    %v2405 = vsel %vm286, %v2304, 0
    %v2408 = vsel %vm286, %v2305, 0
    %v2411 = vsel %vm286, %v2306, 0
    %v2414 = vsel %vm286, %v2307, 0
    %v2417 = vsel %vm286, %v2308, 0
    %v2420 = vsel %vm286, %v2309, 0
    %v2423 = vsel %vm286, %v2310, 0
    %v2426 = vsel %vm286, %v2311, 0
    %v2429 = vsel %vm286, %v2312, 0
    %v2432 = vsel %vm286, %v2313, 0
    %v2435 = vsel %vm286, %v2314, 0
    %v2438 = vsel %vm286, %v2315, 0
    %v2441 = vsel %vm286, %v2316, 0
    %v2444 = vsel %vm286, %v2317, 0
    %v2447 = vsel %vm286, %v2318, 0
    %v2450 = vsel %vm286, %v2319, 0
    %v2453 = vsel %vm286, %v2320, 0
    %v2456 = vsel %vm286, %v2321, 0
    %v2459 = vsel %vm286, %v2322, 0
    %v2462 = vsel %vm286, %v2323, 0
    %v2465 = vsel %vm286, %v2324, 0
    %v2468 = vsel %vm286, %v2325, 0
    %v2471 = vsel %vm286, %v2326, 0
    %v2474 = vsel %vm286, %v2327, 0
    %v2477 = vsel %vm286, %v2328, 0
    %v2480 = vsel %vm286, %v2329, 0
    %v2483 = vsel %vm286, %v2330, 0
    %v2486 = vsel %vm286, %v2331, 0
    %v2489 = vsel %vm286, %v2332, 0
    %v2492 = vsel %vm286, %v2333, 0
    %v2495 = vsel %vm286, %v2334, 0
    %v2498 = vsel %vm286, %v2335, 0
    %v2501 = vsel %vm286, %v2336, 0
    %v2504 = vsel %vm286, %v2337, 0
    %v2507 = vsel %vm286, %v2338, 0
    %v2510 = vsel %vm286, %v2339, 0
    %v2513 = vsel %vm286, %v2340, 0
    %v2516 = vsel %vm286, %v2341, 0
    %v2519 = vsel %vm286, %v2342, 0
    %v2522 = vsel %vm286, %v2343, 0
    %v2525 = vsel %vm286, %v2344, 0
    %v2528 = vsel %vm286, %v2345, 0
    %v2531 = vsel %vm286, %v2346, 0
    %v2534 = vsel %vm286, %v2347, 0
    %v2537 = vsel %vm286, %v2348, 0
    %v2540 = vsel %vm286, %v2349, 0
    %v2543 = vsel %vm286, %v2350, 0
    %v2546 = vsel %vm479, %v2352, 0
    %2548 = vmatprep.subr.mxu0 0.0
    %2549 = vmatpush1.msra.mxu0 %v2546
    %2550 = vmatprep.subr.mxu0 0.0
    %2551 = vmatpush1.msra.mxu0 0.0
    %2552 = vmatprep.subr.mxu0 0.0
    %2553 = vmatpush1.msra.mxu0 0.0
    %2554 = vmatprep.subr.mxu0 0.0
    %2555 = vmatpush1.msra.mxu0 0.0
    %2556 = vmatprep.subr.mxu0 0.0
    %2557 = vmatpush1.msra.mxu0 0.0
    %2558 = vmatprep.subr.mxu0 0.0
    %2559 = vmatpush1.msra.mxu0 0.0
    %2560 = vmatprep.subr.mxu0 0.0
    %2561 = vmatpush1.msra.mxu0 0.0
    %2562 = vmatprep.subr.mxu0 0.0
    %2563 = vmatpush1.msra.mxu0 0.0
    %2564 = vmatprep.subr.mxu0 0.0
    %2565 = vmatpush1.msra.mxu0 0.0
    %2566 = vmatprep.subr.mxu0 0.0
    %2567 = vmatpush1.msra.mxu0 0.0
    %2568 = vmatprep.subr.mxu0 0.0
    %2569 = vmatpush1.msra.mxu0 0.0
    %2570 = vmatprep.subr.mxu0 0.0
    %2571 = vmatpush1.msra.mxu0 0.0
    %2572 = vmatprep.subr.mxu0 0.0
    %2573 = vmatpush1.msra.mxu0 0.0
    %2574 = vmatprep.subr.mxu0 0.0
    %2575 = vmatpush1.msra.mxu0 0.0
    %2576 = vmatprep.subr.mxu0 0.0
    %2577 = vmatpush1.msra.mxu0 0.0
    %2578 = vmatprep.subr.mxu0 0.0
    %2579 = vmatpush1.msra.mxu0 0.0
    %2580 = vmatprep.subr.mxu0 0.0
    %2581 = vmatpush1.msra.mxu0 0.0
    %2582 = vmatprep.subr.mxu0 0.0
    %2583 = vmatpush1.msra.mxu0 0.0
    %2584 = vmatprep.subr.mxu0 0.0
    %2585 = vmatpush1.msra.mxu0 0.0
    %2586 = vmatprep.subr.mxu0 0.0
    %2587 = vmatpush1.msra.mxu0 0.0
    %2588 = vmatprep.subr.mxu0 0.0
    %2589 = vmatpush1.msra.mxu0 0.0
    %2590 = vmatprep.subr.mxu0 0.0
    %2591 = vmatpush1.msra.mxu0 0.0
    %2592 = vmatprep.subr.mxu0 0.0
    %2593 = vmatpush1.msra.mxu0 0.0
    %2594 = vmatprep.subr.mxu0 0.0
    %2595 = vmatpush1.msra.mxu0 0.0
    %2596 = vmatprep.subr.mxu0 0.0
    %2597 = vmatpush1.msra.mxu0 0.0
    %2598 = vmatprep.subr.mxu0 0.0
    %2599 = vmatpush1.msra.mxu0 0.0
    %2600 = vmatprep.subr.mxu0 0.0
    %2601 = vmatpush1.msra.mxu0 0.0
    %2602 = vmatprep.subr.mxu0 0.0
    %2603 = vmatpush1.msra.mxu0 0.0
    %2604 = vmatprep.subr.mxu0 0.0
    %2605 = vmatpush1.msra.mxu0 0.0
    %2606 = vmatprep.subr.mxu0 0.0
    %2607 = vmatpush1.msra.mxu0 0.0
    %2608 = vmatprep.subr.mxu0 0.0
    %2609 = vmatpush1.msra.mxu0 0.0
    %2610 = vmatprep.subr.mxu0 0.0
    %2611 = vmatpush1.msra.mxu0 0.0
    %2612 = vmatprep.mubr.f32.mxu0 0.0
    %2613 = vmatmul.mubr.f32.gmra.mrb[0].mxu0 %v2354
    %v2614 = vpop.f32.mrb[0].mxu0
    %v2615 = vadd.f32 0.0, %v2614
    %v2616 = vpop.f32.mrb[0].mxu0
    %2617 = vmatprep.mubr.f32.mxu0 0.0
    %2618 = vmatmul.mubr.f32.gmra.mrb[0].mxu0 %v2357
    %v2619 = vpop.f32.mrb[0].mxu0
    %v2620 = vadd.f32 0.0, %v2619
    %v2621 = vpop.f32.mrb[0].mxu0
    %2622 = vmatprep.mubr.f32.mxu0 0.0
    %2623 = vmatmul.mubr.f32.gmra.mrb[0].mxu0 %v2360
    %v2624 = vpop.f32.mrb[0].mxu0
    %v2625 = vadd.f32 0.0, %v2624
    %v2626 = vpop.f32.mrb[0].mxu0
    %2627 = vmatprep.mubr.f32.mxu0 0.0
    %2628 = vmatmul.mubr.f32.gmra.mrb[0].mxu0 %v2363
    %v2629 = vpop.f32.mrb[0].mxu0
    %v2630 = vadd.f32 0.0, %v2629
    %v2631 = vpop.f32.mrb[0].mxu0
    %2632 = vmatprep.mubr.f32.mxu0 0.0
    %2633 = vmatmul.mubr.f32.gmra.mrb[0].mxu0 %v2366
    %v2634 = vpop.f32.mrb[0].mxu0
    %v2635 = vadd.f32 0.0, %v2634
    %v2636 = vpop.f32.mrb[0].mxu0
    %2637 = vmatprep.mubr.f32.mxu0 0.0
    %2638 = vmatmul.mubr.f32.gmra.mrb[0].mxu0 %v2369
    %v2639 = vpop.f32.mrb[0].mxu0
    %v2640 = vadd.f32 0.0, %v2639
    %v2641 = vpop.f32.mrb[0].mxu0
    %2642 = vmatprep.mubr.f32.mxu0 0.0
    %2643 = vmatmul.mubr.f32.gmra.mrb[0].mxu0 %v2372
    %v2644 = vpop.f32.mrb[0].mxu0
    %v2645 = vadd.f32 0.0, %v2644
    %v2646 = vpop.f32.mrb[0].mxu0
    %2647 = vmatprep.mubr.f32.mxu0 0.0
    %2648 = vmatmul.mubr.f32.gmra.mrb[0].mxu0 %v2375
    %v2649 = vpop.f32.mrb[0].mxu0
    %v2650 = vadd.f32 0.0, %v2649
    %v2651 = vpop.f32.mrb[0].mxu0
    %2652 = vmatprep.mubr.f32.mxu0 0.0
    %2653 = vmatmul.mubr.f32.gmra.mrb[0].mxu0 %v2378
    %v2654 = vpop.f32.mrb[0].mxu0
    %v2655 = vadd.f32 0.0, %v2654
    %v2656 = vpop.f32.mrb[0].mxu0
    %2657 = vmatprep.mubr.f32.mxu0 0.0
    %2658 = vmatmul.mubr.f32.gmra.mrb[0].mxu0 %v2381
    %v2659 = vpop.f32.mrb[0].mxu0
    %v2660 = vadd.f32 0.0, %v2659
    %v2661 = vpop.f32.mrb[0].mxu0
    %2662 = vmatprep.mubr.f32.mxu0 0.0
    %2663 = vmatmul.mubr.f32.gmra.mrb[0].mxu0 %v2384
    %v2664 = vpop.f32.mrb[0].mxu0
    %v2665 = vadd.f32 0.0, %v2664
    %v2666 = vpop.f32.mrb[0].mxu0
    %2667 = vmatprep.mubr.f32.mxu0 0.0
    %2668 = vmatmul.mubr.f32.gmra.mrb[0].mxu0 %v2387
    %v2669 = vpop.f32.mrb[0].mxu0
    %v2670 = vadd.f32 0.0, %v2669
    %v2671 = vpop.f32.mrb[0].mxu0
    %2672 = vmatprep.mubr.f32.mxu0 0.0
    %2673 = vmatmul.mubr.f32.gmra.mrb[0].mxu0 %v2390
    %v2674 = vpop.f32.mrb[0].mxu0
    %v2675 = vadd.f32 0.0, %v2674
    %v2676 = vpop.f32.mrb[0].mxu0
    %2677 = vmatprep.mubr.f32.mxu0 0.0
    %2678 = vmatmul.mubr.f32.gmra.mrb[0].mxu0 %v2393
    %v2679 = vpop.f32.mrb[0].mxu0
    %v2680 = vadd.f32 0.0, %v2679
    %v2681 = vpop.f32.mrb[0].mxu0
    %2682 = vmatprep.mubr.f32.mxu0 0.0
    %2683 = vmatmul.mubr.f32.gmra.mrb[0].mxu0 %v2396
    %v2684 = vpop.f32.mrb[0].mxu0
    %v2685 = vadd.f32 0.0, %v2684
    %v2686 = vpop.f32.mrb[0].mxu0
    %2687 = vmatprep.mubr.f32.mxu0 0.0
    %2688 = vmatmul.mubr.f32.gmra.mrb[0].mxu0 %v2399
    %v2689 = vpop.f32.mrb[0].mxu0
    %v2690 = vadd.f32 0.0, %v2689
    %v2691 = vpop.f32.mrb[0].mxu0
    %2692 = vmatprep.mubr.f32.mxu0 0.0
    %2693 = vmatmul.mubr.f32.gmra.mrb[0].mxu0 %v2402
    %v2694 = vpop.f32.mrb[0].mxu0
    %v2695 = vadd.f32 0.0, %v2694
    %v2696 = vpop.f32.mrb[0].mxu0
    %2697 = vmatprep.mubr.f32.mxu0 0.0
    %2698 = vmatmul.mubr.f32.gmra.mrb[0].mxu0 %v2405
    %v2699 = vpop.f32.mrb[0].mxu0
    %v2700 = vadd.f32 0.0, %v2699
    %v2701 = vpop.f32.mrb[0].mxu0
    %2702 = vmatprep.mubr.f32.mxu0 0.0
    %2703 = vmatmul.mubr.f32.gmra.mrb[0].mxu0 %v2408
    %v2704 = vpop.f32.mrb[0].mxu0
    %v2705 = vadd.f32 0.0, %v2704
    %v2706 = vpop.f32.mrb[0].mxu0
    %2707 = vmatprep.mubr.f32.mxu0 0.0
    %2708 = vmatmul.mubr.f32.gmra.mrb[0].mxu0 %v2411
    %v2709 = vpop.f32.mrb[0].mxu0
    %v2710 = vadd.f32 0.0, %v2709
    %v2711 = vpop.f32.mrb[0].mxu0
    %2712 = vmatprep.mubr.f32.mxu0 0.0
    %2713 = vmatmul.mubr.f32.gmra.mrb[0].mxu0 %v2414
    %v2714 = vpop.f32.mrb[0].mxu0
    %v2715 = vadd.f32 0.0, %v2714
    %v2716 = vpop.f32.mrb[0].mxu0
    %2717 = vmatprep.mubr.f32.mxu0 0.0
    %2718 = vmatmul.mubr.f32.gmra.mrb[0].mxu0 %v2417
    %v2719 = vpop.f32.mrb[0].mxu0
    %v2720 = vadd.f32 0.0, %v2719
    %v2721 = vpop.f32.mrb[0].mxu0
    %2722 = vmatprep.mubr.f32.mxu0 0.0
    %2723 = vmatmul.mubr.f32.gmra.mrb[0].mxu0 %v2420
    %v2724 = vpop.f32.mrb[0].mxu0
    %v2725 = vadd.f32 0.0, %v2724
    %v2726 = vpop.f32.mrb[0].mxu0
    %2727 = vmatprep.mubr.f32.mxu0 0.0
    %2728 = vmatmul.mubr.f32.gmra.mrb[0].mxu0 %v2423
    %v2729 = vpop.f32.mrb[0].mxu0
    %v2730 = vadd.f32 0.0, %v2729
    %v2731 = vpop.f32.mrb[0].mxu0
    %2732 = vmatprep.mubr.f32.mxu0 0.0
    %2733 = vmatmul.mubr.f32.gmra.mrb[0].mxu0 %v2426
    %v2734 = vpop.f32.mrb[0].mxu0
    %v2735 = vadd.f32 0.0, %v2734
    %v2736 = vpop.f32.mrb[0].mxu0
    %2737 = vmatprep.mubr.f32.mxu0 0.0
    %2738 = vmatmul.mubr.f32.gmra.mrb[0].mxu0 %v2429
    %v2739 = vpop.f32.mrb[0].mxu0
    %v2740 = vadd.f32 0.0, %v2739
    %v2741 = vpop.f32.mrb[0].mxu0
    %2742 = vmatprep.mubr.f32.mxu0 0.0
    %2743 = vmatmul.mubr.f32.gmra.mrb[0].mxu0 %v2432
    %v2744 = vpop.f32.mrb[0].mxu0
    %v2745 = vadd.f32 0.0, %v2744
    %v2746 = vpop.f32.mrb[0].mxu0
    %2747 = vmatprep.mubr.f32.mxu0 0.0
    %2748 = vmatmul.mubr.f32.gmra.mrb[0].mxu0 %v2435
    %v2749 = vpop.f32.mrb[0].mxu0
    %v2750 = vadd.f32 0.0, %v2749
    %v2751 = vpop.f32.mrb[0].mxu0
    %2752 = vmatprep.mubr.f32.mxu0 0.0
    %2753 = vmatmul.mubr.f32.gmra.mrb[0].mxu0 %v2438
    %v2754 = vpop.f32.mrb[0].mxu0
    %v2755 = vadd.f32 0.0, %v2754
    %v2756 = vpop.f32.mrb[0].mxu0
    %2757 = vmatprep.mubr.f32.mxu0 0.0
    %2758 = vmatmul.mubr.f32.gmra.mrb[0].mxu0 %v2441
    %v2759 = vpop.f32.mrb[0].mxu0
    %v2760 = vadd.f32 0.0, %v2759
    %v2761 = vpop.f32.mrb[0].mxu0
    %2762 = vmatprep.mubr.f32.mxu0 0.0
    %2763 = vmatmul.mubr.f32.gmra.mrb[0].mxu0 %v2444
    %v2764 = vpop.f32.mrb[0].mxu0
    %v2765 = vadd.f32 0.0, %v2764
    %v2766 = vpop.f32.mrb[0].mxu0
    %2767 = vmatprep.mubr.f32.mxu0 0.0
    %2768 = vmatmul.mubr.f32.gmra.mrb[0].mxu0 %v2447
    %v2769 = vpop.f32.mrb[0].mxu0
    %v2770 = vadd.f32 0.0, %v2769
    %v2771 = vpop.f32.mrb[0].mxu0
    %2772 = vmatprep.mubr.f32.mxu0 0.0
    %2773 = vmatmul.mubr.f32.gmra.mrb[0].mxu0 %v2450
    %v2774 = vpop.f32.mrb[0].mxu0
    %v2775 = vadd.f32 0.0, %v2774
    %v2776 = vpop.f32.mrb[0].mxu0
    %2777 = vmatprep.mubr.f32.mxu0 0.0
    %2778 = vmatmul.mubr.f32.gmra.mrb[0].mxu0 %v2453
    %v2779 = vpop.f32.mrb[0].mxu0
    %v2780 = vadd.f32 0.0, %v2779
    %v2781 = vpop.f32.mrb[0].mxu0
    %2782 = vmatprep.mubr.f32.mxu0 0.0
    %2783 = vmatmul.mubr.f32.gmra.mrb[0].mxu0 %v2456
    %v2784 = vpop.f32.mrb[0].mxu0
    %v2785 = vadd.f32 0.0, %v2784
    %v2786 = vpop.f32.mrb[0].mxu0
    %2787 = vmatprep.mubr.f32.mxu0 0.0
    %2788 = vmatmul.mubr.f32.gmra.mrb[0].mxu0 %v2459
    %v2789 = vpop.f32.mrb[0].mxu0
    %v2790 = vadd.f32 0.0, %v2789
    %v2791 = vpop.f32.mrb[0].mxu0
    %2792 = vmatprep.mubr.f32.mxu0 0.0
    %2793 = vmatmul.mubr.f32.gmra.mrb[0].mxu0 %v2462
    %v2794 = vpop.f32.mrb[0].mxu0
    %v2795 = vadd.f32 0.0, %v2794
    %v2796 = vpop.f32.mrb[0].mxu0
    %2797 = vmatprep.mubr.f32.mxu0 0.0
    %2798 = vmatmul.mubr.f32.gmra.mrb[0].mxu0 %v2465
    %v2799 = vpop.f32.mrb[0].mxu0
    %v2800 = vadd.f32 0.0, %v2799
    %v2801 = vpop.f32.mrb[0].mxu0
    %2802 = vmatprep.mubr.f32.mxu0 0.0
    %2803 = vmatmul.mubr.f32.gmra.mrb[0].mxu0 %v2468
    %v2804 = vpop.f32.mrb[0].mxu0
    %v2805 = vadd.f32 0.0, %v2804
    %v2806 = vpop.f32.mrb[0].mxu0
    %2807 = vmatprep.mubr.f32.mxu0 0.0
    %2808 = vmatmul.mubr.f32.gmra.mrb[0].mxu0 %v2471
    %v2809 = vpop.f32.mrb[0].mxu0
    %v2810 = vadd.f32 0.0, %v2809
    %v2811 = vpop.f32.mrb[0].mxu0
    %2812 = vmatprep.mubr.f32.mxu0 0.0
    %2813 = vmatmul.mubr.f32.gmra.mrb[0].mxu0 %v2474
    %v2814 = vpop.f32.mrb[0].mxu0
    %v2815 = vadd.f32 0.0, %v2814
    %v2816 = vpop.f32.mrb[0].mxu0
    %2817 = vmatprep.mubr.f32.mxu0 0.0
    %2818 = vmatmul.mubr.f32.gmra.mrb[0].mxu0 %v2477
    %v2819 = vpop.f32.mrb[0].mxu0
    %v2820 = vadd.f32 0.0, %v2819
    %v2821 = vpop.f32.mrb[0].mxu0
    %2822 = vmatprep.mubr.f32.mxu0 0.0
    %2823 = vmatmul.mubr.f32.gmra.mrb[0].mxu0 %v2480
    %v2824 = vpop.f32.mrb[0].mxu0
    %v2825 = vadd.f32 0.0, %v2824
    %v2826 = vpop.f32.mrb[0].mxu0
    %2827 = vmatprep.mubr.f32.mxu0 0.0
    %2828 = vmatmul.mubr.f32.gmra.mrb[0].mxu0 %v2483
    %v2829 = vpop.f32.mrb[0].mxu0
    %v2830 = vadd.f32 0.0, %v2829
    %v2831 = vpop.f32.mrb[0].mxu0
    %2832 = vmatprep.mubr.f32.mxu0 0.0
    %2833 = vmatmul.mubr.f32.gmra.mrb[0].mxu0 %v2486
    %v2834 = vpop.f32.mrb[0].mxu0
    %v2835 = vadd.f32 0.0, %v2834
    %v2836 = vpop.f32.mrb[0].mxu0
    %2837 = vmatprep.mubr.f32.mxu0 0.0
    %2838 = vmatmul.mubr.f32.gmra.mrb[0].mxu0 %v2489
    %v2839 = vpop.f32.mrb[0].mxu0
    %v2840 = vadd.f32 0.0, %v2839
    %v2841 = vpop.f32.mrb[0].mxu0
    %2842 = vmatprep.mubr.f32.mxu0 0.0
    %2843 = vmatmul.mubr.f32.gmra.mrb[0].mxu0 %v2492
    %v2844 = vpop.f32.mrb[0].mxu0
    %v2845 = vadd.f32 0.0, %v2844
    %v2846 = vpop.f32.mrb[0].mxu0
    %2847 = vmatprep.mubr.f32.mxu0 0.0
    %2848 = vmatmul.mubr.f32.gmra.mrb[0].mxu0 %v2495
    %v2849 = vpop.f32.mrb[0].mxu0
    %v2850 = vadd.f32 0.0, %v2849
    %v2851 = vpop.f32.mrb[0].mxu0
    %2852 = vmatprep.mubr.f32.mxu0 0.0
    %2853 = vmatmul.mubr.f32.gmra.mrb[0].mxu0 %v2498
    %v2854 = vpop.f32.mrb[0].mxu0
    %v2855 = vadd.f32 0.0, %v2854
    %v2856 = vpop.f32.mrb[0].mxu0
    %2857 = vmatprep.mubr.f32.mxu0 0.0
    %2858 = vmatmul.mubr.f32.gmra.mrb[0].mxu0 %v2501
    %v2859 = vpop.f32.mrb[0].mxu0
    %v2860 = vadd.f32 0.0, %v2859
    %v2861 = vpop.f32.mrb[0].mxu0
    %2862 = vmatprep.mubr.f32.mxu0 0.0
    %2863 = vmatmul.mubr.f32.gmra.mrb[0].mxu0 %v2504
    %v2864 = vpop.f32.mrb[0].mxu0
    %v2865 = vadd.f32 0.0, %v2864
    %v2866 = vpop.f32.mrb[0].mxu0
    %2867 = vmatprep.mubr.f32.mxu0 0.0
    %2868 = vmatmul.mubr.f32.gmra.mrb[0].mxu0 %v2507
    %v2869 = vpop.f32.mrb[0].mxu0
    %v2870 = vadd.f32 0.0, %v2869
    %v2871 = vpop.f32.mrb[0].mxu0
    %2872 = vmatprep.mubr.f32.mxu0 0.0
    %2873 = vmatmul.mubr.f32.gmra.mrb[0].mxu0 %v2510
    %v2874 = vpop.f32.mrb[0].mxu0
    %v2875 = vadd.f32 0.0, %v2874
    %v2876 = vpop.f32.mrb[0].mxu0
    %2877 = vmatprep.mubr.f32.mxu0 0.0
    %2878 = vmatmul.mubr.f32.gmra.mrb[0].mxu0 %v2513
    %v2879 = vpop.f32.mrb[0].mxu0
    %v2880 = vadd.f32 0.0, %v2879
    %v2881 = vpop.f32.mrb[0].mxu0
    %2882 = vmatprep.mubr.f32.mxu0 0.0
    %2883 = vmatmul.mubr.f32.gmra.mrb[0].mxu0 %v2516
    %v2884 = vpop.f32.mrb[0].mxu0
    %v2885 = vadd.f32 0.0, %v2884
    %v2886 = vpop.f32.mrb[0].mxu0
    %2887 = vmatprep.mubr.f32.mxu0 0.0
    %2888 = vmatmul.mubr.f32.gmra.mrb[0].mxu0 %v2519
    %v2889 = vpop.f32.mrb[0].mxu0
    %v2890 = vadd.f32 0.0, %v2889
    %v2891 = vpop.f32.mrb[0].mxu0
    %2892 = vmatprep.mubr.f32.mxu0 0.0
    %2893 = vmatmul.mubr.f32.gmra.mrb[0].mxu0 %v2522
    %v2894 = vpop.f32.mrb[0].mxu0
    %v2895 = vadd.f32 0.0, %v2894
    %v2896 = vpop.f32.mrb[0].mxu0
    %2897 = vmatprep.mubr.f32.mxu0 0.0
    %2898 = vmatmul.mubr.f32.gmra.mrb[0].mxu0 %v2525
    %v2899 = vpop.f32.mrb[0].mxu0
    %v2900 = vadd.f32 0.0, %v2899
    %v2901 = vpop.f32.mrb[0].mxu0
    %2902 = vmatprep.mubr.f32.mxu0 0.0
    %2903 = vmatmul.mubr.f32.gmra.mrb[0].mxu0 %v2528
    %v2904 = vpop.f32.mrb[0].mxu0
    %v2905 = vadd.f32 0.0, %v2904
    %v2906 = vpop.f32.mrb[0].mxu0
    %2907 = vmatprep.mubr.f32.mxu0 0.0
    %2908 = vmatmul.mubr.f32.gmra.mrb[0].mxu0 %v2531
    %v2909 = vpop.f32.mrb[0].mxu0
    %v2910 = vadd.f32 0.0, %v2909
    %v2911 = vpop.f32.mrb[0].mxu0
    %2912 = vmatprep.mubr.f32.mxu0 0.0
    %2913 = vmatmul.mubr.f32.gmra.mrb[0].mxu0 %v2534
    %v2914 = vpop.f32.mrb[0].mxu0
    %v2915 = vadd.f32 0.0, %v2914
    %v2916 = vpop.f32.mrb[0].mxu0
    %2917 = vmatprep.mubr.f32.mxu0 0.0
    %2918 = vmatmul.mubr.f32.gmra.mrb[0].mxu0 %v2537
    %v2919 = vpop.f32.mrb[0].mxu0
    %v2920 = vadd.f32 0.0, %v2919
    %v2921 = vpop.f32.mrb[0].mxu0
    %2922 = vmatprep.mubr.f32.mxu0 0.0
    %2923 = vmatmul.mubr.f32.gmra.mrb[0].mxu0 %v2540
    %v2924 = vpop.f32.mrb[0].mxu0
    %v2925 = vadd.f32 0.0, %v2924
    %v2926 = vpop.f32.mrb[0].mxu0
    %2927 = vmatprep.mubr.f32.mxu0 0.0
    %2928 = vmatmul.mubr.f32.gmra.mrb[0].mxu0 %v2543
    %v2929 = vpop.f32.mrb[0].mxu0
    %v2930 = vadd.f32 0.0, %v2929
    %v2931 = vpop.f32.mrb[0].mxu0
    %2932 = vdwg.mxu0
    %v2933 = vadd.f32 %v2158, %v2615
    %v2934 = vadd.f32 %v2159, %v2620
    %v2935 = vadd.f32 %v2160, %v2625
    %v2936 = vadd.f32 %v2161, %v2630
    %v2937 = vadd.f32 %v2162, %v2635
    %v2938 = vadd.f32 %v2163, %v2640
    %v2939 = vadd.f32 %v2164, %v2645
    %v2940 = vadd.f32 %v2165, %v2650
    %v2941 = vadd.f32 %v2166, %v2655
    %v2942 = vadd.f32 %v2167, %v2660
    %v2943 = vadd.f32 %v2168, %v2665
    %v2944 = vadd.f32 %v2169, %v2670
    %v2945 = vadd.f32 %v2170, %v2675
    %v2946 = vadd.f32 %v2171, %v2680
    %v2947 = vadd.f32 %v2172, %v2685
    %v2948 = vadd.f32 %v2173, %v2690
    %v2949 = vadd.f32 %v2174, %v2695
    %v2950 = vadd.f32 %v2175, %v2700
    %v2951 = vadd.f32 %v2176, %v2705
    %v2952 = vadd.f32 %v2177, %v2710
    %v2953 = vadd.f32 %v2178, %v2715
    %v2954 = vadd.f32 %v2179, %v2720
    %v2955 = vadd.f32 %v2180, %v2725
    %v2956 = vadd.f32 %v2181, %v2730
    %v2957 = vadd.f32 %v2182, %v2735
    %v2958 = vadd.f32 %v2183, %v2740
    %v2959 = vadd.f32 %v2184, %v2745
    %v2960 = vadd.f32 %v2185, %v2750
    %v2961 = vadd.f32 %v2186, %v2755
    %v2962 = vadd.f32 %v2187, %v2760
    %v2963 = vadd.f32 %v2188, %v2765
    %v2964 = vadd.f32 %v2189, %v2770
    %v2965 = vadd.f32 %v2190, %v2775
    %v2966 = vadd.f32 %v2191, %v2780
    %v2967 = vadd.f32 %v2192, %v2785
    %v2968 = vadd.f32 %v2193, %v2790
    %v2969 = vadd.f32 %v2194, %v2795
    %v2970 = vadd.f32 %v2195, %v2800
    %v2971 = vadd.f32 %v2196, %v2805
    %v2972 = vadd.f32 %v2197, %v2810
    %v2973 = vadd.f32 %v2198, %v2815
    %v2974 = vadd.f32 %v2199, %v2820
    %v2975 = vadd.f32 %v2200, %v2825
    %v2976 = vadd.f32 %v2201, %v2830
    %v2977 = vadd.f32 %v2202, %v2835
    %v2978 = vadd.f32 %v2203, %v2840
    %v2979 = vadd.f32 %v2204, %v2845
    %v2980 = vadd.f32 %v2205, %v2850
    %v2981 = vadd.f32 %v2206, %v2855
    %v2982 = vadd.f32 %v2207, %v2860
    %v2983 = vadd.f32 %v2208, %v2865
    %v2984 = vadd.f32 %v2209, %v2870
    %v2985 = vadd.f32 %v2210, %v2875
    %v2986 = vadd.f32 %v2211, %v2880
    %v2987 = vadd.f32 %v2212, %v2885
    %v2988 = vadd.f32 %v2213, %v2890
    %v2989 = vadd.f32 %v2214, %v2895
    %v2990 = vadd.f32 %v2215, %v2900
    %v2991 = vadd.f32 %v2216, %v2905
    %v2992 = vadd.f32 %v2217, %v2910
    %v2993 = vadd.f32 %v2218, %v2915
    %v2994 = vadd.f32 %v2219, %v2920
    %v2995 = vadd.f32 %v2220, %v2925
    %v2996 = vadd.f32 %v2221, %v2930
    %v2997 = vld [vmem:[%s2222 + $0x1] sm:$0xff]
    %v2998 = vld [vmem:[%s2222 + $0x9] sm:$0xff]
    %v2999 = vld [vmem:[%s2222 + $0x19] sm:$0xff]
    %v3000 = vld [vmem:[%s2222 + $0x21] sm:$0xff]
    %v3001 = vld [vmem:[%s2222 + $0x31] sm:$0xff]
    %v3002 = vld [vmem:[%s2222 + $0x39] sm:$0xff]
    %v3003 = vld [vmem:[%s2222 + $0x49] sm:$0xff]
    %v3004 = vld [vmem:[%s2222 + $0x51] sm:$0xff]
    %v3005 = vld [vmem:[%s2222 + $0x61] sm:$0xff]
    %v3006 = vld [vmem:[%s2222 + $0x69] sm:$0xff]
    %v3007 = vld [vmem:[%s2222 + $0x79] sm:$0xff]
    %v3008 = vld [vmem:[%s2222 + $0x81] sm:$0xff]
    %v3009 = vld [vmem:[%s2222 + $0x91] sm:$0xff]
    %v3010 = vld [vmem:[%s2222 + $0x99] sm:$0xff]
    %v3011 = vld [vmem:[%s2222 + $0xa9] sm:$0xff]
    %v3012 = vld [vmem:[%s2222 + $0xb1] sm:$0xff]
    %v3013 = vld [vmem:[%s2222 + $0xc1] sm:$0xff]
    %v3014 = vld [vmem:[%s2222 + $0xc9] sm:$0xff]
    %v3015 = vld [vmem:[%s2222 + $0xd9] sm:$0xff]
    %v3016 = vld [vmem:[%s2222 + $0xe1] sm:$0xff]
    %v3017 = vld [vmem:[%s2222 + $0xf1] sm:$0xff]
    %v3018 = vld [vmem:[%s2222 + $0xf9] sm:$0xff]
    %v3019 = vld [vmem:[%s2222 + $0x109] sm:$0xff]
    %v3020 = vld [vmem:[%s2222 + $0x111] sm:$0xff]
    %v3021 = vld [vmem:[%s2222 + $0x121] sm:$0xff]
    %v3022 = vld [vmem:[%s2222 + $0x129] sm:$0xff]
    %v3023 = vld [vmem:[%s2222 + $0x139] sm:$0xff]
    %v3024 = vld [vmem:[%s2222 + $0x141] sm:$0xff]
    %v3025 = vld [vmem:[%s2222 + $0x151] sm:$0xff]
    %v3026 = vld [vmem:[%s2222 + $0x159] sm:$0xff]
    %v3027 = vld [vmem:[%s2222 + $0x169] sm:$0xff]
    %v3028 = vld [vmem:[%s2222 + $0x171] sm:$0xff]
    %v3029 = vld [vmem:[%s2222 + $0x1b1] sm:$0xff]
    %v3030 = vld [vmem:[%s2222 + $0x1b9] sm:$0xff]
    %v3031 = vld [vmem:[%s2222 + $0x1c9] sm:$0xff]
    %v3032 = vld [vmem:[%s2222 + $0x1d1] sm:$0xff]
    %v3033 = vld [vmem:[%s2222 + $0x1e1] sm:$0xff]
    %v3034 = vld [vmem:[%s2222 + $0x1e9] sm:$0xff]
    %v3035 = vld [vmem:[%s2222 + $0x1f9] sm:$0xff]
    %v3036 = vld [vmem:[%s2222 + $0x201] sm:$0xff]
    %v3037 = vld [vmem:[%s2222 + $0x211] sm:$0xff]
    %v3038 = vld [vmem:[%s2222 + $0x219] sm:$0xff]
    %v3039 = vld [vmem:[%s2222 + $0x229] sm:$0xff]
    %v3040 = vld [vmem:[%s2222 + $0x231] sm:$0xff]
    %v3041 = vld [vmem:[%s2222 + $0x241] sm:$0xff]
    %v3042 = vld [vmem:[%s2222 + $0x249] sm:$0xff]
    %v3043 = vld [vmem:[%s2222 + $0x259] sm:$0xff]
    %v3044 = vld [vmem:[%s2222 + $0x261] sm:$0xff]
    %v3045 = vld [vmem:[%s2222 + $0x271] sm:$0xff]
    %v3046 = vld [vmem:[%s2222 + $0x279] sm:$0xff]
    %v3047 = vld [vmem:[%s2222 + $0x289] sm:$0xff]
    %v3048 = vld [vmem:[%s2222 + $0x291] sm:$0xff]
    %v3049 = vld [vmem:[%s2222 + $0x2a1] sm:$0xff]
    %v3050 = vld [vmem:[%s2222 + $0x2a9] sm:$0xff]
    %v3051 = vld [vmem:[%s2222 + $0x2b9] sm:$0xff]
    %v3052 = vld [vmem:[%s2222 + $0x2c1] sm:$0xff]
    %v3053 = vld [vmem:[%s2222 + $0x2d1] sm:$0xff]
    %v3054 = vld [vmem:[%s2222 + $0x2d9] sm:$0xff]
    %v3055 = vld [vmem:[%s2222 + $0x2e9] sm:$0xff]
    %v3056 = vld [vmem:[%s2222 + $0x2f1] sm:$0xff]
    %v3057 = vld [vmem:[%s2222 + $0x301] sm:$0xff]
    %v3058 = vld [vmem:[%s2222 + $0x309] sm:$0xff]
    %v3059 = vld [vmem:[%s2222 + $0x319] sm:$0xff]
    %v3060 = vld [vmem:[%s2222 + $0x321] sm:$0xff]
    %v3061 = vmax.f32 %v2997, 0.0
    %v3062 = vmax.f32 %v2998, 0.0
    %v3063 = vmax.f32 %v2999, 0.0
    %v3064 = vmax.f32 %v3000, 0.0
    %v3065 = vmax.f32 %v3001, 0.0
    %v3066 = vmax.f32 %v3002, 0.0
    %v3067 = vmax.f32 %v3003, 0.0
    %v3068 = vmax.f32 %v3004, 0.0
    %v3069 = vmax.f32 %v3005, 0.0
    %v3070 = vmax.f32 %v3006, 0.0
    %v3071 = vmax.f32 %v3007, 0.0
    %v3072 = vmax.f32 %v3008, 0.0
    %v3073 = vmax.f32 %v3009, 0.0
    %v3074 = vmax.f32 %v3010, 0.0
    %v3075 = vmax.f32 %v3011, 0.0
    %v3076 = vmax.f32 %v3012, 0.0
    %v3077 = vmax.f32 %v3013, 0.0
    %v3078 = vmax.f32 %v3014, 0.0
    %v3079 = vmax.f32 %v3015, 0.0
    %v3080 = vmax.f32 %v3016, 0.0
    %v3081 = vmax.f32 %v3017, 0.0
    %v3082 = vmax.f32 %v3018, 0.0
    %v3083 = vmax.f32 %v3019, 0.0
    %v3084 = vmax.f32 %v3020, 0.0
    %v3085 = vmax.f32 %v3021, 0.0
    %v3086 = vmax.f32 %v3022, 0.0
    %v3087 = vmax.f32 %v3023, 0.0
    %v3088 = vmax.f32 %v3024, 0.0
    %v3089 = vmax.f32 %v3025, 0.0
    %v3090 = vmax.f32 %v3026, 0.0
    %v3091 = vmax.f32 %v3027, 0.0
    %v3092 = vmax.f32 %v3028, 0.0
    %v3093 = vmax.f32 %v3029, 0.0
    %v3094 = vmax.f32 %v3030, 0.0
    %v3095 = vmax.f32 %v3031, 0.0
    %v3096 = vmax.f32 %v3032, 0.0
    %v3097 = vmax.f32 %v3033, 0.0
    %v3098 = vmax.f32 %v3034, 0.0
    %v3099 = vmax.f32 %v3035, 0.0
    %v3100 = vmax.f32 %v3036, 0.0
    %v3101 = vmax.f32 %v3037, 0.0
    %v3102 = vmax.f32 %v3038, 0.0
    %v3103 = vmax.f32 %v3039, 0.0
    %v3104 = vmax.f32 %v3040, 0.0
    %v3105 = vmax.f32 %v3041, 0.0
    %v3106 = vmax.f32 %v3042, 0.0
    %v3107 = vmax.f32 %v3043, 0.0
    %v3108 = vmax.f32 %v3044, 0.0
    %v3109 = vmax.f32 %v3045, 0.0
    %v3110 = vmax.f32 %v3046, 0.0
    %v3111 = vmax.f32 %v3047, 0.0
    %v3112 = vmax.f32 %v3048, 0.0
    %v3113 = vmax.f32 %v3049, 0.0
    %v3114 = vmax.f32 %v3050, 0.0
    %v3115 = vmax.f32 %v3051, 0.0
    %v3116 = vmax.f32 %v3052, 0.0
    %v3117 = vmax.f32 %v3053, 0.0
    %v3118 = vmax.f32 %v3054, 0.0
    %v3119 = vmax.f32 %v3055, 0.0
    %v3120 = vmax.f32 %v3056, 0.0
    %v3121 = vmax.f32 %v3057, 0.0
    %v3122 = vmax.f32 %v3058, 0.0
    %v3123 = vmax.f32 %v3059, 0.0
    %v3124 = vmax.f32 %v3060, 0.0
    %s3125 = scalar_lea.vmem %s1, 16
    %v3126 = vld [vmem:[%s3125] sm:$0xf]
    %v3128 = vsel %vm286, %v3061, 0
    %v3131 = vsel %vm286, %v3062, 0
    %v3134 = vsel %vm286, %v3063, 0
    %v3137 = vsel %vm286, %v3064, 0
    %v3140 = vsel %vm286, %v3065, 0
    %v3143 = vsel %vm286, %v3066, 0
    %v3146 = vsel %vm286, %v3067, 0
    %v3149 = vsel %vm286, %v3068, 0
    %v3152 = vsel %vm286, %v3069, 0
    %v3155 = vsel %vm286, %v3070, 0
    %v3158 = vsel %vm286, %v3071, 0
    %v3161 = vsel %vm286, %v3072, 0
    %v3164 = vsel %vm286, %v3073, 0
    %v3167 = vsel %vm286, %v3074, 0
    %v3170 = vsel %vm286, %v3075, 0
    %v3173 = vsel %vm286, %v3076, 0
    %v3176 = vsel %vm286, %v3077, 0
    %v3179 = vsel %vm286, %v3078, 0
    %v3182 = vsel %vm286, %v3079, 0
    %v3185 = vsel %vm286, %v3080, 0
    %v3188 = vsel %vm286, %v3081, 0
    %v3191 = vsel %vm286, %v3082, 0
    %v3194 = vsel %vm286, %v3083, 0
    %v3197 = vsel %vm286, %v3084, 0
    %v3200 = vsel %vm286, %v3085, 0
    %v3203 = vsel %vm286, %v3086, 0
    %v3206 = vsel %vm286, %v3087, 0
    %v3209 = vsel %vm286, %v3088, 0
    %v3212 = vsel %vm286, %v3089, 0
    %v3215 = vsel %vm286, %v3090, 0
    %v3218 = vsel %vm286, %v3091, 0
    %v3221 = vsel %vm286, %v3092, 0
    %v3224 = vsel %vm286, %v3093, 0
    %v3227 = vsel %vm286, %v3094, 0
    %v3230 = vsel %vm286, %v3095, 0
    %v3233 = vsel %vm286, %v3096, 0
    %v3236 = vsel %vm286, %v3097, 0
    %v3239 = vsel %vm286, %v3098, 0
    %v3242 = vsel %vm286, %v3099, 0
    %v3245 = vsel %vm286, %v3100, 0
    %v3248 = vsel %vm286, %v3101, 0
    %v3251 = vsel %vm286, %v3102, 0
    %v3254 = vsel %vm286, %v3103, 0
    %v3257 = vsel %vm286, %v3104, 0
    %v3260 = vsel %vm286, %v3105, 0
    %v3263 = vsel %vm286, %v3106, 0
    %v3266 = vsel %vm286, %v3107, 0
    %v3269 = vsel %vm286, %v3108, 0
    %v3272 = vsel %vm286, %v3109, 0
    %v3275 = vsel %vm286, %v3110, 0
    %v3278 = vsel %vm286, %v3111, 0
    %v3281 = vsel %vm286, %v3112, 0
    %v3284 = vsel %vm286, %v3113, 0
    %v3287 = vsel %vm286, %v3114, 0
    %v3290 = vsel %vm286, %v3115, 0
    %v3293 = vsel %vm286, %v3116, 0
    %v3296 = vsel %vm286, %v3117, 0
    %v3299 = vsel %vm286, %v3118, 0
    %v3302 = vsel %vm286, %v3119, 0
    %v3305 = vsel %vm286, %v3120, 0
    %v3308 = vsel %vm286, %v3121, 0
    %v3311 = vsel %vm286, %v3122, 0
    %v3314 = vsel %vm286, %v3123, 0
    %v3317 = vsel %vm286, %v3124, 0
    %v3320 = vsel %vm479, %v3126, 0
    %3322 = vmatprep.subr.mxu0 0.0
    %3323 = vmatpush1.msra.mxu0 %v3320
    %3324 = vmatprep.subr.mxu0 0.0
    %3325 = vmatpush1.msra.mxu0 0.0
    %3326 = vmatprep.subr.mxu0 0.0
    %3327 = vmatpush1.msra.mxu0 0.0
    %3328 = vmatprep.subr.mxu0 0.0
    %3329 = vmatpush1.msra.mxu0 0.0
    %3330 = vmatprep.subr.mxu0 0.0
    %3331 = vmatpush1.msra.mxu0 0.0
    %3332 = vmatprep.subr.mxu0 0.0
    %3333 = vmatpush1.msra.mxu0 0.0
    %3334 = vmatprep.subr.mxu0 0.0
    %3335 = vmatpush1.msra.mxu0 0.0
    %3336 = vmatprep.subr.mxu0 0.0
    %3337 = vmatpush1.msra.mxu0 0.0
    %3338 = vmatprep.subr.mxu0 0.0
    %3339 = vmatpush1.msra.mxu0 0.0
    %3340 = vmatprep.subr.mxu0 0.0
    %3341 = vmatpush1.msra.mxu0 0.0
    %3342 = vmatprep.subr.mxu0 0.0
    %3343 = vmatpush1.msra.mxu0 0.0
    %3344 = vmatprep.subr.mxu0 0.0
    %3345 = vmatpush1.msra.mxu0 0.0
    %3346 = vmatprep.subr.mxu0 0.0
    %3347 = vmatpush1.msra.mxu0 0.0
    %3348 = vmatprep.subr.mxu0 0.0
    %3349 = vmatpush1.msra.mxu0 0.0
    %3350 = vmatprep.subr.mxu0 0.0
    %3351 = vmatpush1.msra.mxu0 0.0
    %3352 = vmatprep.subr.mxu0 0.0
    %3353 = vmatpush1.msra.mxu0 0.0
    %3354 = vmatprep.subr.mxu0 0.0
    %3355 = vmatpush1.msra.mxu0 0.0
    %3356 = vmatprep.subr.mxu0 0.0
    %3357 = vmatpush1.msra.mxu0 0.0
    %3358 = vmatprep.subr.mxu0 0.0
    %3359 = vmatpush1.msra.mxu0 0.0
    %3360 = vmatprep.subr.mxu0 0.0
    %3361 = vmatpush1.msra.mxu0 0.0
    %3362 = vmatprep.subr.mxu0 0.0
    %3363 = vmatpush1.msra.mxu0 0.0
    %3364 = vmatprep.subr.mxu0 0.0
    %3365 = vmatpush1.msra.mxu0 0.0
    %3366 = vmatprep.subr.mxu0 0.0
    %3367 = vmatpush1.msra.mxu0 0.0
    %3368 = vmatprep.subr.mxu0 0.0
    %3369 = vmatpush1.msra.mxu0 0.0
    %3370 = vmatprep.subr.mxu0 0.0
    %3371 = vmatpush1.msra.mxu0 0.0
    %3372 = vmatprep.subr.mxu0 0.0
    %3373 = vmatpush1.msra.mxu0 0.0
    %3374 = vmatprep.subr.mxu0 0.0
    %3375 = vmatpush1.msra.mxu0 0.0
    %3376 = vmatprep.subr.mxu0 0.0
    %3377 = vmatpush1.msra.mxu0 0.0
    %3378 = vmatprep.subr.mxu0 0.0
    %3379 = vmatpush1.msra.mxu0 0.0
    %3380 = vmatprep.subr.mxu0 0.0
    %3381 = vmatpush1.msra.mxu0 0.0
    %3382 = vmatprep.subr.mxu0 0.0
    %3383 = vmatpush1.msra.mxu0 0.0
    %3384 = vmatprep.subr.mxu0 0.0
    %3385 = vmatpush1.msra.mxu0 0.0
    %3386 = vmatprep.mubr.f32.mxu0 0.0
    %3387 = vmatmul.mubr.f32.gmra.mrb[0].mxu0 %v3128
    %v3388 = vpop.f32.mrb[0].mxu0
    %v3389 = vadd.f32 0.0, %v3388
    %v3390 = vpop.f32.mrb[0].mxu0
    %3391 = vmatprep.mubr.f32.mxu0 0.0
    %3392 = vmatmul.mubr.f32.gmra.mrb[0].mxu0 %v3131
    %v3393 = vpop.f32.mrb[0].mxu0
    %v3394 = vadd.f32 0.0, %v3393
    %v3395 = vpop.f32.mrb[0].mxu0
    %3396 = vmatprep.mubr.f32.mxu0 0.0
    %3397 = vmatmul.mubr.f32.gmra.mrb[0].mxu0 %v3134
    %v3398 = vpop.f32.mrb[0].mxu0
    %v3399 = vadd.f32 0.0, %v3398
    %v3400 = vpop.f32.mrb[0].mxu0
    %3401 = vmatprep.mubr.f32.mxu0 0.0
    %3402 = vmatmul.mubr.f32.gmra.mrb[0].mxu0 %v3137
    %v3403 = vpop.f32.mrb[0].mxu0
    %v3404 = vadd.f32 0.0, %v3403
    %v3405 = vpop.f32.mrb[0].mxu0
    %3406 = vmatprep.mubr.f32.mxu0 0.0
    %3407 = vmatmul.mubr.f32.gmra.mrb[0].mxu0 %v3140
    %v3408 = vpop.f32.mrb[0].mxu0
    %v3409 = vadd.f32 0.0, %v3408
    %v3410 = vpop.f32.mrb[0].mxu0
    %3411 = vmatprep.mubr.f32.mxu0 0.0
    %3412 = vmatmul.mubr.f32.gmra.mrb[0].mxu0 %v3143
    %v3413 = vpop.f32.mrb[0].mxu0
    %v3414 = vadd.f32 0.0, %v3413
    %v3415 = vpop.f32.mrb[0].mxu0
    %3416 = vmatprep.mubr.f32.mxu0 0.0
    %3417 = vmatmul.mubr.f32.gmra.mrb[0].mxu0 %v3146
    %v3418 = vpop.f32.mrb[0].mxu0
    %v3419 = vadd.f32 0.0, %v3418
    %v3420 = vpop.f32.mrb[0].mxu0
    %3421 = vmatprep.mubr.f32.mxu0 0.0
    %3422 = vmatmul.mubr.f32.gmra.mrb[0].mxu0 %v3149
    %v3423 = vpop.f32.mrb[0].mxu0
    %v3424 = vadd.f32 0.0, %v3423
    %v3425 = vpop.f32.mrb[0].mxu0
    %3426 = vmatprep.mubr.f32.mxu0 0.0
    %3427 = vmatmul.mubr.f32.gmra.mrb[0].mxu0 %v3152
    %v3428 = vpop.f32.mrb[0].mxu0
    %v3429 = vadd.f32 0.0, %v3428
    %v3430 = vpop.f32.mrb[0].mxu0
    %3431 = vmatprep.mubr.f32.mxu0 0.0
    %3432 = vmatmul.mubr.f32.gmra.mrb[0].mxu0 %v3155
    %v3433 = vpop.f32.mrb[0].mxu0
    %v3434 = vadd.f32 0.0, %v3433
    %v3435 = vpop.f32.mrb[0].mxu0
    %3436 = vmatprep.mubr.f32.mxu0 0.0
    %3437 = vmatmul.mubr.f32.gmra.mrb[0].mxu0 %v3158
    %v3438 = vpop.f32.mrb[0].mxu0
    %v3439 = vadd.f32 0.0, %v3438
    %v3440 = vpop.f32.mrb[0].mxu0
    %3441 = vmatprep.mubr.f32.mxu0 0.0
    %3442 = vmatmul.mubr.f32.gmra.mrb[0].mxu0 %v3161
    %v3443 = vpop.f32.mrb[0].mxu0
    %v3444 = vadd.f32 0.0, %v3443
    %v3445 = vpop.f32.mrb[0].mxu0
    %3446 = vmatprep.mubr.f32.mxu0 0.0
    %3447 = vmatmul.mubr.f32.gmra.mrb[0].mxu0 %v3164
    %v3448 = vpop.f32.mrb[0].mxu0
    %v3449 = vadd.f32 0.0, %v3448
    %v3450 = vpop.f32.mrb[0].mxu0
    %3451 = vmatprep.mubr.f32.mxu0 0.0
    %3452 = vmatmul.mubr.f32.gmra.mrb[0].mxu0 %v3167
    %v3453 = vpop.f32.mrb[0].mxu0
    %v3454 = vadd.f32 0.0, %v3453
    %v3455 = vpop.f32.mrb[0].mxu0
    %3456 = vmatprep.mubr.f32.mxu0 0.0
    %3457 = vmatmul.mubr.f32.gmra.mrb[0].mxu0 %v3170
    %v3458 = vpop.f32.mrb[0].mxu0
    %v3459 = vadd.f32 0.0, %v3458
    %v3460 = vpop.f32.mrb[0].mxu0
    %3461 = vmatprep.mubr.f32.mxu0 0.0
    %3462 = vmatmul.mubr.f32.gmra.mrb[0].mxu0 %v3173
    %v3463 = vpop.f32.mrb[0].mxu0
    %v3464 = vadd.f32 0.0, %v3463
    %v3465 = vpop.f32.mrb[0].mxu0
    %3466 = vmatprep.mubr.f32.mxu0 0.0
    %3467 = vmatmul.mubr.f32.gmra.mrb[0].mxu0 %v3176
    %v3468 = vpop.f32.mrb[0].mxu0
    %v3469 = vadd.f32 0.0, %v3468
    %v3470 = vpop.f32.mrb[0].mxu0
    %3471 = vmatprep.mubr.f32.mxu0 0.0
    %3472 = vmatmul.mubr.f32.gmra.mrb[0].mxu0 %v3179
    %v3473 = vpop.f32.mrb[0].mxu0
    %v3474 = vadd.f32 0.0, %v3473
    %v3475 = vpop.f32.mrb[0].mxu0
    %3476 = vmatprep.mubr.f32.mxu0 0.0
    %3477 = vmatmul.mubr.f32.gmra.mrb[0].mxu0 %v3182
    %v3478 = vpop.f32.mrb[0].mxu0
    %v3479 = vadd.f32 0.0, %v3478
    %v3480 = vpop.f32.mrb[0].mxu0
    %3481 = vmatprep.mubr.f32.mxu0 0.0
    %3482 = vmatmul.mubr.f32.gmra.mrb[0].mxu0 %v3185
    %v3483 = vpop.f32.mrb[0].mxu0
    %v3484 = vadd.f32 0.0, %v3483
    %v3485 = vpop.f32.mrb[0].mxu0
    %3486 = vmatprep.mubr.f32.mxu0 0.0
    %3487 = vmatmul.mubr.f32.gmra.mrb[0].mxu0 %v3188
    %v3488 = vpop.f32.mrb[0].mxu0
    %v3489 = vadd.f32 0.0, %v3488
    %v3490 = vpop.f32.mrb[0].mxu0
    %3491 = vmatprep.mubr.f32.mxu0 0.0
    %3492 = vmatmul.mubr.f32.gmra.mrb[0].mxu0 %v3191
    %v3493 = vpop.f32.mrb[0].mxu0
    %v3494 = vadd.f32 0.0, %v3493
    %v3495 = vpop.f32.mrb[0].mxu0
    %3496 = vmatprep.mubr.f32.mxu0 0.0
    %3497 = vmatmul.mubr.f32.gmra.mrb[0].mxu0 %v3194
    %v3498 = vpop.f32.mrb[0].mxu0
    %v3499 = vadd.f32 0.0, %v3498
    %v3500 = vpop.f32.mrb[0].mxu0
    %3501 = vmatprep.mubr.f32.mxu0 0.0
    %3502 = vmatmul.mubr.f32.gmra.mrb[0].mxu0 %v3197
    %v3503 = vpop.f32.mrb[0].mxu0
    %v3504 = vadd.f32 0.0, %v3503
    %v3505 = vpop.f32.mrb[0].mxu0
    %3506 = vmatprep.mubr.f32.mxu0 0.0
    %3507 = vmatmul.mubr.f32.gmra.mrb[0].mxu0 %v3200
    %v3508 = vpop.f32.mrb[0].mxu0
    %v3509 = vadd.f32 0.0, %v3508
    %v3510 = vpop.f32.mrb[0].mxu0
    %3511 = vmatprep.mubr.f32.mxu0 0.0
    %3512 = vmatmul.mubr.f32.gmra.mrb[0].mxu0 %v3203
    %v3513 = vpop.f32.mrb[0].mxu0
    %v3514 = vadd.f32 0.0, %v3513
    %v3515 = vpop.f32.mrb[0].mxu0
    %3516 = vmatprep.mubr.f32.mxu0 0.0
    %3517 = vmatmul.mubr.f32.gmra.mrb[0].mxu0 %v3206
    %v3518 = vpop.f32.mrb[0].mxu0
    %v3519 = vadd.f32 0.0, %v3518
    %v3520 = vpop.f32.mrb[0].mxu0
    %3521 = vmatprep.mubr.f32.mxu0 0.0
    %3522 = vmatmul.mubr.f32.gmra.mrb[0].mxu0 %v3209
    %v3523 = vpop.f32.mrb[0].mxu0
    %v3524 = vadd.f32 0.0, %v3523
    %v3525 = vpop.f32.mrb[0].mxu0
    %3526 = vmatprep.mubr.f32.mxu0 0.0
    %3527 = vmatmul.mubr.f32.gmra.mrb[0].mxu0 %v3212
    %v3528 = vpop.f32.mrb[0].mxu0
    %v3529 = vadd.f32 0.0, %v3528
    %v3530 = vpop.f32.mrb[0].mxu0
    %3531 = vmatprep.mubr.f32.mxu0 0.0
    %3532 = vmatmul.mubr.f32.gmra.mrb[0].mxu0 %v3215
    %v3533 = vpop.f32.mrb[0].mxu0
    %v3534 = vadd.f32 0.0, %v3533
    %v3535 = vpop.f32.mrb[0].mxu0
    %3536 = vmatprep.mubr.f32.mxu0 0.0
    %3537 = vmatmul.mubr.f32.gmra.mrb[0].mxu0 %v3218
    %v3538 = vpop.f32.mrb[0].mxu0
    %v3539 = vadd.f32 0.0, %v3538
    %v3540 = vpop.f32.mrb[0].mxu0
    %3541 = vmatprep.mubr.f32.mxu0 0.0
    %3542 = vmatmul.mubr.f32.gmra.mrb[0].mxu0 %v3221
    %v3543 = vpop.f32.mrb[0].mxu0
    %v3544 = vadd.f32 0.0, %v3543
    %v3545 = vpop.f32.mrb[0].mxu0
    %3546 = vmatprep.mubr.f32.mxu0 0.0
    %3547 = vmatmul.mubr.f32.gmra.mrb[0].mxu0 %v3224
    %v3548 = vpop.f32.mrb[0].mxu0
    %v3549 = vadd.f32 0.0, %v3548
    %v3550 = vpop.f32.mrb[0].mxu0
    %3551 = vmatprep.mubr.f32.mxu0 0.0
    %3552 = vmatmul.mubr.f32.gmra.mrb[0].mxu0 %v3227
    %v3553 = vpop.f32.mrb[0].mxu0
    %v3554 = vadd.f32 0.0, %v3553
    %v3555 = vpop.f32.mrb[0].mxu0
    %3556 = vmatprep.mubr.f32.mxu0 0.0
    %3557 = vmatmul.mubr.f32.gmra.mrb[0].mxu0 %v3230
    %v3558 = vpop.f32.mrb[0].mxu0
    %v3559 = vadd.f32 0.0, %v3558
    %v3560 = vpop.f32.mrb[0].mxu0
    %3561 = vmatprep.mubr.f32.mxu0 0.0
    %3562 = vmatmul.mubr.f32.gmra.mrb[0].mxu0 %v3233
    %v3563 = vpop.f32.mrb[0].mxu0
    %v3564 = vadd.f32 0.0, %v3563
    %v3565 = vpop.f32.mrb[0].mxu0
    %3566 = vmatprep.mubr.f32.mxu0 0.0
    %3567 = vmatmul.mubr.f32.gmra.mrb[0].mxu0 %v3236
    %v3568 = vpop.f32.mrb[0].mxu0
    %v3569 = vadd.f32 0.0, %v3568
    %v3570 = vpop.f32.mrb[0].mxu0
    %3571 = vmatprep.mubr.f32.mxu0 0.0
    %3572 = vmatmul.mubr.f32.gmra.mrb[0].mxu0 %v3239
    %v3573 = vpop.f32.mrb[0].mxu0
    %v3574 = vadd.f32 0.0, %v3573
    %v3575 = vpop.f32.mrb[0].mxu0
    %3576 = vmatprep.mubr.f32.mxu0 0.0
    %3577 = vmatmul.mubr.f32.gmra.mrb[0].mxu0 %v3242
    %v3578 = vpop.f32.mrb[0].mxu0
    %v3579 = vadd.f32 0.0, %v3578
    %v3580 = vpop.f32.mrb[0].mxu0
    %3581 = vmatprep.mubr.f32.mxu0 0.0
    %3582 = vmatmul.mubr.f32.gmra.mrb[0].mxu0 %v3245
    %v3583 = vpop.f32.mrb[0].mxu0
    %v3584 = vadd.f32 0.0, %v3583
    %v3585 = vpop.f32.mrb[0].mxu0
    %3586 = vmatprep.mubr.f32.mxu0 0.0
    %3587 = vmatmul.mubr.f32.gmra.mrb[0].mxu0 %v3248
    %v3588 = vpop.f32.mrb[0].mxu0
    %v3589 = vadd.f32 0.0, %v3588
    %v3590 = vpop.f32.mrb[0].mxu0
    %3591 = vmatprep.mubr.f32.mxu0 0.0
    %3592 = vmatmul.mubr.f32.gmra.mrb[0].mxu0 %v3251
    %v3593 = vpop.f32.mrb[0].mxu0
    %v3594 = vadd.f32 0.0, %v3593
    %v3595 = vpop.f32.mrb[0].mxu0
    %3596 = vmatprep.mubr.f32.mxu0 0.0
    %3597 = vmatmul.mubr.f32.gmra.mrb[0].mxu0 %v3254
    %v3598 = vpop.f32.mrb[0].mxu0
    %v3599 = vadd.f32 0.0, %v3598
    %v3600 = vpop.f32.mrb[0].mxu0
    %3601 = vmatprep.mubr.f32.mxu0 0.0
    %3602 = vmatmul.mubr.f32.gmra.mrb[0].mxu0 %v3257
    %v3603 = vpop.f32.mrb[0].mxu0
    %v3604 = vadd.f32 0.0, %v3603
    %v3605 = vpop.f32.mrb[0].mxu0
    %3606 = vmatprep.mubr.f32.mxu0 0.0
    %3607 = vmatmul.mubr.f32.gmra.mrb[0].mxu0 %v3260
    %v3608 = vpop.f32.mrb[0].mxu0
    %v3609 = vadd.f32 0.0, %v3608
    %v3610 = vpop.f32.mrb[0].mxu0
    %3611 = vmatprep.mubr.f32.mxu0 0.0
    %3612 = vmatmul.mubr.f32.gmra.mrb[0].mxu0 %v3263
    %v3613 = vpop.f32.mrb[0].mxu0
    %v3614 = vadd.f32 0.0, %v3613
    %v3615 = vpop.f32.mrb[0].mxu0
    %3616 = vmatprep.mubr.f32.mxu0 0.0
    %3617 = vmatmul.mubr.f32.gmra.mrb[0].mxu0 %v3266
    %v3618 = vpop.f32.mrb[0].mxu0
    %v3619 = vadd.f32 0.0, %v3618
    %v3620 = vpop.f32.mrb[0].mxu0
    %3621 = vmatprep.mubr.f32.mxu0 0.0
    %3622 = vmatmul.mubr.f32.gmra.mrb[0].mxu0 %v3269
    %v3623 = vpop.f32.mrb[0].mxu0
    %v3624 = vadd.f32 0.0, %v3623
    %v3625 = vpop.f32.mrb[0].mxu0
    %3626 = vmatprep.mubr.f32.mxu0 0.0
    %3627 = vmatmul.mubr.f32.gmra.mrb[0].mxu0 %v3272
    %v3628 = vpop.f32.mrb[0].mxu0
    %v3629 = vadd.f32 0.0, %v3628
    %v3630 = vpop.f32.mrb[0].mxu0
    %3631 = vmatprep.mubr.f32.mxu0 0.0
    %3632 = vmatmul.mubr.f32.gmra.mrb[0].mxu0 %v3275
    %v3633 = vpop.f32.mrb[0].mxu0
    %v3634 = vadd.f32 0.0, %v3633
    %v3635 = vpop.f32.mrb[0].mxu0
    %3636 = vmatprep.mubr.f32.mxu0 0.0
    %3637 = vmatmul.mubr.f32.gmra.mrb[0].mxu0 %v3278
    %v3638 = vpop.f32.mrb[0].mxu0
    %v3639 = vadd.f32 0.0, %v3638
    %v3640 = vpop.f32.mrb[0].mxu0
    %3641 = vmatprep.mubr.f32.mxu0 0.0
    %3642 = vmatmul.mubr.f32.gmra.mrb[0].mxu0 %v3281
    %v3643 = vpop.f32.mrb[0].mxu0
    %v3644 = vadd.f32 0.0, %v3643
    %v3645 = vpop.f32.mrb[0].mxu0
    %3646 = vmatprep.mubr.f32.mxu0 0.0
    %3647 = vmatmul.mubr.f32.gmra.mrb[0].mxu0 %v3284
    %v3648 = vpop.f32.mrb[0].mxu0
    %v3649 = vadd.f32 0.0, %v3648
    %v3650 = vpop.f32.mrb[0].mxu0
    %3651 = vmatprep.mubr.f32.mxu0 0.0
    %3652 = vmatmul.mubr.f32.gmra.mrb[0].mxu0 %v3287
    %v3653 = vpop.f32.mrb[0].mxu0
    %v3654 = vadd.f32 0.0, %v3653
    %v3655 = vpop.f32.mrb[0].mxu0
    %3656 = vmatprep.mubr.f32.mxu0 0.0
    %3657 = vmatmul.mubr.f32.gmra.mrb[0].mxu0 %v3290
    %v3658 = vpop.f32.mrb[0].mxu0
    %v3659 = vadd.f32 0.0, %v3658
    %v3660 = vpop.f32.mrb[0].mxu0
    %3661 = vmatprep.mubr.f32.mxu0 0.0
    %3662 = vmatmul.mubr.f32.gmra.mrb[0].mxu0 %v3293
    %v3663 = vpop.f32.mrb[0].mxu0
    %v3664 = vadd.f32 0.0, %v3663
    %v3665 = vpop.f32.mrb[0].mxu0
    %3666 = vmatprep.mubr.f32.mxu0 0.0
    %3667 = vmatmul.mubr.f32.gmra.mrb[0].mxu0 %v3296
    %v3668 = vpop.f32.mrb[0].mxu0
    %v3669 = vadd.f32 0.0, %v3668
    %v3670 = vpop.f32.mrb[0].mxu0
    %3671 = vmatprep.mubr.f32.mxu0 0.0
    %3672 = vmatmul.mubr.f32.gmra.mrb[0].mxu0 %v3299
    %v3673 = vpop.f32.mrb[0].mxu0
    %v3674 = vadd.f32 0.0, %v3673
    %v3675 = vpop.f32.mrb[0].mxu0
    %3676 = vmatprep.mubr.f32.mxu0 0.0
    %3677 = vmatmul.mubr.f32.gmra.mrb[0].mxu0 %v3302
    %v3678 = vpop.f32.mrb[0].mxu0
    %v3679 = vadd.f32 0.0, %v3678
    %v3680 = vpop.f32.mrb[0].mxu0
    %3681 = vmatprep.mubr.f32.mxu0 0.0
    %3682 = vmatmul.mubr.f32.gmra.mrb[0].mxu0 %v3305
    %v3683 = vpop.f32.mrb[0].mxu0
    %v3684 = vadd.f32 0.0, %v3683
    %v3685 = vpop.f32.mrb[0].mxu0
    %3686 = vmatprep.mubr.f32.mxu0 0.0
    %3687 = vmatmul.mubr.f32.gmra.mrb[0].mxu0 %v3308
    %v3688 = vpop.f32.mrb[0].mxu0
    %v3689 = vadd.f32 0.0, %v3688
    %v3690 = vpop.f32.mrb[0].mxu0
    %3691 = vmatprep.mubr.f32.mxu0 0.0
    %3692 = vmatmul.mubr.f32.gmra.mrb[0].mxu0 %v3311
    %v3693 = vpop.f32.mrb[0].mxu0
    %v3694 = vadd.f32 0.0, %v3693
    %v3695 = vpop.f32.mrb[0].mxu0
    %3696 = vmatprep.mubr.f32.mxu0 0.0
    %3697 = vmatmul.mubr.f32.gmra.mrb[0].mxu0 %v3314
    %v3698 = vpop.f32.mrb[0].mxu0
    %v3699 = vadd.f32 0.0, %v3698
    %v3700 = vpop.f32.mrb[0].mxu0
    %3701 = vmatprep.mubr.f32.mxu0 0.0
    %3702 = vmatmul.mubr.f32.gmra.mrb[0].mxu0 %v3317
    %v3703 = vpop.f32.mrb[0].mxu0
    %v3704 = vadd.f32 0.0, %v3703
    %v3705 = vpop.f32.mrb[0].mxu0
    %3706 = vdwg.mxu0
    %v3707 = vadd.f32 %v2933, %v3389
    %v3708 = vadd.f32 %v2934, %v3394
    %v3709 = vadd.f32 %v2935, %v3399
    %v3710 = vadd.f32 %v2936, %v3404
    %v3711 = vadd.f32 %v2937, %v3409
    %v3712 = vadd.f32 %v2938, %v3414
    %v3713 = vadd.f32 %v2939, %v3419
    %v3714 = vadd.f32 %v2940, %v3424
    %v3715 = vadd.f32 %v2941, %v3429
    %v3716 = vadd.f32 %v2942, %v3434
    %v3717 = vadd.f32 %v2943, %v3439
    %v3718 = vadd.f32 %v2944, %v3444
    %v3719 = vadd.f32 %v2945, %v3449
    %v3720 = vadd.f32 %v2946, %v3454
    %v3721 = vadd.f32 %v2947, %v3459
    %v3722 = vadd.f32 %v2948, %v3464
    %v3723 = vadd.f32 %v2949, %v3469
    %v3724 = vadd.f32 %v2950, %v3474
    %v3725 = vadd.f32 %v2951, %v3479
    %v3726 = vadd.f32 %v2952, %v3484
    %v3727 = vadd.f32 %v2953, %v3489
    %v3728 = vadd.f32 %v2954, %v3494
    %v3729 = vadd.f32 %v2955, %v3499
    %v3730 = vadd.f32 %v2956, %v3504
    %v3731 = vadd.f32 %v2957, %v3509
    %v3732 = vadd.f32 %v2958, %v3514
    %v3733 = vadd.f32 %v2959, %v3519
    %v3734 = vadd.f32 %v2960, %v3524
    %v3735 = vadd.f32 %v2961, %v3529
    %v3736 = vadd.f32 %v2962, %v3534
    %v3737 = vadd.f32 %v2963, %v3539
    %v3738 = vadd.f32 %v2964, %v3544
    %v3739 = vadd.f32 %v2965, %v3549
    %v3740 = vadd.f32 %v2966, %v3554
    %v3741 = vadd.f32 %v2967, %v3559
    %v3742 = vadd.f32 %v2968, %v3564
    %v3743 = vadd.f32 %v2969, %v3569
    %v3744 = vadd.f32 %v2970, %v3574
    %v3745 = vadd.f32 %v2971, %v3579
    %v3746 = vadd.f32 %v2972, %v3584
    %v3747 = vadd.f32 %v2973, %v3589
    %v3748 = vadd.f32 %v2974, %v3594
    %v3749 = vadd.f32 %v2975, %v3599
    %v3750 = vadd.f32 %v2976, %v3604
    %v3751 = vadd.f32 %v2977, %v3609
    %v3752 = vadd.f32 %v2978, %v3614
    %v3753 = vadd.f32 %v2979, %v3619
    %v3754 = vadd.f32 %v2980, %v3624
    %v3755 = vadd.f32 %v2981, %v3629
    %v3756 = vadd.f32 %v2982, %v3634
    %v3757 = vadd.f32 %v2983, %v3639
    %v3758 = vadd.f32 %v2984, %v3644
    %v3759 = vadd.f32 %v2985, %v3649
    %v3760 = vadd.f32 %v2986, %v3654
    %v3761 = vadd.f32 %v2987, %v3659
    %v3762 = vadd.f32 %v2988, %v3664
    %v3763 = vadd.f32 %v2989, %v3669
    %v3764 = vadd.f32 %v2990, %v3674
    %v3765 = vadd.f32 %v2991, %v3679
    %v3766 = vadd.f32 %v2992, %v3684
    %v3767 = vadd.f32 %v2993, %v3689
    %v3768 = vadd.f32 %v2994, %v3694
    %v3769 = vadd.f32 %v2995, %v3699
    %v3770 = vadd.f32 %v2996, %v3704
    %v3771 = vld [vmem:[%s2222 + $0x2] sm:$0xff]
    %v3772 = vld [vmem:[%s2222 + $0xa] sm:$0xff]
    %v3773 = vld [vmem:[%s2222 + $0x1a] sm:$0xff]
    %v3774 = vld [vmem:[%s2222 + $0x22] sm:$0xff]
    %v3775 = vld [vmem:[%s2222 + $0x32] sm:$0xff]
    %v3776 = vld [vmem:[%s2222 + $0x3a] sm:$0xff]
    %v3777 = vld [vmem:[%s2222 + $0x4a] sm:$0xff]
    %v3778 = vld [vmem:[%s2222 + $0x52] sm:$0xff]
    %v3779 = vld [vmem:[%s2222 + $0x62] sm:$0xff]
    %v3780 = vld [vmem:[%s2222 + $0x6a] sm:$0xff]
    %v3781 = vld [vmem:[%s2222 + $0x7a] sm:$0xff]
    %v3782 = vld [vmem:[%s2222 + $0x82] sm:$0xff]
    %v3783 = vld [vmem:[%s2222 + $0x92] sm:$0xff]
    %v3784 = vld [vmem:[%s2222 + $0x9a] sm:$0xff]
    %v3785 = vld [vmem:[%s2222 + $0xaa] sm:$0xff]
    %v3786 = vld [vmem:[%s2222 + $0xb2] sm:$0xff]
    %v3787 = vld [vmem:[%s2222 + $0xc2] sm:$0xff]
    %v3788 = vld [vmem:[%s2222 + $0xca] sm:$0xff]
    %v3789 = vld [vmem:[%s2222 + $0xda] sm:$0xff]
    %v3790 = vld [vmem:[%s2222 + $0xe2] sm:$0xff]
    %v3791 = vld [vmem:[%s2222 + $0xf2] sm:$0xff]
    %v3792 = vld [vmem:[%s2222 + $0xfa] sm:$0xff]
    %v3793 = vld [vmem:[%s2222 + $0x10a] sm:$0xff]
    %v3794 = vld [vmem:[%s2222 + $0x112] sm:$0xff]
    %v3795 = vld [vmem:[%s2222 + $0x122] sm:$0xff]
    %v3796 = vld [vmem:[%s2222 + $0x12a] sm:$0xff]
    %v3797 = vld [vmem:[%s2222 + $0x13a] sm:$0xff]
    %v3798 = vld [vmem:[%s2222 + $0x142] sm:$0xff]
    %v3799 = vld [vmem:[%s2222 + $0x152] sm:$0xff]
    %v3800 = vld [vmem:[%s2222 + $0x15a] sm:$0xff]
    %v3801 = vld [vmem:[%s2222 + $0x16a] sm:$0xff]
    %v3802 = vld [vmem:[%s2222 + $0x172] sm:$0xff]
    %v3803 = vld [vmem:[%s2222 + $0x1b2] sm:$0xff]
    %v3804 = vld [vmem:[%s2222 + $0x1ba] sm:$0xff]
    %v3805 = vld [vmem:[%s2222 + $0x1ca] sm:$0xff]
    %v3806 = vld [vmem:[%s2222 + $0x1d2] sm:$0xff]
    %v3807 = vld [vmem:[%s2222 + $0x1e2] sm:$0xff]
    %v3808 = vld [vmem:[%s2222 + $0x1ea] sm:$0xff]
    %v3809 = vld [vmem:[%s2222 + $0x1fa] sm:$0xff]
    %v3810 = vld [vmem:[%s2222 + $0x202] sm:$0xff]
    %v3811 = vld [vmem:[%s2222 + $0x212] sm:$0xff]
    %v3812 = vld [vmem:[%s2222 + $0x21a] sm:$0xff]
    %v3813 = vld [vmem:[%s2222 + $0x22a] sm:$0xff]
    %v3814 = vld [vmem:[%s2222 + $0x232] sm:$0xff]
    %v3815 = vld [vmem:[%s2222 + $0x242] sm:$0xff]
    %v3816 = vld [vmem:[%s2222 + $0x24a] sm:$0xff]
    %v3817 = vld [vmem:[%s2222 + $0x25a] sm:$0xff]
    %v3818 = vld [vmem:[%s2222 + $0x262] sm:$0xff]
    %v3819 = vld [vmem:[%s2222 + $0x272] sm:$0xff]
    %v3820 = vld [vmem:[%s2222 + $0x27a] sm:$0xff]
    %v3821 = vld [vmem:[%s2222 + $0x28a] sm:$0xff]
    %v3822 = vld [vmem:[%s2222 + $0x292] sm:$0xff]
    %v3823 = vld [vmem:[%s2222 + $0x2a2] sm:$0xff]
    %v3824 = vld [vmem:[%s2222 + $0x2aa] sm:$0xff]
    %v3825 = vld [vmem:[%s2222 + $0x2ba] sm:$0xff]
    %v3826 = vld [vmem:[%s2222 + $0x2c2] sm:$0xff]
    %v3827 = vld [vmem:[%s2222 + $0x2d2] sm:$0xff]
    %v3828 = vld [vmem:[%s2222 + $0x2da] sm:$0xff]
    %v3829 = vld [vmem:[%s2222 + $0x2ea] sm:$0xff]
    %v3830 = vld [vmem:[%s2222 + $0x2f2] sm:$0xff]
    %v3831 = vld [vmem:[%s2222 + $0x302] sm:$0xff]
    %v3832 = vld [vmem:[%s2222 + $0x30a] sm:$0xff]
    %v3833 = vld [vmem:[%s2222 + $0x31a] sm:$0xff]
    %v3834 = vld [vmem:[%s2222 + $0x322] sm:$0xff]
    %v3835 = vmax.f32 %v3771, 0.0
    %v3836 = vmax.f32 %v3772, 0.0
    %v3837 = vmax.f32 %v3773, 0.0
    %v3838 = vmax.f32 %v3774, 0.0
    %v3839 = vmax.f32 %v3775, 0.0
    %v3840 = vmax.f32 %v3776, 0.0
    %v3841 = vmax.f32 %v3777, 0.0
    %v3842 = vmax.f32 %v3778, 0.0
    %v3843 = vmax.f32 %v3779, 0.0
    %v3844 = vmax.f32 %v3780, 0.0
    %v3845 = vmax.f32 %v3781, 0.0
    %v3846 = vmax.f32 %v3782, 0.0
    %v3847 = vmax.f32 %v3783, 0.0
    %v3848 = vmax.f32 %v3784, 0.0
    %v3849 = vmax.f32 %v3785, 0.0
    %v3850 = vmax.f32 %v3786, 0.0
    %v3851 = vmax.f32 %v3787, 0.0
    %v3852 = vmax.f32 %v3788, 0.0
    %v3853 = vmax.f32 %v3789, 0.0
    %v3854 = vmax.f32 %v3790, 0.0
    %v3855 = vmax.f32 %v3791, 0.0
    %v3856 = vmax.f32 %v3792, 0.0
    %v3857 = vmax.f32 %v3793, 0.0
    %v3858 = vmax.f32 %v3794, 0.0
    %v3859 = vmax.f32 %v3795, 0.0
    %v3860 = vmax.f32 %v3796, 0.0
    %v3861 = vmax.f32 %v3797, 0.0
    %v3862 = vmax.f32 %v3798, 0.0
    %v3863 = vmax.f32 %v3799, 0.0
    %v3864 = vmax.f32 %v3800, 0.0
    %v3865 = vmax.f32 %v3801, 0.0
    %v3866 = vmax.f32 %v3802, 0.0
    %v3867 = vmax.f32 %v3803, 0.0
    %v3868 = vmax.f32 %v3804, 0.0
    %v3869 = vmax.f32 %v3805, 0.0
    %v3870 = vmax.f32 %v3806, 0.0
    %v3871 = vmax.f32 %v3807, 0.0
    %v3872 = vmax.f32 %v3808, 0.0
    %v3873 = vmax.f32 %v3809, 0.0
    %v3874 = vmax.f32 %v3810, 0.0
    %v3875 = vmax.f32 %v3811, 0.0
    %v3876 = vmax.f32 %v3812, 0.0
    %v3877 = vmax.f32 %v3813, 0.0
    %v3878 = vmax.f32 %v3814, 0.0
    %v3879 = vmax.f32 %v3815, 0.0
    %v3880 = vmax.f32 %v3816, 0.0
    %v3881 = vmax.f32 %v3817, 0.0
    %v3882 = vmax.f32 %v3818, 0.0
    %v3883 = vmax.f32 %v3819, 0.0
    %v3884 = vmax.f32 %v3820, 0.0
    %v3885 = vmax.f32 %v3821, 0.0
    %v3886 = vmax.f32 %v3822, 0.0
    %v3887 = vmax.f32 %v3823, 0.0
    %v3888 = vmax.f32 %v3824, 0.0
    %v3889 = vmax.f32 %v3825, 0.0
    %v3890 = vmax.f32 %v3826, 0.0
    %v3891 = vmax.f32 %v3827, 0.0
    %v3892 = vmax.f32 %v3828, 0.0
    %v3893 = vmax.f32 %v3829, 0.0
    %v3894 = vmax.f32 %v3830, 0.0
    %v3895 = vmax.f32 %v3831, 0.0
    %v3896 = vmax.f32 %v3832, 0.0
    %v3897 = vmax.f32 %v3833, 0.0
    %v3898 = vmax.f32 %v3834, 0.0
    %s3899 = scalar_lea.vmem %s1, 20
    %v3900 = vld [vmem:[%s3899] sm:$0xf]
    %v3902 = vsel %vm286, %v3835, 0
    %v3905 = vsel %vm286, %v3836, 0
    %v3908 = vsel %vm286, %v3837, 0
    %v3911 = vsel %vm286, %v3838, 0
    %v3914 = vsel %vm286, %v3839, 0
    %v3917 = vsel %vm286, %v3840, 0
    %v3920 = vsel %vm286, %v3841, 0
    %v3923 = vsel %vm286, %v3842, 0
    %v3926 = vsel %vm286, %v3843, 0
    %v3929 = vsel %vm286, %v3844, 0
    %v3932 = vsel %vm286, %v3845, 0
    %v3935 = vsel %vm286, %v3846, 0
    %v3938 = vsel %vm286, %v3847, 0
    %v3941 = vsel %vm286, %v3848, 0
    %v3944 = vsel %vm286, %v3849, 0
    %v3947 = vsel %vm286, %v3850, 0
    %v3950 = vsel %vm286, %v3851, 0
    %v3953 = vsel %vm286, %v3852, 0
    %v3956 = vsel %vm286, %v3853, 0
    %v3959 = vsel %vm286, %v3854, 0
    %v3962 = vsel %vm286, %v3855, 0
    %v3965 = vsel %vm286, %v3856, 0
    %v3968 = vsel %vm286, %v3857, 0
    %v3971 = vsel %vm286, %v3858, 0
    %v3974 = vsel %vm286, %v3859, 0
    %v3977 = vsel %vm286, %v3860, 0
    %v3980 = vsel %vm286, %v3861, 0
    %v3983 = vsel %vm286, %v3862, 0
    %v3986 = vsel %vm286, %v3863, 0
    %v3989 = vsel %vm286, %v3864, 0
    %v3992 = vsel %vm286, %v3865, 0
    %v3995 = vsel %vm286, %v3866, 0
    %v3998 = vsel %vm286, %v3867, 0
    %v4001 = vsel %vm286, %v3868, 0
    %v4004 = vsel %vm286, %v3869, 0
    %v4007 = vsel %vm286, %v3870, 0
    %v4010 = vsel %vm286, %v3871, 0
    %v4013 = vsel %vm286, %v3872, 0
    %v4016 = vsel %vm286, %v3873, 0
    %v4019 = vsel %vm286, %v3874, 0
    %v4022 = vsel %vm286, %v3875, 0
    %v4025 = vsel %vm286, %v3876, 0
    %v4028 = vsel %vm286, %v3877, 0
    %v4031 = vsel %vm286, %v3878, 0
    %v4034 = vsel %vm286, %v3879, 0
    %v4037 = vsel %vm286, %v3880, 0
    %v4040 = vsel %vm286, %v3881, 0
    %v4043 = vsel %vm286, %v3882, 0
    %v4046 = vsel %vm286, %v3883, 0
    %v4049 = vsel %vm286, %v3884, 0
    %v4052 = vsel %vm286, %v3885, 0
    %v4055 = vsel %vm286, %v3886, 0
    %v4058 = vsel %vm286, %v3887, 0
    %v4061 = vsel %vm286, %v3888, 0
    %v4064 = vsel %vm286, %v3889, 0
    %v4067 = vsel %vm286, %v3890, 0
    %v4070 = vsel %vm286, %v3891, 0
    %v4073 = vsel %vm286, %v3892, 0
    %v4076 = vsel %vm286, %v3893, 0
    %v4079 = vsel %vm286, %v3894, 0
    %v4082 = vsel %vm286, %v3895, 0
    %v4085 = vsel %vm286, %v3896, 0
    %v4088 = vsel %vm286, %v3897, 0
    %v4091 = vsel %vm286, %v3898, 0
    %v4094 = vsel %vm479, %v3900, 0
    %4096 = vmatprep.subr.mxu0 0.0
    %4097 = vmatpush1.msra.mxu0 %v4094
    %4098 = vmatprep.subr.mxu0 0.0
    %4099 = vmatpush1.msra.mxu0 0.0
    %4100 = vmatprep.subr.mxu0 0.0
    %4101 = vmatpush1.msra.mxu0 0.0
    %4102 = vmatprep.subr.mxu0 0.0
    %4103 = vmatpush1.msra.mxu0 0.0
    %4104 = vmatprep.subr.mxu0 0.0
    %4105 = vmatpush1.msra.mxu0 0.0
    %4106 = vmatprep.subr.mxu0 0.0
    %4107 = vmatpush1.msra.mxu0 0.0
    %4108 = vmatprep.subr.mxu0 0.0
    %4109 = vmatpush1.msra.mxu0 0.0
    %4110 = vmatprep.subr.mxu0 0.0
    %4111 = vmatpush1.msra.mxu0 0.0
    %4112 = vmatprep.subr.mxu0 0.0
    %4113 = vmatpush1.msra.mxu0 0.0
    %4114 = vmatprep.subr.mxu0 0.0
    %4115 = vmatpush1.msra.mxu0 0.0
    %4116 = vmatprep.subr.mxu0 0.0
    %4117 = vmatpush1.msra.mxu0 0.0
    %4118 = vmatprep.subr.mxu0 0.0
    %4119 = vmatpush1.msra.mxu0 0.0
    %4120 = vmatprep.subr.mxu0 0.0
    %4121 = vmatpush1.msra.mxu0 0.0
    %4122 = vmatprep.subr.mxu0 0.0
    %4123 = vmatpush1.msra.mxu0 0.0
    %4124 = vmatprep.subr.mxu0 0.0
    %4125 = vmatpush1.msra.mxu0 0.0
    %4126 = vmatprep.subr.mxu0 0.0
    %4127 = vmatpush1.msra.mxu0 0.0
    %4128 = vmatprep.subr.mxu0 0.0
    %4129 = vmatpush1.msra.mxu0 0.0
    %4130 = vmatprep.subr.mxu0 0.0
    %4131 = vmatpush1.msra.mxu0 0.0
    %4132 = vmatprep.subr.mxu0 0.0
    %4133 = vmatpush1.msra.mxu0 0.0
    %4134 = vmatprep.subr.mxu0 0.0
    %4135 = vmatpush1.msra.mxu0 0.0
    %4136 = vmatprep.subr.mxu0 0.0
    %4137 = vmatpush1.msra.mxu0 0.0
    %4138 = vmatprep.subr.mxu0 0.0
    %4139 = vmatpush1.msra.mxu0 0.0
    %4140 = vmatprep.subr.mxu0 0.0
    %4141 = vmatpush1.msra.mxu0 0.0
    %4142 = vmatprep.subr.mxu0 0.0
    %4143 = vmatpush1.msra.mxu0 0.0
    %4144 = vmatprep.subr.mxu0 0.0
    %4145 = vmatpush1.msra.mxu0 0.0
    %4146 = vmatprep.subr.mxu0 0.0
    %4147 = vmatpush1.msra.mxu0 0.0
    %4148 = vmatprep.subr.mxu0 0.0
    %4149 = vmatpush1.msra.mxu0 0.0
    %4150 = vmatprep.subr.mxu0 0.0
    %4151 = vmatpush1.msra.mxu0 0.0
    %4152 = vmatprep.subr.mxu0 0.0
    %4153 = vmatpush1.msra.mxu0 0.0
    %4154 = vmatprep.subr.mxu0 0.0
    %4155 = vmatpush1.msra.mxu0 0.0
    %4156 = vmatprep.subr.mxu0 0.0
    %4157 = vmatpush1.msra.mxu0 0.0
    %4158 = vmatprep.subr.mxu0 0.0
    %4159 = vmatpush1.msra.mxu0 0.0
    %4160 = vmatprep.mubr.f32.mxu0 0.0
    %4161 = vmatmul.mubr.f32.gmra.mrb[0].mxu0 %v3902
    %v4162 = vpop.f32.mrb[0].mxu0
    %v4163 = vadd.f32 0.0, %v4162
    %v4164 = vpop.f32.mrb[0].mxu0
    %4165 = vmatprep.mubr.f32.mxu0 0.0
    %4166 = vmatmul.mubr.f32.gmra.mrb[0].mxu0 %v3905
    %v4167 = vpop.f32.mrb[0].mxu0
    %v4168 = vadd.f32 0.0, %v4167
    %v4169 = vpop.f32.mrb[0].mxu0
    %4170 = vmatprep.mubr.f32.mxu0 0.0
    %4171 = vmatmul.mubr.f32.gmra.mrb[0].mxu0 %v3908
    %v4172 = vpop.f32.mrb[0].mxu0
    %v4173 = vadd.f32 0.0, %v4172
    %v4174 = vpop.f32.mrb[0].mxu0
    %4175 = vmatprep.mubr.f32.mxu0 0.0
    %4176 = vmatmul.mubr.f32.gmra.mrb[0].mxu0 %v3911
    %v4177 = vpop.f32.mrb[0].mxu0
    %v4178 = vadd.f32 0.0, %v4177
    %v4179 = vpop.f32.mrb[0].mxu0
    %4180 = vmatprep.mubr.f32.mxu0 0.0
    %4181 = vmatmul.mubr.f32.gmra.mrb[0].mxu0 %v3914
    %v4182 = vpop.f32.mrb[0].mxu0
    %v4183 = vadd.f32 0.0, %v4182
    %v4184 = vpop.f32.mrb[0].mxu0
    %4185 = vmatprep.mubr.f32.mxu0 0.0
    %4186 = vmatmul.mubr.f32.gmra.mrb[0].mxu0 %v3917
    %v4187 = vpop.f32.mrb[0].mxu0
    %v4188 = vadd.f32 0.0, %v4187
    %v4189 = vpop.f32.mrb[0].mxu0
    %4190 = vmatprep.mubr.f32.mxu0 0.0
    %4191 = vmatmul.mubr.f32.gmra.mrb[0].mxu0 %v3920
    %v4192 = vpop.f32.mrb[0].mxu0
    %v4193 = vadd.f32 0.0, %v4192
    %v4194 = vpop.f32.mrb[0].mxu0
    %4195 = vmatprep.mubr.f32.mxu0 0.0
    %4196 = vmatmul.mubr.f32.gmra.mrb[0].mxu0 %v3923
    %v4197 = vpop.f32.mrb[0].mxu0
    %v4198 = vadd.f32 0.0, %v4197
    %v4199 = vpop.f32.mrb[0].mxu0
    %4200 = vmatprep.mubr.f32.mxu0 0.0
    %4201 = vmatmul.mubr.f32.gmra.mrb[0].mxu0 %v3926
    %v4202 = vpop.f32.mrb[0].mxu0
    %v4203 = vadd.f32 0.0, %v4202
    %v4204 = vpop.f32.mrb[0].mxu0
    %4205 = vmatprep.mubr.f32.mxu0 0.0
    %4206 = vmatmul.mubr.f32.gmra.mrb[0].mxu0 %v3929
    %v4207 = vpop.f32.mrb[0].mxu0
    %v4208 = vadd.f32 0.0, %v4207
    %v4209 = vpop.f32.mrb[0].mxu0
    %4210 = vmatprep.mubr.f32.mxu0 0.0
    %4211 = vmatmul.mubr.f32.gmra.mrb[0].mxu0 %v3932
    %v4212 = vpop.f32.mrb[0].mxu0
    %v4213 = vadd.f32 0.0, %v4212
    %v4214 = vpop.f32.mrb[0].mxu0
    %4215 = vmatprep.mubr.f32.mxu0 0.0
    %4216 = vmatmul.mubr.f32.gmra.mrb[0].mxu0 %v3935
    %v4217 = vpop.f32.mrb[0].mxu0
    %v4218 = vadd.f32 0.0, %v4217
    %v4219 = vpop.f32.mrb[0].mxu0
    %4220 = vmatprep.mubr.f32.mxu0 0.0
    %4221 = vmatmul.mubr.f32.gmra.mrb[0].mxu0 %v3938
    %v4222 = vpop.f32.mrb[0].mxu0
    %v4223 = vadd.f32 0.0, %v4222
    %v4224 = vpop.f32.mrb[0].mxu0
    %4225 = vmatprep.mubr.f32.mxu0 0.0
    %4226 = vmatmul.mubr.f32.gmra.mrb[0].mxu0 %v3941
    %v4227 = vpop.f32.mrb[0].mxu0
    %v4228 = vadd.f32 0.0, %v4227
    %v4229 = vpop.f32.mrb[0].mxu0
    %4230 = vmatprep.mubr.f32.mxu0 0.0
    %4231 = vmatmul.mubr.f32.gmra.mrb[0].mxu0 %v3944
    %v4232 = vpop.f32.mrb[0].mxu0
    %v4233 = vadd.f32 0.0, %v4232
    %v4234 = vpop.f32.mrb[0].mxu0
    %4235 = vmatprep.mubr.f32.mxu0 0.0
    %4236 = vmatmul.mubr.f32.gmra.mrb[0].mxu0 %v3947
    %v4237 = vpop.f32.mrb[0].mxu0
    %v4238 = vadd.f32 0.0, %v4237
    %v4239 = vpop.f32.mrb[0].mxu0
    %4240 = vmatprep.mubr.f32.mxu0 0.0
    %4241 = vmatmul.mubr.f32.gmra.mrb[0].mxu0 %v3950
    %v4242 = vpop.f32.mrb[0].mxu0
    %v4243 = vadd.f32 0.0, %v4242
    %v4244 = vpop.f32.mrb[0].mxu0
    %4245 = vmatprep.mubr.f32.mxu0 0.0
    %4246 = vmatmul.mubr.f32.gmra.mrb[0].mxu0 %v3953
    %v4247 = vpop.f32.mrb[0].mxu0
    %v4248 = vadd.f32 0.0, %v4247
    %v4249 = vpop.f32.mrb[0].mxu0
    %4250 = vmatprep.mubr.f32.mxu0 0.0
    %4251 = vmatmul.mubr.f32.gmra.mrb[0].mxu0 %v3956
    %v4252 = vpop.f32.mrb[0].mxu0
    %v4253 = vadd.f32 0.0, %v4252
    %v4254 = vpop.f32.mrb[0].mxu0
    %4255 = vmatprep.mubr.f32.mxu0 0.0
    %4256 = vmatmul.mubr.f32.gmra.mrb[0].mxu0 %v3959
    %v4257 = vpop.f32.mrb[0].mxu0
    %v4258 = vadd.f32 0.0, %v4257
    %v4259 = vpop.f32.mrb[0].mxu0
    %4260 = vmatprep.mubr.f32.mxu0 0.0
    %4261 = vmatmul.mubr.f32.gmra.mrb[0].mxu0 %v3962
    %v4262 = vpop.f32.mrb[0].mxu0
    %v4263 = vadd.f32 0.0, %v4262
    %v4264 = vpop.f32.mrb[0].mxu0
    %4265 = vmatprep.mubr.f32.mxu0 0.0
    %4266 = vmatmul.mubr.f32.gmra.mrb[0].mxu0 %v3965
    %v4267 = vpop.f32.mrb[0].mxu0
    %v4268 = vadd.f32 0.0, %v4267
    %v4269 = vpop.f32.mrb[0].mxu0
    %4270 = vmatprep.mubr.f32.mxu0 0.0
    %4271 = vmatmul.mubr.f32.gmra.mrb[0].mxu0 %v3968
    %v4272 = vpop.f32.mrb[0].mxu0
    %v4273 = vadd.f32 0.0, %v4272
    %v4274 = vpop.f32.mrb[0].mxu0
    %4275 = vmatprep.mubr.f32.mxu0 0.0
    %4276 = vmatmul.mubr.f32.gmra.mrb[0].mxu0 %v3971
    %v4277 = vpop.f32.mrb[0].mxu0
    %v4278 = vadd.f32 0.0, %v4277
    %v4279 = vpop.f32.mrb[0].mxu0
    %4280 = vmatprep.mubr.f32.mxu0 0.0
    %4281 = vmatmul.mubr.f32.gmra.mrb[0].mxu0 %v3974
    %v4282 = vpop.f32.mrb[0].mxu0
    %v4283 = vadd.f32 0.0, %v4282
    %v4284 = vpop.f32.mrb[0].mxu0
    %4285 = vmatprep.mubr.f32.mxu0 0.0
    %4286 = vmatmul.mubr.f32.gmra.mrb[0].mxu0 %v3977
    %v4287 = vpop.f32.mrb[0].mxu0
    %v4288 = vadd.f32 0.0, %v4287
    %v4289 = vpop.f32.mrb[0].mxu0
    %4290 = vmatprep.mubr.f32.mxu0 0.0
    %4291 = vmatmul.mubr.f32.gmra.mrb[0].mxu0 %v3980
    %v4292 = vpop.f32.mrb[0].mxu0
    %v4293 = vadd.f32 0.0, %v4292
    %v4294 = vpop.f32.mrb[0].mxu0
    %4295 = vmatprep.mubr.f32.mxu0 0.0
    %4296 = vmatmul.mubr.f32.gmra.mrb[0].mxu0 %v3983
    %v4297 = vpop.f32.mrb[0].mxu0
    %v4298 = vadd.f32 0.0, %v4297
    %v4299 = vpop.f32.mrb[0].mxu0
    %4300 = vmatprep.mubr.f32.mxu0 0.0
    %4301 = vmatmul.mubr.f32.gmra.mrb[0].mxu0 %v3986
    %v4302 = vpop.f32.mrb[0].mxu0
    %v4303 = vadd.f32 0.0, %v4302
    %v4304 = vpop.f32.mrb[0].mxu0
    %4305 = vmatprep.mubr.f32.mxu0 0.0
    %4306 = vmatmul.mubr.f32.gmra.mrb[0].mxu0 %v3989
    %v4307 = vpop.f32.mrb[0].mxu0
    %v4308 = vadd.f32 0.0, %v4307
    %v4309 = vpop.f32.mrb[0].mxu0
    %4310 = vmatprep.mubr.f32.mxu0 0.0
    %4311 = vmatmul.mubr.f32.gmra.mrb[0].mxu0 %v3992
    %v4312 = vpop.f32.mrb[0].mxu0
    %v4313 = vadd.f32 0.0, %v4312
    %v4314 = vpop.f32.mrb[0].mxu0
    %4315 = vmatprep.mubr.f32.mxu0 0.0
    %4316 = vmatmul.mubr.f32.gmra.mrb[0].mxu0 %v3995
    %v4317 = vpop.f32.mrb[0].mxu0
    %v4318 = vadd.f32 0.0, %v4317
    %v4319 = vpop.f32.mrb[0].mxu0
    %4320 = vmatprep.mubr.f32.mxu0 0.0
    %4321 = vmatmul.mubr.f32.gmra.mrb[0].mxu0 %v3998
    %v4322 = vpop.f32.mrb[0].mxu0
    %v4323 = vadd.f32 0.0, %v4322
    %v4324 = vpop.f32.mrb[0].mxu0
    %4325 = vmatprep.mubr.f32.mxu0 0.0
    %4326 = vmatmul.mubr.f32.gmra.mrb[0].mxu0 %v4001
    %v4327 = vpop.f32.mrb[0].mxu0
    %v4328 = vadd.f32 0.0, %v4327
    %v4329 = vpop.f32.mrb[0].mxu0
    %4330 = vmatprep.mubr.f32.mxu0 0.0
    %4331 = vmatmul.mubr.f32.gmra.mrb[0].mxu0 %v4004
    %v4332 = vpop.f32.mrb[0].mxu0
    %v4333 = vadd.f32 0.0, %v4332
    %v4334 = vpop.f32.mrb[0].mxu0
    %4335 = vmatprep.mubr.f32.mxu0 0.0
    %4336 = vmatmul.mubr.f32.gmra.mrb[0].mxu0 %v4007
    %v4337 = vpop.f32.mrb[0].mxu0
    %v4338 = vadd.f32 0.0, %v4337
    %v4339 = vpop.f32.mrb[0].mxu0
    %4340 = vmatprep.mubr.f32.mxu0 0.0
    %4341 = vmatmul.mubr.f32.gmra.mrb[0].mxu0 %v4010
    %v4342 = vpop.f32.mrb[0].mxu0
    %v4343 = vadd.f32 0.0, %v4342
    %v4344 = vpop.f32.mrb[0].mxu0
    %4345 = vmatprep.mubr.f32.mxu0 0.0
    %4346 = vmatmul.mubr.f32.gmra.mrb[0].mxu0 %v4013
    %v4347 = vpop.f32.mrb[0].mxu0
    %v4348 = vadd.f32 0.0, %v4347
    %v4349 = vpop.f32.mrb[0].mxu0
    %4350 = vmatprep.mubr.f32.mxu0 0.0
    %4351 = vmatmul.mubr.f32.gmra.mrb[0].mxu0 %v4016
    %v4352 = vpop.f32.mrb[0].mxu0
    %v4353 = vadd.f32 0.0, %v4352
    %v4354 = vpop.f32.mrb[0].mxu0
    %4355 = vmatprep.mubr.f32.mxu0 0.0
    %4356 = vmatmul.mubr.f32.gmra.mrb[0].mxu0 %v4019
    %v4357 = vpop.f32.mrb[0].mxu0
    %v4358 = vadd.f32 0.0, %v4357
    %v4359 = vpop.f32.mrb[0].mxu0
    %4360 = vmatprep.mubr.f32.mxu0 0.0
    %4361 = vmatmul.mubr.f32.gmra.mrb[0].mxu0 %v4022
    %v4362 = vpop.f32.mrb[0].mxu0
    %v4363 = vadd.f32 0.0, %v4362
    %v4364 = vpop.f32.mrb[0].mxu0
    %4365 = vmatprep.mubr.f32.mxu0 0.0
    %4366 = vmatmul.mubr.f32.gmra.mrb[0].mxu0 %v4025
    %v4367 = vpop.f32.mrb[0].mxu0
    %v4368 = vadd.f32 0.0, %v4367
    %v4369 = vpop.f32.mrb[0].mxu0
    %4370 = vmatprep.mubr.f32.mxu0 0.0
    %4371 = vmatmul.mubr.f32.gmra.mrb[0].mxu0 %v4028
    %v4372 = vpop.f32.mrb[0].mxu0
    %v4373 = vadd.f32 0.0, %v4372
    %v4374 = vpop.f32.mrb[0].mxu0
    %4375 = vmatprep.mubr.f32.mxu0 0.0
    %4376 = vmatmul.mubr.f32.gmra.mrb[0].mxu0 %v4031
    %v4377 = vpop.f32.mrb[0].mxu0
    %v4378 = vadd.f32 0.0, %v4377
    %v4379 = vpop.f32.mrb[0].mxu0
    %4380 = vmatprep.mubr.f32.mxu0 0.0
    %4381 = vmatmul.mubr.f32.gmra.mrb[0].mxu0 %v4034
    %v4382 = vpop.f32.mrb[0].mxu0
    %v4383 = vadd.f32 0.0, %v4382
    %v4384 = vpop.f32.mrb[0].mxu0
    %4385 = vmatprep.mubr.f32.mxu0 0.0
    %4386 = vmatmul.mubr.f32.gmra.mrb[0].mxu0 %v4037
    %v4387 = vpop.f32.mrb[0].mxu0
    %v4388 = vadd.f32 0.0, %v4387
    %v4389 = vpop.f32.mrb[0].mxu0
    %4390 = vmatprep.mubr.f32.mxu0 0.0
    %4391 = vmatmul.mubr.f32.gmra.mrb[0].mxu0 %v4040
    %v4392 = vpop.f32.mrb[0].mxu0
    %v4393 = vadd.f32 0.0, %v4392
    %v4394 = vpop.f32.mrb[0].mxu0
    %4395 = vmatprep.mubr.f32.mxu0 0.0
    %4396 = vmatmul.mubr.f32.gmra.mrb[0].mxu0 %v4043
    %v4397 = vpop.f32.mrb[0].mxu0
    %v4398 = vadd.f32 0.0, %v4397
    %v4399 = vpop.f32.mrb[0].mxu0
    %4400 = vmatprep.mubr.f32.mxu0 0.0
    %4401 = vmatmul.mubr.f32.gmra.mrb[0].mxu0 %v4046
    %v4402 = vpop.f32.mrb[0].mxu0
    %v4403 = vadd.f32 0.0, %v4402
    %v4404 = vpop.f32.mrb[0].mxu0
    %4405 = vmatprep.mubr.f32.mxu0 0.0
    %4406 = vmatmul.mubr.f32.gmra.mrb[0].mxu0 %v4049
    %v4407 = vpop.f32.mrb[0].mxu0
    %v4408 = vadd.f32 0.0, %v4407
    %v4409 = vpop.f32.mrb[0].mxu0
    %4410 = vmatprep.mubr.f32.mxu0 0.0
    %4411 = vmatmul.mubr.f32.gmra.mrb[0].mxu0 %v4052
    %v4412 = vpop.f32.mrb[0].mxu0
    %v4413 = vadd.f32 0.0, %v4412
    %v4414 = vpop.f32.mrb[0].mxu0
    %4415 = vmatprep.mubr.f32.mxu0 0.0
    %4416 = vmatmul.mubr.f32.gmra.mrb[0].mxu0 %v4055
    %v4417 = vpop.f32.mrb[0].mxu0
    %v4418 = vadd.f32 0.0, %v4417
    %v4419 = vpop.f32.mrb[0].mxu0
    %4420 = vmatprep.mubr.f32.mxu0 0.0
    %4421 = vmatmul.mubr.f32.gmra.mrb[0].mxu0 %v4058
    %v4422 = vpop.f32.mrb[0].mxu0
    %v4423 = vadd.f32 0.0, %v4422
    %v4424 = vpop.f32.mrb[0].mxu0
    %4425 = vmatprep.mubr.f32.mxu0 0.0
    %4426 = vmatmul.mubr.f32.gmra.mrb[0].mxu0 %v4061
    %v4427 = vpop.f32.mrb[0].mxu0
    %v4428 = vadd.f32 0.0, %v4427
    %v4429 = vpop.f32.mrb[0].mxu0
    %4430 = vmatprep.mubr.f32.mxu0 0.0
    %4431 = vmatmul.mubr.f32.gmra.mrb[0].mxu0 %v4064
    %v4432 = vpop.f32.mrb[0].mxu0
    %v4433 = vadd.f32 0.0, %v4432
    %v4434 = vpop.f32.mrb[0].mxu0
    %4435 = vmatprep.mubr.f32.mxu0 0.0
    %4436 = vmatmul.mubr.f32.gmra.mrb[0].mxu0 %v4067
    %v4437 = vpop.f32.mrb[0].mxu0
    %v4438 = vadd.f32 0.0, %v4437
    %v4439 = vpop.f32.mrb[0].mxu0
    %4440 = vmatprep.mubr.f32.mxu0 0.0
    %4441 = vmatmul.mubr.f32.gmra.mrb[0].mxu0 %v4070
    %v4442 = vpop.f32.mrb[0].mxu0
    %v4443 = vadd.f32 0.0, %v4442
    %v4444 = vpop.f32.mrb[0].mxu0
    %4445 = vmatprep.mubr.f32.mxu0 0.0
    %4446 = vmatmul.mubr.f32.gmra.mrb[0].mxu0 %v4073
    %v4447 = vpop.f32.mrb[0].mxu0
    %v4448 = vadd.f32 0.0, %v4447
    %v4449 = vpop.f32.mrb[0].mxu0
    %4450 = vmatprep.mubr.f32.mxu0 0.0
    %4451 = vmatmul.mubr.f32.gmra.mrb[0].mxu0 %v4076
    %v4452 = vpop.f32.mrb[0].mxu0
    %v4453 = vadd.f32 0.0, %v4452
    %v4454 = vpop.f32.mrb[0].mxu0
    %4455 = vmatprep.mubr.f32.mxu0 0.0
    %4456 = vmatmul.mubr.f32.gmra.mrb[0].mxu0 %v4079
    %v4457 = vpop.f32.mrb[0].mxu0
    %v4458 = vadd.f32 0.0, %v4457
    %v4459 = vpop.f32.mrb[0].mxu0
    %4460 = vmatprep.mubr.f32.mxu0 0.0
    %4461 = vmatmul.mubr.f32.gmra.mrb[0].mxu0 %v4082
    %v4462 = vpop.f32.mrb[0].mxu0
    %v4463 = vadd.f32 0.0, %v4462
    %v4464 = vpop.f32.mrb[0].mxu0
    %4465 = vmatprep.mubr.f32.mxu0 0.0
    %4466 = vmatmul.mubr.f32.gmra.mrb[0].mxu0 %v4085
    %v4467 = vpop.f32.mrb[0].mxu0
    %v4468 = vadd.f32 0.0, %v4467
    %v4469 = vpop.f32.mrb[0].mxu0
    %4470 = vmatprep.mubr.f32.mxu0 0.0
    %4471 = vmatmul.mubr.f32.gmra.mrb[0].mxu0 %v4088
    %v4472 = vpop.f32.mrb[0].mxu0
    %v4473 = vadd.f32 0.0, %v4472
    %v4474 = vpop.f32.mrb[0].mxu0
    %4475 = vmatprep.mubr.f32.mxu0 0.0
    %4476 = vmatmul.mubr.f32.gmra.mrb[0].mxu0 %v4091
    %v4477 = vpop.f32.mrb[0].mxu0
    %v4478 = vadd.f32 0.0, %v4477
    %v4479 = vpop.f32.mrb[0].mxu0
    %4480 = vdwg.mxu0
    %v4481 = vadd.f32 %v3707, %v4163
    %v4482 = vadd.f32 %v3708, %v4168
    %v4483 = vadd.f32 %v3709, %v4173
    %v4484 = vadd.f32 %v3710, %v4178
    %v4485 = vadd.f32 %v3711, %v4183
    %v4486 = vadd.f32 %v3712, %v4188
    %v4487 = vadd.f32 %v3713, %v4193
    %v4488 = vadd.f32 %v3714, %v4198
    %v4489 = vadd.f32 %v3715, %v4203
    %v4490 = vadd.f32 %v3716, %v4208
    %v4491 = vadd.f32 %v3717, %v4213
    %v4492 = vadd.f32 %v3718, %v4218
    %v4493 = vadd.f32 %v3719, %v4223
    %v4494 = vadd.f32 %v3720, %v4228
    %v4495 = vadd.f32 %v3721, %v4233
    %v4496 = vadd.f32 %v3722, %v4238
    %v4497 = vadd.f32 %v3723, %v4243
    %v4498 = vadd.f32 %v3724, %v4248
    %v4499 = vadd.f32 %v3725, %v4253
    %v4500 = vadd.f32 %v3726, %v4258
    %v4501 = vadd.f32 %v3727, %v4263
    %v4502 = vadd.f32 %v3728, %v4268
    %v4503 = vadd.f32 %v3729, %v4273
    %v4504 = vadd.f32 %v3730, %v4278
    %v4505 = vadd.f32 %v3731, %v4283
    %v4506 = vadd.f32 %v3732, %v4288
    %v4507 = vadd.f32 %v3733, %v4293
    %v4508 = vadd.f32 %v3734, %v4298
    %v4509 = vadd.f32 %v3735, %v4303
    %v4510 = vadd.f32 %v3736, %v4308
    %v4511 = vadd.f32 %v3737, %v4313
    %v4512 = vadd.f32 %v3738, %v4318
    %v4513 = vadd.f32 %v3739, %v4323
    %v4514 = vadd.f32 %v3740, %v4328
    %v4515 = vadd.f32 %v3741, %v4333
    %v4516 = vadd.f32 %v3742, %v4338
    %v4517 = vadd.f32 %v3743, %v4343
    %v4518 = vadd.f32 %v3744, %v4348
    %v4519 = vadd.f32 %v3745, %v4353
    %v4520 = vadd.f32 %v3746, %v4358
    %v4521 = vadd.f32 %v3747, %v4363
    %v4522 = vadd.f32 %v3748, %v4368
    %v4523 = vadd.f32 %v3749, %v4373
    %v4524 = vadd.f32 %v3750, %v4378
    %v4525 = vadd.f32 %v3751, %v4383
    %v4526 = vadd.f32 %v3752, %v4388
    %v4527 = vadd.f32 %v3753, %v4393
    %v4528 = vadd.f32 %v3754, %v4398
    %v4529 = vadd.f32 %v3755, %v4403
    %v4530 = vadd.f32 %v3756, %v4408
    %v4531 = vadd.f32 %v3757, %v4413
    %v4532 = vadd.f32 %v3758, %v4418
    %v4533 = vadd.f32 %v3759, %v4423
    %v4534 = vadd.f32 %v3760, %v4428
    %v4535 = vadd.f32 %v3761, %v4433
    %v4536 = vadd.f32 %v3762, %v4438
    %v4537 = vadd.f32 %v3763, %v4443
    %v4538 = vadd.f32 %v3764, %v4448
    %v4539 = vadd.f32 %v3765, %v4453
    %v4540 = vadd.f32 %v3766, %v4458
    %v4541 = vadd.f32 %v3767, %v4463
    %v4542 = vadd.f32 %v3768, %v4468
    %v4543 = vadd.f32 %v3769, %v4473
    %v4544 = vadd.f32 %v3770, %v4478
    %s4545 = scalar_lea.vmem %s0, 48
    %v4546 = vld [vmem:[%s4545] sm:$0xff]
    %v4547 = vld [vmem:[%s4545 + $0x8] sm:$0xff]
    %v4548 = vld [vmem:[%s4545 + $0x18] sm:$0xff]
    %v4549 = vld [vmem:[%s4545 + $0x20] sm:$0xff]
    %v4550 = vld [vmem:[%s4545 + $0x30] sm:$0xff]
    %v4551 = vld [vmem:[%s4545 + $0x38] sm:$0xff]
    %v4552 = vld [vmem:[%s4545 + $0x48] sm:$0xff]
    %v4553 = vld [vmem:[%s4545 + $0x50] sm:$0xff]
    %v4554 = vld [vmem:[%s4545 + $0x60] sm:$0xff]
    %v4555 = vld [vmem:[%s4545 + $0x68] sm:$0xff]
    %v4556 = vld [vmem:[%s4545 + $0x78] sm:$0xff]
    %v4557 = vld [vmem:[%s4545 + $0x80] sm:$0xff]
    %v4558 = vld [vmem:[%s4545 + $0x90] sm:$0xff]
    %v4559 = vld [vmem:[%s4545 + $0x98] sm:$0xff]
    %v4560 = vld [vmem:[%s4545 + $0xa8] sm:$0xff]
    %v4561 = vld [vmem:[%s4545 + $0xb0] sm:$0xff]
    %v4562 = vld [vmem:[%s4545 + $0xc0] sm:$0xff]
    %v4563 = vld [vmem:[%s4545 + $0xc8] sm:$0xff]
    %v4564 = vld [vmem:[%s4545 + $0xd8] sm:$0xff]
    %v4565 = vld [vmem:[%s4545 + $0xe0] sm:$0xff]
    %v4566 = vld [vmem:[%s4545 + $0xf0] sm:$0xff]
    %v4567 = vld [vmem:[%s4545 + $0xf8] sm:$0xff]
    %v4568 = vld [vmem:[%s4545 + $0x108] sm:$0xff]
    %v4569 = vld [vmem:[%s4545 + $0x110] sm:$0xff]
    %v4570 = vld [vmem:[%s4545 + $0x120] sm:$0xff]
    %v4571 = vld [vmem:[%s4545 + $0x128] sm:$0xff]
    %v4572 = vld [vmem:[%s4545 + $0x138] sm:$0xff]
    %v4573 = vld [vmem:[%s4545 + $0x140] sm:$0xff]
    %v4574 = vld [vmem:[%s4545 + $0x150] sm:$0xff]
    %v4575 = vld [vmem:[%s4545 + $0x158] sm:$0xff]
    %v4576 = vld [vmem:[%s4545 + $0x168] sm:$0xff]
    %v4577 = vld [vmem:[%s4545 + $0x170] sm:$0xff]
    %v4578 = vld [vmem:[%s4545 + $0x1b0] sm:$0xff]
    %v4579 = vld [vmem:[%s4545 + $0x1b8] sm:$0xff]
    %v4580 = vld [vmem:[%s4545 + $0x1c8] sm:$0xff]
    %v4581 = vld [vmem:[%s4545 + $0x1d0] sm:$0xff]
    %v4582 = vld [vmem:[%s4545 + $0x1e0] sm:$0xff]
    %v4583 = vld [vmem:[%s4545 + $0x1e8] sm:$0xff]
    %v4584 = vld [vmem:[%s4545 + $0x1f8] sm:$0xff]
    %v4585 = vld [vmem:[%s4545 + $0x200] sm:$0xff]
    %v4586 = vld [vmem:[%s4545 + $0x210] sm:$0xff]
    %v4587 = vld [vmem:[%s4545 + $0x218] sm:$0xff]
    %v4588 = vld [vmem:[%s4545 + $0x228] sm:$0xff]
    %v4589 = vld [vmem:[%s4545 + $0x230] sm:$0xff]
    %v4590 = vld [vmem:[%s4545 + $0x240] sm:$0xff]
    %v4591 = vld [vmem:[%s4545 + $0x248] sm:$0xff]
    %v4592 = vld [vmem:[%s4545 + $0x258] sm:$0xff]
    %v4593 = vld [vmem:[%s4545 + $0x260] sm:$0xff]
    %v4594 = vld [vmem:[%s4545 + $0x270] sm:$0xff]
    %v4595 = vld [vmem:[%s4545 + $0x278] sm:$0xff]
    %v4596 = vld [vmem:[%s4545 + $0x288] sm:$0xff]
    %v4597 = vld [vmem:[%s4545 + $0x290] sm:$0xff]
    %v4598 = vld [vmem:[%s4545 + $0x2a0] sm:$0xff]
    %v4599 = vld [vmem:[%s4545 + $0x2a8] sm:$0xff]
    %v4600 = vld [vmem:[%s4545 + $0x2b8] sm:$0xff]
    %v4601 = vld [vmem:[%s4545 + $0x2c0] sm:$0xff]
    %v4602 = vld [vmem:[%s4545 + $0x2d0] sm:$0xff]
    %v4603 = vld [vmem:[%s4545 + $0x2d8] sm:$0xff]
    %v4604 = vld [vmem:[%s4545 + $0x2e8] sm:$0xff]
    %v4605 = vld [vmem:[%s4545 + $0x2f0] sm:$0xff]
    %v4606 = vld [vmem:[%s4545 + $0x300] sm:$0xff]
    %v4607 = vld [vmem:[%s4545 + $0x308] sm:$0xff]
    %v4608 = vld [vmem:[%s4545 + $0x318] sm:$0xff]
    %v4609 = vld [vmem:[%s4545 + $0x320] sm:$0xff]
    %v4610 = vmax.f32 %v4546, 0.0
    %v4611 = vmax.f32 %v4547, 0.0
    %v4612 = vmax.f32 %v4548, 0.0
    %v4613 = vmax.f32 %v4549, 0.0
    %v4614 = vmax.f32 %v4550, 0.0
    %v4615 = vmax.f32 %v4551, 0.0
    %v4616 = vmax.f32 %v4552, 0.0
    %v4617 = vmax.f32 %v4553, 0.0
    %v4618 = vmax.f32 %v4554, 0.0
    %v4619 = vmax.f32 %v4555, 0.0
    %v4620 = vmax.f32 %v4556, 0.0
    %v4621 = vmax.f32 %v4557, 0.0
    %v4622 = vmax.f32 %v4558, 0.0
    %v4623 = vmax.f32 %v4559, 0.0
    %v4624 = vmax.f32 %v4560, 0.0
    %v4625 = vmax.f32 %v4561, 0.0
    %v4626 = vmax.f32 %v4562, 0.0
    %v4627 = vmax.f32 %v4563, 0.0
    %v4628 = vmax.f32 %v4564, 0.0
    %v4629 = vmax.f32 %v4565, 0.0
    %v4630 = vmax.f32 %v4566, 0.0
    %v4631 = vmax.f32 %v4567, 0.0
    %v4632 = vmax.f32 %v4568, 0.0
    %v4633 = vmax.f32 %v4569, 0.0
    %v4634 = vmax.f32 %v4570, 0.0
    %v4635 = vmax.f32 %v4571, 0.0
    %v4636 = vmax.f32 %v4572, 0.0
    %v4637 = vmax.f32 %v4573, 0.0
    %v4638 = vmax.f32 %v4574, 0.0
    %v4639 = vmax.f32 %v4575, 0.0
    %v4640 = vmax.f32 %v4576, 0.0
    %v4641 = vmax.f32 %v4577, 0.0
    %v4642 = vmax.f32 %v4578, 0.0
    %v4643 = vmax.f32 %v4579, 0.0
    %v4644 = vmax.f32 %v4580, 0.0
    %v4645 = vmax.f32 %v4581, 0.0
    %v4646 = vmax.f32 %v4582, 0.0
    %v4647 = vmax.f32 %v4583, 0.0
    %v4648 = vmax.f32 %v4584, 0.0
    %v4649 = vmax.f32 %v4585, 0.0
    %v4650 = vmax.f32 %v4586, 0.0
    %v4651 = vmax.f32 %v4587, 0.0
    %v4652 = vmax.f32 %v4588, 0.0
    %v4653 = vmax.f32 %v4589, 0.0
    %v4654 = vmax.f32 %v4590, 0.0
    %v4655 = vmax.f32 %v4591, 0.0
    %v4656 = vmax.f32 %v4592, 0.0
    %v4657 = vmax.f32 %v4593, 0.0
    %v4658 = vmax.f32 %v4594, 0.0
    %v4659 = vmax.f32 %v4595, 0.0
    %v4660 = vmax.f32 %v4596, 0.0
    %v4661 = vmax.f32 %v4597, 0.0
    %v4662 = vmax.f32 %v4598, 0.0
    %v4663 = vmax.f32 %v4599, 0.0
    %v4664 = vmax.f32 %v4600, 0.0
    %v4665 = vmax.f32 %v4601, 0.0
    %v4666 = vmax.f32 %v4602, 0.0
    %v4667 = vmax.f32 %v4603, 0.0
    %v4668 = vmax.f32 %v4604, 0.0
    %v4669 = vmax.f32 %v4605, 0.0
    %v4670 = vmax.f32 %v4606, 0.0
    %v4671 = vmax.f32 %v4607, 0.0
    %v4672 = vmax.f32 %v4608, 0.0
    %v4673 = vmax.f32 %v4609, 0.0
    %s4674 = scalar_lea.vmem %s1, 24
    %v4675 = vld [vmem:[%s4674] sm:$0xf]
    %v4677 = vsel %vm286, %v4610, 0
    %v4680 = vsel %vm286, %v4611, 0
    %v4683 = vsel %vm286, %v4612, 0
    %v4686 = vsel %vm286, %v4613, 0
    %v4689 = vsel %vm286, %v4614, 0
    %v4692 = vsel %vm286, %v4615, 0
    %v4695 = vsel %vm286, %v4616, 0
    %v4698 = vsel %vm286, %v4617, 0
    %v4701 = vsel %vm286, %v4618, 0
    %v4704 = vsel %vm286, %v4619, 0
    %v4707 = vsel %vm286, %v4620, 0
    %v4710 = vsel %vm286, %v4621, 0
    %v4713 = vsel %vm286, %v4622, 0
    %v4716 = vsel %vm286, %v4623, 0
    %v4719 = vsel %vm286, %v4624, 0
    %v4722 = vsel %vm286, %v4625, 0
    %v4725 = vsel %vm286, %v4626, 0
    %v4728 = vsel %vm286, %v4627, 0
    %v4731 = vsel %vm286, %v4628, 0
    %v4734 = vsel %vm286, %v4629, 0
    %v4737 = vsel %vm286, %v4630, 0
    %v4740 = vsel %vm286, %v4631, 0
    %v4743 = vsel %vm286, %v4632, 0
    %v4746 = vsel %vm286, %v4633, 0
    %v4749 = vsel %vm286, %v4634, 0
    %v4752 = vsel %vm286, %v4635, 0
    %v4755 = vsel %vm286, %v4636, 0
    %v4758 = vsel %vm286, %v4637, 0
    %v4761 = vsel %vm286, %v4638, 0
    %v4764 = vsel %vm286, %v4639, 0
    %v4767 = vsel %vm286, %v4640, 0
    %v4770 = vsel %vm286, %v4641, 0
    %v4773 = vsel %vm286, %v4642, 0
    %v4776 = vsel %vm286, %v4643, 0
    %v4779 = vsel %vm286, %v4644, 0
    %v4782 = vsel %vm286, %v4645, 0
    %v4785 = vsel %vm286, %v4646, 0
    %v4788 = vsel %vm286, %v4647, 0
    %v4791 = vsel %vm286, %v4648, 0
    %v4794 = vsel %vm286, %v4649, 0
    %v4797 = vsel %vm286, %v4650, 0
    %v4800 = vsel %vm286, %v4651, 0
    %v4803 = vsel %vm286, %v4652, 0
    %v4806 = vsel %vm286, %v4653, 0
    %v4809 = vsel %vm286, %v4654, 0
    %v4812 = vsel %vm286, %v4655, 0
    %v4815 = vsel %vm286, %v4656, 0
    %v4818 = vsel %vm286, %v4657, 0
    %v4821 = vsel %vm286, %v4658, 0
    %v4824 = vsel %vm286, %v4659, 0
    %v4827 = vsel %vm286, %v4660, 0
    %v4830 = vsel %vm286, %v4661, 0
    %v4833 = vsel %vm286, %v4662, 0
    %v4836 = vsel %vm286, %v4663, 0
    %v4839 = vsel %vm286, %v4664, 0
    %v4842 = vsel %vm286, %v4665, 0
    %v4845 = vsel %vm286, %v4666, 0
    %v4848 = vsel %vm286, %v4667, 0
    %v4851 = vsel %vm286, %v4668, 0
    %v4854 = vsel %vm286, %v4669, 0
    %v4857 = vsel %vm286, %v4670, 0
    %v4860 = vsel %vm286, %v4671, 0
    %v4863 = vsel %vm286, %v4672, 0
    %v4866 = vsel %vm286, %v4673, 0
    %v4869 = vsel %vm479, %v4675, 0
    %4871 = vmatprep.subr.mxu0 0.0
    %4872 = vmatpush1.msra.mxu0 %v4869
    %4873 = vmatprep.subr.mxu0 0.0
    %4874 = vmatpush1.msra.mxu0 0.0
    %4875 = vmatprep.subr.mxu0 0.0
    %4876 = vmatpush1.msra.mxu0 0.0
    %4877 = vmatprep.subr.mxu0 0.0
    %4878 = vmatpush1.msra.mxu0 0.0
    %4879 = vmatprep.subr.mxu0 0.0
    %4880 = vmatpush1.msra.mxu0 0.0
    %4881 = vmatprep.subr.mxu0 0.0
    %4882 = vmatpush1.msra.mxu0 0.0
    %4883 = vmatprep.subr.mxu0 0.0
    %4884 = vmatpush1.msra.mxu0 0.0
    %4885 = vmatprep.subr.mxu0 0.0
    %4886 = vmatpush1.msra.mxu0 0.0
    %4887 = vmatprep.subr.mxu0 0.0
    %4888 = vmatpush1.msra.mxu0 0.0
    %4889 = vmatprep.subr.mxu0 0.0
    %4890 = vmatpush1.msra.mxu0 0.0
    %4891 = vmatprep.subr.mxu0 0.0
    %4892 = vmatpush1.msra.mxu0 0.0
    %4893 = vmatprep.subr.mxu0 0.0
    %4894 = vmatpush1.msra.mxu0 0.0
    %4895 = vmatprep.subr.mxu0 0.0
    %4896 = vmatpush1.msra.mxu0 0.0
    %4897 = vmatprep.subr.mxu0 0.0
    %4898 = vmatpush1.msra.mxu0 0.0
    %4899 = vmatprep.subr.mxu0 0.0
    %4900 = vmatpush1.msra.mxu0 0.0
    %4901 = vmatprep.subr.mxu0 0.0
    %4902 = vmatpush1.msra.mxu0 0.0
    %4903 = vmatprep.subr.mxu0 0.0
    %4904 = vmatpush1.msra.mxu0 0.0
    %4905 = vmatprep.subr.mxu0 0.0
    %4906 = vmatpush1.msra.mxu0 0.0
    %4907 = vmatprep.subr.mxu0 0.0
    %4908 = vmatpush1.msra.mxu0 0.0
    %4909 = vmatprep.subr.mxu0 0.0
    %4910 = vmatpush1.msra.mxu0 0.0
    %4911 = vmatprep.subr.mxu0 0.0
    %4912 = vmatpush1.msra.mxu0 0.0
    %4913 = vmatprep.subr.mxu0 0.0
    %4914 = vmatpush1.msra.mxu0 0.0
    %4915 = vmatprep.subr.mxu0 0.0
    %4916 = vmatpush1.msra.mxu0 0.0
    %4917 = vmatprep.subr.mxu0 0.0
    %4918 = vmatpush1.msra.mxu0 0.0
    %4919 = vmatprep.subr.mxu0 0.0
    %4920 = vmatpush1.msra.mxu0 0.0
    %4921 = vmatprep.subr.mxu0 0.0
    %4922 = vmatpush1.msra.mxu0 0.0
    %4923 = vmatprep.subr.mxu0 0.0
    %4924 = vmatpush1.msra.mxu0 0.0
    %4925 = vmatprep.subr.mxu0 0.0
    %4926 = vmatpush1.msra.mxu0 0.0
    %4927 = vmatprep.subr.mxu0 0.0
    %4928 = vmatpush1.msra.mxu0 0.0
    %4929 = vmatprep.subr.mxu0 0.0
    %4930 = vmatpush1.msra.mxu0 0.0
    %4931 = vmatprep.subr.mxu0 0.0
    %4932 = vmatpush1.msra.mxu0 0.0
    %4933 = vmatprep.subr.mxu0 0.0
    %4934 = vmatpush1.msra.mxu0 0.0
    %4935 = vmatprep.mubr.f32.mxu0 0.0
    %4936 = vmatmul.mubr.f32.gmra.mrb[0].mxu0 %v4677
    %v4937 = vpop.f32.mrb[0].mxu0
    %v4938 = vadd.f32 0.0, %v4937
    %v4939 = vpop.f32.mrb[0].mxu0
    %4940 = vmatprep.mubr.f32.mxu0 0.0
    %4941 = vmatmul.mubr.f32.gmra.mrb[0].mxu0 %v4680
    %v4942 = vpop.f32.mrb[0].mxu0
    %v4943 = vadd.f32 0.0, %v4942
    %v4944 = vpop.f32.mrb[0].mxu0
    %4945 = vmatprep.mubr.f32.mxu0 0.0
    %4946 = vmatmul.mubr.f32.gmra.mrb[0].mxu0 %v4683
    %v4947 = vpop.f32.mrb[0].mxu0
    %v4948 = vadd.f32 0.0, %v4947
    %v4949 = vpop.f32.mrb[0].mxu0
    %4950 = vmatprep.mubr.f32.mxu0 0.0
    %4951 = vmatmul.mubr.f32.gmra.mrb[0].mxu0 %v4686
    %v4952 = vpop.f32.mrb[0].mxu0
    %v4953 = vadd.f32 0.0, %v4952
    %v4954 = vpop.f32.mrb[0].mxu0
    %4955 = vmatprep.mubr.f32.mxu0 0.0
    %4956 = vmatmul.mubr.f32.gmra.mrb[0].mxu0 %v4689
    %v4957 = vpop.f32.mrb[0].mxu0
    %v4958 = vadd.f32 0.0, %v4957
    %v4959 = vpop.f32.mrb[0].mxu0
    %4960 = vmatprep.mubr.f32.mxu0 0.0
    %4961 = vmatmul.mubr.f32.gmra.mrb[0].mxu0 %v4692
    %v4962 = vpop.f32.mrb[0].mxu0
    %v4963 = vadd.f32 0.0, %v4962
    %v4964 = vpop.f32.mrb[0].mxu0
    %4965 = vmatprep.mubr.f32.mxu0 0.0
    %4966 = vmatmul.mubr.f32.gmra.mrb[0].mxu0 %v4695
    %v4967 = vpop.f32.mrb[0].mxu0
    %v4968 = vadd.f32 0.0, %v4967
    %v4969 = vpop.f32.mrb[0].mxu0
    %4970 = vmatprep.mubr.f32.mxu0 0.0
    %4971 = vmatmul.mubr.f32.gmra.mrb[0].mxu0 %v4698
    %v4972 = vpop.f32.mrb[0].mxu0
    %v4973 = vadd.f32 0.0, %v4972
    %v4974 = vpop.f32.mrb[0].mxu0
    %4975 = vmatprep.mubr.f32.mxu0 0.0
    %4976 = vmatmul.mubr.f32.gmra.mrb[0].mxu0 %v4701
    %v4977 = vpop.f32.mrb[0].mxu0
    %v4978 = vadd.f32 0.0, %v4977
    %v4979 = vpop.f32.mrb[0].mxu0
    %4980 = vmatprep.mubr.f32.mxu0 0.0
    %4981 = vmatmul.mubr.f32.gmra.mrb[0].mxu0 %v4704
    %v4982 = vpop.f32.mrb[0].mxu0
    %v4983 = vadd.f32 0.0, %v4982
    %v4984 = vpop.f32.mrb[0].mxu0
    %4985 = vmatprep.mubr.f32.mxu0 0.0
    %4986 = vmatmul.mubr.f32.gmra.mrb[0].mxu0 %v4707
    %v4987 = vpop.f32.mrb[0].mxu0
    %v4988 = vadd.f32 0.0, %v4987
    %v4989 = vpop.f32.mrb[0].mxu0
    %4990 = vmatprep.mubr.f32.mxu0 0.0
    %4991 = vmatmul.mubr.f32.gmra.mrb[0].mxu0 %v4710
    %v4992 = vpop.f32.mrb[0].mxu0
    %v4993 = vadd.f32 0.0, %v4992
    %v4994 = vpop.f32.mrb[0].mxu0
    %4995 = vmatprep.mubr.f32.mxu0 0.0
    %4996 = vmatmul.mubr.f32.gmra.mrb[0].mxu0 %v4713
    %v4997 = vpop.f32.mrb[0].mxu0
    %v4998 = vadd.f32 0.0, %v4997
    %v4999 = vpop.f32.mrb[0].mxu0
    %5000 = vmatprep.mubr.f32.mxu0 0.0
    %5001 = vmatmul.mubr.f32.gmra.mrb[0].mxu0 %v4716
    %v5002 = vpop.f32.mrb[0].mxu0
    %v5003 = vadd.f32 0.0, %v5002
    %v5004 = vpop.f32.mrb[0].mxu0
    %5005 = vmatprep.mubr.f32.mxu0 0.0
    %5006 = vmatmul.mubr.f32.gmra.mrb[0].mxu0 %v4719
    %v5007 = vpop.f32.mrb[0].mxu0
    %v5008 = vadd.f32 0.0, %v5007
    %v5009 = vpop.f32.mrb[0].mxu0
    %5010 = vmatprep.mubr.f32.mxu0 0.0
    %5011 = vmatmul.mubr.f32.gmra.mrb[0].mxu0 %v4722
    %v5012 = vpop.f32.mrb[0].mxu0
    %v5013 = vadd.f32 0.0, %v5012
    %v5014 = vpop.f32.mrb[0].mxu0
    %5015 = vmatprep.mubr.f32.mxu0 0.0
    %5016 = vmatmul.mubr.f32.gmra.mrb[0].mxu0 %v4725
    %v5017 = vpop.f32.mrb[0].mxu0
    %v5018 = vadd.f32 0.0, %v5017
    %v5019 = vpop.f32.mrb[0].mxu0
    %5020 = vmatprep.mubr.f32.mxu0 0.0
    %5021 = vmatmul.mubr.f32.gmra.mrb[0].mxu0 %v4728
    %v5022 = vpop.f32.mrb[0].mxu0
    %v5023 = vadd.f32 0.0, %v5022
    %v5024 = vpop.f32.mrb[0].mxu0
    %5025 = vmatprep.mubr.f32.mxu0 0.0
    %5026 = vmatmul.mubr.f32.gmra.mrb[0].mxu0 %v4731
    %v5027 = vpop.f32.mrb[0].mxu0
    %v5028 = vadd.f32 0.0, %v5027
    %v5029 = vpop.f32.mrb[0].mxu0
    %5030 = vmatprep.mubr.f32.mxu0 0.0
    %5031 = vmatmul.mubr.f32.gmra.mrb[0].mxu0 %v4734
    %v5032 = vpop.f32.mrb[0].mxu0
    %v5033 = vadd.f32 0.0, %v5032
    %v5034 = vpop.f32.mrb[0].mxu0
    %5035 = vmatprep.mubr.f32.mxu0 0.0
    %5036 = vmatmul.mubr.f32.gmra.mrb[0].mxu0 %v4737
    %v5037 = vpop.f32.mrb[0].mxu0
    %v5038 = vadd.f32 0.0, %v5037
    %v5039 = vpop.f32.mrb[0].mxu0
    %5040 = vmatprep.mubr.f32.mxu0 0.0
    %5041 = vmatmul.mubr.f32.gmra.mrb[0].mxu0 %v4740
    %v5042 = vpop.f32.mrb[0].mxu0
    %v5043 = vadd.f32 0.0, %v5042
    %v5044 = vpop.f32.mrb[0].mxu0
    %5045 = vmatprep.mubr.f32.mxu0 0.0
    %5046 = vmatmul.mubr.f32.gmra.mrb[0].mxu0 %v4743
    %v5047 = vpop.f32.mrb[0].mxu0
    %v5048 = vadd.f32 0.0, %v5047
    %v5049 = vpop.f32.mrb[0].mxu0
    %5050 = vmatprep.mubr.f32.mxu0 0.0
    %5051 = vmatmul.mubr.f32.gmra.mrb[0].mxu0 %v4746
    %v5052 = vpop.f32.mrb[0].mxu0
    %v5053 = vadd.f32 0.0, %v5052
    %v5054 = vpop.f32.mrb[0].mxu0
    %5055 = vmatprep.mubr.f32.mxu0 0.0
    %5056 = vmatmul.mubr.f32.gmra.mrb[0].mxu0 %v4749
    %v5057 = vpop.f32.mrb[0].mxu0
    %v5058 = vadd.f32 0.0, %v5057
    %v5059 = vpop.f32.mrb[0].mxu0
    %5060 = vmatprep.mubr.f32.mxu0 0.0
    %5061 = vmatmul.mubr.f32.gmra.mrb[0].mxu0 %v4752
    %v5062 = vpop.f32.mrb[0].mxu0
    %v5063 = vadd.f32 0.0, %v5062
    %v5064 = vpop.f32.mrb[0].mxu0
    %5065 = vmatprep.mubr.f32.mxu0 0.0
    %5066 = vmatmul.mubr.f32.gmra.mrb[0].mxu0 %v4755
    %v5067 = vpop.f32.mrb[0].mxu0
    %v5068 = vadd.f32 0.0, %v5067
    %v5069 = vpop.f32.mrb[0].mxu0
    %5070 = vmatprep.mubr.f32.mxu0 0.0
    %5071 = vmatmul.mubr.f32.gmra.mrb[0].mxu0 %v4758
    %v5072 = vpop.f32.mrb[0].mxu0
    %v5073 = vadd.f32 0.0, %v5072
    %v5074 = vpop.f32.mrb[0].mxu0
    %5075 = vmatprep.mubr.f32.mxu0 0.0
    %5076 = vmatmul.mubr.f32.gmra.mrb[0].mxu0 %v4761
    %v5077 = vpop.f32.mrb[0].mxu0
    %v5078 = vadd.f32 0.0, %v5077
    %v5079 = vpop.f32.mrb[0].mxu0
    %5080 = vmatprep.mubr.f32.mxu0 0.0
    %5081 = vmatmul.mubr.f32.gmra.mrb[0].mxu0 %v4764
    %v5082 = vpop.f32.mrb[0].mxu0
    %v5083 = vadd.f32 0.0, %v5082
    %v5084 = vpop.f32.mrb[0].mxu0
    %5085 = vmatprep.mubr.f32.mxu0 0.0
    %5086 = vmatmul.mubr.f32.gmra.mrb[0].mxu0 %v4767
    %v5087 = vpop.f32.mrb[0].mxu0
    %v5088 = vadd.f32 0.0, %v5087
    %v5089 = vpop.f32.mrb[0].mxu0
    %5090 = vmatprep.mubr.f32.mxu0 0.0
    %5091 = vmatmul.mubr.f32.gmra.mrb[0].mxu0 %v4770
    %v5092 = vpop.f32.mrb[0].mxu0
    %v5093 = vadd.f32 0.0, %v5092
    %v5094 = vpop.f32.mrb[0].mxu0
    %5095 = vmatprep.mubr.f32.mxu0 0.0
    %5096 = vmatmul.mubr.f32.gmra.mrb[0].mxu0 %v4773
    %v5097 = vpop.f32.mrb[0].mxu0
    %v5098 = vadd.f32 0.0, %v5097
    %v5099 = vpop.f32.mrb[0].mxu0
    %5100 = vmatprep.mubr.f32.mxu0 0.0
    %5101 = vmatmul.mubr.f32.gmra.mrb[0].mxu0 %v4776
    %v5102 = vpop.f32.mrb[0].mxu0
    %v5103 = vadd.f32 0.0, %v5102
    %v5104 = vpop.f32.mrb[0].mxu0
    %5105 = vmatprep.mubr.f32.mxu0 0.0
    %5106 = vmatmul.mubr.f32.gmra.mrb[0].mxu0 %v4779
    %v5107 = vpop.f32.mrb[0].mxu0
    %v5108 = vadd.f32 0.0, %v5107
    %v5109 = vpop.f32.mrb[0].mxu0
    %5110 = vmatprep.mubr.f32.mxu0 0.0
    %5111 = vmatmul.mubr.f32.gmra.mrb[0].mxu0 %v4782
    %v5112 = vpop.f32.mrb[0].mxu0
    %v5113 = vadd.f32 0.0, %v5112
    %v5114 = vpop.f32.mrb[0].mxu0
    %5115 = vmatprep.mubr.f32.mxu0 0.0
    %5116 = vmatmul.mubr.f32.gmra.mrb[0].mxu0 %v4785
    %v5117 = vpop.f32.mrb[0].mxu0
    %v5118 = vadd.f32 0.0, %v5117
    %v5119 = vpop.f32.mrb[0].mxu0
    %5120 = vmatprep.mubr.f32.mxu0 0.0
    %5121 = vmatmul.mubr.f32.gmra.mrb[0].mxu0 %v4788
    %v5122 = vpop.f32.mrb[0].mxu0
    %v5123 = vadd.f32 0.0, %v5122
    %v5124 = vpop.f32.mrb[0].mxu0
    %5125 = vmatprep.mubr.f32.mxu0 0.0
    %5126 = vmatmul.mubr.f32.gmra.mrb[0].mxu0 %v4791
    %v5127 = vpop.f32.mrb[0].mxu0
    %v5128 = vadd.f32 0.0, %v5127
    %v5129 = vpop.f32.mrb[0].mxu0
    %5130 = vmatprep.mubr.f32.mxu0 0.0
    %5131 = vmatmul.mubr.f32.gmra.mrb[0].mxu0 %v4794
    %v5132 = vpop.f32.mrb[0].mxu0
    %v5133 = vadd.f32 0.0, %v5132
    %v5134 = vpop.f32.mrb[0].mxu0
    %5135 = vmatprep.mubr.f32.mxu0 0.0
    %5136 = vmatmul.mubr.f32.gmra.mrb[0].mxu0 %v4797
    %v5137 = vpop.f32.mrb[0].mxu0
    %v5138 = vadd.f32 0.0, %v5137
    %v5139 = vpop.f32.mrb[0].mxu0
    %5140 = vmatprep.mubr.f32.mxu0 0.0
    %5141 = vmatmul.mubr.f32.gmra.mrb[0].mxu0 %v4800
    %v5142 = vpop.f32.mrb[0].mxu0
    %v5143 = vadd.f32 0.0, %v5142
    %v5144 = vpop.f32.mrb[0].mxu0
    %5145 = vmatprep.mubr.f32.mxu0 0.0
    %5146 = vmatmul.mubr.f32.gmra.mrb[0].mxu0 %v4803
    %v5147 = vpop.f32.mrb[0].mxu0
    %v5148 = vadd.f32 0.0, %v5147
    %v5149 = vpop.f32.mrb[0].mxu0
    %5150 = vmatprep.mubr.f32.mxu0 0.0
    %5151 = vmatmul.mubr.f32.gmra.mrb[0].mxu0 %v4806
    %v5152 = vpop.f32.mrb[0].mxu0
    %v5153 = vadd.f32 0.0, %v5152
    %v5154 = vpop.f32.mrb[0].mxu0
    %5155 = vmatprep.mubr.f32.mxu0 0.0
    %5156 = vmatmul.mubr.f32.gmra.mrb[0].mxu0 %v4809
    %v5157 = vpop.f32.mrb[0].mxu0
    %v5158 = vadd.f32 0.0, %v5157
    %v5159 = vpop.f32.mrb[0].mxu0
    %5160 = vmatprep.mubr.f32.mxu0 0.0
    %5161 = vmatmul.mubr.f32.gmra.mrb[0].mxu0 %v4812
    %v5162 = vpop.f32.mrb[0].mxu0
    %v5163 = vadd.f32 0.0, %v5162
    %v5164 = vpop.f32.mrb[0].mxu0
    %5165 = vmatprep.mubr.f32.mxu0 0.0
    %5166 = vmatmul.mubr.f32.gmra.mrb[0].mxu0 %v4815
    %v5167 = vpop.f32.mrb[0].mxu0
    %v5168 = vadd.f32 0.0, %v5167
    %v5169 = vpop.f32.mrb[0].mxu0
    %5170 = vmatprep.mubr.f32.mxu0 0.0
    %5171 = vmatmul.mubr.f32.gmra.mrb[0].mxu0 %v4818
    %v5172 = vpop.f32.mrb[0].mxu0
    %v5173 = vadd.f32 0.0, %v5172
    %v5174 = vpop.f32.mrb[0].mxu0
    %5175 = vmatprep.mubr.f32.mxu0 0.0
    %5176 = vmatmul.mubr.f32.gmra.mrb[0].mxu0 %v4821
    %v5177 = vpop.f32.mrb[0].mxu0
    %v5178 = vadd.f32 0.0, %v5177
    %v5179 = vpop.f32.mrb[0].mxu0
    %5180 = vmatprep.mubr.f32.mxu0 0.0
    %5181 = vmatmul.mubr.f32.gmra.mrb[0].mxu0 %v4824
    %v5182 = vpop.f32.mrb[0].mxu0
    %v5183 = vadd.f32 0.0, %v5182
    %v5184 = vpop.f32.mrb[0].mxu0
    %5185 = vmatprep.mubr.f32.mxu0 0.0
    %5186 = vmatmul.mubr.f32.gmra.mrb[0].mxu0 %v4827
    %v5187 = vpop.f32.mrb[0].mxu0
    %v5188 = vadd.f32 0.0, %v5187
    %v5189 = vpop.f32.mrb[0].mxu0
    %5190 = vmatprep.mubr.f32.mxu0 0.0
    %5191 = vmatmul.mubr.f32.gmra.mrb[0].mxu0 %v4830
    %v5192 = vpop.f32.mrb[0].mxu0
    %v5193 = vadd.f32 0.0, %v5192
    %v5194 = vpop.f32.mrb[0].mxu0
    %5195 = vmatprep.mubr.f32.mxu0 0.0
    %5196 = vmatmul.mubr.f32.gmra.mrb[0].mxu0 %v4833
    %v5197 = vpop.f32.mrb[0].mxu0
    %v5198 = vadd.f32 0.0, %v5197
    %v5199 = vpop.f32.mrb[0].mxu0
    %5200 = vmatprep.mubr.f32.mxu0 0.0
    %5201 = vmatmul.mubr.f32.gmra.mrb[0].mxu0 %v4836
    %v5202 = vpop.f32.mrb[0].mxu0
    %v5203 = vadd.f32 0.0, %v5202
    %v5204 = vpop.f32.mrb[0].mxu0
    %5205 = vmatprep.mubr.f32.mxu0 0.0
    %5206 = vmatmul.mubr.f32.gmra.mrb[0].mxu0 %v4839
    %v5207 = vpop.f32.mrb[0].mxu0
    %v5208 = vadd.f32 0.0, %v5207
    %v5209 = vpop.f32.mrb[0].mxu0
    %5210 = vmatprep.mubr.f32.mxu0 0.0
    %5211 = vmatmul.mubr.f32.gmra.mrb[0].mxu0 %v4842
    %v5212 = vpop.f32.mrb[0].mxu0
    %v5213 = vadd.f32 0.0, %v5212
    %v5214 = vpop.f32.mrb[0].mxu0
    %5215 = vmatprep.mubr.f32.mxu0 0.0
    %5216 = vmatmul.mubr.f32.gmra.mrb[0].mxu0 %v4845
    %v5217 = vpop.f32.mrb[0].mxu0
    %v5218 = vadd.f32 0.0, %v5217
    %v5219 = vpop.f32.mrb[0].mxu0
    %5220 = vmatprep.mubr.f32.mxu0 0.0
    %5221 = vmatmul.mubr.f32.gmra.mrb[0].mxu0 %v4848
    %v5222 = vpop.f32.mrb[0].mxu0
    %v5223 = vadd.f32 0.0, %v5222
    %v5224 = vpop.f32.mrb[0].mxu0
    %5225 = vmatprep.mubr.f32.mxu0 0.0
    %5226 = vmatmul.mubr.f32.gmra.mrb[0].mxu0 %v4851
    %v5227 = vpop.f32.mrb[0].mxu0
    %v5228 = vadd.f32 0.0, %v5227
    %v5229 = vpop.f32.mrb[0].mxu0
    %5230 = vmatprep.mubr.f32.mxu0 0.0
    %5231 = vmatmul.mubr.f32.gmra.mrb[0].mxu0 %v4854
    %v5232 = vpop.f32.mrb[0].mxu0
    %v5233 = vadd.f32 0.0, %v5232
    %v5234 = vpop.f32.mrb[0].mxu0
    %5235 = vmatprep.mubr.f32.mxu0 0.0
    %5236 = vmatmul.mubr.f32.gmra.mrb[0].mxu0 %v4857
    %v5237 = vpop.f32.mrb[0].mxu0
    %v5238 = vadd.f32 0.0, %v5237
    %v5239 = vpop.f32.mrb[0].mxu0
    %5240 = vmatprep.mubr.f32.mxu0 0.0
    %5241 = vmatmul.mubr.f32.gmra.mrb[0].mxu0 %v4860
    %v5242 = vpop.f32.mrb[0].mxu0
    %v5243 = vadd.f32 0.0, %v5242
    %v5244 = vpop.f32.mrb[0].mxu0
    %5245 = vmatprep.mubr.f32.mxu0 0.0
    %5246 = vmatmul.mubr.f32.gmra.mrb[0].mxu0 %v4863
    %v5247 = vpop.f32.mrb[0].mxu0
    %v5248 = vadd.f32 0.0, %v5247
    %v5249 = vpop.f32.mrb[0].mxu0
    %5250 = vmatprep.mubr.f32.mxu0 0.0
    %5251 = vmatmul.mubr.f32.gmra.mrb[0].mxu0 %v4866
    %v5252 = vpop.f32.mrb[0].mxu0
    %v5253 = vadd.f32 0.0, %v5252
    %v5254 = vpop.f32.mrb[0].mxu0
    %5255 = vdwg.mxu0
    %v5256 = vadd.f32 %v4481, %v4938
    %v5257 = vadd.f32 %v4482, %v4943
    %v5258 = vadd.f32 %v4483, %v4948
    %v5259 = vadd.f32 %v4484, %v4953
    %v5260 = vadd.f32 %v4485, %v4958
    %v5261 = vadd.f32 %v4486, %v4963
    %v5262 = vadd.f32 %v4487, %v4968
    %v5263 = vadd.f32 %v4488, %v4973
    %v5264 = vadd.f32 %v4489, %v4978
    %v5265 = vadd.f32 %v4490, %v4983
    %v5266 = vadd.f32 %v4491, %v4988
    %v5267 = vadd.f32 %v4492, %v4993
    %v5268 = vadd.f32 %v4493, %v4998
    %v5269 = vadd.f32 %v4494, %v5003
    %v5270 = vadd.f32 %v4495, %v5008
    %v5271 = vadd.f32 %v4496, %v5013
    %v5272 = vadd.f32 %v4497, %v5018
    %v5273 = vadd.f32 %v4498, %v5023
    %v5274 = vadd.f32 %v4499, %v5028
    %v5275 = vadd.f32 %v4500, %v5033
    %v5276 = vadd.f32 %v4501, %v5038
    %v5277 = vadd.f32 %v4502, %v5043
    %v5278 = vadd.f32 %v4503, %v5048
    %v5279 = vadd.f32 %v4504, %v5053
    %v5280 = vadd.f32 %v4505, %v5058
    %v5281 = vadd.f32 %v4506, %v5063
    %v5282 = vadd.f32 %v4507, %v5068
    %v5283 = vadd.f32 %v4508, %v5073
    %v5284 = vadd.f32 %v4509, %v5078
    %v5285 = vadd.f32 %v4510, %v5083
    %v5286 = vadd.f32 %v4511, %v5088
    %v5287 = vadd.f32 %v4512, %v5093
    %v5288 = vadd.f32 %v4513, %v5098
    %v5289 = vadd.f32 %v4514, %v5103
    %v5290 = vadd.f32 %v4515, %v5108
    %v5291 = vadd.f32 %v4516, %v5113
    %v5292 = vadd.f32 %v4517, %v5118
    %v5293 = vadd.f32 %v4518, %v5123
    %v5294 = vadd.f32 %v4519, %v5128
    %v5295 = vadd.f32 %v4520, %v5133
    %v5296 = vadd.f32 %v4521, %v5138
    %v5297 = vadd.f32 %v4522, %v5143
    %v5298 = vadd.f32 %v4523, %v5148
    %v5299 = vadd.f32 %v4524, %v5153
    %v5300 = vadd.f32 %v4525, %v5158
    %v5301 = vadd.f32 %v4526, %v5163
    %v5302 = vadd.f32 %v4527, %v5168
    %v5303 = vadd.f32 %v4528, %v5173
    %v5304 = vadd.f32 %v4529, %v5178
    %v5305 = vadd.f32 %v4530, %v5183
    %v5306 = vadd.f32 %v4531, %v5188
    %v5307 = vadd.f32 %v4532, %v5193
    %v5308 = vadd.f32 %v4533, %v5198
    %v5309 = vadd.f32 %v4534, %v5203
    %v5310 = vadd.f32 %v4535, %v5208
    %v5311 = vadd.f32 %v4536, %v5213
    %v5312 = vadd.f32 %v4537, %v5218
    %v5313 = vadd.f32 %v4538, %v5223
    %v5314 = vadd.f32 %v4539, %v5228
    %v5315 = vadd.f32 %v4540, %v5233
    %v5316 = vadd.f32 %v4541, %v5238
    %v5317 = vadd.f32 %v4542, %v5243
    %v5318 = vadd.f32 %v4543, %v5248
    %v5319 = vadd.f32 %v4544, %v5253
    %v5320 = vld [vmem:[%s4545 + $0x1] sm:$0xff]
    %v5321 = vld [vmem:[%s4545 + $0x9] sm:$0xff]
    %v5322 = vld [vmem:[%s4545 + $0x19] sm:$0xff]
    %v5323 = vld [vmem:[%s4545 + $0x21] sm:$0xff]
    %v5324 = vld [vmem:[%s4545 + $0x31] sm:$0xff]
    %v5325 = vld [vmem:[%s4545 + $0x39] sm:$0xff]
    %v5326 = vld [vmem:[%s4545 + $0x49] sm:$0xff]
    %v5327 = vld [vmem:[%s4545 + $0x51] sm:$0xff]
    %v5328 = vld [vmem:[%s4545 + $0x61] sm:$0xff]
    %v5329 = vld [vmem:[%s4545 + $0x69] sm:$0xff]
    %v5330 = vld [vmem:[%s4545 + $0x79] sm:$0xff]
    %v5331 = vld [vmem:[%s4545 + $0x81] sm:$0xff]
    %v5332 = vld [vmem:[%s4545 + $0x91] sm:$0xff]
    %v5333 = vld [vmem:[%s4545 + $0x99] sm:$0xff]
    %v5334 = vld [vmem:[%s4545 + $0xa9] sm:$0xff]
    %v5335 = vld [vmem:[%s4545 + $0xb1] sm:$0xff]
    %v5336 = vld [vmem:[%s4545 + $0xc1] sm:$0xff]
    %v5337 = vld [vmem:[%s4545 + $0xc9] sm:$0xff]
    %v5338 = vld [vmem:[%s4545 + $0xd9] sm:$0xff]
    %v5339 = vld [vmem:[%s4545 + $0xe1] sm:$0xff]
    %v5340 = vld [vmem:[%s4545 + $0xf1] sm:$0xff]
    %v5341 = vld [vmem:[%s4545 + $0xf9] sm:$0xff]
    %v5342 = vld [vmem:[%s4545 + $0x109] sm:$0xff]
    %v5343 = vld [vmem:[%s4545 + $0x111] sm:$0xff]
    %v5344 = vld [vmem:[%s4545 + $0x121] sm:$0xff]
    %v5345 = vld [vmem:[%s4545 + $0x129] sm:$0xff]
    %v5346 = vld [vmem:[%s4545 + $0x139] sm:$0xff]
    %v5347 = vld [vmem:[%s4545 + $0x141] sm:$0xff]
    %v5348 = vld [vmem:[%s4545 + $0x151] sm:$0xff]
    %v5349 = vld [vmem:[%s4545 + $0x159] sm:$0xff]
    %v5350 = vld [vmem:[%s4545 + $0x169] sm:$0xff]
    %v5351 = vld [vmem:[%s4545 + $0x171] sm:$0xff]
    %v5352 = vld [vmem:[%s4545 + $0x1b1] sm:$0xff]
    %v5353 = vld [vmem:[%s4545 + $0x1b9] sm:$0xff]
    %v5354 = vld [vmem:[%s4545 + $0x1c9] sm:$0xff]
    %v5355 = vld [vmem:[%s4545 + $0x1d1] sm:$0xff]
    %v5356 = vld [vmem:[%s4545 + $0x1e1] sm:$0xff]
    %v5357 = vld [vmem:[%s4545 + $0x1e9] sm:$0xff]
    %v5358 = vld [vmem:[%s4545 + $0x1f9] sm:$0xff]
    %v5359 = vld [vmem:[%s4545 + $0x201] sm:$0xff]
    %v5360 = vld [vmem:[%s4545 + $0x211] sm:$0xff]
    %v5361 = vld [vmem:[%s4545 + $0x219] sm:$0xff]
    %v5362 = vld [vmem:[%s4545 + $0x229] sm:$0xff]
    %v5363 = vld [vmem:[%s4545 + $0x231] sm:$0xff]
    %v5364 = vld [vmem:[%s4545 + $0x241] sm:$0xff]
    %v5365 = vld [vmem:[%s4545 + $0x249] sm:$0xff]
    %v5366 = vld [vmem:[%s4545 + $0x259] sm:$0xff]
    %v5367 = vld [vmem:[%s4545 + $0x261] sm:$0xff]
    %v5368 = vld [vmem:[%s4545 + $0x271] sm:$0xff]
    %v5369 = vld [vmem:[%s4545 + $0x279] sm:$0xff]
    %v5370 = vld [vmem:[%s4545 + $0x289] sm:$0xff]
    %v5371 = vld [vmem:[%s4545 + $0x291] sm:$0xff]
    %v5372 = vld [vmem:[%s4545 + $0x2a1] sm:$0xff]
    %v5373 = vld [vmem:[%s4545 + $0x2a9] sm:$0xff]
    %v5374 = vld [vmem:[%s4545 + $0x2b9] sm:$0xff]
    %v5375 = vld [vmem:[%s4545 + $0x2c1] sm:$0xff]
    %v5376 = vld [vmem:[%s4545 + $0x2d1] sm:$0xff]
    %v5377 = vld [vmem:[%s4545 + $0x2d9] sm:$0xff]
    %v5378 = vld [vmem:[%s4545 + $0x2e9] sm:$0xff]
    %v5379 = vld [vmem:[%s4545 + $0x2f1] sm:$0xff]
    %v5380 = vld [vmem:[%s4545 + $0x301] sm:$0xff]
    %v5381 = vld [vmem:[%s4545 + $0x309] sm:$0xff]
    %v5382 = vld [vmem:[%s4545 + $0x319] sm:$0xff]
    %v5383 = vld [vmem:[%s4545 + $0x321] sm:$0xff]
    %v5384 = vmax.f32 %v5320, 0.0
    %v5385 = vmax.f32 %v5321, 0.0
    %v5386 = vmax.f32 %v5322, 0.0
    %v5387 = vmax.f32 %v5323, 0.0
    %v5388 = vmax.f32 %v5324, 0.0
    %v5389 = vmax.f32 %v5325, 0.0
    %v5390 = vmax.f32 %v5326, 0.0
    %v5391 = vmax.f32 %v5327, 0.0
    %v5392 = vmax.f32 %v5328, 0.0
    %v5393 = vmax.f32 %v5329, 0.0
    %v5394 = vmax.f32 %v5330, 0.0
    %v5395 = vmax.f32 %v5331, 0.0
    %v5396 = vmax.f32 %v5332, 0.0
    %v5397 = vmax.f32 %v5333, 0.0
    %v5398 = vmax.f32 %v5334, 0.0
    %v5399 = vmax.f32 %v5335, 0.0
    %v5400 = vmax.f32 %v5336, 0.0
    %v5401 = vmax.f32 %v5337, 0.0
    %v5402 = vmax.f32 %v5338, 0.0
    %v5403 = vmax.f32 %v5339, 0.0
    %v5404 = vmax.f32 %v5340, 0.0
    %v5405 = vmax.f32 %v5341, 0.0
    %v5406 = vmax.f32 %v5342, 0.0
    %v5407 = vmax.f32 %v5343, 0.0
    %v5408 = vmax.f32 %v5344, 0.0
    %v5409 = vmax.f32 %v5345, 0.0
    %v5410 = vmax.f32 %v5346, 0.0
    %v5411 = vmax.f32 %v5347, 0.0
    %v5412 = vmax.f32 %v5348, 0.0
    %v5413 = vmax.f32 %v5349, 0.0
    %v5414 = vmax.f32 %v5350, 0.0
    %v5415 = vmax.f32 %v5351, 0.0
    %v5416 = vmax.f32 %v5352, 0.0
    %v5417 = vmax.f32 %v5353, 0.0
    %v5418 = vmax.f32 %v5354, 0.0
    %v5419 = vmax.f32 %v5355, 0.0
    %v5420 = vmax.f32 %v5356, 0.0
    %v5421 = vmax.f32 %v5357, 0.0
    %v5422 = vmax.f32 %v5358, 0.0
    %v5423 = vmax.f32 %v5359, 0.0
    %v5424 = vmax.f32 %v5360, 0.0
    %v5425 = vmax.f32 %v5361, 0.0
    %v5426 = vmax.f32 %v5362, 0.0
    %v5427 = vmax.f32 %v5363, 0.0
    %v5428 = vmax.f32 %v5364, 0.0
    %v5429 = vmax.f32 %v5365, 0.0
    %v5430 = vmax.f32 %v5366, 0.0
    %v5431 = vmax.f32 %v5367, 0.0
    %v5432 = vmax.f32 %v5368, 0.0
    %v5433 = vmax.f32 %v5369, 0.0
    %v5434 = vmax.f32 %v5370, 0.0
    %v5435 = vmax.f32 %v5371, 0.0
    %v5436 = vmax.f32 %v5372, 0.0
    %v5437 = vmax.f32 %v5373, 0.0
    %v5438 = vmax.f32 %v5374, 0.0
    %v5439 = vmax.f32 %v5375, 0.0
    %v5440 = vmax.f32 %v5376, 0.0
    %v5441 = vmax.f32 %v5377, 0.0
    %v5442 = vmax.f32 %v5378, 0.0
    %v5443 = vmax.f32 %v5379, 0.0
    %v5444 = vmax.f32 %v5380, 0.0
    %v5445 = vmax.f32 %v5381, 0.0
    %v5446 = vmax.f32 %v5382, 0.0
    %v5447 = vmax.f32 %v5383, 0.0
    %s5448 = scalar_lea.vmem %s1, 28
    %v5449 = vld [vmem:[%s5448] sm:$0xf]
    %v5451 = vsel %vm286, %v5384, 0
    %v5454 = vsel %vm286, %v5385, 0
    %v5457 = vsel %vm286, %v5386, 0
    %v5460 = vsel %vm286, %v5387, 0
    %v5463 = vsel %vm286, %v5388, 0
    %v5466 = vsel %vm286, %v5389, 0
    %v5469 = vsel %vm286, %v5390, 0
    %v5472 = vsel %vm286, %v5391, 0
    %v5475 = vsel %vm286, %v5392, 0
    %v5478 = vsel %vm286, %v5393, 0
    %v5481 = vsel %vm286, %v5394, 0
    %v5484 = vsel %vm286, %v5395, 0
    %v5487 = vsel %vm286, %v5396, 0
    %v5490 = vsel %vm286, %v5397, 0
    %v5493 = vsel %vm286, %v5398, 0
    %v5496 = vsel %vm286, %v5399, 0
    %v5499 = vsel %vm286, %v5400, 0
    %v5502 = vsel %vm286, %v5401, 0
    %v5505 = vsel %vm286, %v5402, 0
    %v5508 = vsel %vm286, %v5403, 0
    %v5511 = vsel %vm286, %v5404, 0
    %v5514 = vsel %vm286, %v5405, 0
    %v5517 = vsel %vm286, %v5406, 0
    %v5520 = vsel %vm286, %v5407, 0
    %v5523 = vsel %vm286, %v5408, 0
    %v5526 = vsel %vm286, %v5409, 0
    %v5529 = vsel %vm286, %v5410, 0
    %v5532 = vsel %vm286, %v5411, 0
    %v5535 = vsel %vm286, %v5412, 0
    %v5538 = vsel %vm286, %v5413, 0
    %v5541 = vsel %vm286, %v5414, 0
    %v5544 = vsel %vm286, %v5415, 0
    %v5547 = vsel %vm286, %v5416, 0
    %v5550 = vsel %vm286, %v5417, 0
    %v5553 = vsel %vm286, %v5418, 0
    %v5556 = vsel %vm286, %v5419, 0
    %v5559 = vsel %vm286, %v5420, 0
    %v5562 = vsel %vm286, %v5421, 0
    %v5565 = vsel %vm286, %v5422, 0
    %v5568 = vsel %vm286, %v5423, 0
    %v5571 = vsel %vm286, %v5424, 0
    %v5574 = vsel %vm286, %v5425, 0
    %v5577 = vsel %vm286, %v5426, 0
    %v5580 = vsel %vm286, %v5427, 0
    %v5583 = vsel %vm286, %v5428, 0
    %v5586 = vsel %vm286, %v5429, 0
    %v5589 = vsel %vm286, %v5430, 0
    %v5592 = vsel %vm286, %v5431, 0
    %v5595 = vsel %vm286, %v5432, 0
    %v5598 = vsel %vm286, %v5433, 0
    %v5601 = vsel %vm286, %v5434, 0
    %v5604 = vsel %vm286, %v5435, 0
    %v5607 = vsel %vm286, %v5436, 0
    %v5610 = vsel %vm286, %v5437, 0
    %v5613 = vsel %vm286, %v5438, 0
    %v5616 = vsel %vm286, %v5439, 0
    %v5619 = vsel %vm286, %v5440, 0
    %v5622 = vsel %vm286, %v5441, 0
    %v5625 = vsel %vm286, %v5442, 0
    %v5628 = vsel %vm286, %v5443, 0
    %v5631 = vsel %vm286, %v5444, 0
    %v5634 = vsel %vm286, %v5445, 0
    %v5637 = vsel %vm286, %v5446, 0
    %v5640 = vsel %vm286, %v5447, 0
    %v5643 = vsel %vm479, %v5449, 0
    %5645 = vmatprep.subr.mxu0 0.0
    %5646 = vmatpush1.msra.mxu0 %v5643
    %5647 = vmatprep.subr.mxu0 0.0
    %5648 = vmatpush1.msra.mxu0 0.0
    %5649 = vmatprep.subr.mxu0 0.0
    %5650 = vmatpush1.msra.mxu0 0.0
    %5651 = vmatprep.subr.mxu0 0.0
    %5652 = vmatpush1.msra.mxu0 0.0
    %5653 = vmatprep.subr.mxu0 0.0
    %5654 = vmatpush1.msra.mxu0 0.0
    %5655 = vmatprep.subr.mxu0 0.0
    %5656 = vmatpush1.msra.mxu0 0.0
    %5657 = vmatprep.subr.mxu0 0.0
    %5658 = vmatpush1.msra.mxu0 0.0
    %5659 = vmatprep.subr.mxu0 0.0
    %5660 = vmatpush1.msra.mxu0 0.0
    %5661 = vmatprep.subr.mxu0 0.0
    %5662 = vmatpush1.msra.mxu0 0.0
    %5663 = vmatprep.subr.mxu0 0.0
    %5664 = vmatpush1.msra.mxu0 0.0
    %5665 = vmatprep.subr.mxu0 0.0
    %5666 = vmatpush1.msra.mxu0 0.0
    %5667 = vmatprep.subr.mxu0 0.0
    %5668 = vmatpush1.msra.mxu0 0.0
    %5669 = vmatprep.subr.mxu0 0.0
    %5670 = vmatpush1.msra.mxu0 0.0
    %5671 = vmatprep.subr.mxu0 0.0
    %5672 = vmatpush1.msra.mxu0 0.0
    %5673 = vmatprep.subr.mxu0 0.0
    %5674 = vmatpush1.msra.mxu0 0.0
    %5675 = vmatprep.subr.mxu0 0.0
    %5676 = vmatpush1.msra.mxu0 0.0
    %5677 = vmatprep.subr.mxu0 0.0
    %5678 = vmatpush1.msra.mxu0 0.0
    %5679 = vmatprep.subr.mxu0 0.0
    %5680 = vmatpush1.msra.mxu0 0.0
    %5681 = vmatprep.subr.mxu0 0.0
    %5682 = vmatpush1.msra.mxu0 0.0
    %5683 = vmatprep.subr.mxu0 0.0
    %5684 = vmatpush1.msra.mxu0 0.0
    %5685 = vmatprep.subr.mxu0 0.0
    %5686 = vmatpush1.msra.mxu0 0.0
    %5687 = vmatprep.subr.mxu0 0.0
    %5688 = vmatpush1.msra.mxu0 0.0
    %5689 = vmatprep.subr.mxu0 0.0
    %5690 = vmatpush1.msra.mxu0 0.0
    %5691 = vmatprep.subr.mxu0 0.0
    %5692 = vmatpush1.msra.mxu0 0.0
    %5693 = vmatprep.subr.mxu0 0.0
    %5694 = vmatpush1.msra.mxu0 0.0
    %5695 = vmatprep.subr.mxu0 0.0
    %5696 = vmatpush1.msra.mxu0 0.0
    %5697 = vmatprep.subr.mxu0 0.0
    %5698 = vmatpush1.msra.mxu0 0.0
    %5699 = vmatprep.subr.mxu0 0.0
    %5700 = vmatpush1.msra.mxu0 0.0
    %5701 = vmatprep.subr.mxu0 0.0
    %5702 = vmatpush1.msra.mxu0 0.0
    %5703 = vmatprep.subr.mxu0 0.0
    %5704 = vmatpush1.msra.mxu0 0.0
    %5705 = vmatprep.subr.mxu0 0.0
    %5706 = vmatpush1.msra.mxu0 0.0
    %5707 = vmatprep.subr.mxu0 0.0
    %5708 = vmatpush1.msra.mxu0 0.0
    %5709 = vmatprep.mubr.f32.mxu0 0.0
    %5710 = vmatmul.mubr.f32.gmra.mrb[0].mxu0 %v5451
    %v5711 = vpop.f32.mrb[0].mxu0
    %v5712 = vadd.f32 0.0, %v5711
    %v5713 = vpop.f32.mrb[0].mxu0
    %5714 = vmatprep.mubr.f32.mxu0 0.0
    %5715 = vmatmul.mubr.f32.gmra.mrb[0].mxu0 %v5454
    %v5716 = vpop.f32.mrb[0].mxu0
    %v5717 = vadd.f32 0.0, %v5716
    %v5718 = vpop.f32.mrb[0].mxu0
    %5719 = vmatprep.mubr.f32.mxu0 0.0
    %5720 = vmatmul.mubr.f32.gmra.mrb[0].mxu0 %v5457
    %v5721 = vpop.f32.mrb[0].mxu0
    %v5722 = vadd.f32 0.0, %v5721
    %v5723 = vpop.f32.mrb[0].mxu0
    %5724 = vmatprep.mubr.f32.mxu0 0.0
    %5725 = vmatmul.mubr.f32.gmra.mrb[0].mxu0 %v5460
    %v5726 = vpop.f32.mrb[0].mxu0
    %v5727 = vadd.f32 0.0, %v5726
    %v5728 = vpop.f32.mrb[0].mxu0
    %5729 = vmatprep.mubr.f32.mxu0 0.0
    %5730 = vmatmul.mubr.f32.gmra.mrb[0].mxu0 %v5463
    %v5731 = vpop.f32.mrb[0].mxu0
    %v5732 = vadd.f32 0.0, %v5731
    %v5733 = vpop.f32.mrb[0].mxu0
    %5734 = vmatprep.mubr.f32.mxu0 0.0
    %5735 = vmatmul.mubr.f32.gmra.mrb[0].mxu0 %v5466
    %v5736 = vpop.f32.mrb[0].mxu0
    %v5737 = vadd.f32 0.0, %v5736
    %v5738 = vpop.f32.mrb[0].mxu0
    %5739 = vmatprep.mubr.f32.mxu0 0.0
    %5740 = vmatmul.mubr.f32.gmra.mrb[0].mxu0 %v5469
    %v5741 = vpop.f32.mrb[0].mxu0
    %v5742 = vadd.f32 0.0, %v5741
    %v5743 = vpop.f32.mrb[0].mxu0
    %5744 = vmatprep.mubr.f32.mxu0 0.0
    %5745 = vmatmul.mubr.f32.gmra.mrb[0].mxu0 %v5472
    %v5746 = vpop.f32.mrb[0].mxu0
    %v5747 = vadd.f32 0.0, %v5746
    %v5748 = vpop.f32.mrb[0].mxu0
    %5749 = vmatprep.mubr.f32.mxu0 0.0
    %5750 = vmatmul.mubr.f32.gmra.mrb[0].mxu0 %v5475
    %v5751 = vpop.f32.mrb[0].mxu0
    %v5752 = vadd.f32 0.0, %v5751
    %v5753 = vpop.f32.mrb[0].mxu0
    %5754 = vmatprep.mubr.f32.mxu0 0.0
    %5755 = vmatmul.mubr.f32.gmra.mrb[0].mxu0 %v5478
    %v5756 = vpop.f32.mrb[0].mxu0
    %v5757 = vadd.f32 0.0, %v5756
    %v5758 = vpop.f32.mrb[0].mxu0
    %5759 = vmatprep.mubr.f32.mxu0 0.0
    %5760 = vmatmul.mubr.f32.gmra.mrb[0].mxu0 %v5481
    %v5761 = vpop.f32.mrb[0].mxu0
    %v5762 = vadd.f32 0.0, %v5761
    %v5763 = vpop.f32.mrb[0].mxu0
    %5764 = vmatprep.mubr.f32.mxu0 0.0
    %5765 = vmatmul.mubr.f32.gmra.mrb[0].mxu0 %v5484
    %v5766 = vpop.f32.mrb[0].mxu0
    %v5767 = vadd.f32 0.0, %v5766
    %v5768 = vpop.f32.mrb[0].mxu0
    %5769 = vmatprep.mubr.f32.mxu0 0.0
    %5770 = vmatmul.mubr.f32.gmra.mrb[0].mxu0 %v5487
    %v5771 = vpop.f32.mrb[0].mxu0
    %v5772 = vadd.f32 0.0, %v5771
    %v5773 = vpop.f32.mrb[0].mxu0
    %5774 = vmatprep.mubr.f32.mxu0 0.0
    %5775 = vmatmul.mubr.f32.gmra.mrb[0].mxu0 %v5490
    %v5776 = vpop.f32.mrb[0].mxu0
    %v5777 = vadd.f32 0.0, %v5776
    %v5778 = vpop.f32.mrb[0].mxu0
    %5779 = vmatprep.mubr.f32.mxu0 0.0
    %5780 = vmatmul.mubr.f32.gmra.mrb[0].mxu0 %v5493
    %v5781 = vpop.f32.mrb[0].mxu0
    %v5782 = vadd.f32 0.0, %v5781
    %v5783 = vpop.f32.mrb[0].mxu0
    %5784 = vmatprep.mubr.f32.mxu0 0.0
    %5785 = vmatmul.mubr.f32.gmra.mrb[0].mxu0 %v5496
    %v5786 = vpop.f32.mrb[0].mxu0
    %v5787 = vadd.f32 0.0, %v5786
    %v5788 = vpop.f32.mrb[0].mxu0
    %5789 = vmatprep.mubr.f32.mxu0 0.0
    %5790 = vmatmul.mubr.f32.gmra.mrb[0].mxu0 %v5499
    %v5791 = vpop.f32.mrb[0].mxu0
    %v5792 = vadd.f32 0.0, %v5791
    %v5793 = vpop.f32.mrb[0].mxu0
    %5794 = vmatprep.mubr.f32.mxu0 0.0
    %5795 = vmatmul.mubr.f32.gmra.mrb[0].mxu0 %v5502
    %v5796 = vpop.f32.mrb[0].mxu0
    %v5797 = vadd.f32 0.0, %v5796
    %v5798 = vpop.f32.mrb[0].mxu0
    %5799 = vmatprep.mubr.f32.mxu0 0.0
    %5800 = vmatmul.mubr.f32.gmra.mrb[0].mxu0 %v5505
    %v5801 = vpop.f32.mrb[0].mxu0
    %v5802 = vadd.f32 0.0, %v5801
    %v5803 = vpop.f32.mrb[0].mxu0
    %5804 = vmatprep.mubr.f32.mxu0 0.0
    %5805 = vmatmul.mubr.f32.gmra.mrb[0].mxu0 %v5508
    %v5806 = vpop.f32.mrb[0].mxu0
    %v5807 = vadd.f32 0.0, %v5806
    %v5808 = vpop.f32.mrb[0].mxu0
    %5809 = vmatprep.mubr.f32.mxu0 0.0
    %5810 = vmatmul.mubr.f32.gmra.mrb[0].mxu0 %v5511
    %v5811 = vpop.f32.mrb[0].mxu0
    %v5812 = vadd.f32 0.0, %v5811
    %v5813 = vpop.f32.mrb[0].mxu0
    %5814 = vmatprep.mubr.f32.mxu0 0.0
    %5815 = vmatmul.mubr.f32.gmra.mrb[0].mxu0 %v5514
    %v5816 = vpop.f32.mrb[0].mxu0
    %v5817 = vadd.f32 0.0, %v5816
    %v5818 = vpop.f32.mrb[0].mxu0
    %5819 = vmatprep.mubr.f32.mxu0 0.0
    %5820 = vmatmul.mubr.f32.gmra.mrb[0].mxu0 %v5517
    %v5821 = vpop.f32.mrb[0].mxu0
    %v5822 = vadd.f32 0.0, %v5821
    %v5823 = vpop.f32.mrb[0].mxu0
    %5824 = vmatprep.mubr.f32.mxu0 0.0
    %5825 = vmatmul.mubr.f32.gmra.mrb[0].mxu0 %v5520
    %v5826 = vpop.f32.mrb[0].mxu0
    %v5827 = vadd.f32 0.0, %v5826
    %v5828 = vpop.f32.mrb[0].mxu0
    %5829 = vmatprep.mubr.f32.mxu0 0.0
    %5830 = vmatmul.mubr.f32.gmra.mrb[0].mxu0 %v5523
    %v5831 = vpop.f32.mrb[0].mxu0
    %v5832 = vadd.f32 0.0, %v5831
    %v5833 = vpop.f32.mrb[0].mxu0
    %5834 = vmatprep.mubr.f32.mxu0 0.0
    %5835 = vmatmul.mubr.f32.gmra.mrb[0].mxu0 %v5526
    %v5836 = vpop.f32.mrb[0].mxu0
    %v5837 = vadd.f32 0.0, %v5836
    %v5838 = vpop.f32.mrb[0].mxu0
    %5839 = vmatprep.mubr.f32.mxu0 0.0
    %5840 = vmatmul.mubr.f32.gmra.mrb[0].mxu0 %v5529
    %v5841 = vpop.f32.mrb[0].mxu0
    %v5842 = vadd.f32 0.0, %v5841
    %v5843 = vpop.f32.mrb[0].mxu0
    %5844 = vmatprep.mubr.f32.mxu0 0.0
    %5845 = vmatmul.mubr.f32.gmra.mrb[0].mxu0 %v5532
    %v5846 = vpop.f32.mrb[0].mxu0
    %v5847 = vadd.f32 0.0, %v5846
    %v5848 = vpop.f32.mrb[0].mxu0
    %5849 = vmatprep.mubr.f32.mxu0 0.0
    %5850 = vmatmul.mubr.f32.gmra.mrb[0].mxu0 %v5535
    %v5851 = vpop.f32.mrb[0].mxu0
    %v5852 = vadd.f32 0.0, %v5851
    %v5853 = vpop.f32.mrb[0].mxu0
    %5854 = vmatprep.mubr.f32.mxu0 0.0
    %5855 = vmatmul.mubr.f32.gmra.mrb[0].mxu0 %v5538
    %v5856 = vpop.f32.mrb[0].mxu0
    %v5857 = vadd.f32 0.0, %v5856
    %v5858 = vpop.f32.mrb[0].mxu0
    %5859 = vmatprep.mubr.f32.mxu0 0.0
    %5860 = vmatmul.mubr.f32.gmra.mrb[0].mxu0 %v5541
    %v5861 = vpop.f32.mrb[0].mxu0
    %v5862 = vadd.f32 0.0, %v5861
    %v5863 = vpop.f32.mrb[0].mxu0
    %5864 = vmatprep.mubr.f32.mxu0 0.0
    %5865 = vmatmul.mubr.f32.gmra.mrb[0].mxu0 %v5544
    %v5866 = vpop.f32.mrb[0].mxu0
    %v5867 = vadd.f32 0.0, %v5866
    %v5868 = vpop.f32.mrb[0].mxu0
    %5869 = vmatprep.mubr.f32.mxu0 0.0
    %5870 = vmatmul.mubr.f32.gmra.mrb[0].mxu0 %v5547
    %v5871 = vpop.f32.mrb[0].mxu0
    %v5872 = vadd.f32 0.0, %v5871
    %v5873 = vpop.f32.mrb[0].mxu0
    %5874 = vmatprep.mubr.f32.mxu0 0.0
    %5875 = vmatmul.mubr.f32.gmra.mrb[0].mxu0 %v5550
    %v5876 = vpop.f32.mrb[0].mxu0
    %v5877 = vadd.f32 0.0, %v5876
    %v5878 = vpop.f32.mrb[0].mxu0
    %5879 = vmatprep.mubr.f32.mxu0 0.0
    %5880 = vmatmul.mubr.f32.gmra.mrb[0].mxu0 %v5553
    %v5881 = vpop.f32.mrb[0].mxu0
    %v5882 = vadd.f32 0.0, %v5881
    %v5883 = vpop.f32.mrb[0].mxu0
    %5884 = vmatprep.mubr.f32.mxu0 0.0
    %5885 = vmatmul.mubr.f32.gmra.mrb[0].mxu0 %v5556
    %v5886 = vpop.f32.mrb[0].mxu0
    %v5887 = vadd.f32 0.0, %v5886
    %v5888 = vpop.f32.mrb[0].mxu0
    %5889 = vmatprep.mubr.f32.mxu0 0.0
    %5890 = vmatmul.mubr.f32.gmra.mrb[0].mxu0 %v5559
    %v5891 = vpop.f32.mrb[0].mxu0
    %v5892 = vadd.f32 0.0, %v5891
    %v5893 = vpop.f32.mrb[0].mxu0
    %5894 = vmatprep.mubr.f32.mxu0 0.0
    %5895 = vmatmul.mubr.f32.gmra.mrb[0].mxu0 %v5562
    %v5896 = vpop.f32.mrb[0].mxu0
    %v5897 = vadd.f32 0.0, %v5896
    %v5898 = vpop.f32.mrb[0].mxu0
    %5899 = vmatprep.mubr.f32.mxu0 0.0
    %5900 = vmatmul.mubr.f32.gmra.mrb[0].mxu0 %v5565
    %v5901 = vpop.f32.mrb[0].mxu0
    %v5902 = vadd.f32 0.0, %v5901
    %v5903 = vpop.f32.mrb[0].mxu0
    %5904 = vmatprep.mubr.f32.mxu0 0.0
    %5905 = vmatmul.mubr.f32.gmra.mrb[0].mxu0 %v5568
    %v5906 = vpop.f32.mrb[0].mxu0
    %v5907 = vadd.f32 0.0, %v5906
    %v5908 = vpop.f32.mrb[0].mxu0
    %5909 = vmatprep.mubr.f32.mxu0 0.0
    %5910 = vmatmul.mubr.f32.gmra.mrb[0].mxu0 %v5571
    %v5911 = vpop.f32.mrb[0].mxu0
    %v5912 = vadd.f32 0.0, %v5911
    %v5913 = vpop.f32.mrb[0].mxu0
    %5914 = vmatprep.mubr.f32.mxu0 0.0
    %5915 = vmatmul.mubr.f32.gmra.mrb[0].mxu0 %v5574
    %v5916 = vpop.f32.mrb[0].mxu0
    %v5917 = vadd.f32 0.0, %v5916
    %v5918 = vpop.f32.mrb[0].mxu0
    %5919 = vmatprep.mubr.f32.mxu0 0.0
    %5920 = vmatmul.mubr.f32.gmra.mrb[0].mxu0 %v5577
    %v5921 = vpop.f32.mrb[0].mxu0
    %v5922 = vadd.f32 0.0, %v5921
    %v5923 = vpop.f32.mrb[0].mxu0
    %5924 = vmatprep.mubr.f32.mxu0 0.0
    %5925 = vmatmul.mubr.f32.gmra.mrb[0].mxu0 %v5580
    %v5926 = vpop.f32.mrb[0].mxu0
    %v5927 = vadd.f32 0.0, %v5926
    %v5928 = vpop.f32.mrb[0].mxu0
    %5929 = vmatprep.mubr.f32.mxu0 0.0
    %5930 = vmatmul.mubr.f32.gmra.mrb[0].mxu0 %v5583
    %v5931 = vpop.f32.mrb[0].mxu0
    %v5932 = vadd.f32 0.0, %v5931
    %v5933 = vpop.f32.mrb[0].mxu0
    %5934 = vmatprep.mubr.f32.mxu0 0.0
    %5935 = vmatmul.mubr.f32.gmra.mrb[0].mxu0 %v5586
    %v5936 = vpop.f32.mrb[0].mxu0
    %v5937 = vadd.f32 0.0, %v5936
    %v5938 = vpop.f32.mrb[0].mxu0
    %5939 = vmatprep.mubr.f32.mxu0 0.0
    %5940 = vmatmul.mubr.f32.gmra.mrb[0].mxu0 %v5589
    %v5941 = vpop.f32.mrb[0].mxu0
    %v5942 = vadd.f32 0.0, %v5941
    %v5943 = vpop.f32.mrb[0].mxu0
    %5944 = vmatprep.mubr.f32.mxu0 0.0
    %5945 = vmatmul.mubr.f32.gmra.mrb[0].mxu0 %v5592
    %v5946 = vpop.f32.mrb[0].mxu0
    %v5947 = vadd.f32 0.0, %v5946
    %v5948 = vpop.f32.mrb[0].mxu0
    %5949 = vmatprep.mubr.f32.mxu0 0.0
    %5950 = vmatmul.mubr.f32.gmra.mrb[0].mxu0 %v5595
    %v5951 = vpop.f32.mrb[0].mxu0
    %v5952 = vadd.f32 0.0, %v5951
    %v5953 = vpop.f32.mrb[0].mxu0
    %5954 = vmatprep.mubr.f32.mxu0 0.0
    %5955 = vmatmul.mubr.f32.gmra.mrb[0].mxu0 %v5598
    %v5956 = vpop.f32.mrb[0].mxu0
    %v5957 = vadd.f32 0.0, %v5956
    %v5958 = vpop.f32.mrb[0].mxu0
    %5959 = vmatprep.mubr.f32.mxu0 0.0
    %5960 = vmatmul.mubr.f32.gmra.mrb[0].mxu0 %v5601
    %v5961 = vpop.f32.mrb[0].mxu0
    %v5962 = vadd.f32 0.0, %v5961
    %v5963 = vpop.f32.mrb[0].mxu0
    %5964 = vmatprep.mubr.f32.mxu0 0.0
    %5965 = vmatmul.mubr.f32.gmra.mrb[0].mxu0 %v5604
    %v5966 = vpop.f32.mrb[0].mxu0
    %v5967 = vadd.f32 0.0, %v5966
    %v5968 = vpop.f32.mrb[0].mxu0
    %5969 = vmatprep.mubr.f32.mxu0 0.0
    %5970 = vmatmul.mubr.f32.gmra.mrb[0].mxu0 %v5607
    %v5971 = vpop.f32.mrb[0].mxu0
    %v5972 = vadd.f32 0.0, %v5971
    %v5973 = vpop.f32.mrb[0].mxu0
    %5974 = vmatprep.mubr.f32.mxu0 0.0
    %5975 = vmatmul.mubr.f32.gmra.mrb[0].mxu0 %v5610
    %v5976 = vpop.f32.mrb[0].mxu0
    %v5977 = vadd.f32 0.0, %v5976
    %v5978 = vpop.f32.mrb[0].mxu0
    %5979 = vmatprep.mubr.f32.mxu0 0.0
    %5980 = vmatmul.mubr.f32.gmra.mrb[0].mxu0 %v5613
    %v5981 = vpop.f32.mrb[0].mxu0
    %v5982 = vadd.f32 0.0, %v5981
    %v5983 = vpop.f32.mrb[0].mxu0
    %5984 = vmatprep.mubr.f32.mxu0 0.0
    %5985 = vmatmul.mubr.f32.gmra.mrb[0].mxu0 %v5616
    %v5986 = vpop.f32.mrb[0].mxu0
    %v5987 = vadd.f32 0.0, %v5986
    %v5988 = vpop.f32.mrb[0].mxu0
    %5989 = vmatprep.mubr.f32.mxu0 0.0
    %5990 = vmatmul.mubr.f32.gmra.mrb[0].mxu0 %v5619
    %v5991 = vpop.f32.mrb[0].mxu0
    %v5992 = vadd.f32 0.0, %v5991
    %v5993 = vpop.f32.mrb[0].mxu0
    %5994 = vmatprep.mubr.f32.mxu0 0.0
    %5995 = vmatmul.mubr.f32.gmra.mrb[0].mxu0 %v5622
    %v5996 = vpop.f32.mrb[0].mxu0
    %v5997 = vadd.f32 0.0, %v5996
    %v5998 = vpop.f32.mrb[0].mxu0
    %5999 = vmatprep.mubr.f32.mxu0 0.0
    %6000 = vmatmul.mubr.f32.gmra.mrb[0].mxu0 %v5625
    %v6001 = vpop.f32.mrb[0].mxu0
    %v6002 = vadd.f32 0.0, %v6001
    %v6003 = vpop.f32.mrb[0].mxu0
    %6004 = vmatprep.mubr.f32.mxu0 0.0
    %6005 = vmatmul.mubr.f32.gmra.mrb[0].mxu0 %v5628
    %v6006 = vpop.f32.mrb[0].mxu0
    %v6007 = vadd.f32 0.0, %v6006
    %v6008 = vpop.f32.mrb[0].mxu0
    %6009 = vmatprep.mubr.f32.mxu0 0.0
    %6010 = vmatmul.mubr.f32.gmra.mrb[0].mxu0 %v5631
    %v6011 = vpop.f32.mrb[0].mxu0
    %v6012 = vadd.f32 0.0, %v6011
    %v6013 = vpop.f32.mrb[0].mxu0
    %6014 = vmatprep.mubr.f32.mxu0 0.0
    %6015 = vmatmul.mubr.f32.gmra.mrb[0].mxu0 %v5634
    %v6016 = vpop.f32.mrb[0].mxu0
    %v6017 = vadd.f32 0.0, %v6016
    %v6018 = vpop.f32.mrb[0].mxu0
    %6019 = vmatprep.mubr.f32.mxu0 0.0
    %6020 = vmatmul.mubr.f32.gmra.mrb[0].mxu0 %v5637
    %v6021 = vpop.f32.mrb[0].mxu0
    %v6022 = vadd.f32 0.0, %v6021
    %v6023 = vpop.f32.mrb[0].mxu0
    %6024 = vmatprep.mubr.f32.mxu0 0.0
    %6025 = vmatmul.mubr.f32.gmra.mrb[0].mxu0 %v5640
    %v6026 = vpop.f32.mrb[0].mxu0
    %v6027 = vadd.f32 0.0, %v6026
    %v6028 = vpop.f32.mrb[0].mxu0
    %6029 = vdwg.mxu0
    %v6030 = vadd.f32 %v5256, %v5712
    %v6031 = vadd.f32 %v5257, %v5717
    %v6032 = vadd.f32 %v5258, %v5722
    %v6033 = vadd.f32 %v5259, %v5727
    %v6034 = vadd.f32 %v5260, %v5732
    %v6035 = vadd.f32 %v5261, %v5737
    %v6036 = vadd.f32 %v5262, %v5742
    %v6037 = vadd.f32 %v5263, %v5747
    %v6038 = vadd.f32 %v5264, %v5752
    %v6039 = vadd.f32 %v5265, %v5757
    %v6040 = vadd.f32 %v5266, %v5762
    %v6041 = vadd.f32 %v5267, %v5767
    %v6042 = vadd.f32 %v5268, %v5772
    %v6043 = vadd.f32 %v5269, %v5777
    %v6044 = vadd.f32 %v5270, %v5782
    %v6045 = vadd.f32 %v5271, %v5787
    %v6046 = vadd.f32 %v5272, %v5792
    %v6047 = vadd.f32 %v5273, %v5797
    %v6048 = vadd.f32 %v5274, %v5802
    %v6049 = vadd.f32 %v5275, %v5807
    %v6050 = vadd.f32 %v5276, %v5812
    %v6051 = vadd.f32 %v5277, %v5817
    %v6052 = vadd.f32 %v5278, %v5822
    %v6053 = vadd.f32 %v5279, %v5827
    %v6054 = vadd.f32 %v5280, %v5832
    %v6055 = vadd.f32 %v5281, %v5837
    %v6056 = vadd.f32 %v5282, %v5842
    %v6057 = vadd.f32 %v5283, %v5847
    %v6058 = vadd.f32 %v5284, %v5852
    %v6059 = vadd.f32 %v5285, %v5857
    %v6060 = vadd.f32 %v5286, %v5862
    %v6061 = vadd.f32 %v5287, %v5867
    %v6062 = vadd.f32 %v5288, %v5872
    %v6063 = vadd.f32 %v5289, %v5877
    %v6064 = vadd.f32 %v5290, %v5882
    %v6065 = vadd.f32 %v5291, %v5887
    %v6066 = vadd.f32 %v5292, %v5892
    %v6067 = vadd.f32 %v5293, %v5897
    %v6068 = vadd.f32 %v5294, %v5902
    %v6069 = vadd.f32 %v5295, %v5907
    %v6070 = vadd.f32 %v5296, %v5912
    %v6071 = vadd.f32 %v5297, %v5917
    %v6072 = vadd.f32 %v5298, %v5922
    %v6073 = vadd.f32 %v5299, %v5927
    %v6074 = vadd.f32 %v5300, %v5932
    %v6075 = vadd.f32 %v5301, %v5937
    %v6076 = vadd.f32 %v5302, %v5942
    %v6077 = vadd.f32 %v5303, %v5947
    %v6078 = vadd.f32 %v5304, %v5952
    %v6079 = vadd.f32 %v5305, %v5957
    %v6080 = vadd.f32 %v5306, %v5962
    %v6081 = vadd.f32 %v5307, %v5967
    %v6082 = vadd.f32 %v5308, %v5972
    %v6083 = vadd.f32 %v5309, %v5977
    %v6084 = vadd.f32 %v5310, %v5982
    %v6085 = vadd.f32 %v5311, %v5987
    %v6086 = vadd.f32 %v5312, %v5992
    %v6087 = vadd.f32 %v5313, %v5997
    %v6088 = vadd.f32 %v5314, %v6002
    %v6089 = vadd.f32 %v5315, %v6007
    %v6090 = vadd.f32 %v5316, %v6012
    %v6091 = vadd.f32 %v5317, %v6017
    %v6092 = vadd.f32 %v5318, %v6022
    %v6093 = vadd.f32 %v5319, %v6027
    %v6094 = vld [vmem:[%s4545 + $0x2] sm:$0xff]
    %v6095 = vld [vmem:[%s4545 + $0xa] sm:$0xff]
    %v6096 = vld [vmem:[%s4545 + $0x1a] sm:$0xff]
    %v6097 = vld [vmem:[%s4545 + $0x22] sm:$0xff]
    %v6098 = vld [vmem:[%s4545 + $0x32] sm:$0xff]
    %v6099 = vld [vmem:[%s4545 + $0x3a] sm:$0xff]
    %v6100 = vld [vmem:[%s4545 + $0x4a] sm:$0xff]
    %v6101 = vld [vmem:[%s4545 + $0x52] sm:$0xff]
    %v6102 = vld [vmem:[%s4545 + $0x62] sm:$0xff]
    %v6103 = vld [vmem:[%s4545 + $0x6a] sm:$0xff]
    %v6104 = vld [vmem:[%s4545 + $0x7a] sm:$0xff]
    %v6105 = vld [vmem:[%s4545 + $0x82] sm:$0xff]
    %v6106 = vld [vmem:[%s4545 + $0x92] sm:$0xff]
    %v6107 = vld [vmem:[%s4545 + $0x9a] sm:$0xff]
    %v6108 = vld [vmem:[%s4545 + $0xaa] sm:$0xff]
    %v6109 = vld [vmem:[%s4545 + $0xb2] sm:$0xff]
    %v6110 = vld [vmem:[%s4545 + $0xc2] sm:$0xff]
    %v6111 = vld [vmem:[%s4545 + $0xca] sm:$0xff]
    %v6112 = vld [vmem:[%s4545 + $0xda] sm:$0xff]
    %v6113 = vld [vmem:[%s4545 + $0xe2] sm:$0xff]
    %v6114 = vld [vmem:[%s4545 + $0xf2] sm:$0xff]
    %v6115 = vld [vmem:[%s4545 + $0xfa] sm:$0xff]
    %v6116 = vld [vmem:[%s4545 + $0x10a] sm:$0xff]
    %v6117 = vld [vmem:[%s4545 + $0x112] sm:$0xff]
    %v6118 = vld [vmem:[%s4545 + $0x122] sm:$0xff]
    %v6119 = vld [vmem:[%s4545 + $0x12a] sm:$0xff]
    %v6120 = vld [vmem:[%s4545 + $0x13a] sm:$0xff]
    %v6121 = vld [vmem:[%s4545 + $0x142] sm:$0xff]
    %v6122 = vld [vmem:[%s4545 + $0x152] sm:$0xff]
    %v6123 = vld [vmem:[%s4545 + $0x15a] sm:$0xff]
    %v6124 = vld [vmem:[%s4545 + $0x16a] sm:$0xff]
    %v6125 = vld [vmem:[%s4545 + $0x172] sm:$0xff]
    %v6126 = vld [vmem:[%s4545 + $0x1b2] sm:$0xff]
    %v6127 = vld [vmem:[%s4545 + $0x1ba] sm:$0xff]
    %v6128 = vld [vmem:[%s4545 + $0x1ca] sm:$0xff]
    %v6129 = vld [vmem:[%s4545 + $0x1d2] sm:$0xff]
    %v6130 = vld [vmem:[%s4545 + $0x1e2] sm:$0xff]
    %v6131 = vld [vmem:[%s4545 + $0x1ea] sm:$0xff]
    %v6132 = vld [vmem:[%s4545 + $0x1fa] sm:$0xff]
    %v6133 = vld [vmem:[%s4545 + $0x202] sm:$0xff]
    %v6134 = vld [vmem:[%s4545 + $0x212] sm:$0xff]
    %v6135 = vld [vmem:[%s4545 + $0x21a] sm:$0xff]
    %v6136 = vld [vmem:[%s4545 + $0x22a] sm:$0xff]
    %v6137 = vld [vmem:[%s4545 + $0x232] sm:$0xff]
    %v6138 = vld [vmem:[%s4545 + $0x242] sm:$0xff]
    %v6139 = vld [vmem:[%s4545 + $0x24a] sm:$0xff]
    %v6140 = vld [vmem:[%s4545 + $0x25a] sm:$0xff]
    %v6141 = vld [vmem:[%s4545 + $0x262] sm:$0xff]
    %v6142 = vld [vmem:[%s4545 + $0x272] sm:$0xff]
    %v6143 = vld [vmem:[%s4545 + $0x27a] sm:$0xff]
    %v6144 = vld [vmem:[%s4545 + $0x28a] sm:$0xff]
    %v6145 = vld [vmem:[%s4545 + $0x292] sm:$0xff]
    %v6146 = vld [vmem:[%s4545 + $0x2a2] sm:$0xff]
    %v6147 = vld [vmem:[%s4545 + $0x2aa] sm:$0xff]
    %v6148 = vld [vmem:[%s4545 + $0x2ba] sm:$0xff]
    %v6149 = vld [vmem:[%s4545 + $0x2c2] sm:$0xff]
    %v6150 = vld [vmem:[%s4545 + $0x2d2] sm:$0xff]
    %v6151 = vld [vmem:[%s4545 + $0x2da] sm:$0xff]
    %v6152 = vld [vmem:[%s4545 + $0x2ea] sm:$0xff]
    %v6153 = vld [vmem:[%s4545 + $0x2f2] sm:$0xff]
    %v6154 = vld [vmem:[%s4545 + $0x302] sm:$0xff]
    %v6155 = vld [vmem:[%s4545 + $0x30a] sm:$0xff]
    %v6156 = vld [vmem:[%s4545 + $0x31a] sm:$0xff]
    %v6157 = vld [vmem:[%s4545 + $0x322] sm:$0xff]
    %v6158 = vmax.f32 %v6094, 0.0
    %v6159 = vmax.f32 %v6095, 0.0
    %v6160 = vmax.f32 %v6096, 0.0
    %v6161 = vmax.f32 %v6097, 0.0
    %v6162 = vmax.f32 %v6098, 0.0
    %v6163 = vmax.f32 %v6099, 0.0
    %v6164 = vmax.f32 %v6100, 0.0
    %v6165 = vmax.f32 %v6101, 0.0
    %v6166 = vmax.f32 %v6102, 0.0
    %v6167 = vmax.f32 %v6103, 0.0
    %v6168 = vmax.f32 %v6104, 0.0
    %v6169 = vmax.f32 %v6105, 0.0
    %v6170 = vmax.f32 %v6106, 0.0
    %v6171 = vmax.f32 %v6107, 0.0
    %v6172 = vmax.f32 %v6108, 0.0
    %v6173 = vmax.f32 %v6109, 0.0
    %v6174 = vmax.f32 %v6110, 0.0
    %v6175 = vmax.f32 %v6111, 0.0
    %v6176 = vmax.f32 %v6112, 0.0
    %v6177 = vmax.f32 %v6113, 0.0
    %v6178 = vmax.f32 %v6114, 0.0
    %v6179 = vmax.f32 %v6115, 0.0
    %v6180 = vmax.f32 %v6116, 0.0
    %v6181 = vmax.f32 %v6117, 0.0
    %v6182 = vmax.f32 %v6118, 0.0
    %v6183 = vmax.f32 %v6119, 0.0
    %v6184 = vmax.f32 %v6120, 0.0
    %v6185 = vmax.f32 %v6121, 0.0
    %v6186 = vmax.f32 %v6122, 0.0
    %v6187 = vmax.f32 %v6123, 0.0
    %v6188 = vmax.f32 %v6124, 0.0
    %v6189 = vmax.f32 %v6125, 0.0
    %v6190 = vmax.f32 %v6126, 0.0
    %v6191 = vmax.f32 %v6127, 0.0
    %v6192 = vmax.f32 %v6128, 0.0
    %v6193 = vmax.f32 %v6129, 0.0
    %v6194 = vmax.f32 %v6130, 0.0
    %v6195 = vmax.f32 %v6131, 0.0
    %v6196 = vmax.f32 %v6132, 0.0
    %v6197 = vmax.f32 %v6133, 0.0
    %v6198 = vmax.f32 %v6134, 0.0
    %v6199 = vmax.f32 %v6135, 0.0
    %v6200 = vmax.f32 %v6136, 0.0
    %v6201 = vmax.f32 %v6137, 0.0
    %v6202 = vmax.f32 %v6138, 0.0
    %v6203 = vmax.f32 %v6139, 0.0
    %v6204 = vmax.f32 %v6140, 0.0
    %v6205 = vmax.f32 %v6141, 0.0
    %v6206 = vmax.f32 %v6142, 0.0
    %v6207 = vmax.f32 %v6143, 0.0
    %v6208 = vmax.f32 %v6144, 0.0
    %v6209 = vmax.f32 %v6145, 0.0
    %v6210 = vmax.f32 %v6146, 0.0
    %v6211 = vmax.f32 %v6147, 0.0
    %v6212 = vmax.f32 %v6148, 0.0
    %v6213 = vmax.f32 %v6149, 0.0
    %v6214 = vmax.f32 %v6150, 0.0
    %v6215 = vmax.f32 %v6151, 0.0
    %v6216 = vmax.f32 %v6152, 0.0
    %v6217 = vmax.f32 %v6153, 0.0
    %v6218 = vmax.f32 %v6154, 0.0
    %v6219 = vmax.f32 %v6155, 0.0
    %v6220 = vmax.f32 %v6156, 0.0
    %v6221 = vmax.f32 %v6157, 0.0
    %s6222 = scalar_lea.vmem %s1, 32
    %v6223 = vld [vmem:[%s6222] sm:$0xf]
    %v6225 = vsel %vm286, %v6158, 0
    %v6228 = vsel %vm286, %v6159, 0
    %v6231 = vsel %vm286, %v6160, 0
    %v6234 = vsel %vm286, %v6161, 0
    %v6237 = vsel %vm286, %v6162, 0
    %v6240 = vsel %vm286, %v6163, 0
    %v6243 = vsel %vm286, %v6164, 0
    %v6246 = vsel %vm286, %v6165, 0
    %v6249 = vsel %vm286, %v6166, 0
    %v6252 = vsel %vm286, %v6167, 0
    %v6255 = vsel %vm286, %v6168, 0
    %v6258 = vsel %vm286, %v6169, 0
    %v6261 = vsel %vm286, %v6170, 0
    %v6264 = vsel %vm286, %v6171, 0
    %v6267 = vsel %vm286, %v6172, 0
    %v6270 = vsel %vm286, %v6173, 0
    %v6273 = vsel %vm286, %v6174, 0
    %v6276 = vsel %vm286, %v6175, 0
    %v6279 = vsel %vm286, %v6176, 0
    %v6282 = vsel %vm286, %v6177, 0
    %v6285 = vsel %vm286, %v6178, 0
    %v6288 = vsel %vm286, %v6179, 0
    %v6291 = vsel %vm286, %v6180, 0
    %v6294 = vsel %vm286, %v6181, 0
    %v6297 = vsel %vm286, %v6182, 0
    %v6300 = vsel %vm286, %v6183, 0
    %v6303 = vsel %vm286, %v6184, 0
    %v6306 = vsel %vm286, %v6185, 0
    %v6309 = vsel %vm286, %v6186, 0
    %v6312 = vsel %vm286, %v6187, 0
    %v6315 = vsel %vm286, %v6188, 0
    %v6318 = vsel %vm286, %v6189, 0
    %v6321 = vsel %vm286, %v6190, 0
    %v6324 = vsel %vm286, %v6191, 0
    %v6327 = vsel %vm286, %v6192, 0
    %v6330 = vsel %vm286, %v6193, 0
    %v6333 = vsel %vm286, %v6194, 0
    %v6336 = vsel %vm286, %v6195, 0
    %v6339 = vsel %vm286, %v6196, 0
    %v6342 = vsel %vm286, %v6197, 0
    %v6345 = vsel %vm286, %v6198, 0
    %v6348 = vsel %vm286, %v6199, 0
    %v6351 = vsel %vm286, %v6200, 0
    %v6354 = vsel %vm286, %v6201, 0
    %v6357 = vsel %vm286, %v6202, 0
    %v6360 = vsel %vm286, %v6203, 0
    %v6363 = vsel %vm286, %v6204, 0
    %v6366 = vsel %vm286, %v6205, 0
    %v6369 = vsel %vm286, %v6206, 0
    %v6372 = vsel %vm286, %v6207, 0
    %v6375 = vsel %vm286, %v6208, 0
    %v6378 = vsel %vm286, %v6209, 0
    %v6381 = vsel %vm286, %v6210, 0
    %v6384 = vsel %vm286, %v6211, 0
    %v6387 = vsel %vm286, %v6212, 0
    %v6390 = vsel %vm286, %v6213, 0
    %v6393 = vsel %vm286, %v6214, 0
    %v6396 = vsel %vm286, %v6215, 0
    %v6399 = vsel %vm286, %v6216, 0
    %v6402 = vsel %vm286, %v6217, 0
    %v6405 = vsel %vm286, %v6218, 0
    %v6408 = vsel %vm286, %v6219, 0
    %v6411 = vsel %vm286, %v6220, 0
    %v6414 = vsel %vm286, %v6221, 0
    %v6417 = vsel %vm479, %v6223, 0
    %6419 = vmatprep.subr.mxu0 0.0
    %6420 = vmatpush1.msra.mxu0 %v6417
    %6421 = vmatprep.subr.mxu0 0.0
    %6422 = vmatpush1.msra.mxu0 0.0
    %6423 = vmatprep.subr.mxu0 0.0
    %6424 = vmatpush1.msra.mxu0 0.0
    %6425 = vmatprep.subr.mxu0 0.0
    %6426 = vmatpush1.msra.mxu0 0.0
    %6427 = vmatprep.subr.mxu0 0.0
    %6428 = vmatpush1.msra.mxu0 0.0
    %6429 = vmatprep.subr.mxu0 0.0
    %6430 = vmatpush1.msra.mxu0 0.0
    %6431 = vmatprep.subr.mxu0 0.0
    %6432 = vmatpush1.msra.mxu0 0.0
    %6433 = vmatprep.subr.mxu0 0.0
    %6434 = vmatpush1.msra.mxu0 0.0
    %6435 = vmatprep.subr.mxu0 0.0
    %6436 = vmatpush1.msra.mxu0 0.0
    %6437 = vmatprep.subr.mxu0 0.0
    %6438 = vmatpush1.msra.mxu0 0.0
    %6439 = vmatprep.subr.mxu0 0.0
    %6440 = vmatpush1.msra.mxu0 0.0
    %6441 = vmatprep.subr.mxu0 0.0
    %6442 = vmatpush1.msra.mxu0 0.0
    %6443 = vmatprep.subr.mxu0 0.0
    %6444 = vmatpush1.msra.mxu0 0.0
    %6445 = vmatprep.subr.mxu0 0.0
    %6446 = vmatpush1.msra.mxu0 0.0
    %6447 = vmatprep.subr.mxu0 0.0
    %6448 = vmatpush1.msra.mxu0 0.0
    %6449 = vmatprep.subr.mxu0 0.0
    %6450 = vmatpush1.msra.mxu0 0.0
    %6451 = vmatprep.subr.mxu0 0.0
    %6452 = vmatpush1.msra.mxu0 0.0
    %6453 = vmatprep.subr.mxu0 0.0
    %6454 = vmatpush1.msra.mxu0 0.0
    %6455 = vmatprep.subr.mxu0 0.0
    %6456 = vmatpush1.msra.mxu0 0.0
    %6457 = vmatprep.subr.mxu0 0.0
    %6458 = vmatpush1.msra.mxu0 0.0
    %6459 = vmatprep.subr.mxu0 0.0
    %6460 = vmatpush1.msra.mxu0 0.0
    %6461 = vmatprep.subr.mxu0 0.0
    %6462 = vmatpush1.msra.mxu0 0.0
    %6463 = vmatprep.subr.mxu0 0.0
    %6464 = vmatpush1.msra.mxu0 0.0
    %6465 = vmatprep.subr.mxu0 0.0
    %6466 = vmatpush1.msra.mxu0 0.0
    %6467 = vmatprep.subr.mxu0 0.0
    %6468 = vmatpush1.msra.mxu0 0.0
    %6469 = vmatprep.subr.mxu0 0.0
    %6470 = vmatpush1.msra.mxu0 0.0
    %6471 = vmatprep.subr.mxu0 0.0
    %6472 = vmatpush1.msra.mxu0 0.0
    %6473 = vmatprep.subr.mxu0 0.0
    %6474 = vmatpush1.msra.mxu0 0.0
    %6475 = vmatprep.subr.mxu0 0.0
    %6476 = vmatpush1.msra.mxu0 0.0
    %6477 = vmatprep.subr.mxu0 0.0
    %6478 = vmatpush1.msra.mxu0 0.0
    %6479 = vmatprep.subr.mxu0 0.0
    %6480 = vmatpush1.msra.mxu0 0.0
    %6481 = vmatprep.subr.mxu0 0.0
    %6482 = vmatpush1.msra.mxu0 0.0
    %6483 = vmatprep.mubr.f32.mxu0 0.0
    %6484 = vmatmul.mubr.f32.gmra.mrb[0].mxu0 %v6225
    %v6485 = vpop.f32.mrb[0].mxu0
    %v6486 = vadd.f32 0.0, %v6485
    %v6487 = vpop.f32.mrb[0].mxu0
    %6488 = vmatprep.mubr.f32.mxu0 0.0
    %6489 = vmatmul.mubr.f32.gmra.mrb[0].mxu0 %v6228
    %v6490 = vpop.f32.mrb[0].mxu0
    %v6491 = vadd.f32 0.0, %v6490
    %v6492 = vpop.f32.mrb[0].mxu0
    %6493 = vmatprep.mubr.f32.mxu0 0.0
    %6494 = vmatmul.mubr.f32.gmra.mrb[0].mxu0 %v6231
    %v6495 = vpop.f32.mrb[0].mxu0
    %v6496 = vadd.f32 0.0, %v6495
    %v6497 = vpop.f32.mrb[0].mxu0
    %6498 = vmatprep.mubr.f32.mxu0 0.0
    %6499 = vmatmul.mubr.f32.gmra.mrb[0].mxu0 %v6234
    %v6500 = vpop.f32.mrb[0].mxu0
    %v6501 = vadd.f32 0.0, %v6500
    %v6502 = vpop.f32.mrb[0].mxu0
    %6503 = vmatprep.mubr.f32.mxu0 0.0
    %6504 = vmatmul.mubr.f32.gmra.mrb[0].mxu0 %v6237
    %v6505 = vpop.f32.mrb[0].mxu0
    %v6506 = vadd.f32 0.0, %v6505
    %v6507 = vpop.f32.mrb[0].mxu0
    %6508 = vmatprep.mubr.f32.mxu0 0.0
    %6509 = vmatmul.mubr.f32.gmra.mrb[0].mxu0 %v6240
    %v6510 = vpop.f32.mrb[0].mxu0
    %v6511 = vadd.f32 0.0, %v6510
    %v6512 = vpop.f32.mrb[0].mxu0
    %6513 = vmatprep.mubr.f32.mxu0 0.0
    %6514 = vmatmul.mubr.f32.gmra.mrb[0].mxu0 %v6243
    %v6515 = vpop.f32.mrb[0].mxu0
    %v6516 = vadd.f32 0.0, %v6515
    %v6517 = vpop.f32.mrb[0].mxu0
    %6518 = vmatprep.mubr.f32.mxu0 0.0
    %6519 = vmatmul.mubr.f32.gmra.mrb[0].mxu0 %v6246
    %v6520 = vpop.f32.mrb[0].mxu0
    %v6521 = vadd.f32 0.0, %v6520
    %v6522 = vpop.f32.mrb[0].mxu0
    %6523 = vmatprep.mubr.f32.mxu0 0.0
    %6524 = vmatmul.mubr.f32.gmra.mrb[0].mxu0 %v6249
    %v6525 = vpop.f32.mrb[0].mxu0
    %v6526 = vadd.f32 0.0, %v6525
    %v6527 = vpop.f32.mrb[0].mxu0
    %6528 = vmatprep.mubr.f32.mxu0 0.0
    %6529 = vmatmul.mubr.f32.gmra.mrb[0].mxu0 %v6252
    %v6530 = vpop.f32.mrb[0].mxu0
    %v6531 = vadd.f32 0.0, %v6530
    %v6532 = vpop.f32.mrb[0].mxu0
    %6533 = vmatprep.mubr.f32.mxu0 0.0
    %6534 = vmatmul.mubr.f32.gmra.mrb[0].mxu0 %v6255
    %v6535 = vpop.f32.mrb[0].mxu0
    %v6536 = vadd.f32 0.0, %v6535
    %v6537 = vpop.f32.mrb[0].mxu0
    %6538 = vmatprep.mubr.f32.mxu0 0.0
    %6539 = vmatmul.mubr.f32.gmra.mrb[0].mxu0 %v6258
    %v6540 = vpop.f32.mrb[0].mxu0
    %v6541 = vadd.f32 0.0, %v6540
    %v6542 = vpop.f32.mrb[0].mxu0
    %6543 = vmatprep.mubr.f32.mxu0 0.0
    %6544 = vmatmul.mubr.f32.gmra.mrb[0].mxu0 %v6261
    %v6545 = vpop.f32.mrb[0].mxu0
    %v6546 = vadd.f32 0.0, %v6545
    %v6547 = vpop.f32.mrb[0].mxu0
    %6548 = vmatprep.mubr.f32.mxu0 0.0
    %6549 = vmatmul.mubr.f32.gmra.mrb[0].mxu0 %v6264
    %v6550 = vpop.f32.mrb[0].mxu0
    %v6551 = vadd.f32 0.0, %v6550
    %v6552 = vpop.f32.mrb[0].mxu0
    %6553 = vmatprep.mubr.f32.mxu0 0.0
    %6554 = vmatmul.mubr.f32.gmra.mrb[0].mxu0 %v6267
    %v6555 = vpop.f32.mrb[0].mxu0
    %v6556 = vadd.f32 0.0, %v6555
    %v6557 = vpop.f32.mrb[0].mxu0
    %6558 = vmatprep.mubr.f32.mxu0 0.0
    %6559 = vmatmul.mubr.f32.gmra.mrb[0].mxu0 %v6270
    %v6560 = vpop.f32.mrb[0].mxu0
    %v6561 = vadd.f32 0.0, %v6560
    %v6562 = vpop.f32.mrb[0].mxu0
    %6563 = vmatprep.mubr.f32.mxu0 0.0
    %6564 = vmatmul.mubr.f32.gmra.mrb[0].mxu0 %v6273
    %v6565 = vpop.f32.mrb[0].mxu0
    %v6566 = vadd.f32 0.0, %v6565
    %v6567 = vpop.f32.mrb[0].mxu0
    %6568 = vmatprep.mubr.f32.mxu0 0.0
    %6569 = vmatmul.mubr.f32.gmra.mrb[0].mxu0 %v6276
    %v6570 = vpop.f32.mrb[0].mxu0
    %v6571 = vadd.f32 0.0, %v6570
    %v6572 = vpop.f32.mrb[0].mxu0
    %6573 = vmatprep.mubr.f32.mxu0 0.0
    %6574 = vmatmul.mubr.f32.gmra.mrb[0].mxu0 %v6279
    %v6575 = vpop.f32.mrb[0].mxu0
    %v6576 = vadd.f32 0.0, %v6575
    %v6577 = vpop.f32.mrb[0].mxu0
    %6578 = vmatprep.mubr.f32.mxu0 0.0
    %6579 = vmatmul.mubr.f32.gmra.mrb[0].mxu0 %v6282
    %v6580 = vpop.f32.mrb[0].mxu0
    %v6581 = vadd.f32 0.0, %v6580
    %v6582 = vpop.f32.mrb[0].mxu0
    %6583 = vmatprep.mubr.f32.mxu0 0.0
    %6584 = vmatmul.mubr.f32.gmra.mrb[0].mxu0 %v6285
    %v6585 = vpop.f32.mrb[0].mxu0
    %v6586 = vadd.f32 0.0, %v6585
    %v6587 = vpop.f32.mrb[0].mxu0
    %6588 = vmatprep.mubr.f32.mxu0 0.0
    %6589 = vmatmul.mubr.f32.gmra.mrb[0].mxu0 %v6288
    %v6590 = vpop.f32.mrb[0].mxu0
    %v6591 = vadd.f32 0.0, %v6590
    %v6592 = vpop.f32.mrb[0].mxu0
    %6593 = vmatprep.mubr.f32.mxu0 0.0
    %6594 = vmatmul.mubr.f32.gmra.mrb[0].mxu0 %v6291
    %v6595 = vpop.f32.mrb[0].mxu0
    %v6596 = vadd.f32 0.0, %v6595
    %v6597 = vpop.f32.mrb[0].mxu0
    %6598 = vmatprep.mubr.f32.mxu0 0.0
    %6599 = vmatmul.mubr.f32.gmra.mrb[0].mxu0 %v6294
    %v6600 = vpop.f32.mrb[0].mxu0
    %v6601 = vadd.f32 0.0, %v6600
    %v6602 = vpop.f32.mrb[0].mxu0
    %6603 = vmatprep.mubr.f32.mxu0 0.0
    %6604 = vmatmul.mubr.f32.gmra.mrb[0].mxu0 %v6297
    %v6605 = vpop.f32.mrb[0].mxu0
    %v6606 = vadd.f32 0.0, %v6605
    %v6607 = vpop.f32.mrb[0].mxu0
    %6608 = vmatprep.mubr.f32.mxu0 0.0
    %6609 = vmatmul.mubr.f32.gmra.mrb[0].mxu0 %v6300
    %v6610 = vpop.f32.mrb[0].mxu0
    %v6611 = vadd.f32 0.0, %v6610
    %v6612 = vpop.f32.mrb[0].mxu0
    %6613 = vmatprep.mubr.f32.mxu0 0.0
    %6614 = vmatmul.mubr.f32.gmra.mrb[0].mxu0 %v6303
    %v6615 = vpop.f32.mrb[0].mxu0
    %v6616 = vadd.f32 0.0, %v6615
    %v6617 = vpop.f32.mrb[0].mxu0
    %6618 = vmatprep.mubr.f32.mxu0 0.0
    %6619 = vmatmul.mubr.f32.gmra.mrb[0].mxu0 %v6306
    %v6620 = vpop.f32.mrb[0].mxu0
    %v6621 = vadd.f32 0.0, %v6620
    %v6622 = vpop.f32.mrb[0].mxu0
    %6623 = vmatprep.mubr.f32.mxu0 0.0
    %6624 = vmatmul.mubr.f32.gmra.mrb[0].mxu0 %v6309
    %v6625 = vpop.f32.mrb[0].mxu0
    %v6626 = vadd.f32 0.0, %v6625
    %v6627 = vpop.f32.mrb[0].mxu0
    %6628 = vmatprep.mubr.f32.mxu0 0.0
    %6629 = vmatmul.mubr.f32.gmra.mrb[0].mxu0 %v6312
    %v6630 = vpop.f32.mrb[0].mxu0
    %v6631 = vadd.f32 0.0, %v6630
    %v6632 = vpop.f32.mrb[0].mxu0
    %6633 = vmatprep.mubr.f32.mxu0 0.0
    %6634 = vmatmul.mubr.f32.gmra.mrb[0].mxu0 %v6315
    %v6635 = vpop.f32.mrb[0].mxu0
    %v6636 = vadd.f32 0.0, %v6635
    %v6637 = vpop.f32.mrb[0].mxu0
    %6638 = vmatprep.mubr.f32.mxu0 0.0
    %6639 = vmatmul.mubr.f32.gmra.mrb[0].mxu0 %v6318
    %v6640 = vpop.f32.mrb[0].mxu0
    %v6641 = vadd.f32 0.0, %v6640
    %v6642 = vpop.f32.mrb[0].mxu0
    %6643 = vmatprep.mubr.f32.mxu0 0.0
    %6644 = vmatmul.mubr.f32.gmra.mrb[0].mxu0 %v6321
    %v6645 = vpop.f32.mrb[0].mxu0
    %v6646 = vadd.f32 0.0, %v6645
    %v6647 = vpop.f32.mrb[0].mxu0
    %6648 = vmatprep.mubr.f32.mxu0 0.0
    %6649 = vmatmul.mubr.f32.gmra.mrb[0].mxu0 %v6324
    %v6650 = vpop.f32.mrb[0].mxu0
    %v6651 = vadd.f32 0.0, %v6650
    %v6652 = vpop.f32.mrb[0].mxu0
    %6653 = vmatprep.mubr.f32.mxu0 0.0
    %6654 = vmatmul.mubr.f32.gmra.mrb[0].mxu0 %v6327
    %v6655 = vpop.f32.mrb[0].mxu0
    %v6656 = vadd.f32 0.0, %v6655
    %v6657 = vpop.f32.mrb[0].mxu0
    %6658 = vmatprep.mubr.f32.mxu0 0.0
    %6659 = vmatmul.mubr.f32.gmra.mrb[0].mxu0 %v6330
    %v6660 = vpop.f32.mrb[0].mxu0
    %v6661 = vadd.f32 0.0, %v6660
    %v6662 = vpop.f32.mrb[0].mxu0
    %6663 = vmatprep.mubr.f32.mxu0 0.0
    %6664 = vmatmul.mubr.f32.gmra.mrb[0].mxu0 %v6333
    %v6665 = vpop.f32.mrb[0].mxu0
    %v6666 = vadd.f32 0.0, %v6665
    %v6667 = vpop.f32.mrb[0].mxu0
    %6668 = vmatprep.mubr.f32.mxu0 0.0
    %6669 = vmatmul.mubr.f32.gmra.mrb[0].mxu0 %v6336
    %v6670 = vpop.f32.mrb[0].mxu0
    %v6671 = vadd.f32 0.0, %v6670
    %v6672 = vpop.f32.mrb[0].mxu0
    %6673 = vmatprep.mubr.f32.mxu0 0.0
    %6674 = vmatmul.mubr.f32.gmra.mrb[0].mxu0 %v6339
    %v6675 = vpop.f32.mrb[0].mxu0
    %v6676 = vadd.f32 0.0, %v6675
    %v6677 = vpop.f32.mrb[0].mxu0
    %6678 = vmatprep.mubr.f32.mxu0 0.0
    %6679 = vmatmul.mubr.f32.gmra.mrb[0].mxu0 %v6342
    %v6680 = vpop.f32.mrb[0].mxu0
    %v6681 = vadd.f32 0.0, %v6680
    %v6682 = vpop.f32.mrb[0].mxu0
    %6683 = vmatprep.mubr.f32.mxu0 0.0
    %6684 = vmatmul.mubr.f32.gmra.mrb[0].mxu0 %v6345
    %v6685 = vpop.f32.mrb[0].mxu0
    %v6686 = vadd.f32 0.0, %v6685
    %v6687 = vpop.f32.mrb[0].mxu0
    %6688 = vmatprep.mubr.f32.mxu0 0.0
    %6689 = vmatmul.mubr.f32.gmra.mrb[0].mxu0 %v6348
    %v6690 = vpop.f32.mrb[0].mxu0
    %v6691 = vadd.f32 0.0, %v6690
    %v6692 = vpop.f32.mrb[0].mxu0
    %6693 = vmatprep.mubr.f32.mxu0 0.0
    %6694 = vmatmul.mubr.f32.gmra.mrb[0].mxu0 %v6351
    %v6695 = vpop.f32.mrb[0].mxu0
    %v6696 = vadd.f32 0.0, %v6695
    %v6697 = vpop.f32.mrb[0].mxu0
    %6698 = vmatprep.mubr.f32.mxu0 0.0
    %6699 = vmatmul.mubr.f32.gmra.mrb[0].mxu0 %v6354
    %v6700 = vpop.f32.mrb[0].mxu0
    %v6701 = vadd.f32 0.0, %v6700
    %v6702 = vpop.f32.mrb[0].mxu0
    %6703 = vmatprep.mubr.f32.mxu0 0.0
    %6704 = vmatmul.mubr.f32.gmra.mrb[0].mxu0 %v6357
    %v6705 = vpop.f32.mrb[0].mxu0
    %v6706 = vadd.f32 0.0, %v6705
    %v6707 = vpop.f32.mrb[0].mxu0
    %6708 = vmatprep.mubr.f32.mxu0 0.0
    %6709 = vmatmul.mubr.f32.gmra.mrb[0].mxu0 %v6360
    %v6710 = vpop.f32.mrb[0].mxu0
    %v6711 = vadd.f32 0.0, %v6710
    %v6712 = vpop.f32.mrb[0].mxu0
    %6713 = vmatprep.mubr.f32.mxu0 0.0
    %6714 = vmatmul.mubr.f32.gmra.mrb[0].mxu0 %v6363
    %v6715 = vpop.f32.mrb[0].mxu0
    %v6716 = vadd.f32 0.0, %v6715
    %v6717 = vpop.f32.mrb[0].mxu0
    %6718 = vmatprep.mubr.f32.mxu0 0.0
    %6719 = vmatmul.mubr.f32.gmra.mrb[0].mxu0 %v6366
    %v6720 = vpop.f32.mrb[0].mxu0
    %v6721 = vadd.f32 0.0, %v6720
    %v6722 = vpop.f32.mrb[0].mxu0
    %6723 = vmatprep.mubr.f32.mxu0 0.0
    %6724 = vmatmul.mubr.f32.gmra.mrb[0].mxu0 %v6369
    %v6725 = vpop.f32.mrb[0].mxu0
    %v6726 = vadd.f32 0.0, %v6725
    %v6727 = vpop.f32.mrb[0].mxu0
    %6728 = vmatprep.mubr.f32.mxu0 0.0
    %6729 = vmatmul.mubr.f32.gmra.mrb[0].mxu0 %v6372
    %v6730 = vpop.f32.mrb[0].mxu0
    %v6731 = vadd.f32 0.0, %v6730
    %v6732 = vpop.f32.mrb[0].mxu0
    %6733 = vmatprep.mubr.f32.mxu0 0.0
    %6734 = vmatmul.mubr.f32.gmra.mrb[0].mxu0 %v6375
    %v6735 = vpop.f32.mrb[0].mxu0
    %v6736 = vadd.f32 0.0, %v6735
    %v6737 = vpop.f32.mrb[0].mxu0
    %6738 = vmatprep.mubr.f32.mxu0 0.0
    %6739 = vmatmul.mubr.f32.gmra.mrb[0].mxu0 %v6378
    %v6740 = vpop.f32.mrb[0].mxu0
    %v6741 = vadd.f32 0.0, %v6740
    %v6742 = vpop.f32.mrb[0].mxu0
    %6743 = vmatprep.mubr.f32.mxu0 0.0
    %6744 = vmatmul.mubr.f32.gmra.mrb[0].mxu0 %v6381
    %v6745 = vpop.f32.mrb[0].mxu0
    %v6746 = vadd.f32 0.0, %v6745
    %v6747 = vpop.f32.mrb[0].mxu0
    %6748 = vmatprep.mubr.f32.mxu0 0.0
    %6749 = vmatmul.mubr.f32.gmra.mrb[0].mxu0 %v6384
    %v6750 = vpop.f32.mrb[0].mxu0
    %v6751 = vadd.f32 0.0, %v6750
    %v6752 = vpop.f32.mrb[0].mxu0
    %6753 = vmatprep.mubr.f32.mxu0 0.0
    %6754 = vmatmul.mubr.f32.gmra.mrb[0].mxu0 %v6387
    %v6755 = vpop.f32.mrb[0].mxu0
    %v6756 = vadd.f32 0.0, %v6755
    %v6757 = vpop.f32.mrb[0].mxu0
    %6758 = vmatprep.mubr.f32.mxu0 0.0
    %6759 = vmatmul.mubr.f32.gmra.mrb[0].mxu0 %v6390
    %v6760 = vpop.f32.mrb[0].mxu0
    %v6761 = vadd.f32 0.0, %v6760
    %v6762 = vpop.f32.mrb[0].mxu0
    %6763 = vmatprep.mubr.f32.mxu0 0.0
    %6764 = vmatmul.mubr.f32.gmra.mrb[0].mxu0 %v6393
    %v6765 = vpop.f32.mrb[0].mxu0
    %v6766 = vadd.f32 0.0, %v6765
    %v6767 = vpop.f32.mrb[0].mxu0
    %6768 = vmatprep.mubr.f32.mxu0 0.0
    %6769 = vmatmul.mubr.f32.gmra.mrb[0].mxu0 %v6396
    %v6770 = vpop.f32.mrb[0].mxu0
    %v6771 = vadd.f32 0.0, %v6770
    %v6772 = vpop.f32.mrb[0].mxu0
    %6773 = vmatprep.mubr.f32.mxu0 0.0
    %6774 = vmatmul.mubr.f32.gmra.mrb[0].mxu0 %v6399
    %v6775 = vpop.f32.mrb[0].mxu0
    %v6776 = vadd.f32 0.0, %v6775
    %v6777 = vpop.f32.mrb[0].mxu0
    %6778 = vmatprep.mubr.f32.mxu0 0.0
    %6779 = vmatmul.mubr.f32.gmra.mrb[0].mxu0 %v6402
    %v6780 = vpop.f32.mrb[0].mxu0
    %v6781 = vadd.f32 0.0, %v6780
    %v6782 = vpop.f32.mrb[0].mxu0
    %6783 = vmatprep.mubr.f32.mxu0 0.0
    %6784 = vmatmul.mubr.f32.gmra.mrb[0].mxu0 %v6405
    %v6785 = vpop.f32.mrb[0].mxu0
    %v6786 = vadd.f32 0.0, %v6785
    %v6787 = vpop.f32.mrb[0].mxu0
    %6788 = vmatprep.mubr.f32.mxu0 0.0
    %6789 = vmatmul.mubr.f32.gmra.mrb[0].mxu0 %v6408
    %v6790 = vpop.f32.mrb[0].mxu0
    %v6791 = vadd.f32 0.0, %v6790
    %v6792 = vpop.f32.mrb[0].mxu0
    %6793 = vmatprep.mubr.f32.mxu0 0.0
    %6794 = vmatmul.mubr.f32.gmra.mrb[0].mxu0 %v6411
    %v6795 = vpop.f32.mrb[0].mxu0
    %v6796 = vadd.f32 0.0, %v6795
    %v6797 = vpop.f32.mrb[0].mxu0
    %6798 = vmatprep.mubr.f32.mxu0 0.0
    %6799 = vmatmul.mubr.f32.gmra.mrb[0].mxu0 %v6414
    %v6800 = vpop.f32.mrb[0].mxu0
    %v6801 = vadd.f32 0.0, %v6800
    %v6802 = vpop.f32.mrb[0].mxu0
    %6803 = vdwg.mxu0
    %v6804 = vadd.f32 %v6030, %v6486
    %v6805 = vadd.f32 %v6031, %v6491
    %v6806 = vadd.f32 %v6032, %v6496
    %v6807 = vadd.f32 %v6033, %v6501
    %v6808 = vadd.f32 %v6034, %v6506
    %v6809 = vadd.f32 %v6035, %v6511
    %v6810 = vadd.f32 %v6036, %v6516
    %v6811 = vadd.f32 %v6037, %v6521
    %v6812 = vadd.f32 %v6038, %v6526
    %v6813 = vadd.f32 %v6039, %v6531
    %v6814 = vadd.f32 %v6040, %v6536
    %v6815 = vadd.f32 %v6041, %v6541
    %v6816 = vadd.f32 %v6042, %v6546
    %v6817 = vadd.f32 %v6043, %v6551
    %v6818 = vadd.f32 %v6044, %v6556
    %v6819 = vadd.f32 %v6045, %v6561
    %v6820 = vadd.f32 %v6046, %v6566
    %v6821 = vadd.f32 %v6047, %v6571
    %v6822 = vadd.f32 %v6048, %v6576
    %v6823 = vadd.f32 %v6049, %v6581
    %v6824 = vadd.f32 %v6050, %v6586
    %v6825 = vadd.f32 %v6051, %v6591
    %v6826 = vadd.f32 %v6052, %v6596
    %v6827 = vadd.f32 %v6053, %v6601
    %v6828 = vadd.f32 %v6054, %v6606
    %v6829 = vadd.f32 %v6055, %v6611
    %v6830 = vadd.f32 %v6056, %v6616
    %v6831 = vadd.f32 %v6057, %v6621
    %v6832 = vadd.f32 %v6058, %v6626
    %v6833 = vadd.f32 %v6059, %v6631
    %v6834 = vadd.f32 %v6060, %v6636
    %v6835 = vadd.f32 %v6061, %v6641
    %v6836 = vadd.f32 %v6062, %v6646
    %v6837 = vadd.f32 %v6063, %v6651
    %v6838 = vadd.f32 %v6064, %v6656
    %v6839 = vadd.f32 %v6065, %v6661
    %v6840 = vadd.f32 %v6066, %v6666
    %v6841 = vadd.f32 %v6067, %v6671
    %v6842 = vadd.f32 %v6068, %v6676
    %v6843 = vadd.f32 %v6069, %v6681
    %v6844 = vadd.f32 %v6070, %v6686
    %v6845 = vadd.f32 %v6071, %v6691
    %v6846 = vadd.f32 %v6072, %v6696
    %v6847 = vadd.f32 %v6073, %v6701
    %v6848 = vadd.f32 %v6074, %v6706
    %v6849 = vadd.f32 %v6075, %v6711
    %v6850 = vadd.f32 %v6076, %v6716
    %v6851 = vadd.f32 %v6077, %v6721
    %v6852 = vadd.f32 %v6078, %v6726
    %v6853 = vadd.f32 %v6079, %v6731
    %v6854 = vadd.f32 %v6080, %v6736
    %v6855 = vadd.f32 %v6081, %v6741
    %v6856 = vadd.f32 %v6082, %v6746
    %v6857 = vadd.f32 %v6083, %v6751
    %v6858 = vadd.f32 %v6084, %v6756
    %v6859 = vadd.f32 %v6085, %v6761
    %v6860 = vadd.f32 %v6086, %v6766
    %v6861 = vadd.f32 %v6087, %v6771
    %v6862 = vadd.f32 %v6088, %v6776
    %v6863 = vadd.f32 %v6089, %v6781
    %v6864 = vadd.f32 %v6090, %v6786
    %v6865 = vadd.f32 %v6091, %v6791
    %v6866 = vadd.f32 %v6092, %v6796
    %v6867 = vadd.f32 %v6093, %v6801
    %vm6868 = vcmask 64512
    %v6869 = vsel %vm6868, %v6804, 0.0
    %v6870 = vsel %vm6868, %v6805, 0.0
    %v6871 = vadd.f32 %v6869, %v6870
    %v6872 = vsel %vm6868, %v6806, 0.0
    %v6873 = vadd.f32 %v6871, %v6872
    %v6874 = vsel %vm6868, %v6807, 0.0
    %v6875 = vadd.f32 %v6873, %v6874
    %v6876 = vsel %vm6868, %v6808, 0.0
    %v6877 = vadd.f32 %v6875, %v6876
    %v6878 = vsel %vm6868, %v6809, 0.0
    %v6879 = vadd.f32 %v6877, %v6878
    %v6880 = vsel %vm6868, %v6810, 0.0
    %v6881 = vadd.f32 %v6879, %v6880
    %v6882 = vsel %vm6868, %v6811, 0.0
    %v6883 = vadd.f32 %v6881, %v6882
    %v6884 = vsel %vm6868, %v6812, 0.0
    %v6885 = vadd.f32 %v6883, %v6884
    %v6886 = vsel %vm6868, %v6813, 0.0
    %v6887 = vadd.f32 %v6885, %v6886
    %v6888 = vsel %vm6868, %v6814, 0.0
    %v6889 = vadd.f32 %v6887, %v6888
    %v6890 = vsel %vm6868, %v6815, 0.0
    %v6891 = vadd.f32 %v6889, %v6890
    %v6892 = vsel %vm6868, %v6816, 0.0
    %v6893 = vadd.f32 %v6891, %v6892
    %v6894 = vsel %vm6868, %v6817, 0.0
    %v6895 = vadd.f32 %v6893, %v6894
    %v6896 = vsel %vm6868, %v6818, 0.0
    %v6897 = vadd.f32 %v6895, %v6896
    %v6898 = vsel %vm6868, %v6819, 0.0
    %v6899 = vadd.f32 %v6897, %v6898
    %v6900 = vsel %vm6868, %v6820, 0.0
    %v6901 = vadd.f32 %v6899, %v6900
    %v6902 = vsel %vm6868, %v6821, 0.0
    %v6903 = vadd.f32 %v6901, %v6902
    %v6904 = vsel %vm6868, %v6822, 0.0
    %v6905 = vadd.f32 %v6903, %v6904
    %v6906 = vsel %vm6868, %v6823, 0.0
    %v6907 = vadd.f32 %v6905, %v6906
    %v6908 = vsel %vm6868, %v6824, 0.0
    %v6909 = vadd.f32 %v6907, %v6908
    %v6910 = vsel %vm6868, %v6825, 0.0
    %v6911 = vadd.f32 %v6909, %v6910
    %v6912 = vsel %vm6868, %v6826, 0.0
    %v6913 = vadd.f32 %v6911, %v6912
    %v6914 = vsel %vm6868, %v6827, 0.0
    %v6915 = vadd.f32 %v6913, %v6914
    %v6916 = vsel %vm6868, %v6828, 0.0
    %v6917 = vadd.f32 %v6915, %v6916
    %v6918 = vsel %vm6868, %v6829, 0.0
    %v6919 = vadd.f32 %v6917, %v6918
    %v6920 = vsel %vm6868, %v6830, 0.0
    %v6921 = vadd.f32 %v6919, %v6920
    %v6922 = vsel %vm6868, %v6831, 0.0
    %v6923 = vadd.f32 %v6921, %v6922
    %v6924 = vsel %vm6868, %v6832, 0.0
    %v6925 = vadd.f32 %v6923, %v6924
    %v6926 = vsel %vm6868, %v6833, 0.0
    %v6927 = vadd.f32 %v6925, %v6926
    %v6928 = vsel %vm6868, %v6834, 0.0
    %v6929 = vadd.f32 %v6927, %v6928
    %v6930 = vsel %vm6868, %v6835, 0.0
    %v6931 = vadd.f32 %v6929, %v6930
    %v6932 = vsel %vm6868, %v6836, 0.0
    %v6933 = vadd.f32 %v6931, %v6932
    %v6934 = vsel %vm6868, %v6837, 0.0
    %v6935 = vadd.f32 %v6933, %v6934
    %v6936 = vsel %vm6868, %v6838, 0.0
    %v6937 = vadd.f32 %v6935, %v6936
    %v6938 = vsel %vm6868, %v6839, 0.0
    %v6939 = vadd.f32 %v6937, %v6938
    %v6940 = vsel %vm6868, %v6840, 0.0
    %v6941 = vadd.f32 %v6939, %v6940
    %v6942 = vsel %vm6868, %v6841, 0.0
    %v6943 = vadd.f32 %v6941, %v6942
    %v6944 = vsel %vm6868, %v6842, 0.0
    %v6945 = vadd.f32 %v6943, %v6944
    %v6946 = vsel %vm6868, %v6843, 0.0
    %v6947 = vadd.f32 %v6945, %v6946
    %v6948 = vsel %vm6868, %v6844, 0.0
    %v6949 = vadd.f32 %v6947, %v6948
    %v6950 = vsel %vm6868, %v6845, 0.0
    %v6951 = vadd.f32 %v6949, %v6950
    %v6952 = vsel %vm6868, %v6846, 0.0
    %v6953 = vadd.f32 %v6951, %v6952
    %v6954 = vsel %vm6868, %v6847, 0.0
    %v6955 = vadd.f32 %v6953, %v6954
    %v6956 = vsel %vm6868, %v6848, 0.0
    %v6957 = vadd.f32 %v6955, %v6956
    %v6958 = vsel %vm6868, %v6849, 0.0
    %v6959 = vadd.f32 %v6957, %v6958
    %v6960 = vsel %vm6868, %v6850, 0.0
    %v6961 = vadd.f32 %v6959, %v6960
    %v6962 = vsel %vm6868, %v6851, 0.0
    %v6963 = vadd.f32 %v6961, %v6962
    %v6964 = vsel %vm6868, %v6852, 0.0
    %v6965 = vadd.f32 %v6963, %v6964
    %v6966 = vsel %vm6868, %v6853, 0.0
    %v6967 = vadd.f32 %v6965, %v6966
    %v6968 = vsel %vm6868, %v6854, 0.0
    %v6969 = vadd.f32 %v6967, %v6968
    %v6970 = vsel %vm6868, %v6855, 0.0
    %v6971 = vadd.f32 %v6969, %v6970
    %v6972 = vsel %vm6868, %v6856, 0.0
    %v6973 = vadd.f32 %v6971, %v6972
    %v6974 = vsel %vm6868, %v6857, 0.0
    %v6975 = vadd.f32 %v6973, %v6974
    %v6976 = vsel %vm6868, %v6858, 0.0
    %v6977 = vadd.f32 %v6975, %v6976
    %v6978 = vsel %vm6868, %v6859, 0.0
    %v6979 = vadd.f32 %v6977, %v6978
    %v6980 = vsel %vm6868, %v6860, 0.0
    %v6981 = vadd.f32 %v6979, %v6980
    %v6982 = vsel %vm6868, %v6861, 0.0
    %v6983 = vadd.f32 %v6981, %v6982
    %v6984 = vsel %vm6868, %v6862, 0.0
    %v6985 = vadd.f32 %v6983, %v6984
    %v6986 = vsel %vm6868, %v6863, 0.0
    %v6987 = vadd.f32 %v6985, %v6986
    %v6988 = vsel %vm6868, %v6864, 0.0
    %v6989 = vadd.f32 %v6987, %v6988
    %v6990 = vsel %vm6868, %v6865, 0.0
    %v6991 = vadd.f32 %v6989, %v6990
    %v6992 = vsel %vm6868, %v6866, 0.0
    %v6993 = vadd.f32 %v6991, %v6992
    %v6994 = vsel %vm6868, %v6867, 0.0
    %v6995 = vadd.f32 %v6993, %v6994
    %v6996 = vrot.slane %v6995, 4
    %v6997 = vadd.f32 %v6995, %v6996
    %v6998 = vrot.slane %v6997, 2
    %v6999 = vadd.f32 %v6997, %v6998
    %v7000 = vrot.slane %v6999, 1
    %v7001 = vadd.f32 %v6999, %v7000
    %v7002 = vrcp.pop 512.0
    %v7003 = vmul.f32 %v7001, %v7002
    %v7004 = vsub.f32 %v6804, %v7003
    %v7005 = vsub.f32 %v6805, %v7003
    %v7006 = vsub.f32 %v6806, %v7003
    %v7007 = vsub.f32 %v6807, %v7003
    %v7008 = vsub.f32 %v6808, %v7003
    %v7009 = vsub.f32 %v6809, %v7003
    %v7010 = vsub.f32 %v6810, %v7003
    %v7011 = vsub.f32 %v6811, %v7003
    %v7012 = vsub.f32 %v6812, %v7003
    %v7013 = vsub.f32 %v6813, %v7003
    %v7014 = vsub.f32 %v6814, %v7003
    %v7015 = vsub.f32 %v6815, %v7003
    %v7016 = vsub.f32 %v6816, %v7003
    %v7017 = vsub.f32 %v6817, %v7003
    %v7018 = vsub.f32 %v6818, %v7003
    %v7019 = vsub.f32 %v6819, %v7003
    %v7020 = vsub.f32 %v6820, %v7003
    %v7021 = vsub.f32 %v6821, %v7003
    %v7022 = vsub.f32 %v6822, %v7003
    %v7023 = vsub.f32 %v6823, %v7003
    %v7024 = vsub.f32 %v6824, %v7003
    %v7025 = vsub.f32 %v6825, %v7003
    %v7026 = vsub.f32 %v6826, %v7003
    %v7027 = vsub.f32 %v6827, %v7003
    %v7028 = vsub.f32 %v6828, %v7003
    %v7029 = vsub.f32 %v6829, %v7003
    %v7030 = vsub.f32 %v6830, %v7003
    %v7031 = vsub.f32 %v6831, %v7003
    %v7032 = vsub.f32 %v6832, %v7003
    %v7033 = vsub.f32 %v6833, %v7003
    %v7034 = vsub.f32 %v6834, %v7003
    %v7035 = vsub.f32 %v6835, %v7003
    %v7036 = vsub.f32 %v6836, %v7003
    %v7037 = vsub.f32 %v6837, %v7003
    %v7038 = vsub.f32 %v6838, %v7003
    %v7039 = vsub.f32 %v6839, %v7003
    %v7040 = vsub.f32 %v6840, %v7003
    %v7041 = vsub.f32 %v6841, %v7003
    %v7042 = vsub.f32 %v6842, %v7003
    %v7043 = vsub.f32 %v6843, %v7003
    %v7044 = vsub.f32 %v6844, %v7003
    %v7045 = vsub.f32 %v6845, %v7003
    %v7046 = vsub.f32 %v6846, %v7003
    %v7047 = vsub.f32 %v6847, %v7003
    %v7048 = vsub.f32 %v6848, %v7003
    %v7049 = vsub.f32 %v6849, %v7003
    %v7050 = vsub.f32 %v6850, %v7003
    %v7051 = vsub.f32 %v6851, %v7003
    %v7052 = vsub.f32 %v6852, %v7003
    %v7053 = vsub.f32 %v6853, %v7003
    %v7054 = vsub.f32 %v6854, %v7003
    %v7055 = vsub.f32 %v6855, %v7003
    %v7056 = vsub.f32 %v6856, %v7003
    %v7057 = vsub.f32 %v6857, %v7003
    %v7058 = vsub.f32 %v6858, %v7003
    %v7059 = vsub.f32 %v6859, %v7003
    %v7060 = vsub.f32 %v6860, %v7003
    %v7061 = vsub.f32 %v6861, %v7003
    %v7062 = vsub.f32 %v6862, %v7003
    %v7063 = vsub.f32 %v6863, %v7003
    %v7064 = vsub.f32 %v6864, %v7003
    %v7065 = vsub.f32 %v6865, %v7003
    %v7066 = vsub.f32 %v6866, %v7003
    %v7067 = vsub.f32 %v6867, %v7003
    %v7068 = vmul.f32 %v7004, %v7004
    %v7069 = vmul.f32 %v7005, %v7005
    %v7070 = vmul.f32 %v7006, %v7006
    %v7071 = vmul.f32 %v7007, %v7007
    %v7072 = vmul.f32 %v7008, %v7008
    %v7073 = vmul.f32 %v7009, %v7009
    %v7074 = vmul.f32 %v7010, %v7010
    %v7075 = vmul.f32 %v7011, %v7011
    %v7076 = vmul.f32 %v7012, %v7012
    %v7077 = vmul.f32 %v7013, %v7013
    %v7078 = vmul.f32 %v7014, %v7014
    %v7079 = vmul.f32 %v7015, %v7015
    %v7080 = vmul.f32 %v7016, %v7016
    %v7081 = vmul.f32 %v7017, %v7017
    %v7082 = vmul.f32 %v7018, %v7018
    %v7083 = vmul.f32 %v7019, %v7019
    %v7084 = vmul.f32 %v7020, %v7020
    %v7085 = vmul.f32 %v7021, %v7021
    %v7086 = vmul.f32 %v7022, %v7022
    %v7087 = vmul.f32 %v7023, %v7023
    %v7088 = vmul.f32 %v7024, %v7024
    %v7089 = vmul.f32 %v7025, %v7025
    %v7090 = vmul.f32 %v7026, %v7026
    %v7091 = vmul.f32 %v7027, %v7027
    %v7092 = vmul.f32 %v7028, %v7028
    %v7093 = vmul.f32 %v7029, %v7029
    %v7094 = vmul.f32 %v7030, %v7030
    %v7095 = vmul.f32 %v7031, %v7031
    %v7096 = vmul.f32 %v7032, %v7032
    %v7097 = vmul.f32 %v7033, %v7033
    %v7098 = vmul.f32 %v7034, %v7034
    %v7099 = vmul.f32 %v7035, %v7035
    %v7100 = vmul.f32 %v7036, %v7036
    %v7101 = vmul.f32 %v7037, %v7037
    %v7102 = vmul.f32 %v7038, %v7038
    %v7103 = vmul.f32 %v7039, %v7039
    %v7104 = vmul.f32 %v7040, %v7040
    %v7105 = vmul.f32 %v7041, %v7041
    %v7106 = vmul.f32 %v7042, %v7042
    %v7107 = vmul.f32 %v7043, %v7043
    %v7108 = vmul.f32 %v7044, %v7044
    %v7109 = vmul.f32 %v7045, %v7045
    %v7110 = vmul.f32 %v7046, %v7046
    %v7111 = vmul.f32 %v7047, %v7047
    %v7112 = vmul.f32 %v7048, %v7048
    %v7113 = vmul.f32 %v7049, %v7049
    %v7114 = vmul.f32 %v7050, %v7050
    %v7115 = vmul.f32 %v7051, %v7051
    %v7116 = vmul.f32 %v7052, %v7052
    %v7117 = vmul.f32 %v7053, %v7053
    %v7118 = vmul.f32 %v7054, %v7054
    %v7119 = vmul.f32 %v7055, %v7055
    %v7120 = vmul.f32 %v7056, %v7056
    %v7121 = vmul.f32 %v7057, %v7057
    %v7122 = vmul.f32 %v7058, %v7058
    %v7123 = vmul.f32 %v7059, %v7059
    %v7124 = vmul.f32 %v7060, %v7060
    %v7125 = vmul.f32 %v7061, %v7061
    %v7126 = vmul.f32 %v7062, %v7062
    %v7127 = vmul.f32 %v7063, %v7063
    %v7128 = vmul.f32 %v7064, %v7064
    %v7129 = vmul.f32 %v7065, %v7065
    %v7130 = vmul.f32 %v7066, %v7066
    %v7131 = vmul.f32 %v7067, %v7067
    %v7132 = vsel %vm6868, %v7068, 0.0
    %v7133 = vsel %vm6868, %v7069, 0.0
    %v7134 = vadd.f32 %v7132, %v7133
    %v7135 = vsel %vm6868, %v7070, 0.0
    %v7136 = vadd.f32 %v7134, %v7135
    %v7137 = vsel %vm6868, %v7071, 0.0
    %v7138 = vadd.f32 %v7136, %v7137
    %v7139 = vsel %vm6868, %v7072, 0.0
    %v7140 = vadd.f32 %v7138, %v7139
    %v7141 = vsel %vm6868, %v7073, 0.0
    %v7142 = vadd.f32 %v7140, %v7141
    %v7143 = vsel %vm6868, %v7074, 0.0
    %v7144 = vadd.f32 %v7142, %v7143
    %v7145 = vsel %vm6868, %v7075, 0.0
    %v7146 = vadd.f32 %v7144, %v7145
    %v7147 = vsel %vm6868, %v7076, 0.0
    %v7148 = vadd.f32 %v7146, %v7147
    %v7149 = vsel %vm6868, %v7077, 0.0
    %v7150 = vadd.f32 %v7148, %v7149
    %v7151 = vsel %vm6868, %v7078, 0.0
    %v7152 = vadd.f32 %v7150, %v7151
    %v7153 = vsel %vm6868, %v7079, 0.0
    %v7154 = vadd.f32 %v7152, %v7153
    %v7155 = vsel %vm6868, %v7080, 0.0
    %v7156 = vadd.f32 %v7154, %v7155
    %v7157 = vsel %vm6868, %v7081, 0.0
    %v7158 = vadd.f32 %v7156, %v7157
    %v7159 = vsel %vm6868, %v7082, 0.0
    %v7160 = vadd.f32 %v7158, %v7159
    %v7161 = vsel %vm6868, %v7083, 0.0
    %v7162 = vadd.f32 %v7160, %v7161
    %v7163 = vsel %vm6868, %v7084, 0.0
    %v7164 = vadd.f32 %v7162, %v7163
    %v7165 = vsel %vm6868, %v7085, 0.0
    %v7166 = vadd.f32 %v7164, %v7165
    %v7167 = vsel %vm6868, %v7086, 0.0
    %v7168 = vadd.f32 %v7166, %v7167
    %v7169 = vsel %vm6868, %v7087, 0.0
    %v7170 = vadd.f32 %v7168, %v7169
    %v7171 = vsel %vm6868, %v7088, 0.0
    %v7172 = vadd.f32 %v7170, %v7171
    %v7173 = vsel %vm6868, %v7089, 0.0
    %v7174 = vadd.f32 %v7172, %v7173
    %v7175 = vsel %vm6868, %v7090, 0.0
    %v7176 = vadd.f32 %v7174, %v7175
    %v7177 = vsel %vm6868, %v7091, 0.0
    %v7178 = vadd.f32 %v7176, %v7177
    %v7179 = vsel %vm6868, %v7092, 0.0
    %v7180 = vadd.f32 %v7178, %v7179
    %v7181 = vsel %vm6868, %v7093, 0.0
    %v7182 = vadd.f32 %v7180, %v7181
    %v7183 = vsel %vm6868, %v7094, 0.0
    %v7184 = vadd.f32 %v7182, %v7183
    %v7185 = vsel %vm6868, %v7095, 0.0
    %v7186 = vadd.f32 %v7184, %v7185
    %v7187 = vsel %vm6868, %v7096, 0.0
    %v7188 = vadd.f32 %v7186, %v7187
    %v7189 = vsel %vm6868, %v7097, 0.0
    %v7190 = vadd.f32 %v7188, %v7189
    %v7191 = vsel %vm6868, %v7098, 0.0
    %v7192 = vadd.f32 %v7190, %v7191
    %v7193 = vsel %vm6868, %v7099, 0.0
    %v7194 = vadd.f32 %v7192, %v7193
    %v7195 = vsel %vm6868, %v7100, 0.0
    %v7196 = vadd.f32 %v7194, %v7195
    %v7197 = vsel %vm6868, %v7101, 0.0
    %v7198 = vadd.f32 %v7196, %v7197
    %v7199 = vsel %vm6868, %v7102, 0.0
    %v7200 = vadd.f32 %v7198, %v7199
    %v7201 = vsel %vm6868, %v7103, 0.0
    %v7202 = vadd.f32 %v7200, %v7201
    %v7203 = vsel %vm6868, %v7104, 0.0
    %v7204 = vadd.f32 %v7202, %v7203
    %v7205 = vsel %vm6868, %v7105, 0.0
    %v7206 = vadd.f32 %v7204, %v7205
    %v7207 = vsel %vm6868, %v7106, 0.0
    %v7208 = vadd.f32 %v7206, %v7207
    %v7209 = vsel %vm6868, %v7107, 0.0
    %v7210 = vadd.f32 %v7208, %v7209
    %v7211 = vsel %vm6868, %v7108, 0.0
    %v7212 = vadd.f32 %v7210, %v7211
    %v7213 = vsel %vm6868, %v7109, 0.0
    %v7214 = vadd.f32 %v7212, %v7213
    %v7215 = vsel %vm6868, %v7110, 0.0
    %v7216 = vadd.f32 %v7214, %v7215
    %v7217 = vsel %vm6868, %v7111, 0.0
    %v7218 = vadd.f32 %v7216, %v7217
    %v7219 = vsel %vm6868, %v7112, 0.0
    %v7220 = vadd.f32 %v7218, %v7219
    %v7221 = vsel %vm6868, %v7113, 0.0
    %v7222 = vadd.f32 %v7220, %v7221
    %v7223 = vsel %vm6868, %v7114, 0.0
    %v7224 = vadd.f32 %v7222, %v7223
    %v7225 = vsel %vm6868, %v7115, 0.0
    %v7226 = vadd.f32 %v7224, %v7225
    %v7227 = vsel %vm6868, %v7116, 0.0
    %v7228 = vadd.f32 %v7226, %v7227
    %v7229 = vsel %vm6868, %v7117, 0.0
    %v7230 = vadd.f32 %v7228, %v7229
    %v7231 = vsel %vm6868, %v7118, 0.0
    %v7232 = vadd.f32 %v7230, %v7231
    %v7233 = vsel %vm6868, %v7119, 0.0
    %v7234 = vadd.f32 %v7232, %v7233
    %v7235 = vsel %vm6868, %v7120, 0.0
    %v7236 = vadd.f32 %v7234, %v7235
    %v7237 = vsel %vm6868, %v7121, 0.0
    %v7238 = vadd.f32 %v7236, %v7237
    %v7239 = vsel %vm6868, %v7122, 0.0
    %v7240 = vadd.f32 %v7238, %v7239
    %v7241 = vsel %vm6868, %v7123, 0.0
    %v7242 = vadd.f32 %v7240, %v7241
    %v7243 = vsel %vm6868, %v7124, 0.0
    %v7244 = vadd.f32 %v7242, %v7243
    %v7245 = vsel %vm6868, %v7125, 0.0
    %v7246 = vadd.f32 %v7244, %v7245
    %v7247 = vsel %vm6868, %v7126, 0.0
    %v7248 = vadd.f32 %v7246, %v7247
    %v7249 = vsel %vm6868, %v7127, 0.0
    %v7250 = vadd.f32 %v7248, %v7249
    %v7251 = vsel %vm6868, %v7128, 0.0
    %v7252 = vadd.f32 %v7250, %v7251
    %v7253 = vsel %vm6868, %v7129, 0.0
    %v7254 = vadd.f32 %v7252, %v7253
    %v7255 = vsel %vm6868, %v7130, 0.0
    %v7256 = vadd.f32 %v7254, %v7255
    %v7257 = vsel %vm6868, %v7131, 0.0
    %v7258 = vadd.f32 %v7256, %v7257
    %v7259 = vrot.slane %v7258, 4
    %v7260 = vadd.f32 %v7258, %v7259
    %v7261 = vrot.slane %v7260, 2
    %v7262 = vadd.f32 %v7260, %v7261
    %v7263 = vrot.slane %v7262, 1
    %v7264 = vadd.f32 %v7262, %v7263
    %v7265 = vmul.f32 %v7264, %v7002
    %v7266 = vadd.f32 %v7265, 0.001
    %v7267 = vrsqrt.pop %v7266
    %v7268 = vmul.f32 %v7004, %v7267
    %v7269 = vmul.f32 %v7005, %v7267
    %v7270 = vmul.f32 %v7006, %v7267
    %v7271 = vmul.f32 %v7007, %v7267
    %v7272 = vmul.f32 %v7008, %v7267
    %v7273 = vmul.f32 %v7009, %v7267
    %v7274 = vmul.f32 %v7010, %v7267
    %v7275 = vmul.f32 %v7011, %v7267
    %v7276 = vmul.f32 %v7012, %v7267
    %v7277 = vmul.f32 %v7013, %v7267
    %v7278 = vmul.f32 %v7014, %v7267
    %v7279 = vmul.f32 %v7015, %v7267
    %v7280 = vmul.f32 %v7016, %v7267
    %v7281 = vmul.f32 %v7017, %v7267
    %v7282 = vmul.f32 %v7018, %v7267
    %v7283 = vmul.f32 %v7019, %v7267
    %v7284 = vmul.f32 %v7020, %v7267
    %v7285 = vmul.f32 %v7021, %v7267
    %v7286 = vmul.f32 %v7022, %v7267
    %v7287 = vmul.f32 %v7023, %v7267
    %v7288 = vmul.f32 %v7024, %v7267
    %v7289 = vmul.f32 %v7025, %v7267
    %v7290 = vmul.f32 %v7026, %v7267
    %v7291 = vmul.f32 %v7027, %v7267
    %v7292 = vmul.f32 %v7028, %v7267
    %v7293 = vmul.f32 %v7029, %v7267
    %v7294 = vmul.f32 %v7030, %v7267
    %v7295 = vmul.f32 %v7031, %v7267
    %v7296 = vmul.f32 %v7032, %v7267
    %v7297 = vmul.f32 %v7033, %v7267
    %v7298 = vmul.f32 %v7034, %v7267
    %v7299 = vmul.f32 %v7035, %v7267
    %v7300 = vmul.f32 %v7036, %v7267
    %v7301 = vmul.f32 %v7037, %v7267
    %v7302 = vmul.f32 %v7038, %v7267
    %v7303 = vmul.f32 %v7039, %v7267
    %v7304 = vmul.f32 %v7040, %v7267
    %v7305 = vmul.f32 %v7041, %v7267
    %v7306 = vmul.f32 %v7042, %v7267
    %v7307 = vmul.f32 %v7043, %v7267
    %v7308 = vmul.f32 %v7044, %v7267
    %v7309 = vmul.f32 %v7045, %v7267
    %v7310 = vmul.f32 %v7046, %v7267
    %v7311 = vmul.f32 %v7047, %v7267
    %v7312 = vmul.f32 %v7048, %v7267
    %v7313 = vmul.f32 %v7049, %v7267
    %v7314 = vmul.f32 %v7050, %v7267
    %v7315 = vmul.f32 %v7051, %v7267
    %v7316 = vmul.f32 %v7052, %v7267
    %v7317 = vmul.f32 %v7053, %v7267
    %v7318 = vmul.f32 %v7054, %v7267
    %v7319 = vmul.f32 %v7055, %v7267
    %v7320 = vmul.f32 %v7056, %v7267
    %v7321 = vmul.f32 %v7057, %v7267
    %v7322 = vmul.f32 %v7058, %v7267
    %v7323 = vmul.f32 %v7059, %v7267
    %v7324 = vmul.f32 %v7060, %v7267
    %v7325 = vmul.f32 %v7061, %v7267
    %v7326 = vmul.f32 %v7062, %v7267
    %v7327 = vmul.f32 %v7063, %v7267
    %v7328 = vmul.f32 %v7064, %v7267
    %v7329 = vmul.f32 %v7065, %v7267
    %v7330 = vmul.f32 %v7066, %v7267
    %v7331 = vmul.f32 %v7067, %v7267
    %v7332 = vld [vmem:[%s2] sm:$0x1]
    %v7334 = vlaneseq
    %v7335 = vshrl.u32 %v7334, 7
    %v7336 = vsub.s32 0, %v7335
    %v7337 = vrot.slane %v7332, %v7336
    %v7339 = vmul.f32 %v7268, %v7337
    %v7340 = vmul.f32 %v7269, %v7337
    %v7341 = vmul.f32 %v7270, %v7337
    %v7342 = vmul.f32 %v7271, %v7337
    %v7343 = vmul.f32 %v7272, %v7337
    %v7344 = vmul.f32 %v7273, %v7337
    %v7345 = vmul.f32 %v7274, %v7337
    %v7346 = vmul.f32 %v7275, %v7337
    %v7347 = vmul.f32 %v7276, %v7337
    %v7348 = vmul.f32 %v7277, %v7337
    %v7349 = vmul.f32 %v7278, %v7337
    %v7350 = vmul.f32 %v7279, %v7337
    %v7351 = vmul.f32 %v7280, %v7337
    %v7352 = vmul.f32 %v7281, %v7337
    %v7353 = vmul.f32 %v7282, %v7337
    %v7354 = vmul.f32 %v7283, %v7337
    %v7355 = vmul.f32 %v7284, %v7337
    %v7356 = vmul.f32 %v7285, %v7337
    %v7357 = vmul.f32 %v7286, %v7337
    %v7358 = vmul.f32 %v7287, %v7337
    %v7359 = vmul.f32 %v7288, %v7337
    %v7360 = vmul.f32 %v7289, %v7337
    %v7361 = vmul.f32 %v7290, %v7337
    %v7362 = vmul.f32 %v7291, %v7337
    %v7363 = vmul.f32 %v7292, %v7337
    %v7364 = vmul.f32 %v7293, %v7337
    %v7365 = vmul.f32 %v7294, %v7337
    %v7366 = vmul.f32 %v7295, %v7337
    %v7367 = vmul.f32 %v7296, %v7337
    %v7368 = vmul.f32 %v7297, %v7337
    %v7369 = vmul.f32 %v7298, %v7337
    %v7370 = vmul.f32 %v7299, %v7337
    %v7371 = vmul.f32 %v7300, %v7337
    %v7372 = vmul.f32 %v7301, %v7337
    %v7373 = vmul.f32 %v7302, %v7337
    %v7374 = vmul.f32 %v7303, %v7337
    %v7375 = vmul.f32 %v7304, %v7337
    %v7376 = vmul.f32 %v7305, %v7337
    %v7377 = vmul.f32 %v7306, %v7337
    %v7378 = vmul.f32 %v7307, %v7337
    %v7379 = vmul.f32 %v7308, %v7337
    %v7380 = vmul.f32 %v7309, %v7337
    %v7381 = vmul.f32 %v7310, %v7337
    %v7382 = vmul.f32 %v7311, %v7337
    %v7383 = vmul.f32 %v7312, %v7337
    %v7384 = vmul.f32 %v7313, %v7337
    %v7385 = vmul.f32 %v7314, %v7337
    %v7386 = vmul.f32 %v7315, %v7337
    %v7387 = vmul.f32 %v7316, %v7337
    %v7388 = vmul.f32 %v7317, %v7337
    %v7389 = vmul.f32 %v7318, %v7337
    %v7390 = vmul.f32 %v7319, %v7337
    %v7391 = vmul.f32 %v7320, %v7337
    %v7392 = vmul.f32 %v7321, %v7337
    %v7393 = vmul.f32 %v7322, %v7337
    %v7394 = vmul.f32 %v7323, %v7337
    %v7395 = vmul.f32 %v7324, %v7337
    %v7396 = vmul.f32 %v7325, %v7337
    %v7397 = vmul.f32 %v7326, %v7337
    %v7398 = vmul.f32 %v7327, %v7337
    %v7399 = vmul.f32 %v7328, %v7337
    %v7400 = vmul.f32 %v7329, %v7337
    %v7401 = vmul.f32 %v7330, %v7337
    %v7402 = vmul.f32 %v7331, %v7337
    %v7403 = vld [vmem:[%s3] sm:$0x1]
    %v7405 = vlaneseq
    %v7406 = vshrl.u32 %v7405, 7
    %v7407 = vsub.s32 0, %v7406
    %v7408 = vrot.slane %v7403, %v7407
    %v7410 = vadd.f32 %v7339, %v7408
    %v7411 = vadd.f32 %v7340, %v7408
    %v7412 = vadd.f32 %v7341, %v7408
    %v7413 = vadd.f32 %v7342, %v7408
    %v7414 = vadd.f32 %v7343, %v7408
    %v7415 = vadd.f32 %v7344, %v7408
    %v7416 = vadd.f32 %v7345, %v7408
    %v7417 = vadd.f32 %v7346, %v7408
    %v7418 = vadd.f32 %v7347, %v7408
    %v7419 = vadd.f32 %v7348, %v7408
    %v7420 = vadd.f32 %v7349, %v7408
    %v7421 = vadd.f32 %v7350, %v7408
    %v7422 = vadd.f32 %v7351, %v7408
    %v7423 = vadd.f32 %v7352, %v7408
    %v7424 = vadd.f32 %v7353, %v7408
    %v7425 = vadd.f32 %v7354, %v7408
    %v7426 = vadd.f32 %v7355, %v7408
    %v7427 = vadd.f32 %v7356, %v7408
    %v7428 = vadd.f32 %v7357, %v7408
    %v7429 = vadd.f32 %v7358, %v7408
    %v7430 = vadd.f32 %v7359, %v7408
    %v7431 = vadd.f32 %v7360, %v7408
    %v7432 = vadd.f32 %v7361, %v7408
    %v7433 = vadd.f32 %v7362, %v7408
    %v7434 = vadd.f32 %v7363, %v7408
    %v7435 = vadd.f32 %v7364, %v7408
    %v7436 = vadd.f32 %v7365, %v7408
    %v7437 = vadd.f32 %v7366, %v7408
    %v7438 = vadd.f32 %v7367, %v7408
    %v7439 = vadd.f32 %v7368, %v7408
    %v7440 = vadd.f32 %v7369, %v7408
    %v7441 = vadd.f32 %v7370, %v7408
    %v7442 = vadd.f32 %v7371, %v7408
    %v7443 = vadd.f32 %v7372, %v7408
    %v7444 = vadd.f32 %v7373, %v7408
    %v7445 = vadd.f32 %v7374, %v7408
    %v7446 = vadd.f32 %v7375, %v7408
    %v7447 = vadd.f32 %v7376, %v7408
    %v7448 = vadd.f32 %v7377, %v7408
    %v7449 = vadd.f32 %v7378, %v7408
    %v7450 = vadd.f32 %v7379, %v7408
    %v7451 = vadd.f32 %v7380, %v7408
    %v7452 = vadd.f32 %v7381, %v7408
    %v7453 = vadd.f32 %v7382, %v7408
    %v7454 = vadd.f32 %v7383, %v7408
    %v7455 = vadd.f32 %v7384, %v7408
    %v7456 = vadd.f32 %v7385, %v7408
    %v7457 = vadd.f32 %v7386, %v7408
    %v7458 = vadd.f32 %v7387, %v7408
    %v7459 = vadd.f32 %v7388, %v7408
    %v7460 = vadd.f32 %v7389, %v7408
    %v7461 = vadd.f32 %v7390, %v7408
    %v7462 = vadd.f32 %v7391, %v7408
    %v7463 = vadd.f32 %v7392, %v7408
    %v7464 = vadd.f32 %v7393, %v7408
    %v7465 = vadd.f32 %v7394, %v7408
    %v7466 = vadd.f32 %v7395, %v7408
    %v7467 = vadd.f32 %v7396, %v7408
    %v7468 = vadd.f32 %v7397, %v7408
    %v7469 = vadd.f32 %v7398, %v7408
    %v7470 = vadd.f32 %v7399, %v7408
    %v7471 = vadd.f32 %v7400, %v7408
    %v7472 = vadd.f32 %v7401, %v7408
    %v7473 = vadd.f32 %v7402, %v7408
    %v7474 = vmax.f32 %v7410, 0.0
    %v7475 = vmax.f32 %v7411, 0.0
    %v7476 = vmax.f32 %v7412, 0.0
    %v7477 = vmax.f32 %v7413, 0.0
    %v7478 = vmax.f32 %v7414, 0.0
    %v7479 = vmax.f32 %v7415, 0.0
    %v7480 = vmax.f32 %v7416, 0.0
    %v7481 = vmax.f32 %v7417, 0.0
    %v7482 = vmax.f32 %v7418, 0.0
    %v7483 = vmax.f32 %v7419, 0.0
    %v7484 = vmax.f32 %v7420, 0.0
    %v7485 = vmax.f32 %v7421, 0.0
    %v7486 = vmax.f32 %v7422, 0.0
    %v7487 = vmax.f32 %v7423, 0.0
    %v7488 = vmax.f32 %v7424, 0.0
    %v7489 = vmax.f32 %v7425, 0.0
    %v7490 = vmax.f32 %v7426, 0.0
    %v7491 = vmax.f32 %v7427, 0.0
    %v7492 = vmax.f32 %v7428, 0.0
    %v7493 = vmax.f32 %v7429, 0.0
    %v7494 = vmax.f32 %v7430, 0.0
    %v7495 = vmax.f32 %v7431, 0.0
    %v7496 = vmax.f32 %v7432, 0.0
    %v7497 = vmax.f32 %v7433, 0.0
    %v7498 = vmax.f32 %v7434, 0.0
    %v7499 = vmax.f32 %v7435, 0.0
    %v7500 = vmax.f32 %v7436, 0.0
    %v7501 = vmax.f32 %v7437, 0.0
    %v7502 = vmax.f32 %v7438, 0.0
    %v7503 = vmax.f32 %v7439, 0.0
    %v7504 = vmax.f32 %v7440, 0.0
    %v7505 = vmax.f32 %v7441, 0.0
    %v7506 = vmax.f32 %v7442, 0.0
    %v7507 = vmax.f32 %v7443, 0.0
    %v7508 = vmax.f32 %v7444, 0.0
    %v7509 = vmax.f32 %v7445, 0.0
    %v7510 = vmax.f32 %v7446, 0.0
    %v7511 = vmax.f32 %v7447, 0.0
    %v7512 = vmax.f32 %v7448, 0.0
    %v7513 = vmax.f32 %v7449, 0.0
    %v7514 = vmax.f32 %v7450, 0.0
    %v7515 = vmax.f32 %v7451, 0.0
    %v7516 = vmax.f32 %v7452, 0.0
    %v7517 = vmax.f32 %v7453, 0.0
    %v7518 = vmax.f32 %v7454, 0.0
    %v7519 = vmax.f32 %v7455, 0.0
    %v7520 = vmax.f32 %v7456, 0.0
    %v7521 = vmax.f32 %v7457, 0.0
    %v7522 = vmax.f32 %v7458, 0.0
    %v7523 = vmax.f32 %v7459, 0.0
    %v7524 = vmax.f32 %v7460, 0.0
    %v7525 = vmax.f32 %v7461, 0.0
    %v7526 = vmax.f32 %v7462, 0.0
    %v7527 = vmax.f32 %v7463, 0.0
    %v7528 = vmax.f32 %v7464, 0.0
    %v7529 = vmax.f32 %v7465, 0.0
    %v7530 = vmax.f32 %v7466, 0.0
    %v7531 = vmax.f32 %v7467, 0.0
    %v7532 = vmax.f32 %v7468, 0.0
    %v7533 = vmax.f32 %v7469, 0.0
    %v7534 = vmax.f32 %v7470, 0.0
    %v7535 = vmax.f32 %v7471, 0.0
    %v7536 = vmax.f32 %v7472, 0.0
    %v7537 = vmax.f32 %v7473, 0.0
    %7538 = vst.msk [vmem:[#allocation2] sm:$0xff] %vm6868, 0.0
    %7539 = vst.msk [vmem:[#allocation2 + $0x8] sm:$0xff] %vm6868, 0.0
    %vm7540 = vcmask 58368
    %7541 = vst.msk [vmem:[#allocation2 + $0x10] sm:$0x3] %vm7540, 0.0
    %7542 = vst.msk [vmem:[#allocation2 + $0x1b0] sm:$0xff] %vm6868, 0.0
    %7543 = vst.msk [vmem:[#allocation2 + $0x1b8] sm:$0xff] %vm6868, 0.0
    %7544 = vst.msk [vmem:[#allocation2 + $0x1c0] sm:$0x3] %vm7540, 0.0
    %s7545 = scalar_lea.vmem [#allocation2], 408
    %7546 = vst.msk [vmem:[%s7545] sm:$0xff] %vm6868, 0.0
    %7547 = vst.msk [vmem:[%s7545 + $0x8] sm:$0xff] %vm6868, 0.0
    %7548 = vst.msk [vmem:[%s7545 + $0x10] sm:$0x3] %vm7540, 0.0
    %7549 = vst.msk [vmem:[%s7545 + $0x1b0] sm:$0xff] %vm6868, 0.0
    %7550 = vst.msk [vmem:[%s7545 + $0x1b8] sm:$0xff] %vm6868, 0.0
    %7551 = vst.msk [vmem:[%s7545 + $0x1c0] sm:$0x3] %vm7540, 0.0
    %vm7552 = vcmask 57344
    %7553 = vst.msk [vmem:[#allocation2] sm:$0x1] %vm7552, 0.0
    %7554 = vst.msk [vmem:[#allocation2 + $0x18] sm:$0x1] %vm7552, 0.0
    %7555 = vst.msk [vmem:[#allocation2 + $0x30] sm:$0x1] %vm7552, 0.0
    %7556 = vst.msk [vmem:[#allocation2 + $0x48] sm:$0x1] %vm7552, 0.0
    %7557 = vst.msk [vmem:[#allocation2 + $0x60] sm:$0x1] %vm7552, 0.0
    %7558 = vst.msk [vmem:[#allocation2 + $0x78] sm:$0x1] %vm7552, 0.0
    %7559 = vst.msk [vmem:[#allocation2 + $0x90] sm:$0x1] %vm7552, 0.0
    %7560 = vst.msk [vmem:[#allocation2 + $0xa8] sm:$0x1] %vm7552, 0.0
    %7561 = vst.msk [vmem:[#allocation2 + $0xc0] sm:$0x1] %vm7552, 0.0
    %7562 = vst.msk [vmem:[#allocation2 + $0xd8] sm:$0x1] %vm7552, 0.0
    %7563 = vst.msk [vmem:[#allocation2 + $0xf0] sm:$0x1] %vm7552, 0.0
    %7564 = vst.msk [vmem:[#allocation2 + $0x108] sm:$0x1] %vm7552, 0.0
    %7565 = vst.msk [vmem:[#allocation2 + $0x120] sm:$0x1] %vm7552, 0.0
    %7566 = vst.msk [vmem:[#allocation2 + $0x138] sm:$0x1] %vm7552, 0.0
    %7567 = vst.msk [vmem:[#allocation2 + $0x150] sm:$0x1] %vm7552, 0.0
    %7568 = vst.msk [vmem:[#allocation2 + $0x168] sm:$0x1] %vm7552, 0.0
    %7569 = vst.msk [vmem:[#allocation2 + $0x180] sm:$0x1] %vm7552, 0.0
    %7570 = vst.msk [vmem:[#allocation2 + $0x198] sm:$0x1] %vm7552, 0.0
    %7571 = vst.msk [vmem:[#allocation2 + $0x1b0] sm:$0x1] %vm7552, 0.0
    %7572 = vst.msk [vmem:[#allocation2 + $0x1c8] sm:$0x1] %vm7552, 0.0
    %7573 = vst.msk [vmem:[#allocation2 + $0x1e0] sm:$0x1] %vm7552, 0.0
    %7574 = vst.msk [vmem:[#allocation2 + $0x1f8] sm:$0x1] %vm7552, 0.0
    %7575 = vst.msk [vmem:[#allocation2 + $0x210] sm:$0x1] %vm7552, 0.0
    %7576 = vst.msk [vmem:[#allocation2 + $0x228] sm:$0x1] %vm7552, 0.0
    %7577 = vst.msk [vmem:[#allocation2 + $0x240] sm:$0x1] %vm7552, 0.0
    %7578 = vst.msk [vmem:[#allocation2 + $0x258] sm:$0x1] %vm7552, 0.0
    %7579 = vst.msk [vmem:[#allocation2 + $0x270] sm:$0x1] %vm7552, 0.0
    %7580 = vst.msk [vmem:[#allocation2 + $0x288] sm:$0x1] %vm7552, 0.0
    %7581 = vst.msk [vmem:[#allocation2 + $0x2a0] sm:$0x1] %vm7552, 0.0
    %7582 = vst.msk [vmem:[#allocation2 + $0x2b8] sm:$0x1] %vm7552, 0.0
    %7583 = vst.msk [vmem:[#allocation2 + $0x2d0] sm:$0x1] %vm7552, 0.0
    %7584 = vst.msk [vmem:[#allocation2 + $0x2e8] sm:$0x1] %vm7552, 0.0
    %7585 = vst.msk [vmem:[#allocation2 + $0x300] sm:$0x1] %vm7552, 0.0
    %7586 = vst.msk [vmem:[#allocation2 + $0x318] sm:$0x1] %vm7552, 0.0
    %7587 = vst.msk [vmem:[#allocation2 + $0x330] sm:$0x1] %vm7552, 0.0
    %7588 = vst.msk [vmem:[#allocation2 + $0x348] sm:$0x1] %vm7552, 0.0
    %7589 = vst.msk [vmem:[#allocation2 + $0x11] sm:$0x1] %vm7552, 0.0
    %7590 = vst.msk [vmem:[#allocation2 + $0x29] sm:$0x1] %vm7552, 0.0
    %7591 = vst.msk [vmem:[#allocation2 + $0x41] sm:$0x1] %vm7552, 0.0
    %7592 = vst.msk [vmem:[#allocation2 + $0x59] sm:$0x1] %vm7552, 0.0
    %7593 = vst.msk [vmem:[#allocation2 + $0x71] sm:$0x1] %vm7552, 0.0
    %7594 = vst.msk [vmem:[#allocation2 + $0x89] sm:$0x1] %vm7552, 0.0
    %7595 = vst.msk [vmem:[#allocation2 + $0xa1] sm:$0x1] %vm7552, 0.0
    %7596 = vst.msk [vmem:[#allocation2 + $0xb9] sm:$0x1] %vm7552, 0.0
    %7597 = vst.msk [vmem:[#allocation2 + $0xd1] sm:$0x1] %vm7552, 0.0
    %7598 = vst.msk [vmem:[#allocation2 + $0xe9] sm:$0x1] %vm7552, 0.0
    %7599 = vst.msk [vmem:[#allocation2 + $0x101] sm:$0x1] %vm7552, 0.0
    %7600 = vst.msk [vmem:[#allocation2 + $0x119] sm:$0x1] %vm7552, 0.0
    %7601 = vst.msk [vmem:[#allocation2 + $0x131] sm:$0x1] %vm7552, 0.0
    %7602 = vst.msk [vmem:[#allocation2 + $0x149] sm:$0x1] %vm7552, 0.0
    %7603 = vst.msk [vmem:[#allocation2 + $0x161] sm:$0x1] %vm7552, 0.0
    %7604 = vst.msk [vmem:[#allocation2 + $0x179] sm:$0x1] %vm7552, 0.0
    %7605 = vst.msk [vmem:[#allocation2 + $0x191] sm:$0x1] %vm7552, 0.0
    %7606 = vst.msk [vmem:[#allocation2 + $0x1a9] sm:$0x1] %vm7552, 0.0
    %7607 = vst.msk [vmem:[#allocation2 + $0x1c1] sm:$0x1] %vm7552, 0.0
    %7608 = vst.msk [vmem:[#allocation2 + $0x1d9] sm:$0x1] %vm7552, 0.0
    %7609 = vst.msk [vmem:[#allocation2 + $0x1f1] sm:$0x1] %vm7552, 0.0
    %7610 = vst.msk [vmem:[#allocation2 + $0x209] sm:$0x1] %vm7552, 0.0
    %7611 = vst.msk [vmem:[#allocation2 + $0x221] sm:$0x1] %vm7552, 0.0
    %7612 = vst.msk [vmem:[#allocation2 + $0x239] sm:$0x1] %vm7552, 0.0
    %7613 = vst.msk [vmem:[#allocation2 + $0x251] sm:$0x1] %vm7552, 0.0
    %7614 = vst.msk [vmem:[#allocation2 + $0x269] sm:$0x1] %vm7552, 0.0
    %7615 = vst.msk [vmem:[#allocation2 + $0x281] sm:$0x1] %vm7552, 0.0
    %7616 = vst.msk [vmem:[#allocation2 + $0x299] sm:$0x1] %vm7552, 0.0
    %7617 = vst.msk [vmem:[#allocation2 + $0x2b1] sm:$0x1] %vm7552, 0.0
    %7618 = vst.msk [vmem:[#allocation2 + $0x2c9] sm:$0x1] %vm7552, 0.0
    %7619 = vst.msk [vmem:[#allocation2 + $0x2e1] sm:$0x1] %vm7552, 0.0
    %7620 = vst.msk [vmem:[#allocation2 + $0x2f9] sm:$0x1] %vm7552, 0.0
    %7621 = vst.msk [vmem:[#allocation2 + $0x311] sm:$0x1] %vm7552, 0.0
    %7622 = vst.msk [vmem:[#allocation2 + $0x329] sm:$0x1] %vm7552, 0.0
    %7623 = vst.msk [vmem:[#allocation2 + $0x341] sm:$0x1] %vm7552, 0.0
    %7624 = vst.msk [vmem:[#allocation2 + $0x359] sm:$0x1] %vm7552, 0.0
    %s7625 = scalar_lea.vmem [#allocation2], 24
    %7626 = vst.msk [vmem:[%s7625 + $0x1] sm:$0xff] %vm6868, %v7474
    %7627 = vst.msk [vmem:[%s7625 + $0x9] sm:$0xff] %vm6868, %v7475
    %7628 = vst.msk [vmem:[%s7625 + $0x19] sm:$0xff] %vm6868, %v7476
    %7629 = vst.msk [vmem:[%s7625 + $0x21] sm:$0xff] %vm6868, %v7477
    %7630 = vst.msk [vmem:[%s7625 + $0x31] sm:$0xff] %vm6868, %v7478
    %7631 = vst.msk [vmem:[%s7625 + $0x39] sm:$0xff] %vm6868, %v7479
    %7632 = vst.msk [vmem:[%s7625 + $0x49] sm:$0xff] %vm6868, %v7480
    %7633 = vst.msk [vmem:[%s7625 + $0x51] sm:$0xff] %vm6868, %v7481
    %7634 = vst.msk [vmem:[%s7625 + $0x61] sm:$0xff] %vm6868, %v7482
    %7635 = vst.msk [vmem:[%s7625 + $0x69] sm:$0xff] %vm6868, %v7483
    %7636 = vst.msk [vmem:[%s7625 + $0x79] sm:$0xff] %vm6868, %v7484
    %7637 = vst.msk [vmem:[%s7625 + $0x81] sm:$0xff] %vm6868, %v7485
    %7638 = vst.msk [vmem:[%s7625 + $0x91] sm:$0xff] %vm6868, %v7486
    %7639 = vst.msk [vmem:[%s7625 + $0x99] sm:$0xff] %vm6868, %v7487
    %7640 = vst.msk [vmem:[%s7625 + $0xa9] sm:$0xff] %vm6868, %v7488
    %7641 = vst.msk [vmem:[%s7625 + $0xb1] sm:$0xff] %vm6868, %v7489
    %7642 = vst.msk [vmem:[%s7625 + $0xc1] sm:$0xff] %vm6868, %v7490
    %7643 = vst.msk [vmem:[%s7625 + $0xc9] sm:$0xff] %vm6868, %v7491
    %7644 = vst.msk [vmem:[%s7625 + $0xd9] sm:$0xff] %vm6868, %v7492
    %7645 = vst.msk [vmem:[%s7625 + $0xe1] sm:$0xff] %vm6868, %v7493
    %7646 = vst.msk [vmem:[%s7625 + $0xf1] sm:$0xff] %vm6868, %v7494
    %7647 = vst.msk [vmem:[%s7625 + $0xf9] sm:$0xff] %vm6868, %v7495
    %7648 = vst.msk [vmem:[%s7625 + $0x109] sm:$0xff] %vm6868, %v7496
    %7649 = vst.msk [vmem:[%s7625 + $0x111] sm:$0xff] %vm6868, %v7497
    %7650 = vst.msk [vmem:[%s7625 + $0x121] sm:$0xff] %vm6868, %v7498
    %7651 = vst.msk [vmem:[%s7625 + $0x129] sm:$0xff] %vm6868, %v7499
    %7652 = vst.msk [vmem:[%s7625 + $0x139] sm:$0xff] %vm6868, %v7500
    %7653 = vst.msk [vmem:[%s7625 + $0x141] sm:$0xff] %vm6868, %v7501
    %7654 = vst.msk [vmem:[%s7625 + $0x151] sm:$0xff] %vm6868, %v7502
    %7655 = vst.msk [vmem:[%s7625 + $0x159] sm:$0xff] %vm6868, %v7503
    %7656 = vst.msk [vmem:[%s7625 + $0x169] sm:$0xff] %vm6868, %v7504
    %7657 = vst.msk [vmem:[%s7625 + $0x171] sm:$0xff] %vm6868, %v7505
    %7658 = vst.msk [vmem:[%s7625 + $0x1b1] sm:$0xff] %vm6868, %v7506
    %7659 = vst.msk [vmem:[%s7625 + $0x1b9] sm:$0xff] %vm6868, %v7507
    %7660 = vst.msk [vmem:[%s7625 + $0x1c9] sm:$0xff] %vm6868, %v7508
    %7661 = vst.msk [vmem:[%s7625 + $0x1d1] sm:$0xff] %vm6868, %v7509
    %7662 = vst.msk [vmem:[%s7625 + $0x1e1] sm:$0xff] %vm6868, %v7510
    %7663 = vst.msk [vmem:[%s7625 + $0x1e9] sm:$0xff] %vm6868, %v7511
    %7664 = vst.msk [vmem:[%s7625 + $0x1f9] sm:$0xff] %vm6868, %v7512
    %7665 = vst.msk [vmem:[%s7625 + $0x201] sm:$0xff] %vm6868, %v7513
    %7666 = vst.msk [vmem:[%s7625 + $0x211] sm:$0xff] %vm6868, %v7514
    %7667 = vst.msk [vmem:[%s7625 + $0x219] sm:$0xff] %vm6868, %v7515
    %7668 = vst.msk [vmem:[%s7625 + $0x229] sm:$0xff] %vm6868, %v7516
    %7669 = vst.msk [vmem:[%s7625 + $0x231] sm:$0xff] %vm6868, %v7517
    %7670 = vst.msk [vmem:[%s7625 + $0x241] sm:$0xff] %vm6868, %v7518
    %7671 = vst.msk [vmem:[%s7625 + $0x249] sm:$0xff] %vm6868, %v7519
    %7672 = vst.msk [vmem:[%s7625 + $0x259] sm:$0xff] %vm6868, %v7520
    %7673 = vst.msk [vmem:[%s7625 + $0x261] sm:$0xff] %vm6868, %v7521
    %7674 = vst.msk [vmem:[%s7625 + $0x271] sm:$0xff] %vm6868, %v7522
    %7675 = vst.msk [vmem:[%s7625 + $0x279] sm:$0xff] %vm6868, %v7523
    %7676 = vst.msk [vmem:[%s7625 + $0x289] sm:$0xff] %vm6868, %v7524
    %7677 = vst.msk [vmem:[%s7625 + $0x291] sm:$0xff] %vm6868, %v7525
    %7678 = vst.msk [vmem:[%s7625 + $0x2a1] sm:$0xff] %vm6868, %v7526
    %7679 = vst.msk [vmem:[%s7625 + $0x2a9] sm:$0xff] %vm6868, %v7527
    %7680 = vst.msk [vmem:[%s7625 + $0x2b9] sm:$0xff] %vm6868, %v7528
    %7681 = vst.msk [vmem:[%s7625 + $0x2c1] sm:$0xff] %vm6868, %v7529
    %7682 = vst.msk [vmem:[%s7625 + $0x2d1] sm:$0xff] %vm6868, %v7530
    %7683 = vst.msk [vmem:[%s7625 + $0x2d9] sm:$0xff] %vm6868, %v7531
    %7684 = vst.msk [vmem:[%s7625 + $0x2e9] sm:$0xff] %vm6868, %v7532
    %7685 = vst.msk [vmem:[%s7625 + $0x2f1] sm:$0xff] %vm6868, %v7533
    %7686 = vst.msk [vmem:[%s7625 + $0x301] sm:$0xff] %vm6868, %v7534
    %7687 = vst.msk [vmem:[%s7625 + $0x309] sm:$0xff] %vm6868, %v7535
    %7688 = vst.msk [vmem:[%s7625 + $0x319] sm:$0xff] %vm6868, %v7536
    %7689 = vst.msk [vmem:[%s7625 + $0x321] sm:$0xff] %vm6868, %v7537
    %v7690 = vld [vmem:[#allocation2] sm:$0xff]
    %v7691 = vld [vmem:[#allocation2 + $0x8] sm:$0xff]
    %v7692 = vld [vmem:[#allocation2 + $0x18] sm:$0xff]
    %v7693 = vld [vmem:[#allocation2 + $0x20] sm:$0xff]
    %v7694 = vld [vmem:[#allocation2 + $0x30] sm:$0xff]
    %v7695 = vld [vmem:[#allocation2 + $0x38] sm:$0xff]
    %v7696 = vld [vmem:[#allocation2 + $0x48] sm:$0xff]
    %v7697 = vld [vmem:[#allocation2 + $0x50] sm:$0xff]
    %v7698 = vld [vmem:[#allocation2 + $0x60] sm:$0xff]
    %v7699 = vld [vmem:[#allocation2 + $0x68] sm:$0xff]
    %v7700 = vld [vmem:[#allocation2 + $0x78] sm:$0xff]
    %v7701 = vld [vmem:[#allocation2 + $0x80] sm:$0xff]
    %v7702 = vld [vmem:[#allocation2 + $0x90] sm:$0xff]
    %v7703 = vld [vmem:[#allocation2 + $0x98] sm:$0xff]
    %v7704 = vld [vmem:[#allocation2 + $0xa8] sm:$0xff]
    %v7705 = vld [vmem:[#allocation2 + $0xb0] sm:$0xff]
    %v7706 = vld [vmem:[#allocation2 + $0xc0] sm:$0xff]
    %v7707 = vld [vmem:[#allocation2 + $0xc8] sm:$0xff]
    %v7708 = vld [vmem:[#allocation2 + $0xd8] sm:$0xff]
    %v7709 = vld [vmem:[#allocation2 + $0xe0] sm:$0xff]
    %v7710 = vld [vmem:[#allocation2 + $0xf0] sm:$0xff]
    %v7711 = vld [vmem:[#allocation2 + $0xf8] sm:$0xff]
    %v7712 = vld [vmem:[#allocation2 + $0x108] sm:$0xff]
    %v7713 = vld [vmem:[#allocation2 + $0x110] sm:$0xff]
    %v7714 = vld [vmem:[#allocation2 + $0x120] sm:$0xff]
    %v7715 = vld [vmem:[#allocation2 + $0x128] sm:$0xff]
    %v7716 = vld [vmem:[#allocation2 + $0x138] sm:$0xff]
    %v7717 = vld [vmem:[#allocation2 + $0x140] sm:$0xff]
    %v7718 = vld [vmem:[#allocation2 + $0x150] sm:$0xff]
    %v7719 = vld [vmem:[#allocation2 + $0x158] sm:$0xff]
    %v7720 = vld [vmem:[#allocation2 + $0x168] sm:$0xff]
    %v7721 = vld [vmem:[#allocation2 + $0x170] sm:$0xff]
    %v7722 = vld [vmem:[#allocation2 + $0x1b0] sm:$0xff]
    %v7723 = vld [vmem:[#allocation2 + $0x1b8] sm:$0xff]
    %v7724 = vld [vmem:[#allocation2 + $0x1c8] sm:$0xff]
    %v7725 = vld [vmem:[#allocation2 + $0x1d0] sm:$0xff]
    %v7726 = vld [vmem:[#allocation2 + $0x1e0] sm:$0xff]
    %v7727 = vld [vmem:[#allocation2 + $0x1e8] sm:$0xff]
    %v7728 = vld [vmem:[#allocation2 + $0x1f8] sm:$0xff]
    %v7729 = vld [vmem:[#allocation2 + $0x200] sm:$0xff]
    %v7730 = vld [vmem:[#allocation2 + $0x210] sm:$0xff]
    %v7731 = vld [vmem:[#allocation2 + $0x218] sm:$0xff]
    %v7732 = vld [vmem:[#allocation2 + $0x228] sm:$0xff]
    %v7733 = vld [vmem:[#allocation2 + $0x230] sm:$0xff]
    %v7734 = vld [vmem:[#allocation2 + $0x240] sm:$0xff]
    %v7735 = vld [vmem:[#allocation2 + $0x248] sm:$0xff]
    %v7736 = vld [vmem:[#allocation2 + $0x258] sm:$0xff]
    %v7737 = vld [vmem:[#allocation2 + $0x260] sm:$0xff]
    %v7738 = vld [vmem:[#allocation2 + $0x270] sm:$0xff]
    %v7739 = vld [vmem:[#allocation2 + $0x278] sm:$0xff]
    %v7740 = vld [vmem:[#allocation2 + $0x288] sm:$0xff]
    %v7741 = vld [vmem:[#allocation2 + $0x290] sm:$0xff]
    %v7742 = vld [vmem:[#allocation2 + $0x2a0] sm:$0xff]
    %v7743 = vld [vmem:[#allocation2 + $0x2a8] sm:$0xff]
    %v7744 = vld [vmem:[#allocation2 + $0x2b8] sm:$0xff]
    %v7745 = vld [vmem:[#allocation2 + $0x2c0] sm:$0xff]
    %v7746 = vld [vmem:[#allocation2 + $0x2d0] sm:$0xff]
    %v7747 = vld [vmem:[#allocation2 + $0x2d8] sm:$0xff]
    %v7748 = vld [vmem:[#allocation2 + $0x2e8] sm:$0xff]
    %v7749 = vld [vmem:[#allocation2 + $0x2f0] sm:$0xff]
    %v7750 = vld [vmem:[#allocation2 + $0x300] sm:$0xff]
    %v7751 = vld [vmem:[#allocation2 + $0x308] sm:$0xff]
    %v7752 = vld [vmem:[#allocation2 + $0x318] sm:$0xff]
    %v7753 = vld [vmem:[#allocation2 + $0x320] sm:$0xff]
    %v7754 = vld [vmem:[%s4] sm:$0xff]
    %v7755 = vld [vmem:[#allocation2 + $0x1] sm:$0xff]
    %v7756 = vld [vmem:[#allocation2 + $0x9] sm:$0xff]
    %v7757 = vld [vmem:[#allocation2 + $0x19] sm:$0xff]
    %v7758 = vld [vmem:[#allocation2 + $0x21] sm:$0xff]
    %v7759 = vld [vmem:[#allocation2 + $0x31] sm:$0xff]
    %v7760 = vld [vmem:[#allocation2 + $0x39] sm:$0xff]
    %v7761 = vld [vmem:[#allocation2 + $0x49] sm:$0xff]
    %v7762 = vld [vmem:[#allocation2 + $0x51] sm:$0xff]
    %v7763 = vld [vmem:[#allocation2 + $0x61] sm:$0xff]
    %v7764 = vld [vmem:[#allocation2 + $0x69] sm:$0xff]
    %v7765 = vld [vmem:[#allocation2 + $0x79] sm:$0xff]
    %v7766 = vld [vmem:[#allocation2 + $0x81] sm:$0xff]
    %v7767 = vld [vmem:[#allocation2 + $0x91] sm:$0xff]
    %v7768 = vld [vmem:[#allocation2 + $0x99] sm:$0xff]
    %v7769 = vld [vmem:[#allocation2 + $0xa9] sm:$0xff]
    %v7770 = vld [vmem:[#allocation2 + $0xb1] sm:$0xff]
    %v7771 = vld [vmem:[#allocation2 + $0xc1] sm:$0xff]
    %v7772 = vld [vmem:[#allocation2 + $0xc9] sm:$0xff]
    %v7773 = vld [vmem:[#allocation2 + $0xd9] sm:$0xff]
    %v7774 = vld [vmem:[#allocation2 + $0xe1] sm:$0xff]
    %v7775 = vld [vmem:[#allocation2 + $0xf1] sm:$0xff]
    %v7776 = vld [vmem:[#allocation2 + $0xf9] sm:$0xff]
    %v7777 = vld [vmem:[#allocation2 + $0x109] sm:$0xff]
    %v7778 = vld [vmem:[#allocation2 + $0x111] sm:$0xff]
    %v7779 = vld [vmem:[#allocation2 + $0x121] sm:$0xff]
    %v7780 = vld [vmem:[#allocation2 + $0x129] sm:$0xff]
    %v7781 = vld [vmem:[#allocation2 + $0x139] sm:$0xff]
    %v7782 = vld [vmem:[#allocation2 + $0x141] sm:$0xff]
    %v7783 = vld [vmem:[#allocation2 + $0x151] sm:$0xff]
    %v7784 = vld [vmem:[#allocation2 + $0x159] sm:$0xff]
    %v7785 = vld [vmem:[#allocation2 + $0x169] sm:$0xff]
    %v7786 = vld [vmem:[#allocation2 + $0x171] sm:$0xff]
    %v7787 = vld [vmem:[#allocation2 + $0x1b1] sm:$0xff]
    %v7788 = vld [vmem:[#allocation2 + $0x1b9] sm:$0xff]
    %v7789 = vld [vmem:[#allocation2 + $0x1c9] sm:$0xff]
    %v7790 = vld [vmem:[#allocation2 + $0x1d1] sm:$0xff]
    %v7791 = vld [vmem:[#allocation2 + $0x1e1] sm:$0xff]
    %v7792 = vld [vmem:[#allocation2 + $0x1e9] sm:$0xff]
    %v7793 = vld [vmem:[#allocation2 + $0x1f9] sm:$0xff]
    %v7794 = vld [vmem:[#allocation2 + $0x201] sm:$0xff]
    %v7795 = vld [vmem:[#allocation2 + $0x211] sm:$0xff]
    %v7796 = vld [vmem:[#allocation2 + $0x219] sm:$0xff]
    %v7797 = vld [vmem:[#allocation2 + $0x229] sm:$0xff]
    %v7798 = vld [vmem:[#allocation2 + $0x231] sm:$0xff]
    %v7799 = vld [vmem:[#allocation2 + $0x241] sm:$0xff]
    %v7800 = vld [vmem:[#allocation2 + $0x249] sm:$0xff]
    %v7801 = vld [vmem:[#allocation2 + $0x259] sm:$0xff]
    %v7802 = vld [vmem:[#allocation2 + $0x261] sm:$0xff]
    %v7803 = vld [vmem:[#allocation2 + $0x271] sm:$0xff]
    %v7804 = vld [vmem:[#allocation2 + $0x279] sm:$0xff]
    %v7805 = vld [vmem:[#allocation2 + $0x289] sm:$0xff]
    %v7806 = vld [vmem:[#allocation2 + $0x291] sm:$0xff]
    %v7807 = vld [vmem:[#allocation2 + $0x2a1] sm:$0xff]
    %v7808 = vld [vmem:[#allocation2 + $0x2a9] sm:$0xff]
    %v7809 = vld [vmem:[#allocation2 + $0x2b9] sm:$0xff]
    %v7810 = vld [vmem:[#allocation2 + $0x2c1] sm:$0xff]
    %v7811 = vld [vmem:[#allocation2 + $0x2d1] sm:$0xff]
    %v7812 = vld [vmem:[#allocation2 + $0x2d9] sm:$0xff]
    %v7813 = vld [vmem:[#allocation2 + $0x2e9] sm:$0xff]
    %v7814 = vld [vmem:[#allocation2 + $0x2f1] sm:$0xff]
    %v7815 = vld [vmem:[#allocation2 + $0x301] sm:$0xff]
    %v7816 = vld [vmem:[#allocation2 + $0x309] sm:$0xff]
    %v7817 = vld [vmem:[#allocation2 + $0x319] sm:$0xff]
    %v7818 = vld [vmem:[#allocation2 + $0x321] sm:$0xff]
    %s7819 = scalar_lea.vmem %s4, 8
    %v7820 = vld [vmem:[%s7819] sm:$0xff]
    %v7822 = vsel %vm6868, %v7820, 0
    %v7825 = vsel %vm6868, %v7755, 0
    %v7828 = vsel %vm6868, %v7756, 0
    %v7831 = vsel %vm6868, %v7757, 0
    %v7834 = vsel %vm6868, %v7758, 0
    %v7837 = vsel %vm6868, %v7759, 0
    %v7840 = vsel %vm6868, %v7760, 0
    %v7843 = vsel %vm6868, %v7761, 0
    %v7846 = vsel %vm6868, %v7762, 0
    %v7849 = vsel %vm6868, %v7763, 0
    %v7852 = vsel %vm6868, %v7764, 0
    %v7855 = vsel %vm6868, %v7765, 0
    %v7858 = vsel %vm6868, %v7766, 0
    %v7861 = vsel %vm6868, %v7767, 0
    %v7864 = vsel %vm6868, %v7768, 0
    %v7867 = vsel %vm6868, %v7769, 0
    %v7870 = vsel %vm6868, %v7770, 0
    %v7873 = vsel %vm6868, %v7771, 0
    %v7876 = vsel %vm6868, %v7772, 0
    %v7879 = vsel %vm6868, %v7773, 0
    %v7882 = vsel %vm6868, %v7774, 0
    %v7885 = vsel %vm6868, %v7775, 0
    %v7888 = vsel %vm6868, %v7776, 0
    %v7891 = vsel %vm6868, %v7777, 0
    %v7894 = vsel %vm6868, %v7778, 0
    %v7897 = vsel %vm6868, %v7779, 0
    %v7900 = vsel %vm6868, %v7780, 0
    %v7903 = vsel %vm6868, %v7781, 0
    %v7906 = vsel %vm6868, %v7782, 0
    %v7909 = vsel %vm6868, %v7783, 0
    %v7912 = vsel %vm6868, %v7784, 0
    %v7915 = vsel %vm6868, %v7785, 0
    %v7918 = vsel %vm6868, %v7786, 0
    %v7921 = vsel %vm6868, %v7787, 0
    %v7924 = vsel %vm6868, %v7788, 0
    %v7927 = vsel %vm6868, %v7789, 0
    %v7930 = vsel %vm6868, %v7790, 0
    %v7933 = vsel %vm6868, %v7791, 0
    %v7936 = vsel %vm6868, %v7792, 0
    %v7939 = vsel %vm6868, %v7793, 0
    %v7942 = vsel %vm6868, %v7794, 0
    %v7945 = vsel %vm6868, %v7795, 0
    %v7948 = vsel %vm6868, %v7796, 0
    %v7951 = vsel %vm6868, %v7797, 0
    %v7954 = vsel %vm6868, %v7798, 0
    %v7957 = vsel %vm6868, %v7799, 0
    %v7960 = vsel %vm6868, %v7800, 0
    %v7963 = vsel %vm6868, %v7801, 0
    %v7966 = vsel %vm6868, %v7802, 0
    %v7969 = vsel %vm6868, %v7803, 0
    %v7972 = vsel %vm6868, %v7804, 0
    %v7975 = vsel %vm6868, %v7805, 0
    %v7978 = vsel %vm6868, %v7806, 0
    %v7981 = vsel %vm6868, %v7807, 0
    %v7984 = vsel %vm6868, %v7808, 0
    %v7987 = vsel %vm6868, %v7809, 0
    %v7990 = vsel %vm6868, %v7810, 0
    %v7993 = vsel %vm6868, %v7811, 0
    %v7996 = vsel %vm6868, %v7812, 0
    %v7999 = vsel %vm6868, %v7813, 0
    %v8002 = vsel %vm6868, %v7814, 0
    %v8005 = vsel %vm6868, %v7815, 0
    %v8008 = vsel %vm6868, %v7816, 0
    %v8011 = vsel %vm6868, %v7817, 0
    %v8014 = vsel %vm6868, %v7818, 0
    %8016 = vmatprep.subr.mxu0 0.0
    %8017 = vmatpush1.xpose.msra.mxu0 %v7825
    %8018 = vmatprep.subr.mxu0 0.0
    %8019 = vmatpush1.xpose.msra.mxu0 %v7828
    %8020 = vmatprep.subr.mxu0 0.0
    %8021 = vmatpush1.xpose.msra.mxu0 %v7831
    %8022 = vmatprep.subr.mxu0 0.0
    %8023 = vmatpush1.xpose.msra.mxu0 %v7834
    %8024 = vmatprep.subr.mxu0 0.0
    %8025 = vmatpush1.xpose.msra.mxu0 %v7837
    %8026 = vmatprep.subr.mxu0 0.0
    %8027 = vmatpush1.xpose.msra.mxu0 %v7840
    %8028 = vmatprep.subr.mxu0 0.0
    %8029 = vmatpush1.xpose.msra.mxu0 %v7843
    %8030 = vmatprep.subr.mxu0 0.0
    %8031 = vmatpush1.xpose.msra.mxu0 %v7846
    %8032 = vmatprep.subr.mxu0 0.0
    %8033 = vmatpush1.xpose.msra.mxu0 %v7849
    %8034 = vmatprep.subr.mxu0 0.0
    %8035 = vmatpush1.xpose.msra.mxu0 %v7852
    %8036 = vmatprep.subr.mxu0 0.0
    %8037 = vmatpush1.xpose.msra.mxu0 %v7855
    %8038 = vmatprep.subr.mxu0 0.0
    %8039 = vmatpush1.xpose.msra.mxu0 %v7858
    %8040 = vmatprep.subr.mxu0 0.0
    %8041 = vmatpush1.xpose.msra.mxu0 %v7861
    %8042 = vmatprep.subr.mxu0 0.0
    %8043 = vmatpush1.xpose.msra.mxu0 %v7864
    %8044 = vmatprep.subr.mxu0 0.0
    %8045 = vmatpush1.xpose.msra.mxu0 %v7867
    %8046 = vmatprep.subr.mxu0 0.0
    %8047 = vmatpush1.xpose.msra.mxu0 %v7870
    %8048 = vmatprep.subr.mxu0 0.0
    %8049 = vmatpush1.xpose.msra.mxu0 %v7873
    %8050 = vmatprep.subr.mxu0 0.0
    %8051 = vmatpush1.xpose.msra.mxu0 %v7876
    %8052 = vmatprep.subr.mxu0 0.0
    %8053 = vmatpush1.xpose.msra.mxu0 %v7879
    %8054 = vmatprep.subr.mxu0 0.0
    %8055 = vmatpush1.xpose.msra.mxu0 %v7882
    %8056 = vmatprep.subr.mxu0 0.0
    %8057 = vmatpush1.xpose.msra.mxu0 %v7885
    %8058 = vmatprep.subr.mxu0 0.0
    %8059 = vmatpush1.xpose.msra.mxu0 %v7888
    %8060 = vmatprep.subr.mxu0 0.0
    %8061 = vmatpush1.xpose.msra.mxu0 %v7891
    %8062 = vmatprep.subr.mxu0 0.0
    %8063 = vmatpush1.xpose.msra.mxu0 %v7894
    %8064 = vmatprep.subr.mxu0 0.0
    %8065 = vmatpush1.xpose.msra.mxu0 %v7897
    %8066 = vmatprep.subr.mxu0 0.0
    %8067 = vmatpush1.xpose.msra.mxu0 %v7900
    %8068 = vmatprep.subr.mxu0 0.0
    %8069 = vmatpush1.xpose.msra.mxu0 %v7903
    %8070 = vmatprep.subr.mxu0 0.0
    %8071 = vmatpush1.xpose.msra.mxu0 %v7906
    %8072 = vmatprep.subr.mxu0 0.0
    %8073 = vmatpush1.xpose.msra.mxu0 %v7909
    %8074 = vmatprep.subr.mxu0 0.0
    %8075 = vmatpush1.xpose.msra.mxu0 %v7912
    %8076 = vmatprep.subr.mxu0 0.0
    %8077 = vmatpush1.xpose.msra.mxu0 %v7915
    %8078 = vmatprep.subr.mxu0 0.0
    %8079 = vmatpush1.xpose.msra.mxu0 %v7918
    %8080 = vmatprep.mubr.f32.mxu0 0.0
    %8081 = vmatmul.mubr.f32.gmra.mrb[0].mxu0 %v7822
    %v8082 = vpop.f32.mrb[0].mxu0
    %v8083 = vadd.f32 0.0, %v8082
    %v8084 = vpop.f32.mrb[0].mxu0
    %v8085 = vadd.f32 0.0, %v8084
    %8086 = vdwg.mxu0
    %8087 = vmatprep.subr.mxu0 0.0
    %8088 = vmatpush1.xpose.msra.mxu0 %v7921
    %8089 = vmatprep.subr.mxu0 0.0
    %8090 = vmatpush1.xpose.msra.mxu0 %v7924
    %8091 = vmatprep.subr.mxu0 0.0
    %8092 = vmatpush1.xpose.msra.mxu0 %v7927
    %8093 = vmatprep.subr.mxu0 0.0
    %8094 = vmatpush1.xpose.msra.mxu0 %v7930
    %8095 = vmatprep.subr.mxu0 0.0
    %8096 = vmatpush1.xpose.msra.mxu0 %v7933
    %8097 = vmatprep.subr.mxu0 0.0
    %8098 = vmatpush1.xpose.msra.mxu0 %v7936
    %8099 = vmatprep.subr.mxu0 0.0
    %8100 = vmatpush1.xpose.msra.mxu0 %v7939
    %8101 = vmatprep.subr.mxu0 0.0
    %8102 = vmatpush1.xpose.msra.mxu0 %v7942
    %8103 = vmatprep.subr.mxu0 0.0
    %8104 = vmatpush1.xpose.msra.mxu0 %v7945
    %8105 = vmatprep.subr.mxu0 0.0
    %8106 = vmatpush1.xpose.msra.mxu0 %v7948
    %8107 = vmatprep.subr.mxu0 0.0
    %8108 = vmatpush1.xpose.msra.mxu0 %v7951
    %8109 = vmatprep.subr.mxu0 0.0
    %8110 = vmatpush1.xpose.msra.mxu0 %v7954
    %8111 = vmatprep.subr.mxu0 0.0
    %8112 = vmatpush1.xpose.msra.mxu0 %v7957
    %8113 = vmatprep.subr.mxu0 0.0
    %8114 = vmatpush1.xpose.msra.mxu0 %v7960
    %8115 = vmatprep.subr.mxu0 0.0
    %8116 = vmatpush1.xpose.msra.mxu0 %v7963
    %8117 = vmatprep.subr.mxu0 0.0
    %8118 = vmatpush1.xpose.msra.mxu0 %v7966
    %8119 = vmatprep.subr.mxu0 0.0
    %8120 = vmatpush1.xpose.msra.mxu0 %v7969
    %8121 = vmatprep.subr.mxu0 0.0
    %8122 = vmatpush1.xpose.msra.mxu0 %v7972
    %8123 = vmatprep.subr.mxu0 0.0
    %8124 = vmatpush1.xpose.msra.mxu0 %v7975
    %8125 = vmatprep.subr.mxu0 0.0
    %8126 = vmatpush1.xpose.msra.mxu0 %v7978
    %8127 = vmatprep.subr.mxu0 0.0
    %8128 = vmatpush1.xpose.msra.mxu0 %v7981
    %8129 = vmatprep.subr.mxu0 0.0
    %8130 = vmatpush1.xpose.msra.mxu0 %v7984
    %8131 = vmatprep.subr.mxu0 0.0
    %8132 = vmatpush1.xpose.msra.mxu0 %v7987
    %8133 = vmatprep.subr.mxu0 0.0
    %8134 = vmatpush1.xpose.msra.mxu0 %v7990
    %8135 = vmatprep.subr.mxu0 0.0
    %8136 = vmatpush1.xpose.msra.mxu0 %v7993
    %8137 = vmatprep.subr.mxu0 0.0
    %8138 = vmatpush1.xpose.msra.mxu0 %v7996
    %8139 = vmatprep.subr.mxu0 0.0
    %8140 = vmatpush1.xpose.msra.mxu0 %v7999
    %8141 = vmatprep.subr.mxu0 0.0
    %8142 = vmatpush1.xpose.msra.mxu0 %v8002
    %8143 = vmatprep.subr.mxu0 0.0
    %8144 = vmatpush1.xpose.msra.mxu0 %v8005
    %8145 = vmatprep.subr.mxu0 0.0
    %8146 = vmatpush1.xpose.msra.mxu0 %v8008
    %8147 = vmatprep.subr.mxu0 0.0
    %8148 = vmatpush1.xpose.msra.mxu0 %v8011
    %8149 = vmatprep.subr.mxu0 0.0
    %8150 = vmatpush1.xpose.msra.mxu0 %v8014
    %8151 = vmatprep.mubr.f32.mxu0 0.0
    %8152 = vmatmul.mubr.f32.gmra.mrb[0].mxu0 %v7822
    %v8153 = vpop.f32.mrb[0].mxu0
    %v8154 = vadd.f32 0.0, %v8153
    %v8155 = vpop.f32.mrb[0].mxu0
    %v8156 = vadd.f32 0.0, %v8155
    %8157 = vdwg.mxu0
    %v8159 = vsel %vm6868, %v7754, 0
    %v8162 = vsel %vm6868, %v7690, 0
    %v8165 = vsel %vm6868, %v7691, 0
    %v8168 = vsel %vm6868, %v7692, 0
    %v8171 = vsel %vm6868, %v7693, 0
    %v8174 = vsel %vm6868, %v7694, 0
    %v8177 = vsel %vm6868, %v7695, 0
    %v8180 = vsel %vm6868, %v7696, 0
    %v8183 = vsel %vm6868, %v7697, 0
    %v8186 = vsel %vm6868, %v7698, 0
    %v8189 = vsel %vm6868, %v7699, 0
    %v8192 = vsel %vm6868, %v7700, 0
    %v8195 = vsel %vm6868, %v7701, 0
    %v8198 = vsel %vm6868, %v7702, 0
    %v8201 = vsel %vm6868, %v7703, 0
    %v8204 = vsel %vm6868, %v7704, 0
    %v8207 = vsel %vm6868, %v7705, 0
    %v8210 = vsel %vm6868, %v7706, 0
    %v8213 = vsel %vm6868, %v7707, 0
    %v8216 = vsel %vm6868, %v7708, 0
    %v8219 = vsel %vm6868, %v7709, 0
    %v8222 = vsel %vm6868, %v7710, 0
    %v8225 = vsel %vm6868, %v7711, 0
    %v8228 = vsel %vm6868, %v7712, 0
    %v8231 = vsel %vm6868, %v7713, 0
    %v8234 = vsel %vm6868, %v7714, 0
    %v8237 = vsel %vm6868, %v7715, 0
    %v8240 = vsel %vm6868, %v7716, 0
    %v8243 = vsel %vm6868, %v7717, 0
    %v8246 = vsel %vm6868, %v7718, 0
    %v8249 = vsel %vm6868, %v7719, 0
    %v8252 = vsel %vm6868, %v7720, 0
    %v8255 = vsel %vm6868, %v7721, 0
    %v8258 = vsel %vm6868, %v7722, 0
    %v8261 = vsel %vm6868, %v7723, 0
    %v8264 = vsel %vm6868, %v7724, 0
    %v8267 = vsel %vm6868, %v7725, 0
    %v8270 = vsel %vm6868, %v7726, 0
    %v8273 = vsel %vm6868, %v7727, 0
    %v8276 = vsel %vm6868, %v7728, 0
    %v8279 = vsel %vm6868, %v7729, 0
    %v8282 = vsel %vm6868, %v7730, 0
    %v8285 = vsel %vm6868, %v7731, 0
    %v8288 = vsel %vm6868, %v7732, 0
    %v8291 = vsel %vm6868, %v7733, 0
    %v8294 = vsel %vm6868, %v7734, 0
    %v8297 = vsel %vm6868, %v7735, 0
    %v8300 = vsel %vm6868, %v7736, 0
    %v8303 = vsel %vm6868, %v7737, 0
    %v8306 = vsel %vm6868, %v7738, 0
    %v8309 = vsel %vm6868, %v7739, 0
    %v8312 = vsel %vm6868, %v7740, 0
    %v8315 = vsel %vm6868, %v7741, 0
    %v8318 = vsel %vm6868, %v7742, 0
    %v8321 = vsel %vm6868, %v7743, 0
    %v8324 = vsel %vm6868, %v7744, 0
    %v8327 = vsel %vm6868, %v7745, 0
    %v8330 = vsel %vm6868, %v7746, 0
    %v8333 = vsel %vm6868, %v7747, 0
    %v8336 = vsel %vm6868, %v7748, 0
    %v8339 = vsel %vm6868, %v7749, 0
    %v8342 = vsel %vm6868, %v7750, 0
    %v8345 = vsel %vm6868, %v7751, 0
    %v8348 = vsel %vm6868, %v7752, 0
    %v8351 = vsel %vm6868, %v7753, 0
    %8353 = vmatprep.subr.mxu0 0.0
    %8354 = vmatpush1.xpose.msra.mxu0 %v8162
    %8355 = vmatprep.subr.mxu0 0.0
    %8356 = vmatpush1.xpose.msra.mxu0 %v8165
    %8357 = vmatprep.subr.mxu0 0.0
    %8358 = vmatpush1.xpose.msra.mxu0 %v8168
    %8359 = vmatprep.subr.mxu0 0.0
    %8360 = vmatpush1.xpose.msra.mxu0 %v8171
    %8361 = vmatprep.subr.mxu0 0.0
    %8362 = vmatpush1.xpose.msra.mxu0 %v8174
    %8363 = vmatprep.subr.mxu0 0.0
    %8364 = vmatpush1.xpose.msra.mxu0 %v8177
    %8365 = vmatprep.subr.mxu0 0.0
    %8366 = vmatpush1.xpose.msra.mxu0 %v8180
    %8367 = vmatprep.subr.mxu0 0.0
    %8368 = vmatpush1.xpose.msra.mxu0 %v8183
    %8369 = vmatprep.subr.mxu0 0.0
    %8370 = vmatpush1.xpose.msra.mxu0 %v8186
    %8371 = vmatprep.subr.mxu0 0.0
    %8372 = vmatpush1.xpose.msra.mxu0 %v8189
    %8373 = vmatprep.subr.mxu0 0.0
    %8374 = vmatpush1.xpose.msra.mxu0 %v8192
    %8375 = vmatprep.subr.mxu0 0.0
    %8376 = vmatpush1.xpose.msra.mxu0 %v8195
    %8377 = vmatprep.subr.mxu0 0.0
    %8378 = vmatpush1.xpose.msra.mxu0 %v8198
    %8379 = vmatprep.subr.mxu0 0.0
    %8380 = vmatpush1.xpose.msra.mxu0 %v8201
    %8381 = vmatprep.subr.mxu0 0.0
    %8382 = vmatpush1.xpose.msra.mxu0 %v8204
    %8383 = vmatprep.subr.mxu0 0.0
    %8384 = vmatpush1.xpose.msra.mxu0 %v8207
    %8385 = vmatprep.subr.mxu0 0.0
    %8386 = vmatpush1.xpose.msra.mxu0 %v8210
    %8387 = vmatprep.subr.mxu0 0.0
    %8388 = vmatpush1.xpose.msra.mxu0 %v8213
    %8389 = vmatprep.subr.mxu0 0.0
    %8390 = vmatpush1.xpose.msra.mxu0 %v8216
    %8391 = vmatprep.subr.mxu0 0.0
    %8392 = vmatpush1.xpose.msra.mxu0 %v8219
    %8393 = vmatprep.subr.mxu0 0.0
    %8394 = vmatpush1.xpose.msra.mxu0 %v8222
    %8395 = vmatprep.subr.mxu0 0.0
    %8396 = vmatpush1.xpose.msra.mxu0 %v8225
    %8397 = vmatprep.subr.mxu0 0.0
    %8398 = vmatpush1.xpose.msra.mxu0 %v8228
    %8399 = vmatprep.subr.mxu0 0.0
    %8400 = vmatpush1.xpose.msra.mxu0 %v8231
    %8401 = vmatprep.subr.mxu0 0.0
    %8402 = vmatpush1.xpose.msra.mxu0 %v8234
    %8403 = vmatprep.subr.mxu0 0.0
    %8404 = vmatpush1.xpose.msra.mxu0 %v8237
    %8405 = vmatprep.subr.mxu0 0.0
    %8406 = vmatpush1.xpose.msra.mxu0 %v8240
    %8407 = vmatprep.subr.mxu0 0.0
    %8408 = vmatpush1.xpose.msra.mxu0 %v8243
    %8409 = vmatprep.subr.mxu0 0.0
    %8410 = vmatpush1.xpose.msra.mxu0 %v8246
    %8411 = vmatprep.subr.mxu0 0.0
    %8412 = vmatpush1.xpose.msra.mxu0 %v8249
    %8413 = vmatprep.subr.mxu0 0.0
    %8414 = vmatpush1.xpose.msra.mxu0 %v8252
    %8415 = vmatprep.subr.mxu0 0.0
    %8416 = vmatpush1.xpose.msra.mxu0 %v8255
    %8417 = vmatprep.mubr.f32.mxu0 0.0
    %8418 = vmatmul.mubr.f32.gmra.mrb[0].mxu0 %v8159
    %v8419 = vpop.f32.mrb[0].mxu0
    %v8420 = vadd.f32 %v8083, %v8419
    %v8421 = vpop.f32.mrb[0].mxu0
    %v8422 = vadd.f32 %v8085, %v8421
    %8423 = vdwg.mxu0
    %8424 = vmatprep.subr.mxu0 0.0
    %8425 = vmatpush1.xpose.msra.mxu0 %v8258
    %8426 = vmatprep.subr.mxu0 0.0
    %8427 = vmatpush1.xpose.msra.mxu0 %v8261
    %8428 = vmatprep.subr.mxu0 0.0
    %8429 = vmatpush1.xpose.msra.mxu0 %v8264
    %8430 = vmatprep.subr.mxu0 0.0
    %8431 = vmatpush1.xpose.msra.mxu0 %v8267
    %8432 = vmatprep.subr.mxu0 0.0
    %8433 = vmatpush1.xpose.msra.mxu0 %v8270
    %8434 = vmatprep.subr.mxu0 0.0
    %8435 = vmatpush1.xpose.msra.mxu0 %v8273
    %8436 = vmatprep.subr.mxu0 0.0
    %8437 = vmatpush1.xpose.msra.mxu0 %v8276
    %8438 = vmatprep.subr.mxu0 0.0
    %8439 = vmatpush1.xpose.msra.mxu0 %v8279
    %8440 = vmatprep.subr.mxu0 0.0
    %8441 = vmatpush1.xpose.msra.mxu0 %v8282
    %8442 = vmatprep.subr.mxu0 0.0
    %8443 = vmatpush1.xpose.msra.mxu0 %v8285
    %8444 = vmatprep.subr.mxu0 0.0
    %8445 = vmatpush1.xpose.msra.mxu0 %v8288
    %8446 = vmatprep.subr.mxu0 0.0
    %8447 = vmatpush1.xpose.msra.mxu0 %v8291
    %8448 = vmatprep.subr.mxu0 0.0
    %8449 = vmatpush1.xpose.msra.mxu0 %v8294
    %8450 = vmatprep.subr.mxu0 0.0
    %8451 = vmatpush1.xpose.msra.mxu0 %v8297
    %8452 = vmatprep.subr.mxu0 0.0
    %8453 = vmatpush1.xpose.msra.mxu0 %v8300
    %8454 = vmatprep.subr.mxu0 0.0
    %8455 = vmatpush1.xpose.msra.mxu0 %v8303
    %8456 = vmatprep.subr.mxu0 0.0
    %8457 = vmatpush1.xpose.msra.mxu0 %v8306
    %8458 = vmatprep.subr.mxu0 0.0
    %8459 = vmatpush1.xpose.msra.mxu0 %v8309
    %8460 = vmatprep.subr.mxu0 0.0
    %8461 = vmatpush1.xpose.msra.mxu0 %v8312
    %8462 = vmatprep.subr.mxu0 0.0
    %8463 = vmatpush1.xpose.msra.mxu0 %v8315
    %8464 = vmatprep.subr.mxu0 0.0
    %8465 = vmatpush1.xpose.msra.mxu0 %v8318
    %8466 = vmatprep.subr.mxu0 0.0
    %8467 = vmatpush1.xpose.msra.mxu0 %v8321
    %8468 = vmatprep.subr.mxu0 0.0
    %8469 = vmatpush1.xpose.msra.mxu0 %v8324
    %8470 = vmatprep.subr.mxu0 0.0
    %8471 = vmatpush1.xpose.msra.mxu0 %v8327
    %8472 = vmatprep.subr.mxu0 0.0
    %8473 = vmatpush1.xpose.msra.mxu0 %v8330
    %8474 = vmatprep.subr.mxu0 0.0
    %8475 = vmatpush1.xpose.msra.mxu0 %v8333
    %8476 = vmatprep.subr.mxu0 0.0
    %8477 = vmatpush1.xpose.msra.mxu0 %v8336
    %8478 = vmatprep.subr.mxu0 0.0
    %8479 = vmatpush1.xpose.msra.mxu0 %v8339
    %8480 = vmatprep.subr.mxu0 0.0
    %8481 = vmatpush1.xpose.msra.mxu0 %v8342
    %8482 = vmatprep.subr.mxu0 0.0
    %8483 = vmatpush1.xpose.msra.mxu0 %v8345
    %8484 = vmatprep.subr.mxu0 0.0
    %8485 = vmatpush1.xpose.msra.mxu0 %v8348
    %8486 = vmatprep.subr.mxu0 0.0
    %8487 = vmatpush1.xpose.msra.mxu0 %v8351
    %8488 = vmatprep.mubr.f32.mxu0 0.0
    %8489 = vmatmul.mubr.f32.gmra.mrb[0].mxu0 %v8159
    %v8490 = vpop.f32.mrb[0].mxu0
    %v8491 = vadd.f32 %v8154, %v8490
    %v8492 = vpop.f32.mrb[0].mxu0
    %v8493 = vadd.f32 %v8156, %v8492
    %8494 = vdwg.mxu0
    %v8495 = vld [vmem:[#allocation2 + $0x2] sm:$0xff]
    %v8496 = vld [vmem:[#allocation2 + $0xa] sm:$0xff]
    %v8497 = vld [vmem:[#allocation2 + $0x1a] sm:$0xff]
    %v8498 = vld [vmem:[#allocation2 + $0x22] sm:$0xff]
    %v8499 = vld [vmem:[#allocation2 + $0x32] sm:$0xff]
    %v8500 = vld [vmem:[#allocation2 + $0x3a] sm:$0xff]
    %v8501 = vld [vmem:[#allocation2 + $0x4a] sm:$0xff]
    %v8502 = vld [vmem:[#allocation2 + $0x52] sm:$0xff]
    %v8503 = vld [vmem:[#allocation2 + $0x62] sm:$0xff]
    %v8504 = vld [vmem:[#allocation2 + $0x6a] sm:$0xff]
    %v8505 = vld [vmem:[#allocation2 + $0x7a] sm:$0xff]
    %v8506 = vld [vmem:[#allocation2 + $0x82] sm:$0xff]
    %v8507 = vld [vmem:[#allocation2 + $0x92] sm:$0xff]
    %v8508 = vld [vmem:[#allocation2 + $0x9a] sm:$0xff]
    %v8509 = vld [vmem:[#allocation2 + $0xaa] sm:$0xff]
    %v8510 = vld [vmem:[#allocation2 + $0xb2] sm:$0xff]
    %v8511 = vld [vmem:[#allocation2 + $0xc2] sm:$0xff]
    %v8512 = vld [vmem:[#allocation2 + $0xca] sm:$0xff]
    %v8513 = vld [vmem:[#allocation2 + $0xda] sm:$0xff]
    %v8514 = vld [vmem:[#allocation2 + $0xe2] sm:$0xff]
    %v8515 = vld [vmem:[#allocation2 + $0xf2] sm:$0xff]
    %v8516 = vld [vmem:[#allocation2 + $0xfa] sm:$0xff]
    %v8517 = vld [vmem:[#allocation2 + $0x10a] sm:$0xff]
    %v8518 = vld [vmem:[#allocation2 + $0x112] sm:$0xff]
    %v8519 = vld [vmem:[#allocation2 + $0x122] sm:$0xff]
    %v8520 = vld [vmem:[#allocation2 + $0x12a] sm:$0xff]
    %v8521 = vld [vmem:[#allocation2 + $0x13a] sm:$0xff]
    %v8522 = vld [vmem:[#allocation2 + $0x142] sm:$0xff]
    %v8523 = vld [vmem:[#allocation2 + $0x152] sm:$0xff]
    %v8524 = vld [vmem:[#allocation2 + $0x15a] sm:$0xff]
    %v8525 = vld [vmem:[#allocation2 + $0x16a] sm:$0xff]
    %v8526 = vld [vmem:[#allocation2 + $0x172] sm:$0xff]
    %v8527 = vld [vmem:[#allocation2 + $0x1b2] sm:$0xff]
    %v8528 = vld [vmem:[#allocation2 + $0x1ba] sm:$0xff]
    %v8529 = vld [vmem:[#allocation2 + $0x1ca] sm:$0xff]
    %v8530 = vld [vmem:[#allocation2 + $0x1d2] sm:$0xff]
    %v8531 = vld [vmem:[#allocation2 + $0x1e2] sm:$0xff]
    %v8532 = vld [vmem:[#allocation2 + $0x1ea] sm:$0xff]
    %v8533 = vld [vmem:[#allocation2 + $0x1fa] sm:$0xff]
    %v8534 = vld [vmem:[#allocation2 + $0x202] sm:$0xff]
    %v8535 = vld [vmem:[#allocation2 + $0x212] sm:$0xff]
    %v8536 = vld [vmem:[#allocation2 + $0x21a] sm:$0xff]
    %v8537 = vld [vmem:[#allocation2 + $0x22a] sm:$0xff]
    %v8538 = vld [vmem:[#allocation2 + $0x232] sm:$0xff]
    %v8539 = vld [vmem:[#allocation2 + $0x242] sm:$0xff]
    %v8540 = vld [vmem:[#allocation2 + $0x24a] sm:$0xff]
    %v8541 = vld [vmem:[#allocation2 + $0x25a] sm:$0xff]
    %v8542 = vld [vmem:[#allocation2 + $0x262] sm:$0xff]
    %v8543 = vld [vmem:[#allocation2 + $0x272] sm:$0xff]
    %v8544 = vld [vmem:[#allocation2 + $0x27a] sm:$0xff]
    %v8545 = vld [vmem:[#allocation2 + $0x28a] sm:$0xff]
    %v8546 = vld [vmem:[#allocation2 + $0x292] sm:$0xff]
    %v8547 = vld [vmem:[#allocation2 + $0x2a2] sm:$0xff]
    %v8548 = vld [vmem:[#allocation2 + $0x2aa] sm:$0xff]
    %v8549 = vld [vmem:[#allocation2 + $0x2ba] sm:$0xff]
    %v8550 = vld [vmem:[#allocation2 + $0x2c2] sm:$0xff]
    %v8551 = vld [vmem:[#allocation2 + $0x2d2] sm:$0xff]
    %v8552 = vld [vmem:[#allocation2 + $0x2da] sm:$0xff]
    %v8553 = vld [vmem:[#allocation2 + $0x2ea] sm:$0xff]
    %v8554 = vld [vmem:[#allocation2 + $0x2f2] sm:$0xff]
    %v8555 = vld [vmem:[#allocation2 + $0x302] sm:$0xff]
    %v8556 = vld [vmem:[#allocation2 + $0x30a] sm:$0xff]
    %v8557 = vld [vmem:[#allocation2 + $0x31a] sm:$0xff]
    %v8558 = vld [vmem:[#allocation2 + $0x322] sm:$0xff]
    %s8559 = scalar_lea.vmem %s4, 16
    %v8560 = vld [vmem:[%s8559] sm:$0xff]
    %v8562 = vsel %vm6868, %v8560, 0
    %v8565 = vsel %vm6868, %v8495, 0
    %v8568 = vsel %vm6868, %v8496, 0
    %v8571 = vsel %vm6868, %v8497, 0
    %v8574 = vsel %vm6868, %v8498, 0
    %v8577 = vsel %vm6868, %v8499, 0
    %v8580 = vsel %vm6868, %v8500, 0
    %v8583 = vsel %vm6868, %v8501, 0
    %v8586 = vsel %vm6868, %v8502, 0
    %v8589 = vsel %vm6868, %v8503, 0
    %v8592 = vsel %vm6868, %v8504, 0
    %v8595 = vsel %vm6868, %v8505, 0
    %v8598 = vsel %vm6868, %v8506, 0
    %v8601 = vsel %vm6868, %v8507, 0
    %v8604 = vsel %vm6868, %v8508, 0
    %v8607 = vsel %vm6868, %v8509, 0
    %v8610 = vsel %vm6868, %v8510, 0
    %v8613 = vsel %vm6868, %v8511, 0
    %v8616 = vsel %vm6868, %v8512, 0
    %v8619 = vsel %vm6868, %v8513, 0
    %v8622 = vsel %vm6868, %v8514, 0
    %v8625 = vsel %vm6868, %v8515, 0
    %v8628 = vsel %vm6868, %v8516, 0
    %v8631 = vsel %vm6868, %v8517, 0
    %v8634 = vsel %vm6868, %v8518, 0
    %v8637 = vsel %vm6868, %v8519, 0
    %v8640 = vsel %vm6868, %v8520, 0
    %v8643 = vsel %vm6868, %v8521, 0
    %v8646 = vsel %vm6868, %v8522, 0
    %v8649 = vsel %vm6868, %v8523, 0
    %v8652 = vsel %vm6868, %v8524, 0
    %v8655 = vsel %vm6868, %v8525, 0
    %v8658 = vsel %vm6868, %v8526, 0
    %v8661 = vsel %vm6868, %v8527, 0
    %v8664 = vsel %vm6868, %v8528, 0
    %v8667 = vsel %vm6868, %v8529, 0
    %v8670 = vsel %vm6868, %v8530, 0
    %v8673 = vsel %vm6868, %v8531, 0
    %v8676 = vsel %vm6868, %v8532, 0
    %v8679 = vsel %vm6868, %v8533, 0
    %v8682 = vsel %vm6868, %v8534, 0
    %v8685 = vsel %vm6868, %v8535, 0
    %v8688 = vsel %vm6868, %v8536, 0
    %v8691 = vsel %vm6868, %v8537, 0
    %v8694 = vsel %vm6868, %v8538, 0
    %v8697 = vsel %vm6868, %v8539, 0
    %v8700 = vsel %vm6868, %v8540, 0
    %v8703 = vsel %vm6868, %v8541, 0
    %v8706 = vsel %vm6868, %v8542, 0
    %v8709 = vsel %vm6868, %v8543, 0
    %v8712 = vsel %vm6868, %v8544, 0
    %v8715 = vsel %vm6868, %v8545, 0
    %v8718 = vsel %vm6868, %v8546, 0
    %v8721 = vsel %vm6868, %v8547, 0
    %v8724 = vsel %vm6868, %v8548, 0
    %v8727 = vsel %vm6868, %v8549, 0
    %v8730 = vsel %vm6868, %v8550, 0
    %v8733 = vsel %vm6868, %v8551, 0
    %v8736 = vsel %vm6868, %v8552, 0
    %v8739 = vsel %vm6868, %v8553, 0
    %v8742 = vsel %vm6868, %v8554, 0
    %v8745 = vsel %vm6868, %v8555, 0
    %v8748 = vsel %vm6868, %v8556, 0
    %v8751 = vsel %vm6868, %v8557, 0
    %v8754 = vsel %vm6868, %v8558, 0
    %8756 = vmatprep.subr.mxu0 0.0
    %8757 = vmatpush1.xpose.msra.mxu0 %v8565
    %8758 = vmatprep.subr.mxu0 0.0
    %8759 = vmatpush1.xpose.msra.mxu0 %v8568
    %8760 = vmatprep.subr.mxu0 0.0
    %8761 = vmatpush1.xpose.msra.mxu0 %v8571
    %8762 = vmatprep.subr.mxu0 0.0
    %8763 = vmatpush1.xpose.msra.mxu0 %v8574
    %8764 = vmatprep.subr.mxu0 0.0
    %8765 = vmatpush1.xpose.msra.mxu0 %v8577
    %8766 = vmatprep.subr.mxu0 0.0
    %8767 = vmatpush1.xpose.msra.mxu0 %v8580
    %8768 = vmatprep.subr.mxu0 0.0
    %8769 = vmatpush1.xpose.msra.mxu0 %v8583
    %8770 = vmatprep.subr.mxu0 0.0
    %8771 = vmatpush1.xpose.msra.mxu0 %v8586
    %8772 = vmatprep.subr.mxu0 0.0
    %8773 = vmatpush1.xpose.msra.mxu0 %v8589
    %8774 = vmatprep.subr.mxu0 0.0
    %8775 = vmatpush1.xpose.msra.mxu0 %v8592
    %8776 = vmatprep.subr.mxu0 0.0
    %8777 = vmatpush1.xpose.msra.mxu0 %v8595
    %8778 = vmatprep.subr.mxu0 0.0
    %8779 = vmatpush1.xpose.msra.mxu0 %v8598
    %8780 = vmatprep.subr.mxu0 0.0
    %8781 = vmatpush1.xpose.msra.mxu0 %v8601
    %8782 = vmatprep.subr.mxu0 0.0
    %8783 = vmatpush1.xpose.msra.mxu0 %v8604
    %8784 = vmatprep.subr.mxu0 0.0
    %8785 = vmatpush1.xpose.msra.mxu0 %v8607
    %8786 = vmatprep.subr.mxu0 0.0
    %8787 = vmatpush1.xpose.msra.mxu0 %v8610
    %8788 = vmatprep.subr.mxu0 0.0
    %8789 = vmatpush1.xpose.msra.mxu0 %v8613
    %8790 = vmatprep.subr.mxu0 0.0
    %8791 = vmatpush1.xpose.msra.mxu0 %v8616
    %8792 = vmatprep.subr.mxu0 0.0
    %8793 = vmatpush1.xpose.msra.mxu0 %v8619
    %8794 = vmatprep.subr.mxu0 0.0
    %8795 = vmatpush1.xpose.msra.mxu0 %v8622
    %8796 = vmatprep.subr.mxu0 0.0
    %8797 = vmatpush1.xpose.msra.mxu0 %v8625
    %8798 = vmatprep.subr.mxu0 0.0
    %8799 = vmatpush1.xpose.msra.mxu0 %v8628
    %8800 = vmatprep.subr.mxu0 0.0
    %8801 = vmatpush1.xpose.msra.mxu0 %v8631
    %8802 = vmatprep.subr.mxu0 0.0
    %8803 = vmatpush1.xpose.msra.mxu0 %v8634
    %8804 = vmatprep.subr.mxu0 0.0
    %8805 = vmatpush1.xpose.msra.mxu0 %v8637
    %8806 = vmatprep.subr.mxu0 0.0
    %8807 = vmatpush1.xpose.msra.mxu0 %v8640
    %8808 = vmatprep.subr.mxu0 0.0
    %8809 = vmatpush1.xpose.msra.mxu0 %v8643
    %8810 = vmatprep.subr.mxu0 0.0
    %8811 = vmatpush1.xpose.msra.mxu0 %v8646
    %8812 = vmatprep.subr.mxu0 0.0
    %8813 = vmatpush1.xpose.msra.mxu0 %v8649
    %8814 = vmatprep.subr.mxu0 0.0
    %8815 = vmatpush1.xpose.msra.mxu0 %v8652
    %8816 = vmatprep.subr.mxu0 0.0
    %8817 = vmatpush1.xpose.msra.mxu0 %v8655
    %8818 = vmatprep.subr.mxu0 0.0
    %8819 = vmatpush1.xpose.msra.mxu0 %v8658
    %8820 = vmatprep.mubr.f32.mxu0 0.0
    %8821 = vmatmul.mubr.f32.gmra.mrb[0].mxu0 %v8562
    %v8822 = vpop.f32.mrb[0].mxu0
    %v8823 = vadd.f32 0.0, %v8822
    %v8824 = vpop.f32.mrb[0].mxu0
    %v8825 = vadd.f32 0.0, %v8824
    %8826 = vdwg.mxu0
    %8827 = vmatprep.subr.mxu0 0.0
    %8828 = vmatpush1.xpose.msra.mxu0 %v8661
    %8829 = vmatprep.subr.mxu0 0.0
    %8830 = vmatpush1.xpose.msra.mxu0 %v8664
    %8831 = vmatprep.subr.mxu0 0.0
    %8832 = vmatpush1.xpose.msra.mxu0 %v8667
    %8833 = vmatprep.subr.mxu0 0.0
    %8834 = vmatpush1.xpose.msra.mxu0 %v8670
    %8835 = vmatprep.subr.mxu0 0.0
    %8836 = vmatpush1.xpose.msra.mxu0 %v8673
    %8837 = vmatprep.subr.mxu0 0.0
    %8838 = vmatpush1.xpose.msra.mxu0 %v8676
    %8839 = vmatprep.subr.mxu0 0.0
    %8840 = vmatpush1.xpose.msra.mxu0 %v8679
    %8841 = vmatprep.subr.mxu0 0.0
    %8842 = vmatpush1.xpose.msra.mxu0 %v8682
    %8843 = vmatprep.subr.mxu0 0.0
    %8844 = vmatpush1.xpose.msra.mxu0 %v8685
    %8845 = vmatprep.subr.mxu0 0.0
    %8846 = vmatpush1.xpose.msra.mxu0 %v8688
    %8847 = vmatprep.subr.mxu0 0.0
    %8848 = vmatpush1.xpose.msra.mxu0 %v8691
    %8849 = vmatprep.subr.mxu0 0.0
    %8850 = vmatpush1.xpose.msra.mxu0 %v8694
    %8851 = vmatprep.subr.mxu0 0.0
    %8852 = vmatpush1.xpose.msra.mxu0 %v8697
    %8853 = vmatprep.subr.mxu0 0.0
    %8854 = vmatpush1.xpose.msra.mxu0 %v8700
    %8855 = vmatprep.subr.mxu0 0.0
    %8856 = vmatpush1.xpose.msra.mxu0 %v8703
    %8857 = vmatprep.subr.mxu0 0.0
    %8858 = vmatpush1.xpose.msra.mxu0 %v8706
    %8859 = vmatprep.subr.mxu0 0.0
    %8860 = vmatpush1.xpose.msra.mxu0 %v8709
    %8861 = vmatprep.subr.mxu0 0.0
    %8862 = vmatpush1.xpose.msra.mxu0 %v8712
    %8863 = vmatprep.subr.mxu0 0.0
    %8864 = vmatpush1.xpose.msra.mxu0 %v8715
    %8865 = vmatprep.subr.mxu0 0.0
    %8866 = vmatpush1.xpose.msra.mxu0 %v8718
    %8867 = vmatprep.subr.mxu0 0.0
    %8868 = vmatpush1.xpose.msra.mxu0 %v8721
    %8869 = vmatprep.subr.mxu0 0.0
    %8870 = vmatpush1.xpose.msra.mxu0 %v8724
    %8871 = vmatprep.subr.mxu0 0.0
    %8872 = vmatpush1.xpose.msra.mxu0 %v8727
    %8873 = vmatprep.subr.mxu0 0.0
    %8874 = vmatpush1.xpose.msra.mxu0 %v8730
    %8875 = vmatprep.subr.mxu0 0.0
    %8876 = vmatpush1.xpose.msra.mxu0 %v8733
    %8877 = vmatprep.subr.mxu0 0.0
    %8878 = vmatpush1.xpose.msra.mxu0 %v8736
    %8879 = vmatprep.subr.mxu0 0.0
    %8880 = vmatpush1.xpose.msra.mxu0 %v8739
    %8881 = vmatprep.subr.mxu0 0.0
    %8882 = vmatpush1.xpose.msra.mxu0 %v8742
    %8883 = vmatprep.subr.mxu0 0.0
    %8884 = vmatpush1.xpose.msra.mxu0 %v8745
    %8885 = vmatprep.subr.mxu0 0.0
    %8886 = vmatpush1.xpose.msra.mxu0 %v8748
    %8887 = vmatprep.subr.mxu0 0.0
    %8888 = vmatpush1.xpose.msra.mxu0 %v8751
    %8889 = vmatprep.subr.mxu0 0.0
    %8890 = vmatpush1.xpose.msra.mxu0 %v8754
    %8891 = vmatprep.mubr.f32.mxu0 0.0
    %8892 = vmatmul.mubr.f32.gmra.mrb[0].mxu0 %v8562
    %v8893 = vpop.f32.mrb[0].mxu0
    %v8894 = vadd.f32 0.0, %v8893
    %v8895 = vpop.f32.mrb[0].mxu0
    %v8896 = vadd.f32 0.0, %v8895
    %8897 = vdwg.mxu0
    %v8898 = vadd.f32 %v8420, %v8823
    %v8899 = vadd.f32 %v8422, %v8825
    %v8900 = vadd.f32 %v8491, %v8894
    %v8901 = vadd.f32 %v8493, %v8896
    %v8902 = vld [vmem:[%s7625] sm:$0xff]
    %v8903 = vld [vmem:[%s7625 + $0x8] sm:$0xff]
    %v8904 = vld [vmem:[%s7625 + $0x18] sm:$0xff]
    %v8905 = vld [vmem:[%s7625 + $0x20] sm:$0xff]
    %v8906 = vld [vmem:[%s7625 + $0x30] sm:$0xff]
    %v8907 = vld [vmem:[%s7625 + $0x38] sm:$0xff]
    %v8908 = vld [vmem:[%s7625 + $0x48] sm:$0xff]
    %v8909 = vld [vmem:[%s7625 + $0x50] sm:$0xff]
    %v8910 = vld [vmem:[%s7625 + $0x60] sm:$0xff]
    %v8911 = vld [vmem:[%s7625 + $0x68] sm:$0xff]
    %v8912 = vld [vmem:[%s7625 + $0x78] sm:$0xff]
    %v8913 = vld [vmem:[%s7625 + $0x80] sm:$0xff]
    %v8914 = vld [vmem:[%s7625 + $0x90] sm:$0xff]
    %v8915 = vld [vmem:[%s7625 + $0x98] sm:$0xff]
    %v8916 = vld [vmem:[%s7625 + $0xa8] sm:$0xff]
    %v8917 = vld [vmem:[%s7625 + $0xb0] sm:$0xff]
    %v8918 = vld [vmem:[%s7625 + $0xc0] sm:$0xff]
    %v8919 = vld [vmem:[%s7625 + $0xc8] sm:$0xff]
    %v8920 = vld [vmem:[%s7625 + $0xd8] sm:$0xff]
    %v8921 = vld [vmem:[%s7625 + $0xe0] sm:$0xff]
    %v8922 = vld [vmem:[%s7625 + $0xf0] sm:$0xff]
    %v8923 = vld [vmem:[%s7625 + $0xf8] sm:$0xff]
    %v8924 = vld [vmem:[%s7625 + $0x108] sm:$0xff]
    %v8925 = vld [vmem:[%s7625 + $0x110] sm:$0xff]
    %v8926 = vld [vmem:[%s7625 + $0x120] sm:$0xff]
    %v8927 = vld [vmem:[%s7625 + $0x128] sm:$0xff]
    %v8928 = vld [vmem:[%s7625 + $0x138] sm:$0xff]
    %v8929 = vld [vmem:[%s7625 + $0x140] sm:$0xff]
    %v8930 = vld [vmem:[%s7625 + $0x150] sm:$0xff]
    %v8931 = vld [vmem:[%s7625 + $0x158] sm:$0xff]
    %v8932 = vld [vmem:[%s7625 + $0x168] sm:$0xff]
    %v8933 = vld [vmem:[%s7625 + $0x170] sm:$0xff]
    %v8934 = vld [vmem:[%s7625 + $0x1b0] sm:$0xff]
    %v8935 = vld [vmem:[%s7625 + $0x1b8] sm:$0xff]
    %v8936 = vld [vmem:[%s7625 + $0x1c8] sm:$0xff]
    %v8937 = vld [vmem:[%s7625 + $0x1d0] sm:$0xff]
    %v8938 = vld [vmem:[%s7625 + $0x1e0] sm:$0xff]
    %v8939 = vld [vmem:[%s7625 + $0x1e8] sm:$0xff]
    %v8940 = vld [vmem:[%s7625 + $0x1f8] sm:$0xff]
    %v8941 = vld [vmem:[%s7625 + $0x200] sm:$0xff]
    %v8942 = vld [vmem:[%s7625 + $0x210] sm:$0xff]
    %v8943 = vld [vmem:[%s7625 + $0x218] sm:$0xff]
    %v8944 = vld [vmem:[%s7625 + $0x228] sm:$0xff]
    %v8945 = vld [vmem:[%s7625 + $0x230] sm:$0xff]
    %v8946 = vld [vmem:[%s7625 + $0x240] sm:$0xff]
    %v8947 = vld [vmem:[%s7625 + $0x248] sm:$0xff]
    %v8948 = vld [vmem:[%s7625 + $0x258] sm:$0xff]
    %v8949 = vld [vmem:[%s7625 + $0x260] sm:$0xff]
    %v8950 = vld [vmem:[%s7625 + $0x270] sm:$0xff]
    %v8951 = vld [vmem:[%s7625 + $0x278] sm:$0xff]
    %v8952 = vld [vmem:[%s7625 + $0x288] sm:$0xff]
    %v8953 = vld [vmem:[%s7625 + $0x290] sm:$0xff]
    %v8954 = vld [vmem:[%s7625 + $0x2a0] sm:$0xff]
    %v8955 = vld [vmem:[%s7625 + $0x2a8] sm:$0xff]
    %v8956 = vld [vmem:[%s7625 + $0x2b8] sm:$0xff]
    %v8957 = vld [vmem:[%s7625 + $0x2c0] sm:$0xff]
    %v8958 = vld [vmem:[%s7625 + $0x2d0] sm:$0xff]
    %v8959 = vld [vmem:[%s7625 + $0x2d8] sm:$0xff]
    %v8960 = vld [vmem:[%s7625 + $0x2e8] sm:$0xff]
    %v8961 = vld [vmem:[%s7625 + $0x2f0] sm:$0xff]
    %v8962 = vld [vmem:[%s7625 + $0x300] sm:$0xff]
    %v8963 = vld [vmem:[%s7625 + $0x308] sm:$0xff]
    %v8964 = vld [vmem:[%s7625 + $0x318] sm:$0xff]
    %v8965 = vld [vmem:[%s7625 + $0x320] sm:$0xff]
    %s8966 = scalar_lea.vmem %s4, 24
    %v8967 = vld [vmem:[%s8966] sm:$0xff]
    %v8969 = vsel %vm6868, %v8967, 0
    %v8972 = vsel %vm6868, %v8902, 0
    %v8975 = vsel %vm6868, %v8903, 0
    %v8978 = vsel %vm6868, %v8904, 0
    %v8981 = vsel %vm6868, %v8905, 0
    %v8984 = vsel %vm6868, %v8906, 0
    %v8987 = vsel %vm6868, %v8907, 0
    %v8990 = vsel %vm6868, %v8908, 0
    %v8993 = vsel %vm6868, %v8909, 0
    %v8996 = vsel %vm6868, %v8910, 0
    %v8999 = vsel %vm6868, %v8911, 0
    %v9002 = vsel %vm6868, %v8912, 0
    %v9005 = vsel %vm6868, %v8913, 0
    %v9008 = vsel %vm6868, %v8914, 0
    %v9011 = vsel %vm6868, %v8915, 0
    %v9014 = vsel %vm6868, %v8916, 0
    %v9017 = vsel %vm6868, %v8917, 0
    %v9020 = vsel %vm6868, %v8918, 0
    %v9023 = vsel %vm6868, %v8919, 0
    %v9026 = vsel %vm6868, %v8920, 0
    %v9029 = vsel %vm6868, %v8921, 0
    %v9032 = vsel %vm6868, %v8922, 0
    %v9035 = vsel %vm6868, %v8923, 0
    %v9038 = vsel %vm6868, %v8924, 0
    %v9041 = vsel %vm6868, %v8925, 0
    %v9044 = vsel %vm6868, %v8926, 0
    %v9047 = vsel %vm6868, %v8927, 0
    %v9050 = vsel %vm6868, %v8928, 0
    %v9053 = vsel %vm6868, %v8929, 0
    %v9056 = vsel %vm6868, %v8930, 0
    %v9059 = vsel %vm6868, %v8931, 0
    %v9062 = vsel %vm6868, %v8932, 0
    %v9065 = vsel %vm6868, %v8933, 0
    %v9068 = vsel %vm6868, %v8934, 0
    %v9071 = vsel %vm6868, %v8935, 0
    %v9074 = vsel %vm6868, %v8936, 0
    %v9077 = vsel %vm6868, %v8937, 0
    %v9080 = vsel %vm6868, %v8938, 0
    %v9083 = vsel %vm6868, %v8939, 0
    %v9086 = vsel %vm6868, %v8940, 0
    %v9089 = vsel %vm6868, %v8941, 0
    %v9092 = vsel %vm6868, %v8942, 0
    %v9095 = vsel %vm6868, %v8943, 0
    %v9098 = vsel %vm6868, %v8944, 0
    %v9101 = vsel %vm6868, %v8945, 0
    %v9104 = vsel %vm6868, %v8946, 0
    %v9107 = vsel %vm6868, %v8947, 0
    %v9110 = vsel %vm6868, %v8948, 0
    %v9113 = vsel %vm6868, %v8949, 0
    %v9116 = vsel %vm6868, %v8950, 0
    %v9119 = vsel %vm6868, %v8951, 0
    %v9122 = vsel %vm6868, %v8952, 0
    %v9125 = vsel %vm6868, %v8953, 0
    %v9128 = vsel %vm6868, %v8954, 0
    %v9131 = vsel %vm6868, %v8955, 0
    %v9134 = vsel %vm6868, %v8956, 0
    %v9137 = vsel %vm6868, %v8957, 0
    %v9140 = vsel %vm6868, %v8958, 0
    %v9143 = vsel %vm6868, %v8959, 0
    %v9146 = vsel %vm6868, %v8960, 0
    %v9149 = vsel %vm6868, %v8961, 0
    %v9152 = vsel %vm6868, %v8962, 0
    %v9155 = vsel %vm6868, %v8963, 0
    %v9158 = vsel %vm6868, %v8964, 0
    %v9161 = vsel %vm6868, %v8965, 0
    %9163 = vmatprep.subr.mxu0 0.0
    %9164 = vmatpush1.xpose.msra.mxu0 %v8972
    %9165 = vmatprep.subr.mxu0 0.0
    %9166 = vmatpush1.xpose.msra.mxu0 %v8975
    %9167 = vmatprep.subr.mxu0 0.0
    %9168 = vmatpush1.xpose.msra.mxu0 %v8978
    %9169 = vmatprep.subr.mxu0 0.0
    %9170 = vmatpush1.xpose.msra.mxu0 %v8981
    %9171 = vmatprep.subr.mxu0 0.0
    %9172 = vmatpush1.xpose.msra.mxu0 %v8984
    %9173 = vmatprep.subr.mxu0 0.0
    %9174 = vmatpush1.xpose.msra.mxu0 %v8987
    %9175 = vmatprep.subr.mxu0 0.0
    %9176 = vmatpush1.xpose.msra.mxu0 %v8990
    %9177 = vmatprep.subr.mxu0 0.0
    %9178 = vmatpush1.xpose.msra.mxu0 %v8993
    %9179 = vmatprep.subr.mxu0 0.0
    %9180 = vmatpush1.xpose.msra.mxu0 %v8996
    %9181 = vmatprep.subr.mxu0 0.0
    %9182 = vmatpush1.xpose.msra.mxu0 %v8999
    %9183 = vmatprep.subr.mxu0 0.0
    %9184 = vmatpush1.xpose.msra.mxu0 %v9002
    %9185 = vmatprep.subr.mxu0 0.0
    %9186 = vmatpush1.xpose.msra.mxu0 %v9005
    %9187 = vmatprep.subr.mxu0 0.0
    %9188 = vmatpush1.xpose.msra.mxu0 %v9008
    %9189 = vmatprep.subr.mxu0 0.0
    %9190 = vmatpush1.xpose.msra.mxu0 %v9011
    %9191 = vmatprep.subr.mxu0 0.0
    %9192 = vmatpush1.xpose.msra.mxu0 %v9014
    %9193 = vmatprep.subr.mxu0 0.0
    %9194 = vmatpush1.xpose.msra.mxu0 %v9017
    %9195 = vmatprep.subr.mxu0 0.0
    %9196 = vmatpush1.xpose.msra.mxu0 %v9020
    %9197 = vmatprep.subr.mxu0 0.0
    %9198 = vmatpush1.xpose.msra.mxu0 %v9023
    %9199 = vmatprep.subr.mxu0 0.0
    %9200 = vmatpush1.xpose.msra.mxu0 %v9026
    %9201 = vmatprep.subr.mxu0 0.0
    %9202 = vmatpush1.xpose.msra.mxu0 %v9029
    %9203 = vmatprep.subr.mxu0 0.0
    %9204 = vmatpush1.xpose.msra.mxu0 %v9032
    %9205 = vmatprep.subr.mxu0 0.0
    %9206 = vmatpush1.xpose.msra.mxu0 %v9035
    %9207 = vmatprep.subr.mxu0 0.0
    %9208 = vmatpush1.xpose.msra.mxu0 %v9038
    %9209 = vmatprep.subr.mxu0 0.0
    %9210 = vmatpush1.xpose.msra.mxu0 %v9041
    %9211 = vmatprep.subr.mxu0 0.0
    %9212 = vmatpush1.xpose.msra.mxu0 %v9044
    %9213 = vmatprep.subr.mxu0 0.0
    %9214 = vmatpush1.xpose.msra.mxu0 %v9047
    %9215 = vmatprep.subr.mxu0 0.0
    %9216 = vmatpush1.xpose.msra.mxu0 %v9050
    %9217 = vmatprep.subr.mxu0 0.0
    %9218 = vmatpush1.xpose.msra.mxu0 %v9053
    %9219 = vmatprep.subr.mxu0 0.0
    %9220 = vmatpush1.xpose.msra.mxu0 %v9056
    %9221 = vmatprep.subr.mxu0 0.0
    %9222 = vmatpush1.xpose.msra.mxu0 %v9059
    %9223 = vmatprep.subr.mxu0 0.0
    %9224 = vmatpush1.xpose.msra.mxu0 %v9062
    %9225 = vmatprep.subr.mxu0 0.0
    %9226 = vmatpush1.xpose.msra.mxu0 %v9065
    %9227 = vmatprep.mubr.f32.mxu0 0.0
    %9228 = vmatmul.mubr.f32.gmra.mrb[0].mxu0 %v8969
    %v9229 = vpop.f32.mrb[0].mxu0
    %v9230 = vadd.f32 0.0, %v9229
    %v9231 = vpop.f32.mrb[0].mxu0
    %v9232 = vadd.f32 0.0, %v9231
    %9233 = vdwg.mxu0
    %9234 = vmatprep.subr.mxu0 0.0
    %9235 = vmatpush1.xpose.msra.mxu0 %v9068
    %9236 = vmatprep.subr.mxu0 0.0
    %9237 = vmatpush1.xpose.msra.mxu0 %v9071
    %9238 = vmatprep.subr.mxu0 0.0
    %9239 = vmatpush1.xpose.msra.mxu0 %v9074
    %9240 = vmatprep.subr.mxu0 0.0
    %9241 = vmatpush1.xpose.msra.mxu0 %v9077
    %9242 = vmatprep.subr.mxu0 0.0
    %9243 = vmatpush1.xpose.msra.mxu0 %v9080
    %9244 = vmatprep.subr.mxu0 0.0
    %9245 = vmatpush1.xpose.msra.mxu0 %v9083
    %9246 = vmatprep.subr.mxu0 0.0
    %9247 = vmatpush1.xpose.msra.mxu0 %v9086
    %9248 = vmatprep.subr.mxu0 0.0
    %9249 = vmatpush1.xpose.msra.mxu0 %v9089
    %9250 = vmatprep.subr.mxu0 0.0
    %9251 = vmatpush1.xpose.msra.mxu0 %v9092
    %9252 = vmatprep.subr.mxu0 0.0
    %9253 = vmatpush1.xpose.msra.mxu0 %v9095
    %9254 = vmatprep.subr.mxu0 0.0
    %9255 = vmatpush1.xpose.msra.mxu0 %v9098
    %9256 = vmatprep.subr.mxu0 0.0
    %9257 = vmatpush1.xpose.msra.mxu0 %v9101
    %9258 = vmatprep.subr.mxu0 0.0
    %9259 = vmatpush1.xpose.msra.mxu0 %v9104
    %9260 = vmatprep.subr.mxu0 0.0
    %9261 = vmatpush1.xpose.msra.mxu0 %v9107
    %9262 = vmatprep.subr.mxu0 0.0
    %9263 = vmatpush1.xpose.msra.mxu0 %v9110
    %9264 = vmatprep.subr.mxu0 0.0
    %9265 = vmatpush1.xpose.msra.mxu0 %v9113
    %9266 = vmatprep.subr.mxu0 0.0
    %9267 = vmatpush1.xpose.msra.mxu0 %v9116
    %9268 = vmatprep.subr.mxu0 0.0
    %9269 = vmatpush1.xpose.msra.mxu0 %v9119
    %9270 = vmatprep.subr.mxu0 0.0
    %9271 = vmatpush1.xpose.msra.mxu0 %v9122
    %9272 = vmatprep.subr.mxu0 0.0
    %9273 = vmatpush1.xpose.msra.mxu0 %v9125
    %9274 = vmatprep.subr.mxu0 0.0
    %9275 = vmatpush1.xpose.msra.mxu0 %v9128
    %9276 = vmatprep.subr.mxu0 0.0
    %9277 = vmatpush1.xpose.msra.mxu0 %v9131
    %9278 = vmatprep.subr.mxu0 0.0
    %9279 = vmatpush1.xpose.msra.mxu0 %v9134
    %9280 = vmatprep.subr.mxu0 0.0
    %9281 = vmatpush1.xpose.msra.mxu0 %v9137
    %9282 = vmatprep.subr.mxu0 0.0
    %9283 = vmatpush1.xpose.msra.mxu0 %v9140
    %9284 = vmatprep.subr.mxu0 0.0
    %9285 = vmatpush1.xpose.msra.mxu0 %v9143
    %9286 = vmatprep.subr.mxu0 0.0
    %9287 = vmatpush1.xpose.msra.mxu0 %v9146
    %9288 = vmatprep.subr.mxu0 0.0
    %9289 = vmatpush1.xpose.msra.mxu0 %v9149
    %9290 = vmatprep.subr.mxu0 0.0
    %9291 = vmatpush1.xpose.msra.mxu0 %v9152
    %9292 = vmatprep.subr.mxu0 0.0
    %9293 = vmatpush1.xpose.msra.mxu0 %v9155
    %9294 = vmatprep.subr.mxu0 0.0
    %9295 = vmatpush1.xpose.msra.mxu0 %v9158
    %9296 = vmatprep.subr.mxu0 0.0
    %9297 = vmatpush1.xpose.msra.mxu0 %v9161
    %9298 = vmatprep.mubr.f32.mxu0 0.0
    %9299 = vmatmul.mubr.f32.gmra.mrb[0].mxu0 %v8969
    %v9300 = vpop.f32.mrb[0].mxu0
    %v9301 = vadd.f32 0.0, %v9300
    %v9302 = vpop.f32.mrb[0].mxu0
    %v9303 = vadd.f32 0.0, %v9302
    %9304 = vdwg.mxu0
    %v9305 = vadd.f32 %v8898, %v9230
    %v9306 = vadd.f32 %v8899, %v9232
    %v9307 = vadd.f32 %v8900, %v9301
    %v9308 = vadd.f32 %v8901, %v9303
    %v9309 = vld [vmem:[%s7625 + $0x1] sm:$0xff]
    %v9310 = vld [vmem:[%s7625 + $0x9] sm:$0xff]
    %v9311 = vld [vmem:[%s7625 + $0x19] sm:$0xff]
    %v9312 = vld [vmem:[%s7625 + $0x21] sm:$0xff]
    %v9313 = vld [vmem:[%s7625 + $0x31] sm:$0xff]
    %v9314 = vld [vmem:[%s7625 + $0x39] sm:$0xff]
    %v9315 = vld [vmem:[%s7625 + $0x49] sm:$0xff]
    %v9316 = vld [vmem:[%s7625 + $0x51] sm:$0xff]
    %v9317 = vld [vmem:[%s7625 + $0x61] sm:$0xff]
    %v9318 = vld [vmem:[%s7625 + $0x69] sm:$0xff]
    %v9319 = vld [vmem:[%s7625 + $0x79] sm:$0xff]
    %v9320 = vld [vmem:[%s7625 + $0x81] sm:$0xff]
    %v9321 = vld [vmem:[%s7625 + $0x91] sm:$0xff]
    %v9322 = vld [vmem:[%s7625 + $0x99] sm:$0xff]
    %v9323 = vld [vmem:[%s7625 + $0xa9] sm:$0xff]
    %v9324 = vld [vmem:[%s7625 + $0xb1] sm:$0xff]
    %v9325 = vld [vmem:[%s7625 + $0xc1] sm:$0xff]
    %v9326 = vld [vmem:[%s7625 + $0xc9] sm:$0xff]
    %v9327 = vld [vmem:[%s7625 + $0xd9] sm:$0xff]
    %v9328 = vld [vmem:[%s7625 + $0xe1] sm:$0xff]
    %v9329 = vld [vmem:[%s7625 + $0xf1] sm:$0xff]
    %v9330 = vld [vmem:[%s7625 + $0xf9] sm:$0xff]
    %v9331 = vld [vmem:[%s7625 + $0x109] sm:$0xff]
    %v9332 = vld [vmem:[%s7625 + $0x111] sm:$0xff]
    %v9333 = vld [vmem:[%s7625 + $0x121] sm:$0xff]
    %v9334 = vld [vmem:[%s7625 + $0x129] sm:$0xff]
    %v9335 = vld [vmem:[%s7625 + $0x139] sm:$0xff]
    %v9336 = vld [vmem:[%s7625 + $0x141] sm:$0xff]
    %v9337 = vld [vmem:[%s7625 + $0x151] sm:$0xff]
    %v9338 = vld [vmem:[%s7625 + $0x159] sm:$0xff]
    %v9339 = vld [vmem:[%s7625 + $0x169] sm:$0xff]
    %v9340 = vld [vmem:[%s7625 + $0x171] sm:$0xff]
    %v9341 = vld [vmem:[%s7625 + $0x1b1] sm:$0xff]
    %v9342 = vld [vmem:[%s7625 + $0x1b9] sm:$0xff]
    %v9343 = vld [vmem:[%s7625 + $0x1c9] sm:$0xff]
    %v9344 = vld [vmem:[%s7625 + $0x1d1] sm:$0xff]
    %v9345 = vld [vmem:[%s7625 + $0x1e1] sm:$0xff]
    %v9346 = vld [vmem:[%s7625 + $0x1e9] sm:$0xff]
    %v9347 = vld [vmem:[%s7625 + $0x1f9] sm:$0xff]
    %v9348 = vld [vmem:[%s7625 + $0x201] sm:$0xff]
    %v9349 = vld [vmem:[%s7625 + $0x211] sm:$0xff]
    %v9350 = vld [vmem:[%s7625 + $0x219] sm:$0xff]
    %v9351 = vld [vmem:[%s7625 + $0x229] sm:$0xff]
    %v9352 = vld [vmem:[%s7625 + $0x231] sm:$0xff]
    %v9353 = vld [vmem:[%s7625 + $0x241] sm:$0xff]
    %v9354 = vld [vmem:[%s7625 + $0x249] sm:$0xff]
    %v9355 = vld [vmem:[%s7625 + $0x259] sm:$0xff]
    %v9356 = vld [vmem:[%s7625 + $0x261] sm:$0xff]
    %v9357 = vld [vmem:[%s7625 + $0x271] sm:$0xff]
    %v9358 = vld [vmem:[%s7625 + $0x279] sm:$0xff]
    %v9359 = vld [vmem:[%s7625 + $0x289] sm:$0xff]
    %v9360 = vld [vmem:[%s7625 + $0x291] sm:$0xff]
    %v9361 = vld [vmem:[%s7625 + $0x2a1] sm:$0xff]
    %v9362 = vld [vmem:[%s7625 + $0x2a9] sm:$0xff]
    %v9363 = vld [vmem:[%s7625 + $0x2b9] sm:$0xff]
    %v9364 = vld [vmem:[%s7625 + $0x2c1] sm:$0xff]
    %v9365 = vld [vmem:[%s7625 + $0x2d1] sm:$0xff]
    %v9366 = vld [vmem:[%s7625 + $0x2d9] sm:$0xff]
    %v9367 = vld [vmem:[%s7625 + $0x2e9] sm:$0xff]
    %v9368 = vld [vmem:[%s7625 + $0x2f1] sm:$0xff]
    %v9369 = vld [vmem:[%s7625 + $0x301] sm:$0xff]
    %v9370 = vld [vmem:[%s7625 + $0x309] sm:$0xff]
    %v9371 = vld [vmem:[%s7625 + $0x319] sm:$0xff]
    %v9372 = vld [vmem:[%s7625 + $0x321] sm:$0xff]
    %s9373 = scalar_lea.vmem %s4, 32
    %v9374 = vld [vmem:[%s9373] sm:$0xff]
    %v9376 = vsel %vm6868, %v9374, 0
    %v9379 = vsel %vm6868, %v9309, 0
    %v9382 = vsel %vm6868, %v9310, 0
    %v9385 = vsel %vm6868, %v9311, 0
    %v9388 = vsel %vm6868, %v9312, 0
    %v9391 = vsel %vm6868, %v9313, 0
    %v9394 = vsel %vm6868, %v9314, 0
    %v9397 = vsel %vm6868, %v9315, 0
    %v9400 = vsel %vm6868, %v9316, 0
    %v9403 = vsel %vm6868, %v9317, 0
    %v9406 = vsel %vm6868, %v9318, 0
    %v9409 = vsel %vm6868, %v9319, 0
    %v9412 = vsel %vm6868, %v9320, 0
    %v9415 = vsel %vm6868, %v9321, 0
    %v9418 = vsel %vm6868, %v9322, 0
    %v9421 = vsel %vm6868, %v9323, 0
    %v9424 = vsel %vm6868, %v9324, 0
    %v9427 = vsel %vm6868, %v9325, 0
    %v9430 = vsel %vm6868, %v9326, 0
    %v9433 = vsel %vm6868, %v9327, 0
    %v9436 = vsel %vm6868, %v9328, 0
    %v9439 = vsel %vm6868, %v9329, 0
    %v9442 = vsel %vm6868, %v9330, 0
    %v9445 = vsel %vm6868, %v9331, 0
    %v9448 = vsel %vm6868, %v9332, 0
    %v9451 = vsel %vm6868, %v9333, 0
    %v9454 = vsel %vm6868, %v9334, 0
    %v9457 = vsel %vm6868, %v9335, 0
    %v9460 = vsel %vm6868, %v9336, 0
    %v9463 = vsel %vm6868, %v9337, 0
    %v9466 = vsel %vm6868, %v9338, 0
    %v9469 = vsel %vm6868, %v9339, 0
    %v9472 = vsel %vm6868, %v9340, 0
    %v9475 = vsel %vm6868, %v9341, 0
    %v9478 = vsel %vm6868, %v9342, 0
    %v9481 = vsel %vm6868, %v9343, 0
    %v9484 = vsel %vm6868, %v9344, 0
    %v9487 = vsel %vm6868, %v9345, 0
    %v9490 = vsel %vm6868, %v9346, 0
    %v9493 = vsel %vm6868, %v9347, 0
    %v9496 = vsel %vm6868, %v9348, 0
    %v9499 = vsel %vm6868, %v9349, 0
    %v9502 = vsel %vm6868, %v9350, 0
    %v9505 = vsel %vm6868, %v9351, 0
    %v9508 = vsel %vm6868, %v9352, 0
    %v9511 = vsel %vm6868, %v9353, 0
    %v9514 = vsel %vm6868, %v9354, 0
    %v9517 = vsel %vm6868, %v9355, 0
    %v9520 = vsel %vm6868, %v9356, 0
    %v9523 = vsel %vm6868, %v9357, 0
    %v9526 = vsel %vm6868, %v9358, 0
    %v9529 = vsel %vm6868, %v9359, 0
    %v9532 = vsel %vm6868, %v9360, 0
    %v9535 = vsel %vm6868, %v9361, 0
    %v9538 = vsel %vm6868, %v9362, 0
    %v9541 = vsel %vm6868, %v9363, 0
    %v9544 = vsel %vm6868, %v9364, 0
    %v9547 = vsel %vm6868, %v9365, 0
    %v9550 = vsel %vm6868, %v9366, 0
    %v9553 = vsel %vm6868, %v9367, 0
    %v9556 = vsel %vm6868, %v9368, 0
    %v9559 = vsel %vm6868, %v9369, 0
    %v9562 = vsel %vm6868, %v9370, 0
    %v9565 = vsel %vm6868, %v9371, 0
    %v9568 = vsel %vm6868, %v9372, 0
    %9570 = vmatprep.subr.mxu0 0.0
    %9571 = vmatpush1.xpose.msra.mxu0 %v9379
    %9572 = vmatprep.subr.mxu0 0.0
    %9573 = vmatpush1.xpose.msra.mxu0 %v9382
    %9574 = vmatprep.subr.mxu0 0.0
    %9575 = vmatpush1.xpose.msra.mxu0 %v9385
    %9576 = vmatprep.subr.mxu0 0.0
    %9577 = vmatpush1.xpose.msra.mxu0 %v9388
    %9578 = vmatprep.subr.mxu0 0.0
    %9579 = vmatpush1.xpose.msra.mxu0 %v9391
    %9580 = vmatprep.subr.mxu0 0.0
    %9581 = vmatpush1.xpose.msra.mxu0 %v9394
    %9582 = vmatprep.subr.mxu0 0.0
    %9583 = vmatpush1.xpose.msra.mxu0 %v9397
    %9584 = vmatprep.subr.mxu0 0.0
    %9585 = vmatpush1.xpose.msra.mxu0 %v9400
    %9586 = vmatprep.subr.mxu0 0.0
    %9587 = vmatpush1.xpose.msra.mxu0 %v9403
    %9588 = vmatprep.subr.mxu0 0.0
    %9589 = vmatpush1.xpose.msra.mxu0 %v9406
    %9590 = vmatprep.subr.mxu0 0.0
    %9591 = vmatpush1.xpose.msra.mxu0 %v9409
    %9592 = vmatprep.subr.mxu0 0.0
    %9593 = vmatpush1.xpose.msra.mxu0 %v9412
    %9594 = vmatprep.subr.mxu0 0.0
    %9595 = vmatpush1.xpose.msra.mxu0 %v9415
    %9596 = vmatprep.subr.mxu0 0.0
    %9597 = vmatpush1.xpose.msra.mxu0 %v9418
    %9598 = vmatprep.subr.mxu0 0.0
    %9599 = vmatpush1.xpose.msra.mxu0 %v9421
    %9600 = vmatprep.subr.mxu0 0.0
    %9601 = vmatpush1.xpose.msra.mxu0 %v9424
    %9602 = vmatprep.subr.mxu0 0.0
    %9603 = vmatpush1.xpose.msra.mxu0 %v9427
    %9604 = vmatprep.subr.mxu0 0.0
    %9605 = vmatpush1.xpose.msra.mxu0 %v9430
    %9606 = vmatprep.subr.mxu0 0.0
    %9607 = vmatpush1.xpose.msra.mxu0 %v9433
    %9608 = vmatprep.subr.mxu0 0.0
    %9609 = vmatpush1.xpose.msra.mxu0 %v9436
    %9610 = vmatprep.subr.mxu0 0.0
    %9611 = vmatpush1.xpose.msra.mxu0 %v9439
    %9612 = vmatprep.subr.mxu0 0.0
    %9613 = vmatpush1.xpose.msra.mxu0 %v9442
    %9614 = vmatprep.subr.mxu0 0.0
    %9615 = vmatpush1.xpose.msra.mxu0 %v9445
    %9616 = vmatprep.subr.mxu0 0.0
    %9617 = vmatpush1.xpose.msra.mxu0 %v9448
    %9618 = vmatprep.subr.mxu0 0.0
    %9619 = vmatpush1.xpose.msra.mxu0 %v9451
    %9620 = vmatprep.subr.mxu0 0.0
    %9621 = vmatpush1.xpose.msra.mxu0 %v9454
    %9622 = vmatprep.subr.mxu0 0.0
    %9623 = vmatpush1.xpose.msra.mxu0 %v9457
    %9624 = vmatprep.subr.mxu0 0.0
    %9625 = vmatpush1.xpose.msra.mxu0 %v9460
    %9626 = vmatprep.subr.mxu0 0.0
    %9627 = vmatpush1.xpose.msra.mxu0 %v9463
    %9628 = vmatprep.subr.mxu0 0.0
    %9629 = vmatpush1.xpose.msra.mxu0 %v9466
    %9630 = vmatprep.subr.mxu0 0.0
    %9631 = vmatpush1.xpose.msra.mxu0 %v9469
    %9632 = vmatprep.subr.mxu0 0.0
    %9633 = vmatpush1.xpose.msra.mxu0 %v9472
    %9634 = vmatprep.mubr.f32.mxu0 0.0
    %9635 = vmatmul.mubr.f32.gmra.mrb[0].mxu0 %v9376
    %v9636 = vpop.f32.mrb[0].mxu0
    %v9637 = vadd.f32 0.0, %v9636
    %v9638 = vpop.f32.mrb[0].mxu0
    %v9639 = vadd.f32 0.0, %v9638
    %9640 = vdwg.mxu0
    %9641 = vmatprep.subr.mxu0 0.0
    %9642 = vmatpush1.xpose.msra.mxu0 %v9475
    %9643 = vmatprep.subr.mxu0 0.0
    %9644 = vmatpush1.xpose.msra.mxu0 %v9478
    %9645 = vmatprep.subr.mxu0 0.0
    %9646 = vmatpush1.xpose.msra.mxu0 %v9481
    %9647 = vmatprep.subr.mxu0 0.0
    %9648 = vmatpush1.xpose.msra.mxu0 %v9484
    %9649 = vmatprep.subr.mxu0 0.0
    %9650 = vmatpush1.xpose.msra.mxu0 %v9487
    %9651 = vmatprep.subr.mxu0 0.0
    %9652 = vmatpush1.xpose.msra.mxu0 %v9490
    %9653 = vmatprep.subr.mxu0 0.0
    %9654 = vmatpush1.xpose.msra.mxu0 %v9493
    %9655 = vmatprep.subr.mxu0 0.0
    %9656 = vmatpush1.xpose.msra.mxu0 %v9496
    %9657 = vmatprep.subr.mxu0 0.0
    %9658 = vmatpush1.xpose.msra.mxu0 %v9499
    %9659 = vmatprep.subr.mxu0 0.0
    %9660 = vmatpush1.xpose.msra.mxu0 %v9502
    %9661 = vmatprep.subr.mxu0 0.0
    %9662 = vmatpush1.xpose.msra.mxu0 %v9505
    %9663 = vmatprep.subr.mxu0 0.0
    %9664 = vmatpush1.xpose.msra.mxu0 %v9508
    %9665 = vmatprep.subr.mxu0 0.0
    %9666 = vmatpush1.xpose.msra.mxu0 %v9511
    %9667 = vmatprep.subr.mxu0 0.0
    %9668 = vmatpush1.xpose.msra.mxu0 %v9514
    %9669 = vmatprep.subr.mxu0 0.0
    %9670 = vmatpush1.xpose.msra.mxu0 %v9517
    %9671 = vmatprep.subr.mxu0 0.0
    %9672 = vmatpush1.xpose.msra.mxu0 %v9520
    %9673 = vmatprep.subr.mxu0 0.0
    %9674 = vmatpush1.xpose.msra.mxu0 %v9523
    %9675 = vmatprep.subr.mxu0 0.0
    %9676 = vmatpush1.xpose.msra.mxu0 %v9526
    %9677 = vmatprep.subr.mxu0 0.0
    %9678 = vmatpush1.xpose.msra.mxu0 %v9529
    %9679 = vmatprep.subr.mxu0 0.0
    %9680 = vmatpush1.xpose.msra.mxu0 %v9532
    %9681 = vmatprep.subr.mxu0 0.0
    %9682 = vmatpush1.xpose.msra.mxu0 %v9535
    %9683 = vmatprep.subr.mxu0 0.0
    %9684 = vmatpush1.xpose.msra.mxu0 %v9538
    %9685 = vmatprep.subr.mxu0 0.0
    %9686 = vmatpush1.xpose.msra.mxu0 %v9541
    %9687 = vmatprep.subr.mxu0 0.0
    %9688 = vmatpush1.xpose.msra.mxu0 %v9544
    %9689 = vmatprep.subr.mxu0 0.0
    %9690 = vmatpush1.xpose.msra.mxu0 %v9547
    %9691 = vmatprep.subr.mxu0 0.0
    %9692 = vmatpush1.xpose.msra.mxu0 %v9550
    %9693 = vmatprep.subr.mxu0 0.0
    %9694 = vmatpush1.xpose.msra.mxu0 %v9553
    %9695 = vmatprep.subr.mxu0 0.0
    %9696 = vmatpush1.xpose.msra.mxu0 %v9556
    %9697 = vmatprep.subr.mxu0 0.0
    %9698 = vmatpush1.xpose.msra.mxu0 %v9559
    %9699 = vmatprep.subr.mxu0 0.0
    %9700 = vmatpush1.xpose.msra.mxu0 %v9562
    %9701 = vmatprep.subr.mxu0 0.0
    %9702 = vmatpush1.xpose.msra.mxu0 %v9565
    %9703 = vmatprep.subr.mxu0 0.0
    %9704 = vmatpush1.xpose.msra.mxu0 %v9568
    %9705 = vmatprep.mubr.f32.mxu0 0.0
    %9706 = vmatmul.mubr.f32.gmra.mrb[0].mxu0 %v9376
    %v9707 = vpop.f32.mrb[0].mxu0
    %v9708 = vadd.f32 0.0, %v9707
    %v9709 = vpop.f32.mrb[0].mxu0
    %v9710 = vadd.f32 0.0, %v9709
    %9711 = vdwg.mxu0
    %v9712 = vadd.f32 %v9305, %v9637
    %v9713 = vadd.f32 %v9306, %v9639
    %v9714 = vadd.f32 %v9307, %v9708
    %v9715 = vadd.f32 %v9308, %v9710
    %v9716 = vld [vmem:[%s7625 + $0x2] sm:$0xff]
    %v9717 = vld [vmem:[%s7625 + $0xa] sm:$0xff]
    %v9718 = vld [vmem:[%s7625 + $0x1a] sm:$0xff]
    %v9719 = vld [vmem:[%s7625 + $0x22] sm:$0xff]
    %v9720 = vld [vmem:[%s7625 + $0x32] sm:$0xff]
    %v9721 = vld [vmem:[%s7625 + $0x3a] sm:$0xff]
    %v9722 = vld [vmem:[%s7625 + $0x4a] sm:$0xff]
    %v9723 = vld [vmem:[%s7625 + $0x52] sm:$0xff]
    %v9724 = vld [vmem:[%s7625 + $0x62] sm:$0xff]
    %v9725 = vld [vmem:[%s7625 + $0x6a] sm:$0xff]
    %v9726 = vld [vmem:[%s7625 + $0x7a] sm:$0xff]
    %v9727 = vld [vmem:[%s7625 + $0x82] sm:$0xff]
    %v9728 = vld [vmem:[%s7625 + $0x92] sm:$0xff]
    %v9729 = vld [vmem:[%s7625 + $0x9a] sm:$0xff]
    %v9730 = vld [vmem:[%s7625 + $0xaa] sm:$0xff]
    %v9731 = vld [vmem:[%s7625 + $0xb2] sm:$0xff]
    %v9732 = vld [vmem:[%s7625 + $0xc2] sm:$0xff]
    %v9733 = vld [vmem:[%s7625 + $0xca] sm:$0xff]
    %v9734 = vld [vmem:[%s7625 + $0xda] sm:$0xff]
    %v9735 = vld [vmem:[%s7625 + $0xe2] sm:$0xff]
    %v9736 = vld [vmem:[%s7625 + $0xf2] sm:$0xff]
    %v9737 = vld [vmem:[%s7625 + $0xfa] sm:$0xff]
    %v9738 = vld [vmem:[%s7625 + $0x10a] sm:$0xff]
    %v9739 = vld [vmem:[%s7625 + $0x112] sm:$0xff]
    %v9740 = vld [vmem:[%s7625 + $0x122] sm:$0xff]
    %v9741 = vld [vmem:[%s7625 + $0x12a] sm:$0xff]
    %v9742 = vld [vmem:[%s7625 + $0x13a] sm:$0xff]
    %v9743 = vld [vmem:[%s7625 + $0x142] sm:$0xff]
    %v9744 = vld [vmem:[%s7625 + $0x152] sm:$0xff]
    %v9745 = vld [vmem:[%s7625 + $0x15a] sm:$0xff]
    %v9746 = vld [vmem:[%s7625 + $0x16a] sm:$0xff]
    %v9747 = vld [vmem:[%s7625 + $0x172] sm:$0xff]
    %v9748 = vld [vmem:[%s7625 + $0x1b2] sm:$0xff]
    %v9749 = vld [vmem:[%s7625 + $0x1ba] sm:$0xff]
    %v9750 = vld [vmem:[%s7625 + $0x1ca] sm:$0xff]
    %v9751 = vld [vmem:[%s7625 + $0x1d2] sm:$0xff]
    %v9752 = vld [vmem:[%s7625 + $0x1e2] sm:$0xff]
    %v9753 = vld [vmem:[%s7625 + $0x1ea] sm:$0xff]
    %v9754 = vld [vmem:[%s7625 + $0x1fa] sm:$0xff]
    %v9755 = vld [vmem:[%s7625 + $0x202] sm:$0xff]
    %v9756 = vld [vmem:[%s7625 + $0x212] sm:$0xff]
    %v9757 = vld [vmem:[%s7625 + $0x21a] sm:$0xff]
    %v9758 = vld [vmem:[%s7625 + $0x22a] sm:$0xff]
    %v9759 = vld [vmem:[%s7625 + $0x232] sm:$0xff]
    %v9760 = vld [vmem:[%s7625 + $0x242] sm:$0xff]
    %v9761 = vld [vmem:[%s7625 + $0x24a] sm:$0xff]
    %v9762 = vld [vmem:[%s7625 + $0x25a] sm:$0xff]
    %v9763 = vld [vmem:[%s7625 + $0x262] sm:$0xff]
    %v9764 = vld [vmem:[%s7625 + $0x272] sm:$0xff]
    %v9765 = vld [vmem:[%s7625 + $0x27a] sm:$0xff]
    %v9766 = vld [vmem:[%s7625 + $0x28a] sm:$0xff]
    %v9767 = vld [vmem:[%s7625 + $0x292] sm:$0xff]
    %v9768 = vld [vmem:[%s7625 + $0x2a2] sm:$0xff]
    %v9769 = vld [vmem:[%s7625 + $0x2aa] sm:$0xff]
    %v9770 = vld [vmem:[%s7625 + $0x2ba] sm:$0xff]
    %v9771 = vld [vmem:[%s7625 + $0x2c2] sm:$0xff]
    %v9772 = vld [vmem:[%s7625 + $0x2d2] sm:$0xff]
    %v9773 = vld [vmem:[%s7625 + $0x2da] sm:$0xff]
    %v9774 = vld [vmem:[%s7625 + $0x2ea] sm:$0xff]
    %v9775 = vld [vmem:[%s7625 + $0x2f2] sm:$0xff]
    %v9776 = vld [vmem:[%s7625 + $0x302] sm:$0xff]
    %v9777 = vld [vmem:[%s7625 + $0x30a] sm:$0xff]
    %v9778 = vld [vmem:[%s7625 + $0x31a] sm:$0xff]
    %v9779 = vld [vmem:[%s7625 + $0x322] sm:$0xff]
    %s9780 = scalar_lea.vmem %s4, 40
    %v9781 = vld [vmem:[%s9780] sm:$0xff]
    %v9783 = vsel %vm6868, %v9781, 0
    %v9786 = vsel %vm6868, %v9716, 0
    %v9789 = vsel %vm6868, %v9717, 0
    %v9792 = vsel %vm6868, %v9718, 0
    %v9795 = vsel %vm6868, %v9719, 0
    %v9798 = vsel %vm6868, %v9720, 0
    %v9801 = vsel %vm6868, %v9721, 0
    %v9804 = vsel %vm6868, %v9722, 0
    %v9807 = vsel %vm6868, %v9723, 0
    %v9810 = vsel %vm6868, %v9724, 0
    %v9813 = vsel %vm6868, %v9725, 0
    %v9816 = vsel %vm6868, %v9726, 0
    %v9819 = vsel %vm6868, %v9727, 0
    %v9822 = vsel %vm6868, %v9728, 0
    %v9825 = vsel %vm6868, %v9729, 0
    %v9828 = vsel %vm6868, %v9730, 0
    %v9831 = vsel %vm6868, %v9731, 0
    %v9834 = vsel %vm6868, %v9732, 0
    %v9837 = vsel %vm6868, %v9733, 0
    %v9840 = vsel %vm6868, %v9734, 0
    %v9843 = vsel %vm6868, %v9735, 0
    %v9846 = vsel %vm6868, %v9736, 0
    %v9849 = vsel %vm6868, %v9737, 0
    %v9852 = vsel %vm6868, %v9738, 0
    %v9855 = vsel %vm6868, %v9739, 0
    %v9858 = vsel %vm6868, %v9740, 0
    %v9861 = vsel %vm6868, %v9741, 0
    %v9864 = vsel %vm6868, %v9742, 0
    %v9867 = vsel %vm6868, %v9743, 0
    %v9870 = vsel %vm6868, %v9744, 0
    %v9873 = vsel %vm6868, %v9745, 0
    %v9876 = vsel %vm6868, %v9746, 0
    %v9879 = vsel %vm6868, %v9747, 0
    %v9882 = vsel %vm6868, %v9748, 0
    %v9885 = vsel %vm6868, %v9749, 0
    %v9888 = vsel %vm6868, %v9750, 0
    %v9891 = vsel %vm6868, %v9751, 0
    %v9894 = vsel %vm6868, %v9752, 0
    %v9897 = vsel %vm6868, %v9753, 0
    %v9900 = vsel %vm6868, %v9754, 0
    %v9903 = vsel %vm6868, %v9755, 0
    %v9906 = vsel %vm6868, %v9756, 0
    %v9909 = vsel %vm6868, %v9757, 0
    %v9912 = vsel %vm6868, %v9758, 0
    %v9915 = vsel %vm6868, %v9759, 0
    %v9918 = vsel %vm6868, %v9760, 0
    %v9921 = vsel %vm6868, %v9761, 0
    %v9924 = vsel %vm6868, %v9762, 0
    %v9927 = vsel %vm6868, %v9763, 0
    %v9930 = vsel %vm6868, %v9764, 0
    %v9933 = vsel %vm6868, %v9765, 0
    %v9936 = vsel %vm6868, %v9766, 0
    %v9939 = vsel %vm6868, %v9767, 0
    %v9942 = vsel %vm6868, %v9768, 0
    %v9945 = vsel %vm6868, %v9769, 0
    %v9948 = vsel %vm6868, %v9770, 0
    %v9951 = vsel %vm6868, %v9771, 0
    %v9954 = vsel %vm6868, %v9772, 0
    %v9957 = vsel %vm6868, %v9773, 0
    %v9960 = vsel %vm6868, %v9774, 0
    %v9963 = vsel %vm6868, %v9775, 0
    %v9966 = vsel %vm6868, %v9776, 0
    %v9969 = vsel %vm6868, %v9777, 0
    %v9972 = vsel %vm6868, %v9778, 0
    %v9975 = vsel %vm6868, %v9779, 0
    %9977 = vmatprep.subr.mxu0 0.0
    %9978 = vmatpush1.xpose.msra.mxu0 %v9786
    %9979 = vmatprep.subr.mxu0 0.0
    %9980 = vmatpush1.xpose.msra.mxu0 %v9789
    %9981 = vmatprep.subr.mxu0 0.0
    %9982 = vmatpush1.xpose.msra.mxu0 %v9792
    %9983 = vmatprep.subr.mxu0 0.0
    %9984 = vmatpush1.xpose.msra.mxu0 %v9795
    %9985 = vmatprep.subr.mxu0 0.0
    %9986 = vmatpush1.xpose.msra.mxu0 %v9798
    %9987 = vmatprep.subr.mxu0 0.0
    %9988 = vmatpush1.xpose.msra.mxu0 %v9801
    %9989 = vmatprep.subr.mxu0 0.0
    %9990 = vmatpush1.xpose.msra.mxu0 %v9804
    %9991 = vmatprep.subr.mxu0 0.0
    %9992 = vmatpush1.xpose.msra.mxu0 %v9807
    %9993 = vmatprep.subr.mxu0 0.0
    %9994 = vmatpush1.xpose.msra.mxu0 %v9810
    %9995 = vmatprep.subr.mxu0 0.0
    %9996 = vmatpush1.xpose.msra.mxu0 %v9813
    %9997 = vmatprep.subr.mxu0 0.0
    %9998 = vmatpush1.xpose.msra.mxu0 %v9816
    %9999 = vmatprep.subr.mxu0 0.0
    %10000 = vmatpush1.xpose.msra.mxu0 %v9819
    %10001 = vmatprep.subr.mxu0 0.0
    %10002 = vmatpush1.xpose.msra.mxu0 %v9822
    %10003 = vmatprep.subr.mxu0 0.0
    %10004 = vmatpush1.xpose.msra.mxu0 %v9825
    %10005 = vmatprep.subr.mxu0 0.0
    %10006 = vmatpush1.xpose.msra.mxu0 %v9828
    %10007 = vmatprep.subr.mxu0 0.0
    %10008 = vmatpush1.xpose.msra.mxu0 %v9831
    %10009 = vmatprep.subr.mxu0 0.0
    %10010 = vmatpush1.xpose.msra.mxu0 %v9834
    %10011 = vmatprep.subr.mxu0 0.0
    %10012 = vmatpush1.xpose.msra.mxu0 %v9837
    %10013 = vmatprep.subr.mxu0 0.0
    %10014 = vmatpush1.xpose.msra.mxu0 %v9840
    %10015 = vmatprep.subr.mxu0 0.0
    %10016 = vmatpush1.xpose.msra.mxu0 %v9843
    %10017 = vmatprep.subr.mxu0 0.0
    %10018 = vmatpush1.xpose.msra.mxu0 %v9846
    %10019 = vmatprep.subr.mxu0 0.0
    %10020 = vmatpush1.xpose.msra.mxu0 %v9849
    %10021 = vmatprep.subr.mxu0 0.0
    %10022 = vmatpush1.xpose.msra.mxu0 %v9852
    %10023 = vmatprep.subr.mxu0 0.0
    %10024 = vmatpush1.xpose.msra.mxu0 %v9855
    %10025 = vmatprep.subr.mxu0 0.0
    %10026 = vmatpush1.xpose.msra.mxu0 %v9858
    %10027 = vmatprep.subr.mxu0 0.0
    %10028 = vmatpush1.xpose.msra.mxu0 %v9861
    %10029 = vmatprep.subr.mxu0 0.0
    %10030 = vmatpush1.xpose.msra.mxu0 %v9864
    %10031 = vmatprep.subr.mxu0 0.0
    %10032 = vmatpush1.xpose.msra.mxu0 %v9867
    %10033 = vmatprep.subr.mxu0 0.0
    %10034 = vmatpush1.xpose.msra.mxu0 %v9870
    %10035 = vmatprep.subr.mxu0 0.0
    %10036 = vmatpush1.xpose.msra.mxu0 %v9873
    %10037 = vmatprep.subr.mxu0 0.0
    %10038 = vmatpush1.xpose.msra.mxu0 %v9876
    %10039 = vmatprep.subr.mxu0 0.0
    %10040 = vmatpush1.xpose.msra.mxu0 %v9879
    %10041 = vmatprep.mubr.f32.mxu0 0.0
    %10042 = vmatmul.mubr.f32.gmra.mrb[0].mxu0 %v9783
    %v10043 = vpop.f32.mrb[0].mxu0
    %v10044 = vadd.f32 0.0, %v10043
    %v10045 = vpop.f32.mrb[0].mxu0
    %v10046 = vadd.f32 0.0, %v10045
    %10047 = vdwg.mxu0
    %10048 = vmatprep.subr.mxu0 0.0
    %10049 = vmatpush1.xpose.msra.mxu0 %v9882
    %10050 = vmatprep.subr.mxu0 0.0
    %10051 = vmatpush1.xpose.msra.mxu0 %v9885
    %10052 = vmatprep.subr.mxu0 0.0
    %10053 = vmatpush1.xpose.msra.mxu0 %v9888
    %10054 = vmatprep.subr.mxu0 0.0
    %10055 = vmatpush1.xpose.msra.mxu0 %v9891
    %10056 = vmatprep.subr.mxu0 0.0
    %10057 = vmatpush1.xpose.msra.mxu0 %v9894
    %10058 = vmatprep.subr.mxu0 0.0
    %10059 = vmatpush1.xpose.msra.mxu0 %v9897
    %10060 = vmatprep.subr.mxu0 0.0
    %10061 = vmatpush1.xpose.msra.mxu0 %v9900
    %10062 = vmatprep.subr.mxu0 0.0
    %10063 = vmatpush1.xpose.msra.mxu0 %v9903
    %10064 = vmatprep.subr.mxu0 0.0
    %10065 = vmatpush1.xpose.msra.mxu0 %v9906
    %10066 = vmatprep.subr.mxu0 0.0
    %10067 = vmatpush1.xpose.msra.mxu0 %v9909
    %10068 = vmatprep.subr.mxu0 0.0
    %10069 = vmatpush1.xpose.msra.mxu0 %v9912
    %10070 = vmatprep.subr.mxu0 0.0
    %10071 = vmatpush1.xpose.msra.mxu0 %v9915
    %10072 = vmatprep.subr.mxu0 0.0
    %10073 = vmatpush1.xpose.msra.mxu0 %v9918
    %10074 = vmatprep.subr.mxu0 0.0
    %10075 = vmatpush1.xpose.msra.mxu0 %v9921
    %10076 = vmatprep.subr.mxu0 0.0
    %10077 = vmatpush1.xpose.msra.mxu0 %v9924
    %10078 = vmatprep.subr.mxu0 0.0
    %10079 = vmatpush1.xpose.msra.mxu0 %v9927
    %10080 = vmatprep.subr.mxu0 0.0
    %10081 = vmatpush1.xpose.msra.mxu0 %v9930
    %10082 = vmatprep.subr.mxu0 0.0
    %10083 = vmatpush1.xpose.msra.mxu0 %v9933
    %10084 = vmatprep.subr.mxu0 0.0
    %10085 = vmatpush1.xpose.msra.mxu0 %v9936
    %10086 = vmatprep.subr.mxu0 0.0
    %10087 = vmatpush1.xpose.msra.mxu0 %v9939
    %10088 = vmatprep.subr.mxu0 0.0
    %10089 = vmatpush1.xpose.msra.mxu0 %v9942
    %10090 = vmatprep.subr.mxu0 0.0
    %10091 = vmatpush1.xpose.msra.mxu0 %v9945
    %10092 = vmatprep.subr.mxu0 0.0
    %10093 = vmatpush1.xpose.msra.mxu0 %v9948
    %10094 = vmatprep.subr.mxu0 0.0
    %10095 = vmatpush1.xpose.msra.mxu0 %v9951
    %10096 = vmatprep.subr.mxu0 0.0
    %10097 = vmatpush1.xpose.msra.mxu0 %v9954
    %10098 = vmatprep.subr.mxu0 0.0
    %10099 = vmatpush1.xpose.msra.mxu0 %v9957
    %10100 = vmatprep.subr.mxu0 0.0
    %10101 = vmatpush1.xpose.msra.mxu0 %v9960
    %10102 = vmatprep.subr.mxu0 0.0
    %10103 = vmatpush1.xpose.msra.mxu0 %v9963
    %10104 = vmatprep.subr.mxu0 0.0
    %10105 = vmatpush1.xpose.msra.mxu0 %v9966
    %10106 = vmatprep.subr.mxu0 0.0
    %10107 = vmatpush1.xpose.msra.mxu0 %v9969
    %10108 = vmatprep.subr.mxu0 0.0
    %10109 = vmatpush1.xpose.msra.mxu0 %v9972
    %10110 = vmatprep.subr.mxu0 0.0
    %10111 = vmatpush1.xpose.msra.mxu0 %v9975
    %10112 = vmatprep.mubr.f32.mxu0 0.0
    %10113 = vmatmul.mubr.f32.gmra.mrb[0].mxu0 %v9783
    %v10114 = vpop.f32.mrb[0].mxu0
    %v10115 = vadd.f32 0.0, %v10114
    %v10116 = vpop.f32.mrb[0].mxu0
    %v10117 = vadd.f32 0.0, %v10116
    %10118 = vdwg.mxu0
    %v10119 = vadd.f32 %v9712, %v10044
    %v10120 = vadd.f32 %v9713, %v10046
    %v10121 = vadd.f32 %v9714, %v10115
    %v10122 = vadd.f32 %v9715, %v10117
    %s10123 = scalar_lea.vmem [#allocation2], 48
    %v10124 = vld [vmem:[%s10123] sm:$0xff]
    %v10125 = vld [vmem:[%s10123 + $0x8] sm:$0xff]
    %v10126 = vld [vmem:[%s10123 + $0x18] sm:$0xff]
    %v10127 = vld [vmem:[%s10123 + $0x20] sm:$0xff]
    %v10128 = vld [vmem:[%s10123 + $0x30] sm:$0xff]
    %v10129 = vld [vmem:[%s10123 + $0x38] sm:$0xff]
    %v10130 = vld [vmem:[%s10123 + $0x48] sm:$0xff]
    %v10131 = vld [vmem:[%s10123 + $0x50] sm:$0xff]
    %v10132 = vld [vmem:[%s10123 + $0x60] sm:$0xff]
    %v10133 = vld [vmem:[%s10123 + $0x68] sm:$0xff]
    %v10134 = vld [vmem:[%s10123 + $0x78] sm:$0xff]
    %v10135 = vld [vmem:[%s10123 + $0x80] sm:$0xff]
    %v10136 = vld [vmem:[%s10123 + $0x90] sm:$0xff]
    %v10137 = vld [vmem:[%s10123 + $0x98] sm:$0xff]
    %v10138 = vld [vmem:[%s10123 + $0xa8] sm:$0xff]
    %v10139 = vld [vmem:[%s10123 + $0xb0] sm:$0xff]
    %v10140 = vld [vmem:[%s10123 + $0xc0] sm:$0xff]
    %v10141 = vld [vmem:[%s10123 + $0xc8] sm:$0xff]
    %v10142 = vld [vmem:[%s10123 + $0xd8] sm:$0xff]
    %v10143 = vld [vmem:[%s10123 + $0xe0] sm:$0xff]
    %v10144 = vld [vmem:[%s10123 + $0xf0] sm:$0xff]
    %v10145 = vld [vmem:[%s10123 + $0xf8] sm:$0xff]
    %v10146 = vld [vmem:[%s10123 + $0x108] sm:$0xff]
    %v10147 = vld [vmem:[%s10123 + $0x110] sm:$0xff]
    %v10148 = vld [vmem:[%s10123 + $0x120] sm:$0xff]
    %v10149 = vld [vmem:[%s10123 + $0x128] sm:$0xff]
    %v10150 = vld [vmem:[%s10123 + $0x138] sm:$0xff]
    %v10151 = vld [vmem:[%s10123 + $0x140] sm:$0xff]
    %v10152 = vld [vmem:[%s10123 + $0x150] sm:$0xff]
    %v10153 = vld [vmem:[%s10123 + $0x158] sm:$0xff]
    %v10154 = vld [vmem:[%s10123 + $0x168] sm:$0xff]
    %v10155 = vld [vmem:[%s10123 + $0x170] sm:$0xff]
    %v10156 = vld [vmem:[%s10123 + $0x1b0] sm:$0xff]
    %v10157 = vld [vmem:[%s10123 + $0x1b8] sm:$0xff]
    %v10158 = vld [vmem:[%s10123 + $0x1c8] sm:$0xff]
    %v10159 = vld [vmem:[%s10123 + $0x1d0] sm:$0xff]
    %v10160 = vld [vmem:[%s10123 + $0x1e0] sm:$0xff]
    %v10161 = vld [vmem:[%s10123 + $0x1e8] sm:$0xff]
    %v10162 = vld [vmem:[%s10123 + $0x1f8] sm:$0xff]
    %v10163 = vld [vmem:[%s10123 + $0x200] sm:$0xff]
    %v10164 = vld [vmem:[%s10123 + $0x210] sm:$0xff]
    %v10165 = vld [vmem:[%s10123 + $0x218] sm:$0xff]
    %v10166 = vld [vmem:[%s10123 + $0x228] sm:$0xff]
    %v10167 = vld [vmem:[%s10123 + $0x230] sm:$0xff]
    %v10168 = vld [vmem:[%s10123 + $0x240] sm:$0xff]
    %v10169 = vld [vmem:[%s10123 + $0x248] sm:$0xff]
    %v10170 = vld [vmem:[%s10123 + $0x258] sm:$0xff]
    %v10171 = vld [vmem:[%s10123 + $0x260] sm:$0xff]
    %v10172 = vld [vmem:[%s10123 + $0x270] sm:$0xff]
    %v10173 = vld [vmem:[%s10123 + $0x278] sm:$0xff]
    %v10174 = vld [vmem:[%s10123 + $0x288] sm:$0xff]
    %v10175 = vld [vmem:[%s10123 + $0x290] sm:$0xff]
    %v10176 = vld [vmem:[%s10123 + $0x2a0] sm:$0xff]
    %v10177 = vld [vmem:[%s10123 + $0x2a8] sm:$0xff]
    %v10178 = vld [vmem:[%s10123 + $0x2b8] sm:$0xff]
    %v10179 = vld [vmem:[%s10123 + $0x2c0] sm:$0xff]
    %v10180 = vld [vmem:[%s10123 + $0x2d0] sm:$0xff]
    %v10181 = vld [vmem:[%s10123 + $0x2d8] sm:$0xff]
    %v10182 = vld [vmem:[%s10123 + $0x2e8] sm:$0xff]
    %v10183 = vld [vmem:[%s10123 + $0x2f0] sm:$0xff]
    %v10184 = vld [vmem:[%s10123 + $0x300] sm:$0xff]
    %v10185 = vld [vmem:[%s10123 + $0x308] sm:$0xff]
    %v10186 = vld [vmem:[%s10123 + $0x318] sm:$0xff]
    %v10187 = vld [vmem:[%s10123 + $0x320] sm:$0xff]
    %s10188 = scalar_lea.vmem %s4, 48
    %v10189 = vld [vmem:[%s10188] sm:$0xff]
    %v10191 = vsel %vm6868, %v10189, 0
    %v10194 = vsel %vm6868, %v10124, 0
    %v10197 = vsel %vm6868, %v10125, 0
    %v10200 = vsel %vm6868, %v10126, 0
    %v10203 = vsel %vm6868, %v10127, 0
    %v10206 = vsel %vm6868, %v10128, 0
    %v10209 = vsel %vm6868, %v10129, 0
    %v10212 = vsel %vm6868, %v10130, 0
    %v10215 = vsel %vm6868, %v10131, 0
    %v10218 = vsel %vm6868, %v10132, 0
    %v10221 = vsel %vm6868, %v10133, 0
    %v10224 = vsel %vm6868, %v10134, 0
    %v10227 = vsel %vm6868, %v10135, 0
    %v10230 = vsel %vm6868, %v10136, 0
    %v10233 = vsel %vm6868, %v10137, 0
    %v10236 = vsel %vm6868, %v10138, 0
    %v10239 = vsel %vm6868, %v10139, 0
    %v10242 = vsel %vm6868, %v10140, 0
    %v10245 = vsel %vm6868, %v10141, 0
    %v10248 = vsel %vm6868, %v10142, 0
    %v10251 = vsel %vm6868, %v10143, 0
    %v10254 = vsel %vm6868, %v10144, 0
    %v10257 = vsel %vm6868, %v10145, 0
    %v10260 = vsel %vm6868, %v10146, 0
    %v10263 = vsel %vm6868, %v10147, 0
    %v10266 = vsel %vm6868, %v10148, 0
    %v10269 = vsel %vm6868, %v10149, 0
    %v10272 = vsel %vm6868, %v10150, 0
    %v10275 = vsel %vm6868, %v10151, 0
    %v10278 = vsel %vm6868, %v10152, 0
    %v10281 = vsel %vm6868, %v10153, 0
    %v10284 = vsel %vm6868, %v10154, 0
    %v10287 = vsel %vm6868, %v10155, 0
    %v10290 = vsel %vm6868, %v10156, 0
    %v10293 = vsel %vm6868, %v10157, 0
    %v10296 = vsel %vm6868, %v10158, 0
    %v10299 = vsel %vm6868, %v10159, 0
    %v10302 = vsel %vm6868, %v10160, 0
    %v10305 = vsel %vm6868, %v10161, 0
    %v10308 = vsel %vm6868, %v10162, 0
    %v10311 = vsel %vm6868, %v10163, 0
    %v10314 = vsel %vm6868, %v10164, 0
    %v10317 = vsel %vm6868, %v10165, 0
    %v10320 = vsel %vm6868, %v10166, 0
    %v10323 = vsel %vm6868, %v10167, 0
    %v10326 = vsel %vm6868, %v10168, 0
    %v10329 = vsel %vm6868, %v10169, 0
    %v10332 = vsel %vm6868, %v10170, 0
    %v10335 = vsel %vm6868, %v10171, 0
    %v10338 = vsel %vm6868, %v10172, 0
    %v10341 = vsel %vm6868, %v10173, 0
    %v10344 = vsel %vm6868, %v10174, 0
    %v10347 = vsel %vm6868, %v10175, 0
    %v10350 = vsel %vm6868, %v10176, 0
    %v10353 = vsel %vm6868, %v10177, 0
    %v10356 = vsel %vm6868, %v10178, 0
    %v10359 = vsel %vm6868, %v10179, 0
    %v10362 = vsel %vm6868, %v10180, 0
    %v10365 = vsel %vm6868, %v10181, 0
    %v10368 = vsel %vm6868, %v10182, 0
    %v10371 = vsel %vm6868, %v10183, 0
    %v10374 = vsel %vm6868, %v10184, 0
    %v10377 = vsel %vm6868, %v10185, 0
    %v10380 = vsel %vm6868, %v10186, 0
    %v10383 = vsel %vm6868, %v10187, 0
    %10385 = vmatprep.subr.mxu0 0.0
    %10386 = vmatpush1.xpose.msra.mxu0 %v10194
    %10387 = vmatprep.subr.mxu0 0.0
    %10388 = vmatpush1.xpose.msra.mxu0 %v10197
    %10389 = vmatprep.subr.mxu0 0.0
    %10390 = vmatpush1.xpose.msra.mxu0 %v10200
    %10391 = vmatprep.subr.mxu0 0.0
    %10392 = vmatpush1.xpose.msra.mxu0 %v10203
    %10393 = vmatprep.subr.mxu0 0.0
    %10394 = vmatpush1.xpose.msra.mxu0 %v10206
    %10395 = vmatprep.subr.mxu0 0.0
    %10396 = vmatpush1.xpose.msra.mxu0 %v10209
    %10397 = vmatprep.subr.mxu0 0.0
    %10398 = vmatpush1.xpose.msra.mxu0 %v10212
    %10399 = vmatprep.subr.mxu0 0.0
    %10400 = vmatpush1.xpose.msra.mxu0 %v10215
    %10401 = vmatprep.subr.mxu0 0.0
    %10402 = vmatpush1.xpose.msra.mxu0 %v10218
    %10403 = vmatprep.subr.mxu0 0.0
    %10404 = vmatpush1.xpose.msra.mxu0 %v10221
    %10405 = vmatprep.subr.mxu0 0.0
    %10406 = vmatpush1.xpose.msra.mxu0 %v10224
    %10407 = vmatprep.subr.mxu0 0.0
    %10408 = vmatpush1.xpose.msra.mxu0 %v10227
    %10409 = vmatprep.subr.mxu0 0.0
    %10410 = vmatpush1.xpose.msra.mxu0 %v10230
    %10411 = vmatprep.subr.mxu0 0.0
    %10412 = vmatpush1.xpose.msra.mxu0 %v10233
    %10413 = vmatprep.subr.mxu0 0.0
    %10414 = vmatpush1.xpose.msra.mxu0 %v10236
    %10415 = vmatprep.subr.mxu0 0.0
    %10416 = vmatpush1.xpose.msra.mxu0 %v10239
    %10417 = vmatprep.subr.mxu0 0.0
    %10418 = vmatpush1.xpose.msra.mxu0 %v10242
    %10419 = vmatprep.subr.mxu0 0.0
    %10420 = vmatpush1.xpose.msra.mxu0 %v10245
    %10421 = vmatprep.subr.mxu0 0.0
    %10422 = vmatpush1.xpose.msra.mxu0 %v10248
    %10423 = vmatprep.subr.mxu0 0.0
    %10424 = vmatpush1.xpose.msra.mxu0 %v10251
    %10425 = vmatprep.subr.mxu0 0.0
    %10426 = vmatpush1.xpose.msra.mxu0 %v10254
    %10427 = vmatprep.subr.mxu0 0.0
    %10428 = vmatpush1.xpose.msra.mxu0 %v10257
    %10429 = vmatprep.subr.mxu0 0.0
    %10430 = vmatpush1.xpose.msra.mxu0 %v10260
    %10431 = vmatprep.subr.mxu0 0.0
    %10432 = vmatpush1.xpose.msra.mxu0 %v10263
    %10433 = vmatprep.subr.mxu0 0.0
    %10434 = vmatpush1.xpose.msra.mxu0 %v10266
    %10435 = vmatprep.subr.mxu0 0.0
    %10436 = vmatpush1.xpose.msra.mxu0 %v10269
    %10437 = vmatprep.subr.mxu0 0.0
    %10438 = vmatpush1.xpose.msra.mxu0 %v10272
    %10439 = vmatprep.subr.mxu0 0.0
    %10440 = vmatpush1.xpose.msra.mxu0 %v10275
    %10441 = vmatprep.subr.mxu0 0.0
    %10442 = vmatpush1.xpose.msra.mxu0 %v10278
    %10443 = vmatprep.subr.mxu0 0.0
    %10444 = vmatpush1.xpose.msra.mxu0 %v10281
    %10445 = vmatprep.subr.mxu0 0.0
    %10446 = vmatpush1.xpose.msra.mxu0 %v10284
    %10447 = vmatprep.subr.mxu0 0.0
    %10448 = vmatpush1.xpose.msra.mxu0 %v10287
    %10449 = vmatprep.mubr.f32.mxu0 0.0
    %10450 = vmatmul.mubr.f32.gmra.mrb[0].mxu0 %v10191
    %v10451 = vpop.f32.mrb[0].mxu0
    %v10452 = vadd.f32 0.0, %v10451
    %v10453 = vpop.f32.mrb[0].mxu0
    %v10454 = vadd.f32 0.0, %v10453
    %10455 = vdwg.mxu0
    %10456 = vmatprep.subr.mxu0 0.0
    %10457 = vmatpush1.xpose.msra.mxu0 %v10290
    %10458 = vmatprep.subr.mxu0 0.0
    %10459 = vmatpush1.xpose.msra.mxu0 %v10293
    %10460 = vmatprep.subr.mxu0 0.0
    %10461 = vmatpush1.xpose.msra.mxu0 %v10296
    %10462 = vmatprep.subr.mxu0 0.0
    %10463 = vmatpush1.xpose.msra.mxu0 %v10299
    %10464 = vmatprep.subr.mxu0 0.0
    %10465 = vmatpush1.xpose.msra.mxu0 %v10302
    %10466 = vmatprep.subr.mxu0 0.0
    %10467 = vmatpush1.xpose.msra.mxu0 %v10305
    %10468 = vmatprep.subr.mxu0 0.0
    %10469 = vmatpush1.xpose.msra.mxu0 %v10308
    %10470 = vmatprep.subr.mxu0 0.0
    %10471 = vmatpush1.xpose.msra.mxu0 %v10311
    %10472 = vmatprep.subr.mxu0 0.0
    %10473 = vmatpush1.xpose.msra.mxu0 %v10314
    %10474 = vmatprep.subr.mxu0 0.0
    %10475 = vmatpush1.xpose.msra.mxu0 %v10317
    %10476 = vmatprep.subr.mxu0 0.0
    %10477 = vmatpush1.xpose.msra.mxu0 %v10320
    %10478 = vmatprep.subr.mxu0 0.0
    %10479 = vmatpush1.xpose.msra.mxu0 %v10323
    %10480 = vmatprep.subr.mxu0 0.0
    %10481 = vmatpush1.xpose.msra.mxu0 %v10326
    %10482 = vmatprep.subr.mxu0 0.0
    %10483 = vmatpush1.xpose.msra.mxu0 %v10329
    %10484 = vmatprep.subr.mxu0 0.0
    %10485 = vmatpush1.xpose.msra.mxu0 %v10332
    %10486 = vmatprep.subr.mxu0 0.0
    %10487 = vmatpush1.xpose.msra.mxu0 %v10335
    %10488 = vmatprep.subr.mxu0 0.0
    %10489 = vmatpush1.xpose.msra.mxu0 %v10338
    %10490 = vmatprep.subr.mxu0 0.0
    %10491 = vmatpush1.xpose.msra.mxu0 %v10341
    %10492 = vmatprep.subr.mxu0 0.0
    %10493 = vmatpush1.xpose.msra.mxu0 %v10344
    %10494 = vmatprep.subr.mxu0 0.0
    %10495 = vmatpush1.xpose.msra.mxu0 %v10347
    %10496 = vmatprep.subr.mxu0 0.0
    %10497 = vmatpush1.xpose.msra.mxu0 %v10350
    %10498 = vmatprep.subr.mxu0 0.0
    %10499 = vmatpush1.xpose.msra.mxu0 %v10353
    %10500 = vmatprep.subr.mxu0 0.0
    %10501 = vmatpush1.xpose.msra.mxu0 %v10356
    %10502 = vmatprep.subr.mxu0 0.0
    %10503 = vmatpush1.xpose.msra.mxu0 %v10359
    %10504 = vmatprep.subr.mxu0 0.0
    %10505 = vmatpush1.xpose.msra.mxu0 %v10362
    %10506 = vmatprep.subr.mxu0 0.0
    %10507 = vmatpush1.xpose.msra.mxu0 %v10365
    %10508 = vmatprep.subr.mxu0 0.0
    %10509 = vmatpush1.xpose.msra.mxu0 %v10368
    %10510 = vmatprep.subr.mxu0 0.0
    %10511 = vmatpush1.xpose.msra.mxu0 %v10371
    %10512 = vmatprep.subr.mxu0 0.0
    %10513 = vmatpush1.xpose.msra.mxu0 %v10374
    %10514 = vmatprep.subr.mxu0 0.0
    %10515 = vmatpush1.xpose.msra.mxu0 %v10377
    %10516 = vmatprep.subr.mxu0 0.0
    %10517 = vmatpush1.xpose.msra.mxu0 %v10380
    %10518 = vmatprep.subr.mxu0 0.0
    %10519 = vmatpush1.xpose.msra.mxu0 %v10383
    %10520 = vmatprep.mubr.f32.mxu0 0.0
    %10521 = vmatmul.mubr.f32.gmra.mrb[0].mxu0 %v10191
    %v10522 = vpop.f32.mrb[0].mxu0
    %v10523 = vadd.f32 0.0, %v10522
    %v10524 = vpop.f32.mrb[0].mxu0
    %v10525 = vadd.f32 0.0, %v10524
    %10526 = vdwg.mxu0
    %v10527 = vadd.f32 %v10119, %v10452
    %v10528 = vadd.f32 %v10120, %v10454
    %v10529 = vadd.f32 %v10121, %v10523
    %v10530 = vadd.f32 %v10122, %v10525
    %v10531 = vld [vmem:[%s10123 + $0x1] sm:$0xff]
    %v10532 = vld [vmem:[%s10123 + $0x9] sm:$0xff]
    %v10533 = vld [vmem:[%s10123 + $0x19] sm:$0xff]
    %v10534 = vld [vmem:[%s10123 + $0x21] sm:$0xff]
    %v10535 = vld [vmem:[%s10123 + $0x31] sm:$0xff]
    %v10536 = vld [vmem:[%s10123 + $0x39] sm:$0xff]
    %v10537 = vld [vmem:[%s10123 + $0x49] sm:$0xff]
    %v10538 = vld [vmem:[%s10123 + $0x51] sm:$0xff]
    %v10539 = vld [vmem:[%s10123 + $0x61] sm:$0xff]
    %v10540 = vld [vmem:[%s10123 + $0x69] sm:$0xff]
    %v10541 = vld [vmem:[%s10123 + $0x79] sm:$0xff]
    %v10542 = vld [vmem:[%s10123 + $0x81] sm:$0xff]
    %v10543 = vld [vmem:[%s10123 + $0x91] sm:$0xff]
    %v10544 = vld [vmem:[%s10123 + $0x99] sm:$0xff]
    %v10545 = vld [vmem:[%s10123 + $0xa9] sm:$0xff]
    %v10546 = vld [vmem:[%s10123 + $0xb1] sm:$0xff]
    %v10547 = vld [vmem:[%s10123 + $0xc1] sm:$0xff]
    %v10548 = vld [vmem:[%s10123 + $0xc9] sm:$0xff]
    %v10549 = vld [vmem:[%s10123 + $0xd9] sm:$0xff]
    %v10550 = vld [vmem:[%s10123 + $0xe1] sm:$0xff]
    %v10551 = vld [vmem:[%s10123 + $0xf1] sm:$0xff]
    %v10552 = vld [vmem:[%s10123 + $0xf9] sm:$0xff]
    %v10553 = vld [vmem:[%s10123 + $0x109] sm:$0xff]
    %v10554 = vld [vmem:[%s10123 + $0x111] sm:$0xff]
    %v10555 = vld [vmem:[%s10123 + $0x121] sm:$0xff]
    %v10556 = vld [vmem:[%s10123 + $0x129] sm:$0xff]
    %v10557 = vld [vmem:[%s10123 + $0x139] sm:$0xff]
    %v10558 = vld [vmem:[%s10123 + $0x141] sm:$0xff]
    %v10559 = vld [vmem:[%s10123 + $0x151] sm:$0xff]
    %v10560 = vld [vmem:[%s10123 + $0x159] sm:$0xff]
    %v10561 = vld [vmem:[%s10123 + $0x169] sm:$0xff]
    %v10562 = vld [vmem:[%s10123 + $0x171] sm:$0xff]
    %v10563 = vld [vmem:[%s10123 + $0x1b1] sm:$0xff]
    %v10564 = vld [vmem:[%s10123 + $0x1b9] sm:$0xff]
    %v10565 = vld [vmem:[%s10123 + $0x1c9] sm:$0xff]
    %v10566 = vld [vmem:[%s10123 + $0x1d1] sm:$0xff]
    %v10567 = vld [vmem:[%s10123 + $0x1e1] sm:$0xff]
    %v10568 = vld [vmem:[%s10123 + $0x1e9] sm:$0xff]
    %v10569 = vld [vmem:[%s10123 + $0x1f9] sm:$0xff]
    %v10570 = vld [vmem:[%s10123 + $0x201] sm:$0xff]
    %v10571 = vld [vmem:[%s10123 + $0x211] sm:$0xff]
    %v10572 = vld [vmem:[%s10123 + $0x219] sm:$0xff]
    %v10573 = vld [vmem:[%s10123 + $0x229] sm:$0xff]
    %v10574 = vld [vmem:[%s10123 + $0x231] sm:$0xff]
    %v10575 = vld [vmem:[%s10123 + $0x241] sm:$0xff]
    %v10576 = vld [vmem:[%s10123 + $0x249] sm:$0xff]
    %v10577 = vld [vmem:[%s10123 + $0x259] sm:$0xff]
    %v10578 = vld [vmem:[%s10123 + $0x261] sm:$0xff]
    %v10579 = vld [vmem:[%s10123 + $0x271] sm:$0xff]
    %v10580 = vld [vmem:[%s10123 + $0x279] sm:$0xff]
    %v10581 = vld [vmem:[%s10123 + $0x289] sm:$0xff]
    %v10582 = vld [vmem:[%s10123 + $0x291] sm:$0xff]
    %v10583 = vld [vmem:[%s10123 + $0x2a1] sm:$0xff]
    %v10584 = vld [vmem:[%s10123 + $0x2a9] sm:$0xff]
    %v10585 = vld [vmem:[%s10123 + $0x2b9] sm:$0xff]
    %v10586 = vld [vmem:[%s10123 + $0x2c1] sm:$0xff]
    %v10587 = vld [vmem:[%s10123 + $0x2d1] sm:$0xff]
    %v10588 = vld [vmem:[%s10123 + $0x2d9] sm:$0xff]
    %v10589 = vld [vmem:[%s10123 + $0x2e9] sm:$0xff]
    %v10590 = vld [vmem:[%s10123 + $0x2f1] sm:$0xff]
    %v10591 = vld [vmem:[%s10123 + $0x301] sm:$0xff]
    %v10592 = vld [vmem:[%s10123 + $0x309] sm:$0xff]
    %v10593 = vld [vmem:[%s10123 + $0x319] sm:$0xff]
    %v10594 = vld [vmem:[%s10123 + $0x321] sm:$0xff]
    %s10595 = scalar_lea.vmem %s4, 56
    %v10596 = vld [vmem:[%s10595] sm:$0xff]
    %v10598 = vsel %vm6868, %v10596, 0
    %v10601 = vsel %vm6868, %v10531, 0
    %v10604 = vsel %vm6868, %v10532, 0
    %v10607 = vsel %vm6868, %v10533, 0
    %v10610 = vsel %vm6868, %v10534, 0
    %v10613 = vsel %vm6868, %v10535, 0
    %v10616 = vsel %vm6868, %v10536, 0
    %v10619 = vsel %vm6868, %v10537, 0
    %v10622 = vsel %vm6868, %v10538, 0
    %v10625 = vsel %vm6868, %v10539, 0
    %v10628 = vsel %vm6868, %v10540, 0
    %v10631 = vsel %vm6868, %v10541, 0
    %v10634 = vsel %vm6868, %v10542, 0
    %v10637 = vsel %vm6868, %v10543, 0
    %v10640 = vsel %vm6868, %v10544, 0
    %v10643 = vsel %vm6868, %v10545, 0
    %v10646 = vsel %vm6868, %v10546, 0
    %v10649 = vsel %vm6868, %v10547, 0
    %v10652 = vsel %vm6868, %v10548, 0
    %v10655 = vsel %vm6868, %v10549, 0
    %v10658 = vsel %vm6868, %v10550, 0
    %v10661 = vsel %vm6868, %v10551, 0
    %v10664 = vsel %vm6868, %v10552, 0
    %v10667 = vsel %vm6868, %v10553, 0
    %v10670 = vsel %vm6868, %v10554, 0
    %v10673 = vsel %vm6868, %v10555, 0
    %v10676 = vsel %vm6868, %v10556, 0
    %v10679 = vsel %vm6868, %v10557, 0
    %v10682 = vsel %vm6868, %v10558, 0
    %v10685 = vsel %vm6868, %v10559, 0
    %v10688 = vsel %vm6868, %v10560, 0
    %v10691 = vsel %vm6868, %v10561, 0
    %v10694 = vsel %vm6868, %v10562, 0
    %v10697 = vsel %vm6868, %v10563, 0
    %v10700 = vsel %vm6868, %v10564, 0
    %v10703 = vsel %vm6868, %v10565, 0
    %v10706 = vsel %vm6868, %v10566, 0
    %v10709 = vsel %vm6868, %v10567, 0
    %v10712 = vsel %vm6868, %v10568, 0
    %v10715 = vsel %vm6868, %v10569, 0
    %v10718 = vsel %vm6868, %v10570, 0
    %v10721 = vsel %vm6868, %v10571, 0
    %v10724 = vsel %vm6868, %v10572, 0
    %v10727 = vsel %vm6868, %v10573, 0
    %v10730 = vsel %vm6868, %v10574, 0
    %v10733 = vsel %vm6868, %v10575, 0
    %v10736 = vsel %vm6868, %v10576, 0
    %v10739 = vsel %vm6868, %v10577, 0
    %v10742 = vsel %vm6868, %v10578, 0
    %v10745 = vsel %vm6868, %v10579, 0
    %v10748 = vsel %vm6868, %v10580, 0
    %v10751 = vsel %vm6868, %v10581, 0
    %v10754 = vsel %vm6868, %v10582, 0
    %v10757 = vsel %vm6868, %v10583, 0
    %v10760 = vsel %vm6868, %v10584, 0
    %v10763 = vsel %vm6868, %v10585, 0
    %v10766 = vsel %vm6868, %v10586, 0
    %v10769 = vsel %vm6868, %v10587, 0
    %v10772 = vsel %vm6868, %v10588, 0
    %v10775 = vsel %vm6868, %v10589, 0
    %v10778 = vsel %vm6868, %v10590, 0
    %v10781 = vsel %vm6868, %v10591, 0
    %v10784 = vsel %vm6868, %v10592, 0
    %v10787 = vsel %vm6868, %v10593, 0
    %v10790 = vsel %vm6868, %v10594, 0
    %10792 = vmatprep.subr.mxu0 0.0
    %10793 = vmatpush1.xpose.msra.mxu0 %v10601
    %10794 = vmatprep.subr.mxu0 0.0
    %10795 = vmatpush1.xpose.msra.mxu0 %v10604
    %10796 = vmatprep.subr.mxu0 0.0
    %10797 = vmatpush1.xpose.msra.mxu0 %v10607
    %10798 = vmatprep.subr.mxu0 0.0
    %10799 = vmatpush1.xpose.msra.mxu0 %v10610
    %10800 = vmatprep.subr.mxu0 0.0
    %10801 = vmatpush1.xpose.msra.mxu0 %v10613
    %10802 = vmatprep.subr.mxu0 0.0
    %10803 = vmatpush1.xpose.msra.mxu0 %v10616
    %10804 = vmatprep.subr.mxu0 0.0
    %10805 = vmatpush1.xpose.msra.mxu0 %v10619
    %10806 = vmatprep.subr.mxu0 0.0
    %10807 = vmatpush1.xpose.msra.mxu0 %v10622
    %10808 = vmatprep.subr.mxu0 0.0
    %10809 = vmatpush1.xpose.msra.mxu0 %v10625
    %10810 = vmatprep.subr.mxu0 0.0
    %10811 = vmatpush1.xpose.msra.mxu0 %v10628
    %10812 = vmatprep.subr.mxu0 0.0
    %10813 = vmatpush1.xpose.msra.mxu0 %v10631
    %10814 = vmatprep.subr.mxu0 0.0
    %10815 = vmatpush1.xpose.msra.mxu0 %v10634
    %10816 = vmatprep.subr.mxu0 0.0
    %10817 = vmatpush1.xpose.msra.mxu0 %v10637
    %10818 = vmatprep.subr.mxu0 0.0
    %10819 = vmatpush1.xpose.msra.mxu0 %v10640
    %10820 = vmatprep.subr.mxu0 0.0
    %10821 = vmatpush1.xpose.msra.mxu0 %v10643
    %10822 = vmatprep.subr.mxu0 0.0
    %10823 = vmatpush1.xpose.msra.mxu0 %v10646
    %10824 = vmatprep.subr.mxu0 0.0
    %10825 = vmatpush1.xpose.msra.mxu0 %v10649
    %10826 = vmatprep.subr.mxu0 0.0
    %10827 = vmatpush1.xpose.msra.mxu0 %v10652
    %10828 = vmatprep.subr.mxu0 0.0
    %10829 = vmatpush1.xpose.msra.mxu0 %v10655
    %10830 = vmatprep.subr.mxu0 0.0
    %10831 = vmatpush1.xpose.msra.mxu0 %v10658
    %10832 = vmatprep.subr.mxu0 0.0
    %10833 = vmatpush1.xpose.msra.mxu0 %v10661
    %10834 = vmatprep.subr.mxu0 0.0
    %10835 = vmatpush1.xpose.msra.mxu0 %v10664
    %10836 = vmatprep.subr.mxu0 0.0
    %10837 = vmatpush1.xpose.msra.mxu0 %v10667
    %10838 = vmatprep.subr.mxu0 0.0
    %10839 = vmatpush1.xpose.msra.mxu0 %v10670
    %10840 = vmatprep.subr.mxu0 0.0
    %10841 = vmatpush1.xpose.msra.mxu0 %v10673
    %10842 = vmatprep.subr.mxu0 0.0
    %10843 = vmatpush1.xpose.msra.mxu0 %v10676
    %10844 = vmatprep.subr.mxu0 0.0
    %10845 = vmatpush1.xpose.msra.mxu0 %v10679
    %10846 = vmatprep.subr.mxu0 0.0
    %10847 = vmatpush1.xpose.msra.mxu0 %v10682
    %10848 = vmatprep.subr.mxu0 0.0
    %10849 = vmatpush1.xpose.msra.mxu0 %v10685
    %10850 = vmatprep.subr.mxu0 0.0
    %10851 = vmatpush1.xpose.msra.mxu0 %v10688
    %10852 = vmatprep.subr.mxu0 0.0
    %10853 = vmatpush1.xpose.msra.mxu0 %v10691
    %10854 = vmatprep.subr.mxu0 0.0
    %10855 = vmatpush1.xpose.msra.mxu0 %v10694
    %10856 = vmatprep.mubr.f32.mxu0 0.0
    %10857 = vmatmul.mubr.f32.gmra.mrb[0].mxu0 %v10598
    %v10858 = vpop.f32.mrb[0].mxu0
    %v10859 = vadd.f32 0.0, %v10858
    %v10860 = vpop.f32.mrb[0].mxu0
    %v10861 = vadd.f32 0.0, %v10860
    %10862 = vdwg.mxu0
    %10863 = vmatprep.subr.mxu0 0.0
    %10864 = vmatpush1.xpose.msra.mxu0 %v10697
    %10865 = vmatprep.subr.mxu0 0.0
    %10866 = vmatpush1.xpose.msra.mxu0 %v10700
    %10867 = vmatprep.subr.mxu0 0.0
    %10868 = vmatpush1.xpose.msra.mxu0 %v10703
    %10869 = vmatprep.subr.mxu0 0.0
    %10870 = vmatpush1.xpose.msra.mxu0 %v10706
    %10871 = vmatprep.subr.mxu0 0.0
    %10872 = vmatpush1.xpose.msra.mxu0 %v10709
    %10873 = vmatprep.subr.mxu0 0.0
    %10874 = vmatpush1.xpose.msra.mxu0 %v10712
    %10875 = vmatprep.subr.mxu0 0.0
    %10876 = vmatpush1.xpose.msra.mxu0 %v10715
    %10877 = vmatprep.subr.mxu0 0.0
    %10878 = vmatpush1.xpose.msra.mxu0 %v10718
    %10879 = vmatprep.subr.mxu0 0.0
    %10880 = vmatpush1.xpose.msra.mxu0 %v10721
    %10881 = vmatprep.subr.mxu0 0.0
    %10882 = vmatpush1.xpose.msra.mxu0 %v10724
    %10883 = vmatprep.subr.mxu0 0.0
    %10884 = vmatpush1.xpose.msra.mxu0 %v10727
    %10885 = vmatprep.subr.mxu0 0.0
    %10886 = vmatpush1.xpose.msra.mxu0 %v10730
    %10887 = vmatprep.subr.mxu0 0.0
    %10888 = vmatpush1.xpose.msra.mxu0 %v10733
    %10889 = vmatprep.subr.mxu0 0.0
    %10890 = vmatpush1.xpose.msra.mxu0 %v10736
    %10891 = vmatprep.subr.mxu0 0.0
    %10892 = vmatpush1.xpose.msra.mxu0 %v10739
    %10893 = vmatprep.subr.mxu0 0.0
    %10894 = vmatpush1.xpose.msra.mxu0 %v10742
    %10895 = vmatprep.subr.mxu0 0.0
    %10896 = vmatpush1.xpose.msra.mxu0 %v10745
    %10897 = vmatprep.subr.mxu0 0.0
    %10898 = vmatpush1.xpose.msra.mxu0 %v10748
    %10899 = vmatprep.subr.mxu0 0.0
    %10900 = vmatpush1.xpose.msra.mxu0 %v10751
    %10901 = vmatprep.subr.mxu0 0.0
    %10902 = vmatpush1.xpose.msra.mxu0 %v10754
    %10903 = vmatprep.subr.mxu0 0.0
    %10904 = vmatpush1.xpose.msra.mxu0 %v10757
    %10905 = vmatprep.subr.mxu0 0.0
    %10906 = vmatpush1.xpose.msra.mxu0 %v10760
    %10907 = vmatprep.subr.mxu0 0.0
    %10908 = vmatpush1.xpose.msra.mxu0 %v10763
    %10909 = vmatprep.subr.mxu0 0.0
    %10910 = vmatpush1.xpose.msra.mxu0 %v10766
    %10911 = vmatprep.subr.mxu0 0.0
    %10912 = vmatpush1.xpose.msra.mxu0 %v10769
    %10913 = vmatprep.subr.mxu0 0.0
    %10914 = vmatpush1.xpose.msra.mxu0 %v10772
    %10915 = vmatprep.subr.mxu0 0.0
    %10916 = vmatpush1.xpose.msra.mxu0 %v10775
    %10917 = vmatprep.subr.mxu0 0.0
    %10918 = vmatpush1.xpose.msra.mxu0 %v10778
    %10919 = vmatprep.subr.mxu0 0.0
    %10920 = vmatpush1.xpose.msra.mxu0 %v10781
    %10921 = vmatprep.subr.mxu0 0.0
    %10922 = vmatpush1.xpose.msra.mxu0 %v10784
    %10923 = vmatprep.subr.mxu0 0.0
    %10924 = vmatpush1.xpose.msra.mxu0 %v10787
    %10925 = vmatprep.subr.mxu0 0.0
    %10926 = vmatpush1.xpose.msra.mxu0 %v10790
    %10927 = vmatprep.mubr.f32.mxu0 0.0
    %10928 = vmatmul.mubr.f32.gmra.mrb[0].mxu0 %v10598
    %v10929 = vpop.f32.mrb[0].mxu0
    %v10930 = vadd.f32 0.0, %v10929
    %v10931 = vpop.f32.mrb[0].mxu0
    %v10932 = vadd.f32 0.0, %v10931
    %10933 = vdwg.mxu0
    %v10934 = vadd.f32 %v10527, %v10859
    %v10935 = vadd.f32 %v10528, %v10861
    %v10936 = vadd.f32 %v10529, %v10930
    %v10937 = vadd.f32 %v10530, %v10932
    %v10938 = vld [vmem:[%s10123 + $0x2] sm:$0xff]
    %v10939 = vld [vmem:[%s10123 + $0xa] sm:$0xff]
    %v10940 = vld [vmem:[%s10123 + $0x1a] sm:$0xff]
    %v10941 = vld [vmem:[%s10123 + $0x22] sm:$0xff]
    %v10942 = vld [vmem:[%s10123 + $0x32] sm:$0xff]
    %v10943 = vld [vmem:[%s10123 + $0x3a] sm:$0xff]
    %v10944 = vld [vmem:[%s10123 + $0x4a] sm:$0xff]
    %v10945 = vld [vmem:[%s10123 + $0x52] sm:$0xff]
    %v10946 = vld [vmem:[%s10123 + $0x62] sm:$0xff]
    %v10947 = vld [vmem:[%s10123 + $0x6a] sm:$0xff]
    %v10948 = vld [vmem:[%s10123 + $0x7a] sm:$0xff]
    %v10949 = vld [vmem:[%s10123 + $0x82] sm:$0xff]
    %v10950 = vld [vmem:[%s10123 + $0x92] sm:$0xff]
    %v10951 = vld [vmem:[%s10123 + $0x9a] sm:$0xff]
    %v10952 = vld [vmem:[%s10123 + $0xaa] sm:$0xff]
    %v10953 = vld [vmem:[%s10123 + $0xb2] sm:$0xff]
    %v10954 = vld [vmem:[%s10123 + $0xc2] sm:$0xff]
    %v10955 = vld [vmem:[%s10123 + $0xca] sm:$0xff]
    %v10956 = vld [vmem:[%s10123 + $0xda] sm:$0xff]
    %v10957 = vld [vmem:[%s10123 + $0xe2] sm:$0xff]
    %v10958 = vld [vmem:[%s10123 + $0xf2] sm:$0xff]
    %v10959 = vld [vmem:[%s10123 + $0xfa] sm:$0xff]
    %v10960 = vld [vmem:[%s10123 + $0x10a] sm:$0xff]
    %v10961 = vld [vmem:[%s10123 + $0x112] sm:$0xff]
    %v10962 = vld [vmem:[%s10123 + $0x122] sm:$0xff]
    %v10963 = vld [vmem:[%s10123 + $0x12a] sm:$0xff]
    %v10964 = vld [vmem:[%s10123 + $0x13a] sm:$0xff]
    %v10965 = vld [vmem:[%s10123 + $0x142] sm:$0xff]
    %v10966 = vld [vmem:[%s10123 + $0x152] sm:$0xff]
    %v10967 = vld [vmem:[%s10123 + $0x15a] sm:$0xff]
    %v10968 = vld [vmem:[%s10123 + $0x16a] sm:$0xff]
    %v10969 = vld [vmem:[%s10123 + $0x172] sm:$0xff]
    %v10970 = vld [vmem:[%s10123 + $0x1b2] sm:$0xff]
    %v10971 = vld [vmem:[%s10123 + $0x1ba] sm:$0xff]
    %v10972 = vld [vmem:[%s10123 + $0x1ca] sm:$0xff]
    %v10973 = vld [vmem:[%s10123 + $0x1d2] sm:$0xff]
    %v10974 = vld [vmem:[%s10123 + $0x1e2] sm:$0xff]
    %v10975 = vld [vmem:[%s10123 + $0x1ea] sm:$0xff]
    %v10976 = vld [vmem:[%s10123 + $0x1fa] sm:$0xff]
    %v10977 = vld [vmem:[%s10123 + $0x202] sm:$0xff]
    %v10978 = vld [vmem:[%s10123 + $0x212] sm:$0xff]
    %v10979 = vld [vmem:[%s10123 + $0x21a] sm:$0xff]
    %v10980 = vld [vmem:[%s10123 + $0x22a] sm:$0xff]
    %v10981 = vld [vmem:[%s10123 + $0x232] sm:$0xff]
    %v10982 = vld [vmem:[%s10123 + $0x242] sm:$0xff]
    %v10983 = vld [vmem:[%s10123 + $0x24a] sm:$0xff]
    %v10984 = vld [vmem:[%s10123 + $0x25a] sm:$0xff]
    %v10985 = vld [vmem:[%s10123 + $0x262] sm:$0xff]
    %v10986 = vld [vmem:[%s10123 + $0x272] sm:$0xff]
    %v10987 = vld [vmem:[%s10123 + $0x27a] sm:$0xff]
    %v10988 = vld [vmem:[%s10123 + $0x28a] sm:$0xff]
    %v10989 = vld [vmem:[%s10123 + $0x292] sm:$0xff]
    %v10990 = vld [vmem:[%s10123 + $0x2a2] sm:$0xff]
    %v10991 = vld [vmem:[%s10123 + $0x2aa] sm:$0xff]
    %v10992 = vld [vmem:[%s10123 + $0x2ba] sm:$0xff]
    %v10993 = vld [vmem:[%s10123 + $0x2c2] sm:$0xff]
    %v10994 = vld [vmem:[%s10123 + $0x2d2] sm:$0xff]
    %v10995 = vld [vmem:[%s10123 + $0x2da] sm:$0xff]
    %v10996 = vld [vmem:[%s10123 + $0x2ea] sm:$0xff]
    %v10997 = vld [vmem:[%s10123 + $0x2f2] sm:$0xff]
    %v10998 = vld [vmem:[%s10123 + $0x302] sm:$0xff]
    %v10999 = vld [vmem:[%s10123 + $0x30a] sm:$0xff]
    %v11000 = vld [vmem:[%s10123 + $0x31a] sm:$0xff]
    %v11001 = vld [vmem:[%s10123 + $0x322] sm:$0xff]
    %s11002 = scalar_lea.vmem %s4, 64
    %v11003 = vld [vmem:[%s11002] sm:$0xff]
    %v11005 = vsel %vm6868, %v11003, 0
    %v11008 = vsel %vm6868, %v10938, 0
    %v11011 = vsel %vm6868, %v10939, 0
    %v11014 = vsel %vm6868, %v10940, 0
    %v11017 = vsel %vm6868, %v10941, 0
    %v11020 = vsel %vm6868, %v10942, 0
    %v11023 = vsel %vm6868, %v10943, 0
    %v11026 = vsel %vm6868, %v10944, 0
    %v11029 = vsel %vm6868, %v10945, 0
    %v11032 = vsel %vm6868, %v10946, 0
    %v11035 = vsel %vm6868, %v10947, 0
    %v11038 = vsel %vm6868, %v10948, 0
    %v11041 = vsel %vm6868, %v10949, 0
    %v11044 = vsel %vm6868, %v10950, 0
    %v11047 = vsel %vm6868, %v10951, 0
    %v11050 = vsel %vm6868, %v10952, 0
    %v11053 = vsel %vm6868, %v10953, 0
    %v11056 = vsel %vm6868, %v10954, 0
    %v11059 = vsel %vm6868, %v10955, 0
    %v11062 = vsel %vm6868, %v10956, 0
    %v11065 = vsel %vm6868, %v10957, 0
    %v11068 = vsel %vm6868, %v10958, 0
    %v11071 = vsel %vm6868, %v10959, 0
    %v11074 = vsel %vm6868, %v10960, 0
    %v11077 = vsel %vm6868, %v10961, 0
    %v11080 = vsel %vm6868, %v10962, 0
    %v11083 = vsel %vm6868, %v10963, 0
    %v11086 = vsel %vm6868, %v10964, 0
    %v11089 = vsel %vm6868, %v10965, 0
    %v11092 = vsel %vm6868, %v10966, 0
    %v11095 = vsel %vm6868, %v10967, 0
    %v11098 = vsel %vm6868, %v10968, 0
    %v11101 = vsel %vm6868, %v10969, 0
    %v11104 = vsel %vm6868, %v10970, 0
    %v11107 = vsel %vm6868, %v10971, 0
    %v11110 = vsel %vm6868, %v10972, 0
    %v11113 = vsel %vm6868, %v10973, 0
    %v11116 = vsel %vm6868, %v10974, 0
    %v11119 = vsel %vm6868, %v10975, 0
    %v11122 = vsel %vm6868, %v10976, 0
    %v11125 = vsel %vm6868, %v10977, 0
    %v11128 = vsel %vm6868, %v10978, 0
    %v11131 = vsel %vm6868, %v10979, 0
    %v11134 = vsel %vm6868, %v10980, 0
    %v11137 = vsel %vm6868, %v10981, 0
    %v11140 = vsel %vm6868, %v10982, 0
    %v11143 = vsel %vm6868, %v10983, 0
    %v11146 = vsel %vm6868, %v10984, 0
    %v11149 = vsel %vm6868, %v10985, 0
    %v11152 = vsel %vm6868, %v10986, 0
    %v11155 = vsel %vm6868, %v10987, 0
    %v11158 = vsel %vm6868, %v10988, 0
    %v11161 = vsel %vm6868, %v10989, 0
    %v11164 = vsel %vm6868, %v10990, 0
    %v11167 = vsel %vm6868, %v10991, 0
    %v11170 = vsel %vm6868, %v10992, 0
    %v11173 = vsel %vm6868, %v10993, 0
    %v11176 = vsel %vm6868, %v10994, 0
    %v11179 = vsel %vm6868, %v10995, 0
    %v11182 = vsel %vm6868, %v10996, 0
    %v11185 = vsel %vm6868, %v10997, 0
    %v11188 = vsel %vm6868, %v10998, 0
    %v11191 = vsel %vm6868, %v10999, 0
    %v11194 = vsel %vm6868, %v11000, 0
    %v11197 = vsel %vm6868, %v11001, 0
    %11199 = vmatprep.subr.mxu0 0.0
    %11200 = vmatpush1.xpose.msra.mxu0 %v11008
    %11201 = vmatprep.subr.mxu0 0.0
    %11202 = vmatpush1.xpose.msra.mxu0 %v11011
    %11203 = vmatprep.subr.mxu0 0.0
    %11204 = vmatpush1.xpose.msra.mxu0 %v11014
    %11205 = vmatprep.subr.mxu0 0.0
    %11206 = vmatpush1.xpose.msra.mxu0 %v11017
    %11207 = vmatprep.subr.mxu0 0.0
    %11208 = vmatpush1.xpose.msra.mxu0 %v11020
    %11209 = vmatprep.subr.mxu0 0.0
    %11210 = vmatpush1.xpose.msra.mxu0 %v11023
    %11211 = vmatprep.subr.mxu0 0.0
    %11212 = vmatpush1.xpose.msra.mxu0 %v11026
    %11213 = vmatprep.subr.mxu0 0.0
    %11214 = vmatpush1.xpose.msra.mxu0 %v11029
    %11215 = vmatprep.subr.mxu0 0.0
    %11216 = vmatpush1.xpose.msra.mxu0 %v11032
    %11217 = vmatprep.subr.mxu0 0.0
    %11218 = vmatpush1.xpose.msra.mxu0 %v11035
    %11219 = vmatprep.subr.mxu0 0.0
    %11220 = vmatpush1.xpose.msra.mxu0 %v11038
    %11221 = vmatprep.subr.mxu0 0.0
    %11222 = vmatpush1.xpose.msra.mxu0 %v11041
    %11223 = vmatprep.subr.mxu0 0.0
    %11224 = vmatpush1.xpose.msra.mxu0 %v11044
    %11225 = vmatprep.subr.mxu0 0.0
    %11226 = vmatpush1.xpose.msra.mxu0 %v11047
    %11227 = vmatprep.subr.mxu0 0.0
    %11228 = vmatpush1.xpose.msra.mxu0 %v11050
    %11229 = vmatprep.subr.mxu0 0.0
    %11230 = vmatpush1.xpose.msra.mxu0 %v11053
    %11231 = vmatprep.subr.mxu0 0.0
    %11232 = vmatpush1.xpose.msra.mxu0 %v11056
    %11233 = vmatprep.subr.mxu0 0.0
    %11234 = vmatpush1.xpose.msra.mxu0 %v11059
    %11235 = vmatprep.subr.mxu0 0.0
    %11236 = vmatpush1.xpose.msra.mxu0 %v11062
    %11237 = vmatprep.subr.mxu0 0.0
    %11238 = vmatpush1.xpose.msra.mxu0 %v11065
    %11239 = vmatprep.subr.mxu0 0.0
    %11240 = vmatpush1.xpose.msra.mxu0 %v11068
    %11241 = vmatprep.subr.mxu0 0.0
    %11242 = vmatpush1.xpose.msra.mxu0 %v11071
    %11243 = vmatprep.subr.mxu0 0.0
    %11244 = vmatpush1.xpose.msra.mxu0 %v11074
    %11245 = vmatprep.subr.mxu0 0.0
    %11246 = vmatpush1.xpose.msra.mxu0 %v11077
    %11247 = vmatprep.subr.mxu0 0.0
    %11248 = vmatpush1.xpose.msra.mxu0 %v11080
    %11249 = vmatprep.subr.mxu0 0.0
    %11250 = vmatpush1.xpose.msra.mxu0 %v11083
    %11251 = vmatprep.subr.mxu0 0.0
    %11252 = vmatpush1.xpose.msra.mxu0 %v11086
    %11253 = vmatprep.subr.mxu0 0.0
    %11254 = vmatpush1.xpose.msra.mxu0 %v11089
    %11255 = vmatprep.subr.mxu0 0.0
    %11256 = vmatpush1.xpose.msra.mxu0 %v11092
    %11257 = vmatprep.subr.mxu0 0.0
    %11258 = vmatpush1.xpose.msra.mxu0 %v11095
    %11259 = vmatprep.subr.mxu0 0.0
    %11260 = vmatpush1.xpose.msra.mxu0 %v11098
    %11261 = vmatprep.subr.mxu0 0.0
    %11262 = vmatpush1.xpose.msra.mxu0 %v11101
    %11263 = vmatprep.mubr.f32.mxu0 0.0
    %11264 = vmatmul.mubr.f32.gmra.mrb[0].mxu0 %v11005
    %v11265 = vpop.f32.mrb[0].mxu0
    %v11266 = vadd.f32 0.0, %v11265
    %v11267 = vpop.f32.mrb[0].mxu0
    %v11268 = vadd.f32 0.0, %v11267
    %11269 = vdwg.mxu0
    %11270 = vmatprep.subr.mxu0 0.0
    %11271 = vmatpush1.xpose.msra.mxu0 %v11104
    %11272 = vmatprep.subr.mxu0 0.0
    %11273 = vmatpush1.xpose.msra.mxu0 %v11107
    %11274 = vmatprep.subr.mxu0 0.0
    %11275 = vmatpush1.xpose.msra.mxu0 %v11110
    %11276 = vmatprep.subr.mxu0 0.0
    %11277 = vmatpush1.xpose.msra.mxu0 %v11113
    %11278 = vmatprep.subr.mxu0 0.0
    %11279 = vmatpush1.xpose.msra.mxu0 %v11116
    %11280 = vmatprep.subr.mxu0 0.0
    %11281 = vmatpush1.xpose.msra.mxu0 %v11119
    %11282 = vmatprep.subr.mxu0 0.0
    %11283 = vmatpush1.xpose.msra.mxu0 %v11122
    %11284 = vmatprep.subr.mxu0 0.0
    %11285 = vmatpush1.xpose.msra.mxu0 %v11125
    %11286 = vmatprep.subr.mxu0 0.0
    %11287 = vmatpush1.xpose.msra.mxu0 %v11128
    %11288 = vmatprep.subr.mxu0 0.0
    %11289 = vmatpush1.xpose.msra.mxu0 %v11131
    %11290 = vmatprep.subr.mxu0 0.0
    %11291 = vmatpush1.xpose.msra.mxu0 %v11134
    %11292 = vmatprep.subr.mxu0 0.0
    %11293 = vmatpush1.xpose.msra.mxu0 %v11137
    %11294 = vmatprep.subr.mxu0 0.0
    %11295 = vmatpush1.xpose.msra.mxu0 %v11140
    %11296 = vmatprep.subr.mxu0 0.0
    %11297 = vmatpush1.xpose.msra.mxu0 %v11143
    %11298 = vmatprep.subr.mxu0 0.0
    %11299 = vmatpush1.xpose.msra.mxu0 %v11146
    %11300 = vmatprep.subr.mxu0 0.0
    %11301 = vmatpush1.xpose.msra.mxu0 %v11149
    %11302 = vmatprep.subr.mxu0 0.0
    %11303 = vmatpush1.xpose.msra.mxu0 %v11152
    %11304 = vmatprep.subr.mxu0 0.0
    %11305 = vmatpush1.xpose.msra.mxu0 %v11155
    %11306 = vmatprep.subr.mxu0 0.0
    %11307 = vmatpush1.xpose.msra.mxu0 %v11158
    %11308 = vmatprep.subr.mxu0 0.0
    %11309 = vmatpush1.xpose.msra.mxu0 %v11161
    %11310 = vmatprep.subr.mxu0 0.0
    %11311 = vmatpush1.xpose.msra.mxu0 %v11164
    %11312 = vmatprep.subr.mxu0 0.0
    %11313 = vmatpush1.xpose.msra.mxu0 %v11167
    %11314 = vmatprep.subr.mxu0 0.0
    %11315 = vmatpush1.xpose.msra.mxu0 %v11170
    %11316 = vmatprep.subr.mxu0 0.0
    %11317 = vmatpush1.xpose.msra.mxu0 %v11173
    %11318 = vmatprep.subr.mxu0 0.0
    %11319 = vmatpush1.xpose.msra.mxu0 %v11176
    %11320 = vmatprep.subr.mxu0 0.0
    %11321 = vmatpush1.xpose.msra.mxu0 %v11179
    %11322 = vmatprep.subr.mxu0 0.0
    %11323 = vmatpush1.xpose.msra.mxu0 %v11182
    %11324 = vmatprep.subr.mxu0 0.0
    %11325 = vmatpush1.xpose.msra.mxu0 %v11185
    %11326 = vmatprep.subr.mxu0 0.0
    %11327 = vmatpush1.xpose.msra.mxu0 %v11188
    %11328 = vmatprep.subr.mxu0 0.0
    %11329 = vmatpush1.xpose.msra.mxu0 %v11191
    %11330 = vmatprep.subr.mxu0 0.0
    %11331 = vmatpush1.xpose.msra.mxu0 %v11194
    %11332 = vmatprep.subr.mxu0 0.0
    %11333 = vmatpush1.xpose.msra.mxu0 %v11197
    %11334 = vmatprep.mubr.f32.mxu0 0.0
    %11335 = vmatmul.mubr.f32.gmra.mrb[0].mxu0 %v11005
    %v11336 = vpop.f32.mrb[0].mxu0
    %v11337 = vadd.f32 0.0, %v11336
    %v11338 = vpop.f32.mrb[0].mxu0
    %v11339 = vadd.f32 0.0, %v11338
    %11340 = vdwg.mxu0
    %v11341 = vadd.f32 %v10934, %v11266
    %v11342 = vadd.f32 %v10935, %v11268
    %v11343 = vadd.f32 %v10936, %v11337
    %v11344 = vadd.f32 %v10937, %v11339
    %v11345 = vadd.f32 %v11341, %v11342
    %v11346 = vadd.f32 %v11345, %v11343
    %v11347 = vadd.f32 %v11346, %v11344
    %11348 = vadd.xlane.f32.xlu0 %v11347
    %v11349 = vpop.xlane.xlu0 %11348
    %v11350 = vmul.f32 %v11349, %v7002
    %v11351 = vsub.f32 %v11341, %v11350
    %v11352 = vsub.f32 %v11342, %v11350
    %v11353 = vsub.f32 %v11343, %v11350
    %v11354 = vsub.f32 %v11344, %v11350
    %v11355 = vmul.f32 %v11351, %v11351
    %v11356 = vmul.f32 %v11352, %v11352
    %v11357 = vmul.f32 %v11353, %v11353
    %v11358 = vmul.f32 %v11354, %v11354
    %v11359 = vadd.f32 %v11355, %v11356
    %v11360 = vadd.f32 %v11359, %v11357
    %v11361 = vadd.f32 %v11360, %v11358
    %11362 = vadd.xlane.f32.xlu0 %v11361
    %v11363 = vpop.xlane.xlu0 %11362
    %v11364 = vmul.f32 %v11363, %v7002
    %v11365 = vadd.f32 %v11364, 0.001
    %v11366 = vrsqrt.pop %v11365
    %v11367 = vmul.f32 %v11351, %v11366
    %v11368 = vmul.f32 %v11352, %v11366
    %v11369 = vmul.f32 %v11353, %v11366
    %v11370 = vmul.f32 %v11354, %v11366
    %v11371 = vld [vmem:[%s5] sm:$0xff]
    %11373 = vset.pattern.permute.xlu0 0
    %11374 = vperm.xlu0 %11373, %v11371
    %v11375 = vpop.permute.xlu0 %11374
    %v11377 = vmul.f32 %v11367, %v11375
    %v11378 = vmul.f32 %v11368, %v11375
    %v11379 = vmul.f32 %v11369, %v11375
    %v11380 = vmul.f32 %v11370, %v11375
    %v11381 = vld [vmem:[%s6] sm:$0xff]
    %11383 = vset.pattern.permute.xlu0 0
    %11384 = vperm.xlu0 %11383, %v11381
    %v11385 = vpop.permute.xlu0 %11384
    %v11387 = vadd.f32 %v11377, %v11385
    %v11388 = vadd.f32 %v11378, %v11385
    %v11389 = vadd.f32 %v11379, %v11385
    %v11390 = vadd.f32 %v11380, %v11385
    %11391 = vst [vmem:[#allocation3] sm:$0xff] %v11387
    %11392 = vst [vmem:[#allocation3 + $0x8] sm:$0xff] %v11388
    %11393 = vst [vmem:[#allocation3 + $0x10] sm:$0xff] %v11389
    %11394 = vst [vmem:[#allocation3 + $0x18] sm:$0xff] %v11390
    // Predicated region
    $region30: #{tpu_custom_call.1} parent=1 // pred_check
      _
    $region31: #{tpu_custom_call.1} parent=1 // pred_check_branch
      %11396 = sbr.rel (0) target = $region33
    $region32: #{tpu_custom_call.1} parent=1 // pred_region
      %s11398 = ssub.s32 512, 512
      %11399 = vsyncadd [#allocation4], %s11398
      %s11401 = sshll.u32 [#allocation3], 4
      %s11402 = int_to_ptr.vmem [resolvable:$true] %s11401
      %11404 = dma.vmem_to_hbm [thread:$0]  %s11402, 512, %s7, [#allocation4]
    $region33: #{tpu_custom_call.1} parent=1 // pred_fallthru
      _
    // Predicated region
    $region34: #{tpu_custom_call.1} parent=1 // pred_check
      _
    $region35: #{tpu_custom_call.1} parent=1 // pred_check_branch
      %11406 = sbr.rel (0) target = $region37
    $region36: #{tpu_custom_call.1} parent=1 // pred_region
      %11407 = dma.done [#allocation4], 512
    $region37: #{tpu_custom_call.1} parent=1 // pred_fallthru
      _
    %11408 = vsyncpa [#allocation4], 1

</llo_original>
